<compile_context>
chip_gen: v7x
topology: tpu7x:2x2x1
jax: 0.10.0
libtpu: 0.0.40
codegen_flags: <defaults>
</compile_context>

<pallas_src>
import jax
import jax.numpy as jnp
from jax.experimental import pallas as pl
from jax.experimental.pallas import tpu as pltpu


# ----------------------------------------------------------------- VMEM budgets

def _vmem_caps():
    """Generation-aware scoped-VMEM limit and per-call working-set budget."""
    try:
        cap = int(pltpu.get_tpu_info().vmem_capacity_bytes)
    except Exception:
        cap = 64 * 1024 * 1024            # conservative (v7x-sized) fallback
    cap = max(cap, 16 * 1024 * 1024)
    limit = min((cap * 3) // 4, 96 * 1024 * 1024)
    budget = min((cap * 2) // 5, 48 * 1024 * 1024)
    return int(limit), int(budget)


_VMEM_LIMIT, _VMEM_BUDGET = _vmem_caps()


def _largest_divisor_tile(total, cap, quantum):
    """Largest divisor of `total` that is <= cap and a multiple of `quantum`;
    falls back to `total` itself (block == full dim is always legal)."""
    if total <= cap:
        return total
    t = (min(total, cap) // quantum) * quantum
    while t >= quantum:
        if total % t == 0:
            return t
        t -= quantum
    return total


# ----------------------------------------------------------------- branch head kernel

def _branch_kernel(x_ref, we_ref, wg_ref, u_ref, g_ref):
    # x: (1, Ci, T) bf16   we: (9*out, Ci) bf16   wg: (32, Ci) bf16   (weights resident)
    x = x_ref[0]
    u_ref[0] = jnp.dot(we_ref[...], x,
                       preferred_element_type=jnp.float32).astype(u_ref.dtype)
    g_ref[0] = jnp.dot(wg_ref[...], x,
                       preferred_element_type=jnp.float32).astype(g_ref.dtype)


def branch_head(x, we_t, wg_t):
    """Channel-major fused branch head (conv1+BN folded through conv4/conv5/conv6+BN6).

    x:    (N, Ci, HW) bf16, spatial in lanes
    we_t: (9*out_fea, Ci) bf16   per-tap edge-path weights
    wg_t: (32, Ci) bf16          fea-path weights
    -> u (N, 9*out_fea, HW) bf16,  g (N, 32, HW) bf16   (both lane-dense)
    """
    N, Ci, HW = x.shape
    Mu, Mg = we_t.shape[0], wg_t.shape[0]

    per_lane = 4 * Ci + 4 * (Mu + Mg)              # dbl-buffered bf16 in + outs, per lane
    fixed = (Mu + Mg) * Ci * 2 + (1 << 14)
    cap_t = max((_VMEM_BUDGET - fixed) // per_lane, 128)
    t_hw = _largest_divisor_tile(HW, cap_t, 128)

    return pl.pallas_call(
        _branch_kernel,
        grid=(N, HW // t_hw),
        in_specs=[
            pl.BlockSpec((1, Ci, t_hw), lambda n, j: (n, 0, j)),
            pl.BlockSpec((Mu, Ci), lambda n, j: (0, 0)),      # resident weights
            pl.BlockSpec((Mg, Ci), lambda n, j: (0, 0)),
        ],
        out_specs=[
            pl.BlockSpec((1, Mu, t_hw), lambda n, j: (n, 0, j)),
            pl.BlockSpec((1, Mg, t_hw), lambda n, j: (n, 0, j)),
        ],
        out_shape=[
            jax.ShapeDtypeStruct((N, Mu, HW), jnp.bfloat16),
            jax.ShapeDtypeStruct((N, Mg, HW), jnp.bfloat16),
        ],
        compiler_params=pltpu.CompilerParams(
            dimension_semantics=("parallel", "parallel"),
            vmem_limit_bytes=_VMEM_LIMIT),
    )(x, we_t, wg_t)


# ----------------------------------------------------------------- combine kernel

def _up_separable(z_ref, ah_ref, aw_ref):
    """Separable align_corners bilinear upsample of one channel group.

    z: (1, C, Hin, Win) bf16, ah: (TH, Hin) bf16, aw: (W, Win) bf16 -> (C, TH, W) f32.
    Height pass first (no redundant work across H tiles), then width pass; both are
    batched-over-channel bf16 matmuls with f32 accumulation."""
    z = z_ref[0]
    c = z.shape[0]
    ah = jnp.broadcast_to(ah_ref[...][None], (c,) + ah_ref.shape)     # (C, TH, Hin)
    t = jnp.einsum("cyi,ciw->cyw", ah, z,
                   preferred_element_type=jnp.float32)                # (C, TH, Win)
    aw = jnp.broadcast_to(aw_ref[...][None], (c,) + aw_ref.shape)     # (C, W, Win)
    return jnp.einsum("cyw,cxw->cyx", t.astype(jnp.bfloat16), aw,
                      preferred_element_type=jnp.float32)             # (C, TH, W)


def _combine_kernel(e1_ref, g1_ref, e2_ref, g2_ref, e3_ref, g3_ref,
                    ah2_ref, aw2_ref, ah3_ref, aw3_ref, be_ref, bf_ref,
                    edge_ref, fea_ref):
    edge = (e1_ref[0].astype(jnp.float32)
            + _up_separable(e2_ref, ah2_ref, aw2_ref)
            + _up_separable(e3_ref, ah3_ref, aw3_ref)
            + be_ref[...])
    fea = (g1_ref[0].astype(jnp.float32)
           + _up_separable(g2_ref, ah2_ref, aw2_ref)
           + _up_separable(g3_ref, ah3_ref, aw3_ref)
           + bf_ref[...])
    edge_ref[0] = edge.astype(edge_ref.dtype)                     # edge: no ReLU
    fea_ref[0] = jnp.maximum(fea, 0.0).astype(fea_ref.dtype)      # ReLU only on edge_fea


def combine_upsample(e1, g1, e2, g2, e3, g3, ah2, aw2, ah3, aw3, b_edge, b_fea,
                     out_dtype=jnp.float32):
    """Fused separable bilinear upsample (branches 2,3) + sum + bias, two outputs."""
    N, ce, H, W = e1.shape
    cf = g1.shape[1]
    H2, W2 = e2.shape[2], e2.shape[3]
    H3, W3 = e3.shape[2], e3.shape[3]

    per_row = (ce + cf) * W * (2 * 2 + 4 * 2)     # bf16 in + f32 out, double buffered
    fixed = ((ce + cf) * (H2 * W2 + H3 * W3) * 4
             + (H * (H2 + H3) + W * (W2 + W3)) * 4 + (1 << 15))
    cap_rows = max((_VMEM_BUDGET - fixed) // per_row, 8)
    th = _largest_divisor_tile(H, cap_rows, 8)

    return pl.pallas_call(
        _combine_kernel,
        grid=(N, H // th),
        in_specs=[
            pl.BlockSpec((1, ce, th, W), lambda n, h: (n, 0, h, 0)),
            pl.BlockSpec((1, cf, th, W), lambda n, h: (n, 0, h, 0)),
            pl.BlockSpec((1, ce, H2, W2), lambda n, h: (n, 0, 0, 0)),
            pl.BlockSpec((1, cf, H2, W2), lambda n, h: (n, 0, 0, 0)),
            pl.BlockSpec((1, ce, H3, W3), lambda n, h: (n, 0, 0, 0)),
            pl.BlockSpec((1, cf, H3, W3), lambda n, h: (n, 0, 0, 0)),
            pl.BlockSpec((th, H2), lambda n, h: (h, 0)),          # row-tiled Ah matrices
            pl.BlockSpec((W, W2), lambda n, h: (0, 0)),
            pl.BlockSpec((th, H3), lambda n, h: (h, 0)),
            pl.BlockSpec((W, W3), lambda n, h: (0, 0)),
            pl.BlockSpec((ce, 1, 1), lambda n, h: (0, 0, 0)),
            pl.BlockSpec((cf, 1, 1), lambda n, h: (0, 0, 0)),
        ],
        out_specs=[
            pl.BlockSpec((1, ce, th, W), lambda n, h: (n, 0, h, 0)),
            pl.BlockSpec((1, cf, th, W), lambda n, h: (n, 0, h, 0)),
        ],
        out_shape=[
            jax.ShapeDtypeStruct((N, ce, H, W), out_dtype),
            jax.ShapeDtypeStruct((N, cf, H, W), out_dtype),
        ],
        compiler_params=pltpu.CompilerParams(
            dimension_semantics=("parallel", "parallel"),
            vmem_limit_bytes=_VMEM_LIMIT),
    )(e1, g1, e2, g2, e3, g3, ah2, aw2, ah3, aw3, b_edge, b_fea)


# ----------------------------------------------------------------- helpers

def _bilinear_matrix(out_size, in_size):
    """Row-stochastic 1-D matrix matching F.interpolate(mode='bilinear', align_corners=True)."""
    if out_size == 1 or in_size == 1:
        src = jnp.zeros((out_size,), jnp.float32)
    else:
        src = jnp.arange(out_size, dtype=jnp.float32) * (in_size - 1) / (out_size - 1)
    lo = jnp.clip(jnp.floor(src).astype(jnp.int32), 0, in_size - 1)
    hi = jnp.clip(lo + 1, 0, in_size - 1)
    frac = src - lo.astype(jnp.float32)
    A = jnp.zeros((out_size, in_size), jnp.float32)
    A = A.at[jnp.arange(out_size), lo].add(1.0 - frac)
    A = A.at[jnp.arange(out_size), hi].add(frac)
    return A


def fold_bn(w_mat, gamma, beta, mean, var, eps=1e-5):
    """Fold eval-mode BatchNorm into a bias-free 1x1 conv: returns (w', b')."""
    scale = gamma / jnp.sqrt(var + eps)
    return w_mat * scale[None, :], beta - mean * scale


# ----------------------------------------------------------------- module

def init_params(key, in_fea=(8, 16, 32), mid_fea=16, out_fea=1):
    ks = jax.random.split(key, 8)

    def bn_params(kk, c):
        k1, k2, k3, k4 = jax.random.split(kk, 4)
        return dict(
            gamma=1.0 + 0.1 * jax.random.normal(k1, (c,), jnp.float32),
            beta=0.1 * jax.random.normal(k2, (c,), jnp.float32),
            mean=0.1 * jax.random.normal(k3, (c,), jnp.float32),
            var=jnp.abs(1.0 + 0.1 * jax.random.normal(k4, (c,), jnp.float32)),
        )

    p = {}
    for i, cin in enumerate(in_fea):                 # conv1/2/3: 1x1 bias-free + BN(mid)
        p[f"conv{i+1}_w"] = 0.1 * jax.random.normal(ks[i], (cin, mid_fea), jnp.float32)
        p[f"bn{i+1}"] = bn_params(jax.random.fold_in(ks[i], 7), mid_fea)
    # conv4: 3x3 mid->out, bias=True; weights stored (ky,kx,cin) x cout
    p["conv4_w"] = 0.1 * jax.random.normal(ks[3], (9 * mid_fea, out_fea), jnp.float32)
    p["conv4_b"] = 0.1 * jax.random.normal(ks[4], (out_fea,), jnp.float32)
    # conv5: 1x1, 3*out -> out, bias=True
    p["conv5_w"] = 0.1 * jax.random.normal(ks[5], (3 * out_fea, out_fea), jnp.float32)
    p["conv5_b"] = 0.1 * jax.random.normal(jax.random.fold_in(ks[5], 1), (out_fea,), jnp.float32)
    # conv6: 1x1, 3*mid -> 32, bias=True, then BatchNorm2d(32) + ReLU
    p["conv6_w"] = 0.1 * jax.random.normal(ks[6], (3 * mid_fea, 32), jnp.float32)
    p["conv6_b"] = 0.1 * jax.random.normal(jax.random.fold_in(ks[6], 1), (32,), jnp.float32)
    p["bn6"] = bn_params(ks[7], 32)
    return p


def edge_module_forward(params, x1, x2, x3, eps=1e-5):
    """Inputs/outputs NCHW.  BatchNorms in eval mode, folded into the convs."""
    mid = params["conv1_w"].shape[1]
    out_fea = params["conv4_w"].shape[1]
    N, _, H, W = x1.shape

    # fold BN6 into conv6
    bn6 = params["bn6"]
    s6 = bn6["gamma"] / jnp.sqrt(bn6["var"] + eps)
    w6f = params["conv6_w"] * s6[None, :]                       # (3*mid, 32)
    b6f = (params["conv6_b"] - bn6["mean"]) * s6 + bn6["beta"]  # (32,)

    w4_taps = params["conv4_w"].reshape(9, mid, out_fea)
    b4 = params["conv4_b"]
    w5 = params["conv5_w"]                                      # (3*out, out)
    b5 = params["conv5_b"]

    b_edge = b5.astype(jnp.float32)
    b_fea = b6f.astype(jnp.float32)

    e_list, g_list, hw_list = [], [], []
    for i, x in enumerate((x1, x2, x3)):
        _, ci, hi, wi = x.shape
        hw_list.append((hi, wi))
        bn = params[f"bn{i+1}"]
        w1f, b1f = fold_bn(params[f"conv{i+1}_w"], bn["gamma"], bn["beta"],
                           bn["mean"], bn["var"], eps)          # (ci, mid), (mid,)
        a5 = w5[i * out_fea:(i + 1) * out_fea, :]               # (out, out) conv5 block
        w6blk = w6f[i * mid:(i + 1) * mid, :]                   # (mid, 32)  conv6 block

        # conv1(+BN)->conv6(+BN6) folded: x -> g (the mid_fea 'fea' is never materialized)
        wg_t = (w1f @ w6blk).T                                  # (32, ci)
        b_fea = b_fea + b1f @ w6blk

        # conv1(+BN)->conv4 tap->conv5 block folded: x -> 9*out tap maps
        we_t = jnp.einsum("cm,tmo,op->tpc", w1f, w4_taps, a5).reshape(9 * out_fea, ci)
        ctap = jnp.einsum("m,tmo,op->tp", b1f, w4_taps, a5)     # (9, out) per-tap bias
        b_edge = b_edge + a5.T @ b4

        xcm = x.reshape(N, ci, hi * wi).astype(jnp.bfloat16)    # channel-major, lanes=HW
        u, g = branch_head(xcm, we_t.astype(jnp.bfloat16), wg_t.astype(jnp.bfloat16))

        # 3x3 tap combination with zero padding + exact border-aware bias map (tiny, XLA).
        # TODO(synk): for large out_fea move this shift-add into the branch kernel
        # (lane rolls + row masks) so the 9*out-row intermediate never touches HBM.
        u = u.reshape(N, 9, out_fea, hi, wi).astype(jnp.float32)
        u_p = jnp.pad(u, ((0, 0), (0, 0), (0, 0), (1, 1), (1, 1)))
        ones_p = jnp.pad(jnp.ones((hi, wi), jnp.float32), ((1, 1), (1, 1)))
        e = jnp.zeros((N, out_fea, hi, wi), jnp.float32)
        bmap = jnp.zeros((out_fea, hi, wi), jnp.float32)
        for dy in range(3):
            for dx in range(3):
                t = dy * 3 + dx
                e = e + u_p[:, t, :, dy:dy + hi, dx:dx + wi]
                bmap = bmap + ctap[t][:, None, None] * ones_p[dy:dy + hi, dx:dx + wi]
        e = e + bmap[None]

        e_list.append(e.astype(jnp.bfloat16))
        g_list.append(g.reshape(N, 32, hi, wi))

    # separable align_corners bilinear matrices for branches 2 and 3 (bf16 operands)
    ah2 = _bilinear_matrix(H, hw_list[1][0]).astype(jnp.bfloat16)
    aw2 = _bilinear_matrix(W, hw_list[1][1]).astype(jnp.bfloat16)
    ah3 = _bilinear_matrix(H, hw_list[2][0]).astype(jnp.bfloat16)
    aw3 = _bilinear_matrix(W, hw_list[2][1]).astype(jnp.bfloat16)

    edge, edge_fea = combine_upsample(
        e_list[0], g_list[0], e_list[1], g_list[1], e_list[2], g_list[2],
        ah2, aw2, ah3, aw3,
        b_edge.reshape(out_fea, 1, 1), b_fea.reshape(32, 1, 1))
    return edge, edge_fea       # already NCHW


# ----------------------------------------------------------------- reference

def _reference_forward(params, x1, x2, x3, eps=1e-5):
    """Pure-JAX f32 reference mirroring the original PyTorch module structure."""
    def bn(x, p):
        s = p["gamma"] / jnp.sqrt(p["var"] + eps)
        return x * s + (p["beta"] - p["mean"] * s)

    def conv1x1(x, w, b=None):
        y = jnp.einsum("nhwc,co->nhwo", x, w)
        return y if b is None else y + b

    def conv3x3(x, w9, b):
        Nn, H, W, C = x.shape
        xp = jnp.pad(x, ((0, 0), (1, 1), (1, 1), (0, 0)))
        pat = jnp.concatenate([xp[:, dy:dy + H, dx:dx + W, :]
                               for dy in range(3) for dx in range(3)], axis=-1)
        return jnp.einsum("nhwk,ko->nhwo", pat, w9) + b

    def up(x, H, W):
        _, Hin, Win, _ = x.shape
        Ah = _bilinear_matrix(H, Hin)
        Aw = _bilinear_matrix(W, Win)
        y = jnp.einsum("yh,nhwc->nywc", Ah, x)
        return jnp.einsum("xw,nywc->nyxc", Aw, y)

    xs = [jnp.transpose(x, (0, 2, 3, 1)).astype(jnp.float32) for x in (x1, x2, x3)]
    _, h, w, _ = xs[0].shape

    feas = [bn(conv1x1(xs[i], params[f"conv{i+1}_w"]), params[f"bn{i+1}"]) for i in range(3)]
    edges = [conv3x3(f, params["conv4_w"], params["conv4_b"]) for f in feas]

    feas = [feas[0], up(feas[1], h, w), up(feas[2], h, w)]
    edges = [edges[0], up(edges[1], h, w), up(edges[2], h, w)]

    edge = conv1x1(jnp.concatenate(edges, axis=-1), params["conv5_w"], params["conv5_b"])
    edge_fea = conv1x1(jnp.concatenate(feas, axis=-1), params["conv6_w"], params["conv6_b"])
    edge_fea = jnp.maximum(bn(edge_fea, params["bn6"]), 0.0)

    return (jnp.transpose(edge, (0, 3, 1, 2)), jnp.transpose(edge_fea, (0, 3, 1, 2)))


# ----------------------------------------------------------------- main

if __name__ == "__main__":
    key = jax.random.PRNGKey(0)
    k_p, k1, k2, k3 = jax.random.split(key, 4)

    in_fea = (8, 16, 32)
    mid_fea = 16
    out_fea = 1
    params = init_params(k_p, in_fea=in_fea, mid_fea=mid_fea, out_fea=out_fea)

    # NCHW inputs, pyramid-style spatial sizes
    x1 = jax.random.normal(k1, (2, in_fea[0], 16, 16), jnp.float32)
    x2 = jax.random.normal(k2, (2, in_fea[1], 8, 8), jnp.float32)
    x3 = jax.random.normal(k3, (2, in_fea[2], 4, 4), jnp.float32)

    fwd = jax.jit(edge_module_forward)
    edge, edge_fea = fwd(params, x1, x2, x3)
    jax.block_until_ready((edge, edge_fea))

    assert edge.shape == (2, out_fea, 16, 16), edge.shape
    assert edge_fea.shape == (2, 32, 16, 16), edge_fea.shape
    assert bool(jnp.all(jnp.isfinite(edge))) and bool(jnp.all(jnp.isfinite(edge_fea)))
    assert bool(jnp.all(edge_fea >= 0.0))      # ReLU applied to edge_fea only

    # numerical check vs. the un-fused f32 reference (bf16 matmuls -> loose tolerance)
    edge_ref, fea_ref = _reference_forward(params, x1, x2, x3)
    assert bool(jnp.allclose(edge, edge_ref, atol=5e-2, rtol=5e-2))
    assert bool(jnp.allclose(edge_fea, fea_ref, atol=5e-2, rtol=5e-2))

    print("KERNEL_OK")
</pallas_src>

<mosaic_0001>
module attributes {stable_mosaic.version = 11 : i64} {
  func.func private @main(%arg0: i32) attributes {dimension_semantics = [#tpu.dimension_semantics<core_parallel>], iteration_bounds = array<i64: 2>, tpu.core_type = #tpu.core_type<sc_scalar_subcore>, window_params = []} {
    return
  }
}

module attributes {stable_mosaic.version = 11 : i64} {
  func.func private @main(%arg0: i32) attributes {dimension_semantics = [#tpu.dimension_semantics<core_parallel>], iteration_bounds = array<i64: 2>, tpu.core_type = #tpu.core_type<sc_scalar_subcore>, window_params = []} {
    return
  }
}

module attributes {stable_mosaic.version = 11 : i64} {
  func.func @_branch_kernel(%arg0: i32, %arg1: i32, %arg2: memref<1x32x16xbf16, #tpu.memory_space<vmem>>, %arg3: memref<9x32xbf16, #tpu.memory_space<vmem>>, %arg4: memref<32x32xbf16, #tpu.memory_space<vmem>>, %arg5: memref<1x9x16xbf16, #tpu.memory_space<vmem>>, %arg6: memref<1x32x16xbf16, #tpu.memory_space<vmem>>) attributes {dimension_semantics = [#tpu.dimension_semantics<parallel>, #tpu.dimension_semantics<parallel>], iteration_bounds = array<i64: 2, 1>, scalar_prefetch = 0 : i64, scratch_operands = 0 : i64, tpu.core_type = #tpu.core_type<tc>, window_params = [{transform_indices = @transform_0, window_bounds = array<i64: 1, 32, 16>}, {pipeline_mode = #tpu.pipeline_mode<synchronous>, transform_indices = @transform_1, window_bounds = array<i64: 9, 32>}, {pipeline_mode = #tpu.pipeline_mode<synchronous>, transform_indices = @transform_2, window_bounds = array<i64: 32, 32>}, {transform_indices = @transform_3, window_bounds = array<i64: 1, 9, 16>}, {transform_indices = @transform_4, window_bounds = array<i64: 1, 32, 16>}]} {
    %c0 = arith.constant 0 : index
    %c0_0 = arith.constant 0 : index
    %c0_1 = arith.constant 0 : index
    %0 = vector.load %arg2[%c0, %c0_0, %c0_1] : memref<1x32x16xbf16, #tpu.memory_space<vmem>>, vector<1x32x16xbf16>
    %1 = vector.shape_cast %0 : vector<1x32x16xbf16> to vector<32x16xbf16>
    %c0_2 = arith.constant 0 : index
    %c0_3 = arith.constant 0 : index
    %2 = vector.load %arg3[%c0_2, %c0_3] : memref<9x32xbf16, #tpu.memory_space<vmem>>, vector<9x32xbf16>
    %cst = arith.constant dense<0.000000e+00> : vector<9x16xf32>
    %3 = tpu.matmul %2, %1, %cst {dimension_numbers = #tpu.dot_dimension_numbers<[1], [0], [0], [1], [0, 0, 1, 1], [], []>} : vector<9x32xbf16>, vector<32x16xbf16>, vector<9x16xf32> -> vector<9x16xf32>
    %4 = arith.truncf %3 : vector<9x16xf32> to vector<9x16xbf16>
    %c0_4 = arith.constant 0 : index
    %c0_5 = arith.constant 0 : index
    %c0_6 = arith.constant 0 : index
    %5 = vector.load %arg5[%c0_4, %c0_5, %c0_6] : memref<1x9x16xbf16, #tpu.memory_space<vmem>>, vector<1x9x16xbf16>
    %6 = vector.shape_cast %5 : vector<1x9x16xbf16> to vector<9x16xbf16>
    %7 = vector.shape_cast %4 : vector<9x16xbf16> to vector<1x9x16xbf16>
    tpu.vector_store %arg5[%c0_4, %c0_5, %c0_6], %7 {strides = array<i32>} : memref<1x9x16xbf16, #tpu.memory_space<vmem>>, vector<1x9x16xbf16>,
    %c0_7 = arith.constant 0 : index
    %c0_8 = arith.constant 0 : index
    %8 = vector.load %arg4[%c0_7, %c0_8] : memref<32x32xbf16, #tpu.memory_space<vmem>>, vector<32x32xbf16>
    %cst_9 = arith.constant dense<0.000000e+00> : vector<32x16xf32>
    %9 = tpu.matmul %8, %1, %cst_9 {dimension_numbers = #tpu.dot_dimension_numbers<[1], [0], [0], [1], [0, 0, 1, 1], [], []>} : vector<32x32xbf16>, vector<32x16xbf16>, vector<32x16xf32> -> vector<32x16xf32>
    %10 = arith.truncf %9 : vector<32x16xf32> to vector<32x16xbf16>
    %c0_10 = arith.constant 0 : index
    %c0_11 = arith.constant 0 : index
    %c0_12 = arith.constant 0 : index
    %11 = vector.load %arg6[%c0_10, %c0_11, %c0_12] : memref<1x32x16xbf16, #tpu.memory_space<vmem>>, vector<1x32x16xbf16>
    %12 = vector.shape_cast %11 : vector<1x32x16xbf16> to vector<32x16xbf16>
    %13 = vector.shape_cast %10 : vector<32x16xbf16> to vector<1x32x16xbf16>
    tpu.vector_store %arg6[%c0_10, %c0_11, %c0_12], %13 {strides = array<i32>} : memref<1x32x16xbf16, #tpu.memory_space<vmem>>, vector<1x32x16xbf16>,
    return
  }
  func.func @transform_0(%arg0: i32, %arg1: i32) -> (i32, i32, i32) {
    %c0_i32 = arith.constant 0 : i32
    %c0_i32_0 = arith.constant 0 : i32
    return %arg0, %c0_i32, %arg1 : i32, i32, i32
  }
  func.func @transform_1(%arg0: i32, %arg1: i32) -> (i32, i32) {
    %c0_i32 = arith.constant 0 : i32
    %c0_i32_0 = arith.constant 0 : i32
    %c0_i32_1 = arith.constant 0 : i32
    return %c0_i32, %c0_i32_0 : i32, i32
  }
  func.func @transform_2(%arg0: i32, %arg1: i32) -> (i32, i32) {
    %c0_i32 = arith.constant 0 : i32
    %c0_i32_0 = arith.constant 0 : i32
    %c0_i32_1 = arith.constant 0 : i32
    return %c0_i32, %c0_i32_0 : i32, i32
  }
  func.func @transform_3(%arg0: i32, %arg1: i32) -> (i32, i32, i32) {
    %c0_i32 = arith.constant 0 : i32
    %c0_i32_0 = arith.constant 0 : i32
    return %arg0, %c0_i32, %arg1 : i32, i32, i32
  }
  func.func @transform_4(%arg0: i32, %arg1: i32) -> (i32, i32, i32) {
    %c0_i32 = arith.constant 0 : i32
    %c0_i32_0 = arith.constant 0 : i32
    return %arg0, %c0_i32, %arg1 : i32, i32, i32
  }
}

module attributes {stable_mosaic.version = 11 : i64} {
  func.func @_branch_kernel(%arg0: i32, %arg1: i32, %arg2: memref<1x16x64xbf16, #tpu.memory_space<vmem>>, %arg3: memref<9x16xbf16, #tpu.memory_space<vmem>>, %arg4: memref<32x16xbf16, #tpu.memory_space<vmem>>, %arg5: memref<1x9x64xbf16, #tpu.memory_space<vmem>>, %arg6: memref<1x32x64xbf16, #tpu.memory_space<vmem>>) attributes {dimension_semantics = [#tpu.dimension_semantics<parallel>, #tpu.dimension_semantics<parallel>], iteration_bounds = array<i64: 2, 1>, scalar_prefetch = 0 : i64, scratch_operands = 0 : i64, tpu.core_type = #tpu.core_type<tc>, window_params = [{transform_indices = @transform_0, window_bounds = array<i64: 1, 16, 64>}, {pipeline_mode = #tpu.pipeline_mode<synchronous>, transform_indices = @transform_1, window_bounds = array<i64: 9, 16>}, {pipeline_mode = #tpu.pipeline_mode<synchronous>, transform_indices = @transform_2, window_bounds = array<i64: 32, 16>}, {transform_indices = @transform_3, window_bounds = array<i64: 1, 9, 64>}, {transform_indices = @transform_4, window_bounds = array<i64: 1, 32, 64>}]} {
    %c0 = arith.constant 0 : index
    %c0_0 = arith.constant 0 : index
    %c0_1 = arith.constant 0 : index
    %0 = vector.load %arg2[%c0, %c0_0, %c0_1] : memref<1x16x64xbf16, #tpu.memory_space<vmem>>, vector<1x16x64xbf16>
    %1 = vector.shape_cast %0 : vector<1x16x64xbf16> to vector<16x64xbf16>
    %c0_2 = arith.constant 0 : index
    %c0_3 = arith.constant 0 : index
    %2 = vector.load %arg3[%c0_2, %c0_3] : memref<9x16xbf16, #tpu.memory_space<vmem>>, vector<9x16xbf16>
    %cst = arith.constant dense<0.000000e+00> : vector<9x64xf32>
    %3 = tpu.matmul %2, %1, %cst {dimension_numbers = #tpu.dot_dimension_numbers<[1], [0], [0], [1], [0, 0, 1, 1], [], []>} : vector<9x16xbf16>, vector<16x64xbf16>, vector<9x64xf32> -> vector<9x64xf32>
    %4 = arith.truncf %3 : vector<9x64xf32> to vector<9x64xbf16>
    %c0_4 = arith.constant 0 : index
    %c0_5 = arith.constant 0 : index
    %c0_6 = arith.constant 0 : index
    %5 = vector.load %arg5[%c0_4, %c0_5, %c0_6] : memref<1x9x64xbf16, #tpu.memory_space<vmem>>, vector<1x9x64xbf16>
    %6 = vector.shape_cast %5 : vector<1x9x64xbf16> to vector<9x64xbf16>
    %7 = vector.shape_cast %4 : vector<9x64xbf16> to vector<1x9x64xbf16>
    tpu.vector_store %arg5[%c0_4, %c0_5, %c0_6], %7 {strides = array<i32>} : memref<1x9x64xbf16, #tpu.memory_space<vmem>>, vector<1x9x64xbf16>,
    %c0_7 = arith.constant 0 : index
    %c0_8 = arith.constant 0 : index
    %8 = vector.load %arg4[%c0_7, %c0_8] : memref<32x16xbf16, #tpu.memory_space<vmem>>, vector<32x16xbf16>
    %cst_9 = arith.constant dense<0.000000e+00> : vector<32x64xf32>
    %9 = tpu.matmul %8, %1, %cst_9 {dimension_numbers = #tpu.dot_dimension_numbers<[1], [0], [0], [1], [0, 0, 1, 1], [], []>} : vector<32x16xbf16>, vector<16x64xbf16>, vector<32x64xf32> -> vector<32x64xf32>
    %10 = arith.truncf %9 : vector<32x64xf32> to vector<32x64xbf16>
    %c0_10 = arith.constant 0 : index
    %c0_11 = arith.constant 0 : index
    %c0_12 = arith.constant 0 : index
    %11 = vector.load %arg6[%c0_10, %c0_11, %c0_12] : memref<1x32x64xbf16, #tpu.memory_space<vmem>>, vector<1x32x64xbf16>
    %12 = vector.shape_cast %11 : vector<1x32x64xbf16> to vector<32x64xbf16>
    %13 = vector.shape_cast %10 : vector<32x64xbf16> to vector<1x32x64xbf16>
    tpu.vector_store %arg6[%c0_10, %c0_11, %c0_12], %13 {strides = array<i32>} : memref<1x32x64xbf16, #tpu.memory_space<vmem>>, vector<1x32x64xbf16>,
    return
  }
  func.func @transform_0(%arg0: i32, %arg1: i32) -> (i32, i32, i32) {
    %c0_i32 = arith.constant 0 : i32
    %c0_i32_0 = arith.constant 0 : i32
    return %arg0, %c0_i32, %arg1 : i32, i32, i32
  }
  func.func @transform_1(%arg0: i32, %arg1: i32) -> (i32, i32) {
    %c0_i32 = arith.constant 0 : i32
    %c0_i32_0 = arith.constant 0 : i32
    %c0_i32_1 = arith.constant 0 : i32
    return %c0_i32, %c0_i32_0 : i32, i32
  }
  func.func @transform_2(%arg0: i32, %arg1: i32) -> (i32, i32) {
    %c0_i32 = arith.constant 0 : i32
    %c0_i32_0 = arith.constant 0 : i32
    %c0_i32_1 = arith.constant 0 : i32
    return %c0_i32, %c0_i32_0 : i32, i32
  }
  func.func @transform_3(%arg0: i32, %arg1: i32) -> (i32, i32, i32) {
    %c0_i32 = arith.constant 0 : i32
    %c0_i32_0 = arith.constant 0 : i32
    return %arg0, %c0_i32, %arg1 : i32, i32, i32
  }
  func.func @transform_4(%arg0: i32, %arg1: i32) -> (i32, i32, i32) {
    %c0_i32 = arith.constant 0 : i32
    %c0_i32_0 = arith.constant 0 : i32
    return %arg0, %c0_i32, %arg1 : i32, i32, i32
  }
}

module attributes {stable_mosaic.version = 11 : i64} {
  func.func @_branch_kernel(%arg0: i32, %arg1: i32, %arg2: memref<1x8x256xbf16, #tpu.memory_space<vmem>>, %arg3: memref<9x8xbf16, #tpu.memory_space<vmem>>, %arg4: memref<32x8xbf16, #tpu.memory_space<vmem>>, %arg5: memref<1x9x256xbf16, #tpu.memory_space<vmem>>, %arg6: memref<1x32x256xbf16, #tpu.memory_space<vmem>>) attributes {dimension_semantics = [#tpu.dimension_semantics<parallel>, #tpu.dimension_semantics<parallel>], iteration_bounds = array<i64: 2, 1>, scalar_prefetch = 0 : i64, scratch_operands = 0 : i64, tpu.core_type = #tpu.core_type<tc>, window_params = [{transform_indices = @transform_0, window_bounds = array<i64: 1, 8, 256>}, {pipeline_mode = #tpu.pipeline_mode<synchronous>, transform_indices = @transform_1, window_bounds = array<i64: 9, 8>}, {pipeline_mode = #tpu.pipeline_mode<synchronous>, transform_indices = @transform_2, window_bounds = array<i64: 32, 8>}, {transform_indices = @transform_3, window_bounds = array<i64: 1, 9, 256>}, {transform_indices = @transform_4, window_bounds = array<i64: 1, 32, 256>}]} {
    %c0 = arith.constant 0 : index
    %c0_0 = arith.constant 0 : index
    %c0_1 = arith.constant 0 : index
    %0 = vector.load %arg2[%c0, %c0_0, %c0_1] : memref<1x8x256xbf16, #tpu.memory_space<vmem>>, vector<1x8x256xbf16>
    %1 = vector.shape_cast %0 : vector<1x8x256xbf16> to vector<8x256xbf16>
    %c0_2 = arith.constant 0 : index
    %c0_3 = arith.constant 0 : index
    %2 = vector.load %arg3[%c0_2, %c0_3] : memref<9x8xbf16, #tpu.memory_space<vmem>>, vector<9x8xbf16>
    %cst = arith.constant dense<0.000000e+00> : vector<9x256xf32>
    %3 = tpu.matmul %2, %1, %cst {dimension_numbers = #tpu.dot_dimension_numbers<[1], [0], [0], [1], [0, 0, 1, 1], [], []>} : vector<9x8xbf16>, vector<8x256xbf16>, vector<9x256xf32> -> vector<9x256xf32>
    %4 = arith.truncf %3 : vector<9x256xf32> to vector<9x256xbf16>
    %c0_4 = arith.constant 0 : index
    %c0_5 = arith.constant 0 : index
    %c0_6 = arith.constant 0 : index
    %5 = vector.load %arg5[%c0_4, %c0_5, %c0_6] : memref<1x9x256xbf16, #tpu.memory_space<vmem>>, vector<1x9x256xbf16>
    %6 = vector.shape_cast %5 : vector<1x9x256xbf16> to vector<9x256xbf16>
    %7 = vector.shape_cast %4 : vector<9x256xbf16> to vector<1x9x256xbf16>
    tpu.vector_store %arg5[%c0_4, %c0_5, %c0_6], %7 {strides = array<i32>} : memref<1x9x256xbf16, #tpu.memory_space<vmem>>, vector<1x9x256xbf16>,
    %c0_7 = arith.constant 0 : index
    %c0_8 = arith.constant 0 : index
    %8 = vector.load %arg4[%c0_7, %c0_8] : memref<32x8xbf16, #tpu.memory_space<vmem>>, vector<32x8xbf16>
    %cst_9 = arith.constant dense<0.000000e+00> : vector<32x256xf32>
    %9 = tpu.matmul %8, %1, %cst_9 {dimension_numbers = #tpu.dot_dimension_numbers<[1], [0], [0], [1], [0, 0, 1, 1], [], []>} : vector<32x8xbf16>, vector<8x256xbf16>, vector<32x256xf32> -> vector<32x256xf32>
    %10 = arith.truncf %9 : vector<32x256xf32> to vector<32x256xbf16>
    %c0_10 = arith.constant 0 : index
    %c0_11 = arith.constant 0 : index
    %c0_12 = arith.constant 0 : index
    %11 = vector.load %arg6[%c0_10, %c0_11, %c0_12] : memref<1x32x256xbf16, #tpu.memory_space<vmem>>, vector<1x32x256xbf16>
    %12 = vector.shape_cast %11 : vector<1x32x256xbf16> to vector<32x256xbf16>
    %13 = vector.shape_cast %10 : vector<32x256xbf16> to vector<1x32x256xbf16>
    tpu.vector_store %arg6[%c0_10, %c0_11, %c0_12], %13 {strides = array<i32>} : memref<1x32x256xbf16, #tpu.memory_space<vmem>>, vector<1x32x256xbf16>,
    return
  }
  func.func @transform_0(%arg0: i32, %arg1: i32) -> (i32, i32, i32) {
    %c0_i32 = arith.constant 0 : i32
    %c0_i32_0 = arith.constant 0 : i32
    return %arg0, %c0_i32, %arg1 : i32, i32, i32
  }
  func.func @transform_1(%arg0: i32, %arg1: i32) -> (i32, i32) {
    %c0_i32 = arith.constant 0 : i32
    %c0_i32_0 = arith.constant 0 : i32
    %c0_i32_1 = arith.constant 0 : i32
    return %c0_i32, %c0_i32_0 : i32, i32
  }
  func.func @transform_2(%arg0: i32, %arg1: i32) -> (i32, i32) {
    %c0_i32 = arith.constant 0 : i32
    %c0_i32_0 = arith.constant 0 : i32
    %c0_i32_1 = arith.constant 0 : i32
    return %c0_i32, %c0_i32_0 : i32, i32
  }
  func.func @transform_3(%arg0: i32, %arg1: i32) -> (i32, i32, i32) {
    %c0_i32 = arith.constant 0 : i32
    %c0_i32_0 = arith.constant 0 : i32
    return %arg0, %c0_i32, %arg1 : i32, i32, i32
  }
  func.func @transform_4(%arg0: i32, %arg1: i32) -> (i32, i32, i32) {
    %c0_i32 = arith.constant 0 : i32
    %c0_i32_0 = arith.constant 0 : i32
    return %arg0, %c0_i32, %arg1 : i32, i32, i32
  }
}

module attributes {stable_mosaic.version = 11 : i64} {
  func.func @_combine_kernel(%arg0: i32, %arg1: i32, %arg2: memref<1x1x16x16xbf16, #tpu.memory_space<vmem>>, %arg3: memref<1x32x16x16xbf16, #tpu.memory_space<vmem>>, %arg4: memref<1x1x8x8xbf16, #tpu.memory_space<vmem>>, %arg5: memref<1x32x8x8xbf16, #tpu.memory_space<vmem>>, %arg6: memref<1x1x4x4xbf16, #tpu.memory_space<vmem>>, %arg7: memref<1x32x4x4xbf16, #tpu.memory_space<vmem>>, %arg8: memref<16x8xbf16, #tpu.memory_space<vmem>>, %arg9: memref<16x8xbf16, #tpu.memory_space<vmem>>, %arg10: memref<16x4xbf16, #tpu.memory_space<vmem>>, %arg11: memref<16x4xbf16, #tpu.memory_space<vmem>>, %arg12: memref<1x1x1xf32, #tpu.memory_space<vmem>>, %arg13: memref<32x1x1xf32, #tpu.memory_space<vmem>>, %arg14: memref<1x1x16x16xf32, #tpu.memory_space<vmem>>, %arg15: memref<1x32x16x16xf32, #tpu.memory_space<vmem>>) attributes {dimension_semantics = [#tpu.dimension_semantics<parallel>, #tpu.dimension_semantics<parallel>], iteration_bounds = array<i64: 2, 1>, scalar_prefetch = 0 : i64, scratch_operands = 0 : i64, tpu.core_type = #tpu.core_type<tc>, window_params = [{transform_indices = @transform_0, window_bounds = array<i64: 1, 1, 16, 16>}, {transform_indices = @transform_1, window_bounds = array<i64: 1, 32, 16, 16>}, {transform_indices = @transform_2, window_bounds = array<i64: 1, 1, 8, 8>}, {transform_indices = @transform_3, window_bounds = array<i64: 1, 32, 8, 8>}, {transform_indices = @transform_4, window_bounds = array<i64: 1, 1, 4, 4>}, {transform_indices = @transform_5, window_bounds = array<i64: 1, 32, 4, 4>}, {transform_indices = @transform_6, window_bounds = array<i64: 16, 8>}, {pipeline_mode = #tpu.pipeline_mode<synchronous>, transform_indices = @transform_7, window_bounds = array<i64: 16, 8>}, {transform_indices = @transform_8, window_bounds = array<i64: 16, 4>}, {pipeline_mode = #tpu.pipeline_mode<synchronous>, transform_indices = @transform_9, window_bounds = array<i64: 16, 4>}, {pipeline_mode = #tpu.pipeline_mode<synchronous>, transform_indices = @transform_10, window_bounds = array<i64: 1, 1, 1>}, {pipeline_mode = #tpu.pipeline_mode<synchronous>, transform_indices = @transform_11, window_bounds = array<i64: 32, 1, 1>}, {transform_indices = @transform_12, window_bounds = array<i64: 1, 1, 16, 16>}, {transform_indices = @transform_13, window_bounds = array<i64: 1, 32, 16, 16>}]} {
    %c0 = arith.constant 0 : index
    %c0_0 = arith.constant 0 : index
    %c0_1 = arith.constant 0 : index
    %c0_2 = arith.constant 0 : index
    %0 = vector.load %arg2[%c0, %c0_0, %c0_1, %c0_2] : memref<1x1x16x16xbf16, #tpu.memory_space<vmem>>, vector<1x1x16x16xbf16>
    %1 = vector.shape_cast %0 : vector<1x1x16x16xbf16> to vector<1x16x16xbf16>
    %2 = arith.extf %1 : vector<1x16x16xbf16> to vector<1x16x16xf32>
    %c0_3 = arith.constant 0 : index
    %c0_4 = arith.constant 0 : index
    %c0_5 = arith.constant 0 : index
    %c0_6 = arith.constant 0 : index
    %3 = vector.load %arg4[%c0_3, %c0_4, %c0_5, %c0_6] : memref<1x1x8x8xbf16, #tpu.memory_space<vmem>>, vector<1x1x8x8xbf16>
    %4 = vector.shape_cast %3 : vector<1x1x8x8xbf16> to vector<1x8x8xbf16>
    %c0_7 = arith.constant 0 : index
    %c0_8 = arith.constant 0 : index
    %5 = vector.load %arg8[%c0_7, %c0_8] : memref<16x8xbf16, #tpu.memory_space<vmem>>, vector<16x8xbf16>
    %6 = vector.shape_cast %5 : vector<16x8xbf16> to vector<1x16x8xbf16>
    "tpu.trace_start"() <{level = 10 : i32, message = "cyi,ciw->cyw"}> : () -> ()
    %cst = arith.constant dense<0.000000e+00> : vector<1x16x8xf32>
    %7 = tpu.matmul %6, %4, %cst {dimension_numbers = #tpu.dot_dimension_numbers<[2], [1], [1], [2], [0, 0, 0, 1, 1, 2], [0], [0]>} : vector<1x16x8xbf16>, vector<1x8x8xbf16>, vector<1x16x8xf32> -> vector<1x16x8xf32>
    "tpu.trace_stop"() : () -> ()
    %c0_9 = arith.constant 0 : index
    %c0_10 = arith.constant 0 : index
    %8 = vector.load %arg9[%c0_9, %c0_10] : memref<16x8xbf16, #tpu.memory_space<vmem>>, vector<16x8xbf16>
    %9 = vector.shape_cast %8 : vector<16x8xbf16> to vector<1x16x8xbf16>
    %10 = arith.truncf %7 : vector<1x16x8xf32> to vector<1x16x8xbf16>
    "tpu.trace_start"() <{level = 10 : i32, message = "cyw,cxw->cyx"}> : () -> ()
    %cst_11 = arith.constant dense<0.000000e+00> : vector<1x16x16xf32>
    %11 = tpu.matmul %10, %9, %cst_11 {dimension_numbers = #tpu.dot_dimension_numbers<[2], [2], [1], [1], [0, 0, 0, 1, 1, 1], [0], [0]>} : vector<1x16x8xbf16>, vector<1x16x8xbf16>, vector<1x16x16xf32> -> vector<1x16x16xf32>
    "tpu.trace_stop"() : () -> ()
    %12 = arith.addf %2, %11 : vector<1x16x16xf32>
    %c0_12 = arith.constant 0 : index
    %c0_13 = arith.constant 0 : index
    %c0_14 = arith.constant 0 : index
    %c0_15 = arith.constant 0 : index
    %13 = vector.load %arg6[%c0_12, %c0_13, %c0_14, %c0_15] : memref<1x1x4x4xbf16, #tpu.memory_space<vmem>>, vector<1x1x4x4xbf16>
    %14 = vector.shape_cast %13 : vector<1x1x4x4xbf16> to vector<1x4x4xbf16>
    %c0_16 = arith.constant 0 : index
    %c0_17 = arith.constant 0 : index
    %15 = vector.load %arg10[%c0_16, %c0_17] : memref<16x4xbf16, #tpu.memory_space<vmem>>, vector<16x4xbf16>
    %16 = vector.shape_cast %15 : vector<16x4xbf16> to vector<1x16x4xbf16>
    "tpu.trace_start"() <{level = 10 : i32, message = "cyi,ciw->cyw"}> : () -> ()
    %cst_18 = arith.constant dense<0.000000e+00> : vector<1x16x4xf32>
    %17 = tpu.matmul %16, %14, %cst_18 {dimension_numbers = #tpu.dot_dimension_numbers<[2], [1], [1], [2], [0, 0, 0, 1, 1, 2], [0], [0]>} : vector<1x16x4xbf16>, vector<1x4x4xbf16>, vector<1x16x4xf32> -> vector<1x16x4xf32>
    "tpu.trace_stop"() : () -> ()
    %c0_19 = arith.constant 0 : index
    %c0_20 = arith.constant 0 : index
    %18 = vector.load %arg11[%c0_19, %c0_20] : memref<16x4xbf16, #tpu.memory_space<vmem>>, vector<16x4xbf16>
    %19 = vector.shape_cast %18 : vector<16x4xbf16> to vector<1x16x4xbf16>
    %20 = arith.truncf %17 : vector<1x16x4xf32> to vector<1x16x4xbf16>
    "tpu.trace_start"() <{level = 10 : i32, message = "cyw,cxw->cyx"}> : () -> ()
    %cst_21 = arith.constant dense<0.000000e+00> : vector<1x16x16xf32>
    %21 = tpu.matmul %20, %19, %cst_21 {dimension_numbers = #tpu.dot_dimension_numbers<[2], [2], [1], [1], [0, 0, 0, 1, 1, 1], [0], [0]>} : vector<1x16x4xbf16>, vector<1x16x4xbf16>, vector<1x16x16xf32> -> vector<1x16x16xf32>
    "tpu.trace_stop"() : () -> ()
    %22 = arith.addf %12, %21 : vector<1x16x16xf32>
    %c0_22 = arith.constant 0 : index
    %c0_23 = arith.constant 0 : index
    %c0_24 = arith.constant 0 : index
    %23 = vector.load %arg12[%c0_22, %c0_23, %c0_24] : memref<1x1x1xf32, #tpu.memory_space<vmem>>, vector<1x1x1xf32>
    %24 = vector.broadcast %23 : vector<1x1x1xf32> to vector<1x16x16xf32>
    %25 = arith.addf %22, %24 : vector<1x16x16xf32>
    %c0_25 = arith.constant 0 : index
    %c0_26 = arith.constant 0 : index
    %c0_27 = arith.constant 0 : index
    %c0_28 = arith.constant 0 : index
    %26 = vector.load %arg3[%c0_25, %c0_26, %c0_27, %c0_28] : memref<1x32x16x16xbf16, #tpu.memory_space<vmem>>, vector<1x32x16x16xbf16>
    %27 = vector.shape_cast %26 : vector<1x32x16x16xbf16> to vector<32x16x16xbf16>
    %28 = arith.extf %27 : vector<32x16x16xbf16> to vector<32x16x16xf32>
    %c0_29 = arith.constant 0 : index
    %c0_30 = arith.constant 0 : index
    %c0_31 = arith.constant 0 : index
    %c0_32 = arith.constant 0 : index
    %29 = vector.load %arg5[%c0_29, %c0_30, %c0_31, %c0_32] : memref<1x32x8x8xbf16, #tpu.memory_space<vmem>>, vector<1x32x8x8xbf16>
    %30 = vector.shape_cast %29 : vector<1x32x8x8xbf16> to vector<32x8x8xbf16>
    %c0_33 = arith.constant 0 : index
    %c0_34 = arith.constant 0 : index
    %31 = vector.load %arg8[%c0_33, %c0_34] : memref<16x8xbf16, #tpu.memory_space<vmem>>, vector<16x8xbf16>
    %32 = vector.shape_cast %31 : vector<16x8xbf16> to vector<1x16x8xbf16>
    %33 = vector.shape_cast %32 : vector<1x16x8xbf16> to vector<1x16x8xbf16>
    %34 = vector.broadcast %33 : vector<1x16x8xbf16> to vector<32x16x8xbf16>
    "tpu.trace_start"() <{level = 10 : i32, message = "cyi,ciw->cyw"}> : () -> ()
    %cst_35 = arith.constant dense<0.000000e+00> : vector<32x16x8xf32>
    %35 = tpu.matmul %34, %30, %cst_35 {dimension_numbers = #tpu.dot_dimension_numbers<[2], [1], [1], [2], [0, 0, 0, 1, 1, 2], [0], [0]>} : vector<32x16x8xbf16>, vector<32x8x8xbf16>, vector<32x16x8xf32> -> vector<32x16x8xf32>
    "tpu.trace_stop"() : () -> ()
    %c0_36 = arith.constant 0 : index
    %c0_37 = arith.constant 0 : index
    %36 = vector.load %arg9[%c0_36, %c0_37] : memref<16x8xbf16, #tpu.memory_space<vmem>>, vector<16x8xbf16>
    %37 = vector.shape_cast %36 : vector<16x8xbf16> to vector<1x16x8xbf16>
    %38 = vector.shape_cast %37 : vector<1x16x8xbf16> to vector<1x16x8xbf16>
    %39 = vector.broadcast %38 : vector<1x16x8xbf16> to vector<32x16x8xbf16>
    %40 = arith.truncf %35 : vector<32x16x8xf32> to vector<32x16x8xbf16>
    "tpu.trace_start"() <{level = 10 : i32, message = "cyw,cxw->cyx"}> : () -> ()
    %cst_38 = arith.constant dense<0.000000e+00> : vector<32x16x16xf32>
    %41 = tpu.matmul %40, %39, %cst_38 {dimension_numbers = #tpu.dot_dimension_numbers<[2], [2], [1], [1], [0, 0, 0, 1, 1, 1], [0], [0]>} : vector<32x16x8xbf16>, vector<32x16x8xbf16>, vector<32x16x16xf32> -> vector<32x16x16xf32>
    "tpu.trace_stop"() : () -> ()
    %42 = arith.addf %28, %41 : vector<32x16x16xf32>
    %c0_39 = arith.constant 0 : index
    %c0_40 = arith.constant 0 : index
    %c0_41 = arith.constant 0 : index
    %c0_42 = arith.constant 0 : index
    %43 = vector.load %arg7[%c0_39, %c0_40, %c0_41, %c0_42] : memref<1x32x4x4xbf16, #tpu.memory_space<vmem>>, vector<1x32x4x4xbf16>
    %44 = vector.shape_cast %43 : vector<1x32x4x4xbf16> to vector<32x4x4xbf16>
    %c0_43 = arith.constant 0 : index
    %c0_44 = arith.constant 0 : index
    %45 = vector.load %arg10[%c0_43, %c0_44] : memref<16x4xbf16, #tpu.memory_space<vmem>>, vector<16x4xbf16>
    %46 = vector.shape_cast %45 : vector<16x4xbf16> to vector<1x16x4xbf16>
    %47 = vector.shape_cast %46 : vector<1x16x4xbf16> to vector<1x16x4xbf16>
    %48 = vector.broadcast %47 : vector<1x16x4xbf16> to vector<32x16x4xbf16>
    "tpu.trace_start"() <{level = 10 : i32, message = "cyi,ciw->cyw"}> : () -> ()
    %cst_45 = arith.constant dense<0.000000e+00> : vector<32x16x4xf32>
    %49 = tpu.matmul %48, %44, %cst_45 {dimension_numbers = #tpu.dot_dimension_numbers<[2], [1], [1], [2], [0, 0, 0, 1, 1, 2], [0], [0]>} : vector<32x16x4xbf16>, vector<32x4x4xbf16>, vector<32x16x4xf32> -> vector<32x16x4xf32>
    "tpu.trace_stop"() : () -> ()
    %c0_46 = arith.constant 0 : index
    %c0_47 = arith.constant 0 : index
    %50 = vector.load %arg11[%c0_46, %c0_47] : memref<16x4xbf16, #tpu.memory_space<vmem>>, vector<16x4xbf16>
    %51 = vector.shape_cast %50 : vector<16x4xbf16> to vector<1x16x4xbf16>
    %52 = vector.shape_cast %51 : vector<1x16x4xbf16> to vector<1x16x4xbf16>
    %53 = vector.broadcast %52 : vector<1x16x4xbf16> to vector<32x16x4xbf16>
    %54 = arith.truncf %49 : vector<32x16x4xf32> to vector<32x16x4xbf16>
    "tpu.trace_start"() <{level = 10 : i32, message = "cyw,cxw->cyx"}> : () -> ()
    %cst_48 = arith.constant dense<0.000000e+00> : vector<32x16x16xf32>
    %55 = tpu.matmul %54, %53, %cst_48 {dimension_numbers = #tpu.dot_dimension_numbers<[2], [2], [1], [1], [0, 0, 0, 1, 1, 1], [0], [0]>} : vector<32x16x4xbf16>, vector<32x16x4xbf16>, vector<32x16x16xf32> -> vector<32x16x16xf32>
    "tpu.trace_stop"() : () -> ()
    %56 = arith.addf %42, %55 : vector<32x16x16xf32>
    %c0_49 = arith.constant 0 : index
    %c0_50 = arith.constant 0 : index
    %c0_51 = arith.constant 0 : index
    %57 = vector.load %arg13[%c0_49, %c0_50, %c0_51] : memref<32x1x1xf32, #tpu.memory_space<vmem>>, vector<32x1x1xf32>
    %58 = vector.broadcast %57 : vector<32x1x1xf32> to vector<32x16x16xf32>
    %59 = arith.addf %56, %58 : vector<32x16x16xf32>
    %c0_52 = arith.constant 0 : index
    %c0_53 = arith.constant 0 : index
    %c0_54 = arith.constant 0 : index
    %c0_55 = arith.constant 0 : index
    %60 = vector.load %arg14[%c0_52, %c0_53, %c0_54, %c0_55] : memref<1x1x16x16xf32, #tpu.memory_space<vmem>>, vector<1x1x16x16xf32>
    %61 = vector.shape_cast %60 : vector<1x1x16x16xf32> to vector<1x16x16xf32>
    %62 = vector.shape_cast %25 : vector<1x16x16xf32> to vector<1x1x16x16xf32>
    tpu.vector_store %arg14[%c0_52, %c0_53, %c0_54, %c0_55], %62 {strides = array<i32>} : memref<1x1x16x16xf32, #tpu.memory_space<vmem>>, vector<1x1x16x16xf32>,
    %cst_56 = arith.constant 0.000000e+00 : f32
    %63 = vector.broadcast %cst_56 : f32 to vector<32x16x16xf32>
    %64 = arith.maximumf %59, %63 : vector<32x16x16xf32>
    %c0_57 = arith.constant 0 : index
    %c0_58 = arith.constant 0 : index
    %c0_59 = arith.constant 0 : index
    %c0_60 = arith.constant 0 : index
    %65 = vector.load %arg15[%c0_57, %c0_58, %c0_59, %c0_60] : memref<1x32x16x16xf32, #tpu.memory_space<vmem>>, vector<1x32x16x16xf32>
    %66 = vector.shape_cast %65 : vector<1x32x16x16xf32> to vector<32x16x16xf32>
    %67 = vector.shape_cast %64 : vector<32x16x16xf32> to vector<1x32x16x16xf32>
    tpu.vector_store %arg15[%c0_57, %c0_58, %c0_59, %c0_60], %67 {strides = array<i32>} : memref<1x32x16x16xf32, #tpu.memory_space<vmem>>, vector<1x32x16x16xf32>,
    return
  }
  func.func @transform_0(%arg0: i32, %arg1: i32) -> (i32, i32, i32, i32) {
    %c0_i32 = arith.constant 0 : i32
    %c0_i32_0 = arith.constant 0 : i32
    %c0_i32_1 = arith.constant 0 : i32
    return %arg0, %c0_i32, %arg1, %c0_i32_0 : i32, i32, i32, i32
  }
  func.func @transform_1(%arg0: i32, %arg1: i32) -> (i32, i32, i32, i32) {
    %c0_i32 = arith.constant 0 : i32
    %c0_i32_0 = arith.constant 0 : i32
    %c0_i32_1 = arith.constant 0 : i32
    return %arg0, %c0_i32, %arg1, %c0_i32_0 : i32, i32, i32, i32
  }
  func.func @transform_2(%arg0: i32, %arg1: i32) -> (i32, i32, i32, i32) {
    %c0_i32 = arith.constant 0 : i32
    %c0_i32_0 = arith.constant 0 : i32
    %c0_i32_1 = arith.constant 0 : i32
    %c0_i32_2 = arith.constant 0 : i32
    return %arg0, %c0_i32, %c0_i32_0, %c0_i32_1 : i32, i32, i32, i32
  }
  func.func @transform_3(%arg0: i32, %arg1: i32) -> (i32, i32, i32, i32) {
    %c0_i32 = arith.constant 0 : i32
    %c0_i32_0 = arith.constant 0 : i32
    %c0_i32_1 = arith.constant 0 : i32
    %c0_i32_2 = arith.constant 0 : i32
    return %arg0, %c0_i32, %c0_i32_0, %c0_i32_1 : i32, i32, i32, i32
  }
  func.func @transform_4(%arg0: i32, %arg1: i32) -> (i32, i32, i32, i32) {
    %c0_i32 = arith.constant 0 : i32
    %c0_i32_0 = arith.constant 0 : i32
    %c0_i32_1 = arith.constant 0 : i32
    %c0_i32_2 = arith.constant 0 : i32
    return %arg0, %c0_i32, %c0_i32_0, %c0_i32_1 : i32, i32, i32, i32
  }
  func.func @transform_5(%arg0: i32, %arg1: i32) -> (i32, i32, i32, i32) {
    %c0_i32 = arith.constant 0 : i32
    %c0_i32_0 = arith.constant 0 : i32
    %c0_i32_1 = arith.constant 0 : i32
    %c0_i32_2 = arith.constant 0 : i32
    return %arg0, %c0_i32, %c0_i32_0, %c0_i32_1 : i32, i32, i32, i32
  }
  func.func @transform_6(%arg0: i32, %arg1: i32) -> (i32, i32) {
    %c0_i32 = arith.constant 0 : i32
    %c0_i32_0 = arith.constant 0 : i32
    return %arg1, %c0_i32 : i32, i32
  }
  func.func @transform_7(%arg0: i32, %arg1: i32) -> (i32, i32) {
    %c0_i32 = arith.constant 0 : i32
    %c0_i32_0 = arith.constant 0 : i32
    %c0_i32_1 = arith.constant 0 : i32
    return %c0_i32, %c0_i32_0 : i32, i32
  }
  func.func @transform_8(%arg0: i32, %arg1: i32) -> (i32, i32) {
    %c0_i32 = arith.constant 0 : i32
    %c0_i32_0 = arith.constant 0 : i32
    return %arg1, %c0_i32 : i32, i32
  }
  func.func @transform_9(%arg0: i32, %arg1: i32) -> (i32, i32) {
    %c0_i32 = arith.constant 0 : i32
    %c0_i32_0 = arith.constant 0 : i32
    %c0_i32_1 = arith.constant 0 : i32
    return %c0_i32, %c0_i32_0 : i32, i32
  }
  func.func @transform_10(%arg0: i32, %arg1: i32) -> (i32, i32, i32) {
    %c0_i32 = arith.constant 0 : i32
    %c0_i32_0 = arith.constant 0 : i32
    %c0_i32_1 = arith.constant 0 : i32
    %c0_i32_2 = arith.constant 0 : i32
    return %c0_i32, %c0_i32_0, %c0_i32_1 : i32, i32, i32
  }
  func.func @transform_11(%arg0: i32, %arg1: i32) -> (i32, i32, i32) {
    %c0_i32 = arith.constant 0 : i32
    %c0_i32_0 = arith.constant 0 : i32
    %c0_i32_1 = arith.constant 0 : i32
    %c0_i32_2 = arith.constant 0 : i32
    return %c0_i32, %c0_i32_0, %c0_i32_1 : i32, i32, i32
  }
  func.func @transform_12(%arg0: i32, %arg1: i32) -> (i32, i32, i32, i32) {
    %c0_i32 = arith.constant 0 : i32
    %c0_i32_0 = arith.constant 0 : i32
    %c0_i32_1 = arith.constant 0 : i32
    return %arg0, %c0_i32, %arg1, %c0_i32_0 : i32, i32, i32, i32
  }
  func.func @transform_13(%arg0: i32, %arg1: i32) -> (i32, i32, i32, i32) {
    %c0_i32 = arith.constant 0 : i32
    %c0_i32_0 = arith.constant 0 : i32
    %c0_i32_1 = arith.constant 0 : i32
    return %arg0, %c0_i32, %arg1, %c0_i32_0 : i32, i32, i32, i32
  }
}

</mosaic_0001>

<llo_original>
// kernel: edge_module_forward.6
$region0: #{edge_module_forward.6}
  #allocation0 [shape = 'u32[]', space=smem, size = 0x4, offset = 0x4, fixed_abs, tag = 'smem constant byte address 0x4 - core index']
  #allocation1 [shape = 'u32[144,128]{1,0:T(1,128)}', space=vmem, size = 0x12000, scoped, tag = 'internal scratch']
  %s0 = inlined_call_operand.vmem [shape: bf16[2,32,16], index: 0, kind: input, shape index: {}]
  %s1 = inlined_call_operand.vmem [shape: bf16[9,32], index: 1, kind: input, shape index: {}]
  %s2 = inlined_call_operand.vmem [shape: bf16[32,32], index: 2, kind: input, shape index: {}]
  %s3 = inlined_call_operand.vmem [shape: bf16[2,9,16], index: 3, kind: output, shape index: {0}]
  %s4 = inlined_call_operand.vmem [shape: bf16[2,32,16], index: 4, kind: output, shape index: {1}]
  %5 = xla_tuple %s3, %s4
  %s6 = sld [smem:[#allocation0]]
  $region53: #{edge_module_forward.6} parent=0
    _
  %s8 = ssub.s32 1, %s6
  %s9 = scalar_select 0, %s8, %s6
  loop: start=0, step=1, limit=4
  $region2: #{edge_module_forward.6} parent=0 // loop_pre_header
    _
  $region3: #{edge_module_forward.6} parent=0 // loop_header
    %s11 = sphi 0, %s15
    %p12 = scmp.ge.s32.totalorder %s11, 4
    %s18 = sphi 0, %s30
    %s19 = sphi 0, %s26
    %s20 = sphi 0, %s18
    %s21 = sphi 0, %s19
    %s22 = sphi 0, %s20
    %s23 = sphi 0, %s21
    %s35 = sphi 0, %s37
    %s38 = sphi 0, %s35
    %s39 = sphi 0, %s38
    %s55 = sphi 0, %s39
    %s59 = sphi 0, %s59
    %s61 = sphi 0, %s59
    %s62 = sphi 0, %s61
    %s76 = sphi 0, %s62
    %s80 = sphi 0, %s80
    %s82 = sphi 0, %s80
    %s83 = sphi 0, %s82
    %s97 = sphi 0, %s83
    %s105 = sphi 0, %s107
    %s108 = sphi 0, %s105
    %s109 = sphi 0, %s108
    %s125 = sphi 0, %s109
    %s133 = sphi 0, %s135
    %s136 = sphi 0, %s133
    %s137 = sphi 0, %s136
    %s153 = sphi 0, %s137
  $region4: #{edge_module_forward.6} parent=0 // loop_header_branch
    %14 = sbr.rel (%p12) target = $region8
  $region5: #{edge_module_forward.6} parent=0 // loop_body
    %s16 = ssub.s32 %s11, 1
    %s17 = ssub.s32 %s11, 2
    %s24 = sadd.s32 1, %s19
    %p25 = scmp.ge.s32.totalorder %s24, 1
    %s26 = scalar_select %p25, 0, %s24
    %s27 = sadd.s32 1, %s18
    %s28 = scalar_select %p25, %s27, %s18
    %p29 = scmp.ge.s32.totalorder %s28, 2
    %s30 = scalar_select %p29, 0, %s28
    %s31 = ssub.s32 %s18, %s30
    %s32 = ssub.s32 %s19, %s26
    %s33 = sor.u32 %s31, %s32
    %p34 = scmp.eq.s32.totalorder %s33, 0
    %s36 = sadd.s32 %s35, 1
    %s37 = scalar_select %p34, %s35, %s36
    %p40 = pneg %p34
    %p41 = scmp.eq.s32.totalorder %s11, 1
    %p42 = por %p40, %p41
    %p43 = scmp.ne.s32.totalorder %s35, %s38
    %p44 = scmp.eq.s32.totalorder %s11, 0
    %p45 = por %p43, %p44
    %p46 = scmp.ne.s32.totalorder %s35, %s38
    %p47 = scmp.eq.s32.totalorder %s16, 1
    %p48 = por %p46, %p47
    %p49 = scmp.ne.s32.totalorder %s38, %s39
    %p50 = scmp.eq.s32.totalorder %s16, 0
    %p51 = por %p49, %p50
    %p52 = scmp.ne.s32.totalorder %s38, %s39
    %p53 = scmp.eq.s32.totalorder %s17, 1
    %p54 = por %p52, %p53
    %p56 = scmp.ne.s32.totalorder %s39, %s55
    %p57 = scmp.eq.s32.totalorder %s17, 0
    %p58 = por %p56, %p57
    %s60 = sadd.s32 %s59, 1
    %p63 = scmp.eq.s32.totalorder %s11, 1
    %p64 = scmp.ne.s32.totalorder %s59, %s61
    %p65 = scmp.eq.s32.totalorder %s11, 0
    %p66 = por %p64, %p65
    %p67 = scmp.ne.s32.totalorder %s59, %s61
    %p68 = scmp.eq.s32.totalorder %s16, 1
    %p69 = por %p67, %p68
    %p70 = scmp.ne.s32.totalorder %s61, %s62
    %p71 = scmp.eq.s32.totalorder %s16, 0
    %p72 = por %p70, %p71
    %p73 = scmp.ne.s32.totalorder %s61, %s62
    %p74 = scmp.eq.s32.totalorder %s17, 1
    %p75 = por %p73, %p74
    %p77 = scmp.ne.s32.totalorder %s62, %s76
    %p78 = scmp.eq.s32.totalorder %s17, 0
    %p79 = por %p77, %p78
    %s81 = sadd.s32 %s80, 1
    %p84 = scmp.eq.s32.totalorder %s11, 1
    %p85 = scmp.ne.s32.totalorder %s80, %s82
    %p86 = scmp.eq.s32.totalorder %s11, 0
    %p87 = por %p85, %p86
    %p88 = scmp.ne.s32.totalorder %s80, %s82
    %p89 = scmp.eq.s32.totalorder %s16, 1
    %p90 = por %p88, %p89
    %p91 = scmp.ne.s32.totalorder %s82, %s83
    %p92 = scmp.eq.s32.totalorder %s16, 0
    %p93 = por %p91, %p92
    %p94 = scmp.ne.s32.totalorder %s82, %s83
    %p95 = scmp.eq.s32.totalorder %s17, 1
    %p96 = por %p94, %p95
    %p98 = scmp.ne.s32.totalorder %s83, %s97
    %p99 = scmp.eq.s32.totalorder %s17, 0
    %p100 = por %p98, %p99
    %s101 = ssub.s32 %s18, %s30
    %s102 = ssub.s32 %s19, %s26
    %s103 = sor.u32 %s101, %s102
    %p104 = scmp.eq.s32.totalorder %s103, 0
    %s106 = sadd.s32 %s105, 1
    %s107 = scalar_select %p104, %s105, %s106
    %p110 = pneg %p104
    %p111 = scmp.eq.s32.totalorder %s11, 1
    %p112 = por %p110, %p111
    %p113 = scmp.ne.s32.totalorder %s105, %s108
    %p114 = scmp.eq.s32.totalorder %s11, 0
    %p115 = por %p113, %p114
    %p116 = scmp.ne.s32.totalorder %s105, %s108
    %p117 = scmp.eq.s32.totalorder %s16, 1
    %p118 = por %p116, %p117
    %p119 = scmp.ne.s32.totalorder %s108, %s109
    %p120 = scmp.eq.s32.totalorder %s16, 0
    %p121 = por %p119, %p120
    %p122 = scmp.ne.s32.totalorder %s108, %s109
    %p123 = scmp.eq.s32.totalorder %s17, 1
    %p124 = por %p122, %p123
    %p126 = scmp.ne.s32.totalorder %s109, %s125
    %p127 = scmp.eq.s32.totalorder %s17, 0
    %p128 = por %p126, %p127
    %s129 = ssub.s32 %s18, %s30
    %s130 = ssub.s32 %s19, %s26
    %s131 = sor.u32 %s129, %s130
    %p132 = scmp.eq.s32.totalorder %s131, 0
    %s134 = sadd.s32 %s133, 1
    %s135 = scalar_select %p132, %s133, %s134
    %p138 = pneg %p132
    %p139 = scmp.eq.s32.totalorder %s11, 1
    %p140 = por %p138, %p139
    %p141 = scmp.ne.s32.totalorder %s133, %s136
    %p142 = scmp.eq.s32.totalorder %s11, 0
    %p143 = por %p141, %p142
    %p144 = scmp.ne.s32.totalorder %s133, %s136
    %p145 = scmp.eq.s32.totalorder %s16, 1
    %p146 = por %p144, %p145
    %p147 = scmp.ne.s32.totalorder %s136, %s137
    %p148 = scmp.eq.s32.totalorder %s16, 0
    %p149 = por %p147, %p148
    %p150 = scmp.ne.s32.totalorder %s136, %s137
    %p151 = scmp.eq.s32.totalorder %s17, 1
    %p152 = por %p150, %p151
    %p154 = scmp.ne.s32.totalorder %s137, %s153
    %p155 = scmp.eq.s32.totalorder %s17, 0
    %p156 = por %p154, %p155
    %p157 = scmp.le.s32.totalorder 1, %s11
    %p158 = scmp.lt.s32.totalorder %s11, 3
    %p159 = pnand %p157, %p158
    %p160 = pneg %p159
    // Predicated region
    $region9: #{edge_module_forward.6} parent=5 // pred_check
      _
    $region10: #{edge_module_forward.6} parent=5 // pred_check_branch
      %162 = sbr.rel (%p159) target = $region12
    $region11: #{edge_module_forward.6} parent=5 // pred_region
      %s163 = ssub.s32 %s11, 1
      // Predicated region
      $region13: #{edge_module_forward.6} parent=11 // pred_check
        %p164 = pneg %p72
      $region14: #{edge_module_forward.6} parent=11 // pred_check_branch
        %166 = sbr.rel (%p164) target = $region16
      $region15: #{edge_module_forward.6} parent=11 // pred_region
        _
      $region16: #{edge_module_forward.6} parent=11 // pred_fallthru
        _
      // Predicated region
      $region17: #{edge_module_forward.6} parent=11 // pred_check
        %p167 = pneg %p93
      $region18: #{edge_module_forward.6} parent=11 // pred_check_branch
        %169 = sbr.rel (%p167) target = $region20
      $region19: #{edge_module_forward.6} parent=11 // pred_region
        _
      $region20: #{edge_module_forward.6} parent=11 // pred_fallthru
        _
    $region12: #{edge_module_forward.6} parent=5 // pred_fallthru
      _
    %p170 = scmp.lt.s32.totalorder %s11, 2
    // Predicated region
    $region21: #{edge_module_forward.6} parent=5 // pred_check
      %p171 = pneg %p170
    $region22: #{edge_module_forward.6} parent=5 // pred_check_branch
      %173 = sbr.rel (%p171) target = $region24
    $region23: #{edge_module_forward.6} parent=5 // pred_region
      // Predicated region
      $region25: #{edge_module_forward.6} parent=23 // pred_check
        %p174 = pneg %p45
      $region26: #{edge_module_forward.6} parent=23 // pred_check_branch
        %176 = sbr.rel (%p174) target = $region28
      $region27: #{edge_module_forward.6} parent=23 // pred_region
        %p177 = scmp.lt.s32.totalorder %s18, 1
        %s178 = scalar_select %p177, %s18, 1
        %p179 = scmp.lt.s32.totalorder %s19, 0
        %s180 = scalar_select %p179, %s19, 0
        %s181 = smul.addr %s178, 4
        %s182 = sadd.s32 %s180, %s181
        %s183 = smul.addr %s182, 4
        %s184 = scalar_lea.vmem %s0, %s183
      $region28: #{edge_module_forward.6} parent=23 // pred_fallthru
        _
    $region24: #{edge_module_forward.6} parent=5 // pred_fallthru
      _
    %p185 = scmp.le.s32.totalorder 1, %s11
    %p186 = scmp.lt.s32.totalorder %s11, 3
    %p187 = pnand %p185, %p186
    %p188 = pneg %p187
    // Predicated region
    $region29: #{edge_module_forward.6} parent=5 // pred_check
      _
    $region30: #{edge_module_forward.6} parent=5 // pred_check_branch
      %190 = sbr.rel (%p187) target = $region32
    $region31: #{edge_module_forward.6} parent=5 // pred_region
      %s191 = ssub.s32 %s11, 1
      %p192 = scmp.lt.s32.totalorder %s20, 1
      %s193 = scalar_select %p192, %s20, 1
      %p194 = scmp.lt.s32.totalorder %s21, 0
      %s195 = scalar_select %p194, %s21, 0
      %s196 = smul.addr %s193, 4
      %s197 = sadd.s32 %s195, %s196
      %s198 = smul.addr %s197, 4
      %s199 = scalar_lea.vmem %s0, %s198
      %p200 = pneg %p51
      %p201 = pneg %p48
      %p202 = pneg %p72
      %p203 = pneg %p69
      %p204 = pneg %p93
      %p205 = pneg %p90
      %p206 = pneg %p121
      %p207 = pneg %p118
      %p208 = scmp.lt.s32.totalorder %s20, 1
      %s209 = scalar_select %p208, %s20, 1
      %p210 = scmp.lt.s32.totalorder %s21, 0
      %s211 = scalar_select %p210, %s21, 0
      %s212 = smul.addr %s209, 2
      %s213 = sadd.s32 %s211, %s212
      %s214 = smul.addr %s213, 4
      %s215 = scalar_lea.vmem %s3, %s214
      %p216 = pneg %p149
      %p217 = pneg %p146
      %p218 = scmp.lt.s32.totalorder %s20, 1
      %s219 = scalar_select %p218, %s20, 1
      %p220 = scmp.lt.s32.totalorder %s21, 0
      %s221 = scalar_select %p220, %s21, 0
      %s222 = smul.addr %s219, 4
      %s223 = sadd.s32 %s221, %s222
      %s224 = smul.addr %s223, 4
      %s225 = scalar_lea.vmem %s4, %s224
      %p226 = scmp.lt.s32.totalorder %s20, 1
      %s227 = scalar_select %p226, %s20, 1
      %p228 = scmp.lt.s32.totalorder %s21, 0
      %s229 = scalar_select %p228, %s21, 0
      %s230 = smul.addr %s227, 4
      %s231 = sadd.s32 %s229, %s230
      %s232 = smul.addr %s231, 4
      %s233 = scalar_lea.vmem %s0, %s232
      %p234 = scmp.lt.s32.totalorder %s20, 1
      %s235 = scalar_select %p234, %s20, 1
      %p236 = scmp.lt.s32.totalorder %s21, 0
      %s237 = scalar_select %p236, %s21, 0
      %s238 = smul.addr %s235, 2
      %s239 = sadd.s32 %s237, %s238
      %s240 = smul.addr %s239, 4
      %s241 = scalar_lea.vmem %s3, %s240
      %p242 = scmp.lt.s32.totalorder %s20, 1
      %s243 = scalar_select %p242, %s20, 1
      %p244 = scmp.lt.s32.totalorder %s21, 0
      %s245 = scalar_select %p244, %s21, 0
      %s246 = smul.addr %s243, 4
      %s247 = sadd.s32 %s245, %s246
      %s248 = smul.addr %s247, 4
      %s249 = scalar_lea.vmem %s4, %s248
      %v251 = vld [vmem:[%s233] sm:$0xf]
      %v252 = vld [vmem:[%s233 + $0x4] sm:$0xf]
      %v253 = vld [vmem:[%s233 + $0x8] sm:$0xf]
      %v254 = vld [vmem:[%s233 + $0xc] sm:$0xf]
      %v255 = vld [vmem:[%s1] sm:$0xf]
      %v256 = vld [vmem:[%s1 + $0x4] sm:$0x1]
      %v259 = vunpack.c.l.b16 %v255
      %v260 = vunpack.c.l.b16 %v256
      %v261 = vpack.c.b16 %v260, %v259
      %v266 = vunpack.c.l.b16 %v251
      %v267 = vunpack.c.l.b16 %v252
      %v268 = vunpack.c.l.b16 %v253
      %v269 = vunpack.c.l.b16 %v254
      %v270 = vpack.c.b16 %v267, %v266
      %v271 = vpack.c.b16 %v269, %v268
      %vm274 = vcmask 261120
      %v276 = vsel %vm274, %v261, 0
      %278 = vmatprep.subr.bf16.mxu0 0
      %279 = vmatpush1.bf16.msra.mxu0 %v270
      %280 = vmatprep.subr.bf16.mxu0 0
      %281 = vmatpush1.bf16.msra.mxu0 %v271
      %282 = vmatprep.subr.bf16.mxu0 0
      %283 = vmatpush1.bf16.msra.mxu0 0
      %284 = vmatprep.subr.bf16.mxu0 0
      %285 = vmatpush1.bf16.msra.mxu0 0
      %286 = vmatprep.subr.bf16.mxu0 0
      %287 = vmatpush1.bf16.msra.mxu0 0
      %288 = vmatprep.subr.bf16.mxu0 0
      %289 = vmatpush1.bf16.msra.mxu0 0
      %290 = vmatprep.subr.bf16.mxu0 0
      %291 = vmatpush1.bf16.msra.mxu0 0
      %292 = vmatprep.subr.bf16.mxu0 0
      %293 = vmatpush1.bf16.msra.mxu0 0
      %294 = vmatprep.subr.bf16.mxu0 0
      %295 = vmatpush1.bf16.msra.mxu0 0
      %296 = vmatprep.subr.bf16.mxu0 0
      %297 = vmatpush1.bf16.msra.mxu0 0
      %298 = vmatprep.subr.bf16.mxu0 0
      %299 = vmatpush1.bf16.msra.mxu0 0
      %300 = vmatprep.subr.bf16.mxu0 0
      %301 = vmatpush1.bf16.msra.mxu0 0
      %302 = vmatprep.subr.bf16.mxu0 0
      %303 = vmatpush1.bf16.msra.mxu0 0
      %304 = vmatprep.subr.bf16.mxu0 0
      %305 = vmatpush1.bf16.msra.mxu0 0
      %306 = vmatprep.subr.bf16.mxu0 0
      %307 = vmatpush1.bf16.msra.mxu0 0
      %308 = vmatprep.subr.bf16.mxu0 0
      %309 = vmatpush1.bf16.msra.mxu0 0
      %310 = vmatprep.mubr.bf16.mxu0 0
      %311 = vmatmul.mubr.bf16.gmra.mrb[0].mxu0 %v276
      %v312 = vpop.f32.mrb[0].mxu0
      %v313 = vadd.f32 0.0, %v312
      %v314 = vpop.f32.mrb[0].mxu0
      %v315 = vpop.f32.mrb[0].mxu0
      %v316 = vadd.f32 0.0, %v315
      %v317 = vpop.f32.mrb[0].mxu0
      %318 = vdwg.mxu0
      %v319 = vpack.c.bf16 %v316, %v313
      %v321 = vunpack.c.l.b16 %v319
      %v322 = vunpack.c.h.b16 %v319
      %v323 = vpack.c.b16 %v321, %v321
      %v324 = vpack.c.b16 %v322, %v322
      %vm327 = vcmask 125952
      %328 = vst.msk [vmem:[%s241] sm:$0xf] %vm327, %v323
      %vm329 = vcmask 122880
      %vm330 = vsmask.f32 256
      %vm331 = vmand %vm329, %vm330
      %v332 = vld [vmem:[%s241 + $0x4] sm:$0x1]
      %v333 = vsel %vm331, %v324, %v332
      %334 = vst [vmem:[%s241 + $0x4] sm:$0x1] %v333
      %v335 = vld [vmem:[%s2] sm:$0xf]
      %v336 = vld [vmem:[%s2 + $0x4] sm:$0xf]
      %v337 = vld [vmem:[%s2 + $0x8] sm:$0xf]
      %v338 = vld [vmem:[%s2 + $0xc] sm:$0xf]
      %v343 = vunpack.c.l.b16 %v335
      %v344 = vunpack.c.l.b16 %v336
      %v345 = vunpack.c.l.b16 %v337
      %v346 = vunpack.c.l.b16 %v338
      %v347 = vpack.c.b16 %v344, %v343
      %v348 = vpack.c.b16 %v346, %v345
      %v350 = vsel %vm274, %v347, 0
      %v353 = vsel %vm274, %v348, 0
      %355 = vmatprep.subr.bf16.mxu0 0
      %356 = vmatpush1.bf16.msra.mxu0 %v270
      %357 = vmatprep.subr.bf16.mxu0 0
      %358 = vmatpush1.bf16.msra.mxu0 %v271
      %359 = vmatprep.subr.bf16.mxu0 0
      %360 = vmatpush1.bf16.msra.mxu0 0
      %361 = vmatprep.subr.bf16.mxu0 0
      %362 = vmatpush1.bf16.msra.mxu0 0
      %363 = vmatprep.subr.bf16.mxu0 0
      %364 = vmatpush1.bf16.msra.mxu0 0
      %365 = vmatprep.subr.bf16.mxu0 0
      %366 = vmatpush1.bf16.msra.mxu0 0
      %367 = vmatprep.subr.bf16.mxu0 0
      %368 = vmatpush1.bf16.msra.mxu0 0
      %369 = vmatprep.subr.bf16.mxu0 0
      %370 = vmatpush1.bf16.msra.mxu0 0
      %371 = vmatprep.subr.bf16.mxu0 0
      %372 = vmatpush1.bf16.msra.mxu0 0
      %373 = vmatprep.subr.bf16.mxu0 0
      %374 = vmatpush1.bf16.msra.mxu0 0
      %375 = vmatprep.subr.bf16.mxu0 0
      %376 = vmatpush1.bf16.msra.mxu0 0
      %377 = vmatprep.subr.bf16.mxu0 0
      %378 = vmatpush1.bf16.msra.mxu0 0
      %379 = vmatprep.subr.bf16.mxu0 0
      %380 = vmatpush1.bf16.msra.mxu0 0
      %381 = vmatprep.subr.bf16.mxu0 0
      %382 = vmatpush1.bf16.msra.mxu0 0
      %383 = vmatprep.subr.bf16.mxu0 0
      %384 = vmatpush1.bf16.msra.mxu0 0
      %385 = vmatprep.subr.bf16.mxu0 0
      %386 = vmatpush1.bf16.msra.mxu0 0
      %387 = vmatprep.mubr.bf16.mxu0 0
      %388 = vmatmul.mubr.bf16.gmra.mrb[0].mxu0 %v350
      %v389 = vpop.f32.mrb[0].mxu0
      %v390 = vadd.f32 0.0, %v389
      %v391 = vpop.f32.mrb[0].mxu0
      %v392 = vpop.f32.mrb[0].mxu0
      %v393 = vadd.f32 0.0, %v392
      %v394 = vpop.f32.mrb[0].mxu0
      %395 = vmatprep.mubr.bf16.mxu0 0
      %396 = vmatmul.mubr.bf16.gmra.mrb[0].mxu0 %v353
      %v397 = vpop.f32.mrb[0].mxu0
      %v398 = vadd.f32 0.0, %v397
      %v399 = vpop.f32.mrb[0].mxu0
      %v400 = vpop.f32.mrb[0].mxu0
      %v401 = vadd.f32 0.0, %v400
      %v402 = vpop.f32.mrb[0].mxu0
      %403 = vdwg.mxu0
      %v404 = vpack.c.bf16 %v393, %v390
      %v405 = vpack.c.bf16 %v401, %v398
      %v408 = vunpack.c.l.b16 %v404
      %v409 = vunpack.c.h.b16 %v404
      %v410 = vunpack.c.l.b16 %v405
      %v411 = vunpack.c.h.b16 %v405
      %v412 = vpack.c.b16 %v408, %v408
      %v413 = vpack.c.b16 %v409, %v409
      %v414 = vpack.c.b16 %v410, %v410
      %v415 = vpack.c.b16 %v411, %v411
      %420 = vst.msk [vmem:[%s249] sm:$0xf] %vm327, %v412
      %421 = vst.msk [vmem:[%s249 + $0x4] sm:$0xf] %vm327, %v413
      %422 = vst.msk [vmem:[%s249 + $0x8] sm:$0xf] %vm327, %v414
      %423 = vst.msk [vmem:[%s249 + $0xc] sm:$0xf] %vm327, %v415
      %p424 = scmp.lt.s32.totalorder %s20, 1
      %s425 = scalar_select %p424, %s20, 1
      %p426 = scmp.lt.s32.totalorder %s21, 0
      %s427 = scalar_select %p426, %s21, 0
      %s428 = smul.addr %s425, 2
      %s429 = sadd.s32 %s427, %s428
      %s430 = smul.addr %s429, 4
      %s431 = scalar_lea.vmem %s3, %s430
      %p432 = scmp.lt.s32.totalorder %s20, 1
      %s433 = scalar_select %p432, %s20, 1
      %p434 = scmp.lt.s32.totalorder %s21, 0
      %s435 = scalar_select %p434, %s21, 0
      %s436 = smul.addr %s433, 4
      %s437 = sadd.s32 %s435, %s436
      %s438 = smul.addr %s437, 4
      %s439 = scalar_lea.vmem %s4, %s438
      // Predicated region
      $region33: #{edge_module_forward.6} parent=31 // pred_check
        %p440 = pneg %p118
      $region34: #{edge_module_forward.6} parent=31 // pred_check_branch
        %442 = sbr.rel (%p440) target = $region36
      $region35: #{edge_module_forward.6} parent=31 // pred_region
        _
      $region36: #{edge_module_forward.6} parent=31 // pred_fallthru
        _
      // Predicated region
      $region37: #{edge_module_forward.6} parent=31 // pred_check
        %p443 = pneg %p146
      $region38: #{edge_module_forward.6} parent=31 // pred_check_branch
        %445 = sbr.rel (%p443) target = $region40
      $region39: #{edge_module_forward.6} parent=31 // pred_region
        _
      $region40: #{edge_module_forward.6} parent=31 // pred_fallthru
        _
    $region32: #{edge_module_forward.6} parent=5 // pred_fallthru
      _
    %p446 = scmp.le.s32.totalorder 2, %s11
    // Predicated region
    $region41: #{edge_module_forward.6} parent=5 // pred_check
      %p447 = pneg %p446
    $region42: #{edge_module_forward.6} parent=5 // pred_check_branch
      %449 = sbr.rel (%p447) target = $region44
    $region43: #{edge_module_forward.6} parent=5 // pred_region
      %s450 = ssub.s32 %s11, 2
      // Predicated region
      $region45: #{edge_module_forward.6} parent=43 // pred_check
        %p451 = pneg %p124
      $region46: #{edge_module_forward.6} parent=43 // pred_check_branch
        %453 = sbr.rel (%p451) target = $region48
      $region47: #{edge_module_forward.6} parent=43 // pred_region
        %p454 = scmp.lt.s32.totalorder %s22, 1
        %s455 = scalar_select %p454, %s22, 1
        %p456 = scmp.lt.s32.totalorder %s23, 0
        %s457 = scalar_select %p456, %s23, 0
        %s458 = smul.addr %s455, 2
        %s459 = sadd.s32 %s457, %s458
        %s460 = smul.addr %s459, 4
        %s461 = scalar_lea.vmem %s3, %s460
      $region48: #{edge_module_forward.6} parent=43 // pred_fallthru
        _
      // Predicated region
      $region49: #{edge_module_forward.6} parent=43 // pred_check
        %p462 = pneg %p152
      $region50: #{edge_module_forward.6} parent=43 // pred_check_branch
        %464 = sbr.rel (%p462) target = $region52
      $region51: #{edge_module_forward.6} parent=43 // pred_region
        %p465 = scmp.lt.s32.totalorder %s22, 1
        %s466 = scalar_select %p465, %s22, 1
        %p467 = scmp.lt.s32.totalorder %s23, 0
        %s468 = scalar_select %p467, %s23, 0
        %s469 = smul.addr %s466, 4
        %s470 = sadd.s32 %s468, %s469
        %s471 = smul.addr %s470, 4
        %s472 = scalar_lea.vmem %s4, %s471
      $region52: #{edge_module_forward.6} parent=43 // pred_fallthru
        _
    $region44: #{edge_module_forward.6} parent=5 // pred_fallthru
      _
  $region6: #{edge_module_forward.6} parent=0 // loop_footer
    %s15 = sadd.s32 1, %s11
  $region7: #{edge_module_forward.6} parent=0 // loop_footer_branch
    %10 = sbr.rel target = $region3
  $region8: #{edge_module_forward.6} parent=0 // loop_exit
    _

// kernel: edge_module_forward.5
$region0: #{edge_module_forward.5}
  #allocation0 [shape = 'u32[]', space=smem, size = 0x4, offset = 0x4, fixed_abs, tag = 'smem constant byte address 0x4 - core index']
  #allocation1 [shape = 'u32[144,128]{1,0:T(1,128)}', space=vmem, size = 0x12000, scoped, tag = 'internal scratch']
  %s0 = inlined_call_operand.vmem [shape: bf16[2,16,64], index: 0, kind: input, shape index: {}]
  %s1 = inlined_call_operand.vmem [shape: bf16[9,16], index: 1, kind: input, shape index: {}]
  %s2 = inlined_call_operand.vmem [shape: bf16[32,16], index: 2, kind: input, shape index: {}]
  %s3 = inlined_call_operand.vmem [shape: bf16[2,9,64], index: 3, kind: output, shape index: {0}]
  %s4 = inlined_call_operand.vmem [shape: bf16[2,32,64], index: 4, kind: output, shape index: {1}]
  %5 = xla_tuple %s3, %s4
  %s6 = sld [smem:[#allocation0]]
  $region53: #{edge_module_forward.5} parent=0
    _
  %s8 = ssub.s32 1, %s6
  %s9 = scalar_select 0, %s8, %s6
  loop: start=0, step=1, limit=4
  $region2: #{edge_module_forward.5} parent=0 // loop_pre_header
    _
  $region3: #{edge_module_forward.5} parent=0 // loop_header
    %s11 = sphi 0, %s15
    %p12 = scmp.ge.s32.totalorder %s11, 4
    %s18 = sphi 0, %s30
    %s19 = sphi 0, %s26
    %s20 = sphi 0, %s18
    %s21 = sphi 0, %s19
    %s22 = sphi 0, %s20
    %s23 = sphi 0, %s21
    %s35 = sphi 0, %s37
    %s38 = sphi 0, %s35
    %s39 = sphi 0, %s38
    %s55 = sphi 0, %s39
    %s59 = sphi 0, %s59
    %s61 = sphi 0, %s59
    %s62 = sphi 0, %s61
    %s76 = sphi 0, %s62
    %s80 = sphi 0, %s80
    %s82 = sphi 0, %s80
    %s83 = sphi 0, %s82
    %s97 = sphi 0, %s83
    %s105 = sphi 0, %s107
    %s108 = sphi 0, %s105
    %s109 = sphi 0, %s108
    %s125 = sphi 0, %s109
    %s133 = sphi 0, %s135
    %s136 = sphi 0, %s133
    %s137 = sphi 0, %s136
    %s153 = sphi 0, %s137
  $region4: #{edge_module_forward.5} parent=0 // loop_header_branch
    %14 = sbr.rel (%p12) target = $region8
  $region5: #{edge_module_forward.5} parent=0 // loop_body
    %s16 = ssub.s32 %s11, 1
    %s17 = ssub.s32 %s11, 2
    %s24 = sadd.s32 1, %s19
    %p25 = scmp.ge.s32.totalorder %s24, 1
    %s26 = scalar_select %p25, 0, %s24
    %s27 = sadd.s32 1, %s18
    %s28 = scalar_select %p25, %s27, %s18
    %p29 = scmp.ge.s32.totalorder %s28, 2
    %s30 = scalar_select %p29, 0, %s28
    %s31 = ssub.s32 %s18, %s30
    %s32 = ssub.s32 %s19, %s26
    %s33 = sor.u32 %s31, %s32
    %p34 = scmp.eq.s32.totalorder %s33, 0
    %s36 = sadd.s32 %s35, 1
    %s37 = scalar_select %p34, %s35, %s36
    %p40 = pneg %p34
    %p41 = scmp.eq.s32.totalorder %s11, 1
    %p42 = por %p40, %p41
    %p43 = scmp.ne.s32.totalorder %s35, %s38
    %p44 = scmp.eq.s32.totalorder %s11, 0
    %p45 = por %p43, %p44
    %p46 = scmp.ne.s32.totalorder %s35, %s38
    %p47 = scmp.eq.s32.totalorder %s16, 1
    %p48 = por %p46, %p47
    %p49 = scmp.ne.s32.totalorder %s38, %s39
    %p50 = scmp.eq.s32.totalorder %s16, 0
    %p51 = por %p49, %p50
    %p52 = scmp.ne.s32.totalorder %s38, %s39
    %p53 = scmp.eq.s32.totalorder %s17, 1
    %p54 = por %p52, %p53
    %p56 = scmp.ne.s32.totalorder %s39, %s55
    %p57 = scmp.eq.s32.totalorder %s17, 0
    %p58 = por %p56, %p57
    %s60 = sadd.s32 %s59, 1
    %p63 = scmp.eq.s32.totalorder %s11, 1
    %p64 = scmp.ne.s32.totalorder %s59, %s61
    %p65 = scmp.eq.s32.totalorder %s11, 0
    %p66 = por %p64, %p65
    %p67 = scmp.ne.s32.totalorder %s59, %s61
    %p68 = scmp.eq.s32.totalorder %s16, 1
    %p69 = por %p67, %p68
    %p70 = scmp.ne.s32.totalorder %s61, %s62
    %p71 = scmp.eq.s32.totalorder %s16, 0
    %p72 = por %p70, %p71
    %p73 = scmp.ne.s32.totalorder %s61, %s62
    %p74 = scmp.eq.s32.totalorder %s17, 1
    %p75 = por %p73, %p74
    %p77 = scmp.ne.s32.totalorder %s62, %s76
    %p78 = scmp.eq.s32.totalorder %s17, 0
    %p79 = por %p77, %p78
    %s81 = sadd.s32 %s80, 1
    %p84 = scmp.eq.s32.totalorder %s11, 1
    %p85 = scmp.ne.s32.totalorder %s80, %s82
    %p86 = scmp.eq.s32.totalorder %s11, 0
    %p87 = por %p85, %p86
    %p88 = scmp.ne.s32.totalorder %s80, %s82
    %p89 = scmp.eq.s32.totalorder %s16, 1
    %p90 = por %p88, %p89
    %p91 = scmp.ne.s32.totalorder %s82, %s83
    %p92 = scmp.eq.s32.totalorder %s16, 0
    %p93 = por %p91, %p92
    %p94 = scmp.ne.s32.totalorder %s82, %s83
    %p95 = scmp.eq.s32.totalorder %s17, 1
    %p96 = por %p94, %p95
    %p98 = scmp.ne.s32.totalorder %s83, %s97
    %p99 = scmp.eq.s32.totalorder %s17, 0
    %p100 = por %p98, %p99
    %s101 = ssub.s32 %s18, %s30
    %s102 = ssub.s32 %s19, %s26
    %s103 = sor.u32 %s101, %s102
    %p104 = scmp.eq.s32.totalorder %s103, 0
    %s106 = sadd.s32 %s105, 1
    %s107 = scalar_select %p104, %s105, %s106
    %p110 = pneg %p104
    %p111 = scmp.eq.s32.totalorder %s11, 1
    %p112 = por %p110, %p111
    %p113 = scmp.ne.s32.totalorder %s105, %s108
    %p114 = scmp.eq.s32.totalorder %s11, 0
    %p115 = por %p113, %p114
    %p116 = scmp.ne.s32.totalorder %s105, %s108
    %p117 = scmp.eq.s32.totalorder %s16, 1
    %p118 = por %p116, %p117
    %p119 = scmp.ne.s32.totalorder %s108, %s109
    %p120 = scmp.eq.s32.totalorder %s16, 0
    %p121 = por %p119, %p120
    %p122 = scmp.ne.s32.totalorder %s108, %s109
    %p123 = scmp.eq.s32.totalorder %s17, 1
    %p124 = por %p122, %p123
    %p126 = scmp.ne.s32.totalorder %s109, %s125
    %p127 = scmp.eq.s32.totalorder %s17, 0
    %p128 = por %p126, %p127
    %s129 = ssub.s32 %s18, %s30
    %s130 = ssub.s32 %s19, %s26
    %s131 = sor.u32 %s129, %s130
    %p132 = scmp.eq.s32.totalorder %s131, 0
    %s134 = sadd.s32 %s133, 1
    %s135 = scalar_select %p132, %s133, %s134
    %p138 = pneg %p132
    %p139 = scmp.eq.s32.totalorder %s11, 1
    %p140 = por %p138, %p139
    %p141 = scmp.ne.s32.totalorder %s133, %s136
    %p142 = scmp.eq.s32.totalorder %s11, 0
    %p143 = por %p141, %p142
    %p144 = scmp.ne.s32.totalorder %s133, %s136
    %p145 = scmp.eq.s32.totalorder %s16, 1
    %p146 = por %p144, %p145
    %p147 = scmp.ne.s32.totalorder %s136, %s137
    %p148 = scmp.eq.s32.totalorder %s16, 0
    %p149 = por %p147, %p148
    %p150 = scmp.ne.s32.totalorder %s136, %s137
    %p151 = scmp.eq.s32.totalorder %s17, 1
    %p152 = por %p150, %p151
    %p154 = scmp.ne.s32.totalorder %s137, %s153
    %p155 = scmp.eq.s32.totalorder %s17, 0
    %p156 = por %p154, %p155
    %p157 = scmp.le.s32.totalorder 1, %s11
    %p158 = scmp.lt.s32.totalorder %s11, 3
    %p159 = pnand %p157, %p158
    %p160 = pneg %p159
    // Predicated region
    $region9: #{edge_module_forward.5} parent=5 // pred_check
      _
    $region10: #{edge_module_forward.5} parent=5 // pred_check_branch
      %162 = sbr.rel (%p159) target = $region12
    $region11: #{edge_module_forward.5} parent=5 // pred_region
      %s163 = ssub.s32 %s11, 1
      // Predicated region
      $region13: #{edge_module_forward.5} parent=11 // pred_check
        %p164 = pneg %p72
      $region14: #{edge_module_forward.5} parent=11 // pred_check_branch
        %166 = sbr.rel (%p164) target = $region16
      $region15: #{edge_module_forward.5} parent=11 // pred_region
        _
      $region16: #{edge_module_forward.5} parent=11 // pred_fallthru
        _
      // Predicated region
      $region17: #{edge_module_forward.5} parent=11 // pred_check
        %p167 = pneg %p93
      $region18: #{edge_module_forward.5} parent=11 // pred_check_branch
        %169 = sbr.rel (%p167) target = $region20
      $region19: #{edge_module_forward.5} parent=11 // pred_region
        _
      $region20: #{edge_module_forward.5} parent=11 // pred_fallthru
        _
    $region12: #{edge_module_forward.5} parent=5 // pred_fallthru
      _
    %p170 = scmp.lt.s32.totalorder %s11, 2
    // Predicated region
    $region21: #{edge_module_forward.5} parent=5 // pred_check
      %p171 = pneg %p170
    $region22: #{edge_module_forward.5} parent=5 // pred_check_branch
      %173 = sbr.rel (%p171) target = $region24
    $region23: #{edge_module_forward.5} parent=5 // pred_region
      // Predicated region
      $region25: #{edge_module_forward.5} parent=23 // pred_check
        %p174 = pneg %p45
      $region26: #{edge_module_forward.5} parent=23 // pred_check_branch
        %176 = sbr.rel (%p174) target = $region28
      $region27: #{edge_module_forward.5} parent=23 // pred_region
        %p177 = scmp.lt.s32.totalorder %s18, 1
        %s178 = scalar_select %p177, %s18, 1
        %p179 = scmp.lt.s32.totalorder %s19, 0
        %s180 = scalar_select %p179, %s19, 0
        %s181 = smul.addr %s178, 2
        %s182 = sadd.s32 %s180, %s181
        %s183 = smul.addr %s182, 4
        %s184 = scalar_lea.vmem %s0, %s183
      $region28: #{edge_module_forward.5} parent=23 // pred_fallthru
        _
    $region24: #{edge_module_forward.5} parent=5 // pred_fallthru
      _
    %p185 = scmp.le.s32.totalorder 1, %s11
    %p186 = scmp.lt.s32.totalorder %s11, 3
    %p187 = pnand %p185, %p186
    %p188 = pneg %p187
    // Predicated region
    $region29: #{edge_module_forward.5} parent=5 // pred_check
      _
    $region30: #{edge_module_forward.5} parent=5 // pred_check_branch
      %190 = sbr.rel (%p187) target = $region32
    $region31: #{edge_module_forward.5} parent=5 // pred_region
      %s191 = ssub.s32 %s11, 1
      %p192 = scmp.lt.s32.totalorder %s20, 1
      %s193 = scalar_select %p192, %s20, 1
      %p194 = scmp.lt.s32.totalorder %s21, 0
      %s195 = scalar_select %p194, %s21, 0
      %s196 = smul.addr %s193, 2
      %s197 = sadd.s32 %s195, %s196
      %s198 = smul.addr %s197, 4
      %s199 = scalar_lea.vmem %s0, %s198
      %p200 = pneg %p51
      %p201 = pneg %p48
      %p202 = pneg %p72
      %p203 = pneg %p69
      %p204 = pneg %p93
      %p205 = pneg %p90
      %p206 = pneg %p121
      %p207 = pneg %p118
      %p208 = scmp.lt.s32.totalorder %s20, 1
      %s209 = scalar_select %p208, %s20, 1
      %p210 = scmp.lt.s32.totalorder %s21, 0
      %s211 = scalar_select %p210, %s21, 0
      %s212 = smul.addr %s209, 2
      %s213 = sadd.s32 %s211, %s212
      %s214 = smul.addr %s213, 4
      %s215 = scalar_lea.vmem %s3, %s214
      %p216 = pneg %p149
      %p217 = pneg %p146
      %p218 = scmp.lt.s32.totalorder %s20, 1
      %s219 = scalar_select %p218, %s20, 1
      %p220 = scmp.lt.s32.totalorder %s21, 0
      %s221 = scalar_select %p220, %s21, 0
      %s222 = smul.addr %s219, 4
      %s223 = sadd.s32 %s221, %s222
      %s224 = smul.addr %s223, 4
      %s225 = scalar_lea.vmem %s4, %s224
      %p226 = scmp.lt.s32.totalorder %s20, 1
      %s227 = scalar_select %p226, %s20, 1
      %p228 = scmp.lt.s32.totalorder %s21, 0
      %s229 = scalar_select %p228, %s21, 0
      %s230 = smul.addr %s227, 2
      %s231 = sadd.s32 %s229, %s230
      %s232 = smul.addr %s231, 4
      %s233 = scalar_lea.vmem %s0, %s232
      %p234 = scmp.lt.s32.totalorder %s20, 1
      %s235 = scalar_select %p234, %s20, 1
      %p236 = scmp.lt.s32.totalorder %s21, 0
      %s237 = scalar_select %p236, %s21, 0
      %s238 = smul.addr %s235, 2
      %s239 = sadd.s32 %s237, %s238
      %s240 = smul.addr %s239, 4
      %s241 = scalar_lea.vmem %s3, %s240
      %p242 = scmp.lt.s32.totalorder %s20, 1
      %s243 = scalar_select %p242, %s20, 1
      %p244 = scmp.lt.s32.totalorder %s21, 0
      %s245 = scalar_select %p244, %s21, 0
      %s246 = smul.addr %s243, 4
      %s247 = sadd.s32 %s245, %s246
      %s248 = smul.addr %s247, 4
      %s249 = scalar_lea.vmem %s4, %s248
      %v251 = vld [vmem:[%s233] sm:$0xf]
      %v252 = vld [vmem:[%s233 + $0x4] sm:$0xf]
      %v253 = vld [vmem:[%s1] sm:$0xf]
      %v254 = vld [vmem:[%s1 + $0x4] sm:$0x1]
      %v257 = vunpack.c.l.b16 %v253
      %v258 = vunpack.c.l.b16 %v254
      %v259 = vpack.c.b16 %v258, %v257
      %v262 = vunpack.c.l.b16 %v251
      %v263 = vunpack.c.l.b16 %v252
      %v264 = vpack.c.b16 %v263, %v262
      %vm266 = vcmask 130048
      %v268 = vsel %vm266, %v259, 0
      %270 = vmatprep.subr.bf16.mxu0 0
      %271 = vmatpush1.bf16.msra.mxu0 %v264
      %272 = vmatprep.subr.bf16.mxu0 0
      %273 = vmatpush1.bf16.msra.mxu0 0
      %274 = vmatprep.subr.bf16.mxu0 0
      %275 = vmatpush1.bf16.msra.mxu0 0
      %276 = vmatprep.subr.bf16.mxu0 0
      %277 = vmatpush1.bf16.msra.mxu0 0
      %278 = vmatprep.subr.bf16.mxu0 0
      %279 = vmatpush1.bf16.msra.mxu0 0
      %280 = vmatprep.subr.bf16.mxu0 0
      %281 = vmatpush1.bf16.msra.mxu0 0
      %282 = vmatprep.subr.bf16.mxu0 0
      %283 = vmatpush1.bf16.msra.mxu0 0
      %284 = vmatprep.subr.bf16.mxu0 0
      %285 = vmatpush1.bf16.msra.mxu0 0
      %286 = vmatprep.subr.bf16.mxu0 0
      %287 = vmatpush1.bf16.msra.mxu0 0
      %288 = vmatprep.subr.bf16.mxu0 0
      %289 = vmatpush1.bf16.msra.mxu0 0
      %290 = vmatprep.subr.bf16.mxu0 0
      %291 = vmatpush1.bf16.msra.mxu0 0
      %292 = vmatprep.subr.bf16.mxu0 0
      %293 = vmatpush1.bf16.msra.mxu0 0
      %294 = vmatprep.subr.bf16.mxu0 0
      %295 = vmatpush1.bf16.msra.mxu0 0
      %296 = vmatprep.subr.bf16.mxu0 0
      %297 = vmatpush1.bf16.msra.mxu0 0
      %298 = vmatprep.subr.bf16.mxu0 0
      %299 = vmatpush1.bf16.msra.mxu0 0
      %300 = vmatprep.subr.bf16.mxu0 0
      %301 = vmatpush1.bf16.msra.mxu0 0
      %302 = vmatprep.mubr.bf16.mxu0 0
      %303 = vmatmul.mubr.bf16.gmra.mrb[0].mxu0 %v268
      %v304 = vpop.f32.mrb[0].mxu0
      %v305 = vadd.f32 0.0, %v304
      %v306 = vpop.f32.mrb[0].mxu0
      %v307 = vpop.f32.mrb[0].mxu0
      %v308 = vadd.f32 0.0, %v307
      %v309 = vpop.f32.mrb[0].mxu0
      %310 = vdwg.mxu0
      %v311 = vpack.c.bf16 %v308, %v305
      %v313 = vunpack.c.l.b16 %v311
      %v314 = vunpack.c.h.b16 %v311
      %v315 = vpack.c.b16 %v313, %v313
      %v316 = vpack.c.b16 %v314, %v314
      %vm319 = vcmask 519168
      %320 = vst.msk [vmem:[%s241] sm:$0xf] %vm319, %v315
      %vm321 = vcmask 516096
      %vm322 = vsmask.f32 256
      %vm323 = vmand %vm321, %vm322
      %v324 = vld [vmem:[%s241 + $0x4] sm:$0x1]
      %v325 = vsel %vm323, %v316, %v324
      %326 = vst [vmem:[%s241 + $0x4] sm:$0x1] %v325
      %v327 = vld [vmem:[%s2] sm:$0xf]
      %v328 = vld [vmem:[%s2 + $0x4] sm:$0xf]
      %v329 = vld [vmem:[%s2 + $0x8] sm:$0xf]
      %v330 = vld [vmem:[%s2 + $0xc] sm:$0xf]
      %v335 = vunpack.c.l.b16 %v327
      %v336 = vunpack.c.l.b16 %v328
      %v337 = vunpack.c.l.b16 %v329
      %v338 = vunpack.c.l.b16 %v330
      %v339 = vpack.c.b16 %v336, %v335
      %v340 = vpack.c.b16 %v338, %v337
      %v342 = vsel %vm266, %v339, 0
      %v345 = vsel %vm266, %v340, 0
      %347 = vmatprep.subr.bf16.mxu0 0
      %348 = vmatpush1.bf16.msra.mxu0 %v264
      %349 = vmatprep.subr.bf16.mxu0 0
      %350 = vmatpush1.bf16.msra.mxu0 0
      %351 = vmatprep.subr.bf16.mxu0 0
      %352 = vmatpush1.bf16.msra.mxu0 0
      %353 = vmatprep.subr.bf16.mxu0 0
      %354 = vmatpush1.bf16.msra.mxu0 0
      %355 = vmatprep.subr.bf16.mxu0 0
      %356 = vmatpush1.bf16.msra.mxu0 0
      %357 = vmatprep.subr.bf16.mxu0 0
      %358 = vmatpush1.bf16.msra.mxu0 0
      %359 = vmatprep.subr.bf16.mxu0 0
      %360 = vmatpush1.bf16.msra.mxu0 0
      %361 = vmatprep.subr.bf16.mxu0 0
      %362 = vmatpush1.bf16.msra.mxu0 0
      %363 = vmatprep.subr.bf16.mxu0 0
      %364 = vmatpush1.bf16.msra.mxu0 0
      %365 = vmatprep.subr.bf16.mxu0 0
      %366 = vmatpush1.bf16.msra.mxu0 0
      %367 = vmatprep.subr.bf16.mxu0 0
      %368 = vmatpush1.bf16.msra.mxu0 0
      %369 = vmatprep.subr.bf16.mxu0 0
      %370 = vmatpush1.bf16.msra.mxu0 0
      %371 = vmatprep.subr.bf16.mxu0 0
      %372 = vmatpush1.bf16.msra.mxu0 0
      %373 = vmatprep.subr.bf16.mxu0 0
      %374 = vmatpush1.bf16.msra.mxu0 0
      %375 = vmatprep.subr.bf16.mxu0 0
      %376 = vmatpush1.bf16.msra.mxu0 0
      %377 = vmatprep.subr.bf16.mxu0 0
      %378 = vmatpush1.bf16.msra.mxu0 0
      %379 = vmatprep.mubr.bf16.mxu0 0
      %380 = vmatmul.mubr.bf16.gmra.mrb[0].mxu0 %v342
      %v381 = vpop.f32.mrb[0].mxu0
      %v382 = vadd.f32 0.0, %v381
      %v383 = vpop.f32.mrb[0].mxu0
      %v384 = vpop.f32.mrb[0].mxu0
      %v385 = vadd.f32 0.0, %v384
      %v386 = vpop.f32.mrb[0].mxu0
      %387 = vmatprep.mubr.bf16.mxu0 0
      %388 = vmatmul.mubr.bf16.gmra.mrb[0].mxu0 %v345
      %v389 = vpop.f32.mrb[0].mxu0
      %v390 = vadd.f32 0.0, %v389
      %v391 = vpop.f32.mrb[0].mxu0
      %v392 = vpop.f32.mrb[0].mxu0
      %v393 = vadd.f32 0.0, %v392
      %v394 = vpop.f32.mrb[0].mxu0
      %395 = vdwg.mxu0
      %v396 = vpack.c.bf16 %v385, %v382
      %v397 = vpack.c.bf16 %v393, %v390
      %v400 = vunpack.c.l.b16 %v396
      %v401 = vunpack.c.h.b16 %v396
      %v402 = vunpack.c.l.b16 %v397
      %v403 = vunpack.c.h.b16 %v397
      %v404 = vpack.c.b16 %v400, %v400
      %v405 = vpack.c.b16 %v401, %v401
      %v406 = vpack.c.b16 %v402, %v402
      %v407 = vpack.c.b16 %v403, %v403
      %412 = vst.msk [vmem:[%s249] sm:$0xf] %vm319, %v404
      %413 = vst.msk [vmem:[%s249 + $0x4] sm:$0xf] %vm319, %v405
      %414 = vst.msk [vmem:[%s249 + $0x8] sm:$0xf] %vm319, %v406
      %415 = vst.msk [vmem:[%s249 + $0xc] sm:$0xf] %vm319, %v407
      %p416 = scmp.lt.s32.totalorder %s20, 1
      %s417 = scalar_select %p416, %s20, 1
      %p418 = scmp.lt.s32.totalorder %s21, 0
      %s419 = scalar_select %p418, %s21, 0
      %s420 = smul.addr %s417, 2
      %s421 = sadd.s32 %s419, %s420
      %s422 = smul.addr %s421, 4
      %s423 = scalar_lea.vmem %s3, %s422
      %p424 = scmp.lt.s32.totalorder %s20, 1
      %s425 = scalar_select %p424, %s20, 1
      %p426 = scmp.lt.s32.totalorder %s21, 0
      %s427 = scalar_select %p426, %s21, 0
      %s428 = smul.addr %s425, 4
      %s429 = sadd.s32 %s427, %s428
      %s430 = smul.addr %s429, 4
      %s431 = scalar_lea.vmem %s4, %s430
      // Predicated region
      $region33: #{edge_module_forward.5} parent=31 // pred_check
        %p432 = pneg %p118
      $region34: #{edge_module_forward.5} parent=31 // pred_check_branch
        %434 = sbr.rel (%p432) target = $region36
      $region35: #{edge_module_forward.5} parent=31 // pred_region
        _
      $region36: #{edge_module_forward.5} parent=31 // pred_fallthru
        _
      // Predicated region
      $region37: #{edge_module_forward.5} parent=31 // pred_check
        %p435 = pneg %p146
      $region38: #{edge_module_forward.5} parent=31 // pred_check_branch
        %437 = sbr.rel (%p435) target = $region40
      $region39: #{edge_module_forward.5} parent=31 // pred_region
        _
      $region40: #{edge_module_forward.5} parent=31 // pred_fallthru
        _
    $region32: #{edge_module_forward.5} parent=5 // pred_fallthru
      _
    %p438 = scmp.le.s32.totalorder 2, %s11
    // Predicated region
    $region41: #{edge_module_forward.5} parent=5 // pred_check
      %p439 = pneg %p438
    $region42: #{edge_module_forward.5} parent=5 // pred_check_branch
      %441 = sbr.rel (%p439) target = $region44
    $region43: #{edge_module_forward.5} parent=5 // pred_region
      %s442 = ssub.s32 %s11, 2
      // Predicated region
      $region45: #{edge_module_forward.5} parent=43 // pred_check
        %p443 = pneg %p124
      $region46: #{edge_module_forward.5} parent=43 // pred_check_branch
        %445 = sbr.rel (%p443) target = $region48
      $region47: #{edge_module_forward.5} parent=43 // pred_region
        %p446 = scmp.lt.s32.totalorder %s22, 1
        %s447 = scalar_select %p446, %s22, 1
        %p448 = scmp.lt.s32.totalorder %s23, 0
        %s449 = scalar_select %p448, %s23, 0
        %s450 = smul.addr %s447, 2
        %s451 = sadd.s32 %s449, %s450
        %s452 = smul.addr %s451, 4
        %s453 = scalar_lea.vmem %s3, %s452
      $region48: #{edge_module_forward.5} parent=43 // pred_fallthru
        _
      // Predicated region
      $region49: #{edge_module_forward.5} parent=43 // pred_check
        %p454 = pneg %p152
      $region50: #{edge_module_forward.5} parent=43 // pred_check_branch
        %456 = sbr.rel (%p454) target = $region52
      $region51: #{edge_module_forward.5} parent=43 // pred_region
        %p457 = scmp.lt.s32.totalorder %s22, 1
        %s458 = scalar_select %p457, %s22, 1
        %p459 = scmp.lt.s32.totalorder %s23, 0
        %s460 = scalar_select %p459, %s23, 0
        %s461 = smul.addr %s458, 4
        %s462 = sadd.s32 %s460, %s461
        %s463 = smul.addr %s462, 4
        %s464 = scalar_lea.vmem %s4, %s463
      $region52: #{edge_module_forward.5} parent=43 // pred_fallthru
        _
    $region44: #{edge_module_forward.5} parent=5 // pred_fallthru
      _
  $region6: #{edge_module_forward.5} parent=0 // loop_footer
    %s15 = sadd.s32 1, %s11
  $region7: #{edge_module_forward.5} parent=0 // loop_footer_branch
    %10 = sbr.rel target = $region3
  $region8: #{edge_module_forward.5} parent=0 // loop_exit
    _

// kernel: edge_module_forward.4
$region0: #{edge_module_forward.4}
  #allocation0 [shape = 'u32[]', space=smem, size = 0x4, offset = 0x4, fixed_abs, tag = 'smem constant byte address 0x4 - core index']
  #allocation1 [shape = 'u32[144,128]{1,0:T(1,128)}', space=vmem, size = 0x12000, scoped, tag = 'internal scratch']
  %s0 = inlined_call_operand.vmem [shape: bf16[2,8,256], index: 0, kind: input, shape index: {}]
  %s1 = inlined_call_operand.vmem [shape: bf16[9,8], index: 1, kind: input, shape index: {}]
  %s2 = inlined_call_operand.vmem [shape: bf16[32,8], index: 2, kind: input, shape index: {}]
  %s3 = inlined_call_operand.vmem [shape: bf16[2,9,256], index: 3, kind: output, shape index: {0}]
  %s4 = inlined_call_operand.vmem [shape: bf16[2,32,256], index: 4, kind: output, shape index: {1}]
  %5 = xla_tuple %s3, %s4
  %s6 = sld [smem:[#allocation0]]
  $region53: #{edge_module_forward.4} parent=0
    _
  %s8 = ssub.s32 1, %s6
  %s9 = scalar_select 0, %s8, %s6
  loop: start=0, step=1, limit=4
  $region2: #{edge_module_forward.4} parent=0 // loop_pre_header
    _
  $region3: #{edge_module_forward.4} parent=0 // loop_header
    %s11 = sphi 0, %s15
    %p12 = scmp.ge.s32.totalorder %s11, 4
    %s18 = sphi 0, %s30
    %s19 = sphi 0, %s26
    %s20 = sphi 0, %s18
    %s21 = sphi 0, %s19
    %s22 = sphi 0, %s20
    %s23 = sphi 0, %s21
    %s35 = sphi 0, %s37
    %s38 = sphi 0, %s35
    %s39 = sphi 0, %s38
    %s55 = sphi 0, %s39
    %s59 = sphi 0, %s59
    %s61 = sphi 0, %s59
    %s62 = sphi 0, %s61
    %s76 = sphi 0, %s62
    %s80 = sphi 0, %s80
    %s82 = sphi 0, %s80
    %s83 = sphi 0, %s82
    %s97 = sphi 0, %s83
    %s105 = sphi 0, %s107
    %s108 = sphi 0, %s105
    %s109 = sphi 0, %s108
    %s125 = sphi 0, %s109
    %s133 = sphi 0, %s135
    %s136 = sphi 0, %s133
    %s137 = sphi 0, %s136
    %s153 = sphi 0, %s137
  $region4: #{edge_module_forward.4} parent=0 // loop_header_branch
    %14 = sbr.rel (%p12) target = $region8
  $region5: #{edge_module_forward.4} parent=0 // loop_body
    %s16 = ssub.s32 %s11, 1
    %s17 = ssub.s32 %s11, 2
    %s24 = sadd.s32 1, %s19
    %p25 = scmp.ge.s32.totalorder %s24, 1
    %s26 = scalar_select %p25, 0, %s24
    %s27 = sadd.s32 1, %s18
    %s28 = scalar_select %p25, %s27, %s18
    %p29 = scmp.ge.s32.totalorder %s28, 2
    %s30 = scalar_select %p29, 0, %s28
    %s31 = ssub.s32 %s18, %s30
    %s32 = ssub.s32 %s19, %s26
    %s33 = sor.u32 %s31, %s32
    %p34 = scmp.eq.s32.totalorder %s33, 0
    %s36 = sadd.s32 %s35, 1
    %s37 = scalar_select %p34, %s35, %s36
    %p40 = pneg %p34
    %p41 = scmp.eq.s32.totalorder %s11, 1
    %p42 = por %p40, %p41
    %p43 = scmp.ne.s32.totalorder %s35, %s38
    %p44 = scmp.eq.s32.totalorder %s11, 0
    %p45 = por %p43, %p44
    %p46 = scmp.ne.s32.totalorder %s35, %s38
    %p47 = scmp.eq.s32.totalorder %s16, 1
    %p48 = por %p46, %p47
    %p49 = scmp.ne.s32.totalorder %s38, %s39
    %p50 = scmp.eq.s32.totalorder %s16, 0
    %p51 = por %p49, %p50
    %p52 = scmp.ne.s32.totalorder %s38, %s39
    %p53 = scmp.eq.s32.totalorder %s17, 1
    %p54 = por %p52, %p53
    %p56 = scmp.ne.s32.totalorder %s39, %s55
    %p57 = scmp.eq.s32.totalorder %s17, 0
    %p58 = por %p56, %p57
    %s60 = sadd.s32 %s59, 1
    %p63 = scmp.eq.s32.totalorder %s11, 1
    %p64 = scmp.ne.s32.totalorder %s59, %s61
    %p65 = scmp.eq.s32.totalorder %s11, 0
    %p66 = por %p64, %p65
    %p67 = scmp.ne.s32.totalorder %s59, %s61
    %p68 = scmp.eq.s32.totalorder %s16, 1
    %p69 = por %p67, %p68
    %p70 = scmp.ne.s32.totalorder %s61, %s62
    %p71 = scmp.eq.s32.totalorder %s16, 0
    %p72 = por %p70, %p71
    %p73 = scmp.ne.s32.totalorder %s61, %s62
    %p74 = scmp.eq.s32.totalorder %s17, 1
    %p75 = por %p73, %p74
    %p77 = scmp.ne.s32.totalorder %s62, %s76
    %p78 = scmp.eq.s32.totalorder %s17, 0
    %p79 = por %p77, %p78
    %s81 = sadd.s32 %s80, 1
    %p84 = scmp.eq.s32.totalorder %s11, 1
    %p85 = scmp.ne.s32.totalorder %s80, %s82
    %p86 = scmp.eq.s32.totalorder %s11, 0
    %p87 = por %p85, %p86
    %p88 = scmp.ne.s32.totalorder %s80, %s82
    %p89 = scmp.eq.s32.totalorder %s16, 1
    %p90 = por %p88, %p89
    %p91 = scmp.ne.s32.totalorder %s82, %s83
    %p92 = scmp.eq.s32.totalorder %s16, 0
    %p93 = por %p91, %p92
    %p94 = scmp.ne.s32.totalorder %s82, %s83
    %p95 = scmp.eq.s32.totalorder %s17, 1
    %p96 = por %p94, %p95
    %p98 = scmp.ne.s32.totalorder %s83, %s97
    %p99 = scmp.eq.s32.totalorder %s17, 0
    %p100 = por %p98, %p99
    %s101 = ssub.s32 %s18, %s30
    %s102 = ssub.s32 %s19, %s26
    %s103 = sor.u32 %s101, %s102
    %p104 = scmp.eq.s32.totalorder %s103, 0
    %s106 = sadd.s32 %s105, 1
    %s107 = scalar_select %p104, %s105, %s106
    %p110 = pneg %p104
    %p111 = scmp.eq.s32.totalorder %s11, 1
    %p112 = por %p110, %p111
    %p113 = scmp.ne.s32.totalorder %s105, %s108
    %p114 = scmp.eq.s32.totalorder %s11, 0
    %p115 = por %p113, %p114
    %p116 = scmp.ne.s32.totalorder %s105, %s108
    %p117 = scmp.eq.s32.totalorder %s16, 1
    %p118 = por %p116, %p117
    %p119 = scmp.ne.s32.totalorder %s108, %s109
    %p120 = scmp.eq.s32.totalorder %s16, 0
    %p121 = por %p119, %p120
    %p122 = scmp.ne.s32.totalorder %s108, %s109
    %p123 = scmp.eq.s32.totalorder %s17, 1
    %p124 = por %p122, %p123
    %p126 = scmp.ne.s32.totalorder %s109, %s125
    %p127 = scmp.eq.s32.totalorder %s17, 0
    %p128 = por %p126, %p127
    %s129 = ssub.s32 %s18, %s30
    %s130 = ssub.s32 %s19, %s26
    %s131 = sor.u32 %s129, %s130
    %p132 = scmp.eq.s32.totalorder %s131, 0
    %s134 = sadd.s32 %s133, 1
    %s135 = scalar_select %p132, %s133, %s134
    %p138 = pneg %p132
    %p139 = scmp.eq.s32.totalorder %s11, 1
    %p140 = por %p138, %p139
    %p141 = scmp.ne.s32.totalorder %s133, %s136
    %p142 = scmp.eq.s32.totalorder %s11, 0
    %p143 = por %p141, %p142
    %p144 = scmp.ne.s32.totalorder %s133, %s136
    %p145 = scmp.eq.s32.totalorder %s16, 1
    %p146 = por %p144, %p145
    %p147 = scmp.ne.s32.totalorder %s136, %s137
    %p148 = scmp.eq.s32.totalorder %s16, 0
    %p149 = por %p147, %p148
    %p150 = scmp.ne.s32.totalorder %s136, %s137
    %p151 = scmp.eq.s32.totalorder %s17, 1
    %p152 = por %p150, %p151
    %p154 = scmp.ne.s32.totalorder %s137, %s153
    %p155 = scmp.eq.s32.totalorder %s17, 0
    %p156 = por %p154, %p155
    %p157 = scmp.le.s32.totalorder 1, %s11
    %p158 = scmp.lt.s32.totalorder %s11, 3
    %p159 = pnand %p157, %p158
    %p160 = pneg %p159
    // Predicated region
    $region9: #{edge_module_forward.4} parent=5 // pred_check
      _
    $region10: #{edge_module_forward.4} parent=5 // pred_check_branch
      %162 = sbr.rel (%p159) target = $region12
    $region11: #{edge_module_forward.4} parent=5 // pred_region
      %s163 = ssub.s32 %s11, 1
      // Predicated region
      $region13: #{edge_module_forward.4} parent=11 // pred_check
        %p164 = pneg %p72
      $region14: #{edge_module_forward.4} parent=11 // pred_check_branch
        %166 = sbr.rel (%p164) target = $region16
      $region15: #{edge_module_forward.4} parent=11 // pred_region
        _
      $region16: #{edge_module_forward.4} parent=11 // pred_fallthru
        _
      // Predicated region
      $region17: #{edge_module_forward.4} parent=11 // pred_check
        %p167 = pneg %p93
      $region18: #{edge_module_forward.4} parent=11 // pred_check_branch
        %169 = sbr.rel (%p167) target = $region20
      $region19: #{edge_module_forward.4} parent=11 // pred_region
        _
      $region20: #{edge_module_forward.4} parent=11 // pred_fallthru
        _
    $region12: #{edge_module_forward.4} parent=5 // pred_fallthru
      _
    %p170 = scmp.lt.s32.totalorder %s11, 2
    // Predicated region
    $region21: #{edge_module_forward.4} parent=5 // pred_check
      %p171 = pneg %p170
    $region22: #{edge_module_forward.4} parent=5 // pred_check_branch
      %173 = sbr.rel (%p171) target = $region24
    $region23: #{edge_module_forward.4} parent=5 // pred_region
      // Predicated region
      $region25: #{edge_module_forward.4} parent=23 // pred_check
        %p174 = pneg %p45
      $region26: #{edge_module_forward.4} parent=23 // pred_check_branch
        %176 = sbr.rel (%p174) target = $region28
      $region27: #{edge_module_forward.4} parent=23 // pred_region
        %s177 = smul.u32 2, %s19
        %p178 = scmp.lt.s32.totalorder %s18, 1
        %s179 = scalar_select %p178, %s18, 1
        %p180 = scmp.lt.s32.totalorder %s177, 1
        %s181 = scalar_select %p180, %s177, 1
        %s182 = smul.addr %s179, 2
        %s183 = sadd.s32 %s181, %s182
        %s184 = smul.addr %s183, 4
        %s185 = scalar_lea.vmem %s0, %s184
        %s186 = smul.u32 2, %s19
      $region28: #{edge_module_forward.4} parent=23 // pred_fallthru
        _
    $region24: #{edge_module_forward.4} parent=5 // pred_fallthru
      _
    %p187 = scmp.le.s32.totalorder 1, %s11
    %p188 = scmp.lt.s32.totalorder %s11, 3
    %p189 = pnand %p187, %p188
    %p190 = pneg %p189
    // Predicated region
    $region29: #{edge_module_forward.4} parent=5 // pred_check
      _
    $region30: #{edge_module_forward.4} parent=5 // pred_check_branch
      %192 = sbr.rel (%p189) target = $region32
    $region31: #{edge_module_forward.4} parent=5 // pred_region
      %s193 = ssub.s32 %s11, 1
      %s194 = smul.u32 2, %s21
      %p195 = scmp.lt.s32.totalorder %s20, 1
      %s196 = scalar_select %p195, %s20, 1
      %p197 = scmp.lt.s32.totalorder %s194, 1
      %s198 = scalar_select %p197, %s194, 1
      %s199 = smul.addr %s196, 2
      %s200 = sadd.s32 %s198, %s199
      %s201 = smul.addr %s200, 4
      %s202 = scalar_lea.vmem %s0, %s201
      %p203 = pneg %p51
      %p204 = pneg %p48
      %p205 = pneg %p72
      %p206 = pneg %p69
      %p207 = pneg %p93
      %p208 = pneg %p90
      %p209 = pneg %p121
      %p210 = pneg %p118
      %s211 = smul.u32 2, %s21
      %p212 = scmp.lt.s32.totalorder %s20, 1
      %s213 = scalar_select %p212, %s20, 1
      %p214 = scmp.lt.s32.totalorder %s211, 1
      %s215 = scalar_select %p214, %s211, 1
      %s216 = smul.addr %s213, 4
      %s217 = sadd.s32 %s215, %s216
      %s218 = smul.addr %s217, 4
      %s219 = scalar_lea.vmem %s3, %s218
      %p220 = pneg %p149
      %p221 = pneg %p146
      %s222 = smul.u32 2, %s21
      %p223 = scmp.lt.s32.totalorder %s20, 1
      %s224 = scalar_select %p223, %s20, 1
      %p225 = scmp.lt.s32.totalorder %s222, 1
      %s226 = scalar_select %p225, %s222, 1
      %s227 = smul.addr %s224, 8
      %s228 = sadd.s32 %s226, %s227
      %s229 = smul.addr %s228, 4
      %s230 = scalar_lea.vmem %s4, %s229
      %s231 = smul.u32 2, %s21
      %p232 = scmp.lt.s32.totalorder %s20, 1
      %s233 = scalar_select %p232, %s20, 1
      %p234 = scmp.lt.s32.totalorder %s231, 1
      %s235 = scalar_select %p234, %s231, 1
      %s236 = smul.addr %s233, 2
      %s237 = sadd.s32 %s235, %s236
      %s238 = smul.addr %s237, 4
      %s239 = scalar_lea.vmem %s0, %s238
      %s240 = smul.u32 2, %s21
      %s241 = smul.u32 2, %s21
      %p242 = scmp.lt.s32.totalorder %s20, 1
      %s243 = scalar_select %p242, %s20, 1
      %p244 = scmp.lt.s32.totalorder %s241, 1
      %s245 = scalar_select %p244, %s241, 1
      %s246 = smul.addr %s243, 4
      %s247 = sadd.s32 %s245, %s246
      %s248 = smul.addr %s247, 4
      %s249 = scalar_lea.vmem %s3, %s248
      %s250 = smul.u32 2, %s21
      %s251 = smul.u32 2, %s21
      %p252 = scmp.lt.s32.totalorder %s20, 1
      %s253 = scalar_select %p252, %s20, 1
      %p254 = scmp.lt.s32.totalorder %s251, 1
      %s255 = scalar_select %p254, %s251, 1
      %s256 = smul.addr %s253, 8
      %s257 = sadd.s32 %s255, %s256
      %s258 = smul.addr %s257, 4
      %s259 = scalar_lea.vmem %s4, %s258
      %s260 = smul.u32 2, %s21
      %v262 = vld [vmem:[%s239] sm:$0xff]
      %v263 = vld [vmem:[%s1] sm:$0xf]
      %v264 = vld [vmem:[%s1 + $0x4] sm:$0x1]
      %v267 = vunpack.c.l.b16 %v263
      %v268 = vunpack.c.l.b16 %v264
      %v269 = vpack.c.b16 %v268, %v267
      %v271 = vunpack.c.l.b16 %v262
      %v272 = vunpack.c.h.b16 %v262
      %v273 = vpack.c.b16 %v271, %v271
      %v274 = vpack.c.b16 %v272, %v272
      %vm275 = vcmask 64512
      %v277 = vsel %vm275, %v269, 0
      %vm279 = vcmask 1043456
      %v281 = vsel %vm279, %v273, 0
      %v284 = vsel %vm279, %v274, 0
      %286 = vmatprep.subr.bf16.mxu0 %v284
      %287 = vmatpush1.bf16.msra.mxu0 %v281
      %288 = vmatprep.subr.bf16.mxu0 0
      %289 = vmatpush1.bf16.msra.mxu0 0
      %290 = vmatprep.subr.bf16.mxu0 0
      %291 = vmatpush1.bf16.msra.mxu0 0
      %292 = vmatprep.subr.bf16.mxu0 0
      %293 = vmatpush1.bf16.msra.mxu0 0
      %294 = vmatprep.subr.bf16.mxu0 0
      %295 = vmatpush1.bf16.msra.mxu0 0
      %296 = vmatprep.subr.bf16.mxu0 0
      %297 = vmatpush1.bf16.msra.mxu0 0
      %298 = vmatprep.subr.bf16.mxu0 0
      %299 = vmatpush1.bf16.msra.mxu0 0
      %300 = vmatprep.subr.bf16.mxu0 0
      %301 = vmatpush1.bf16.msra.mxu0 0
      %302 = vmatprep.subr.bf16.mxu0 0
      %303 = vmatpush1.bf16.msra.mxu0 0
      %304 = vmatprep.subr.bf16.mxu0 0
      %305 = vmatpush1.bf16.msra.mxu0 0
      %306 = vmatprep.subr.bf16.mxu0 0
      %307 = vmatpush1.bf16.msra.mxu0 0
      %308 = vmatprep.subr.bf16.mxu0 0
      %309 = vmatpush1.bf16.msra.mxu0 0
      %310 = vmatprep.subr.bf16.mxu0 0
      %311 = vmatpush1.bf16.msra.mxu0 0
      %312 = vmatprep.subr.bf16.mxu0 0
      %313 = vmatpush1.bf16.msra.mxu0 0
      %314 = vmatprep.subr.bf16.mxu0 0
      %315 = vmatpush1.bf16.msra.mxu0 0
      %316 = vmatprep.subr.bf16.mxu0 0
      %317 = vmatpush1.bf16.msra.mxu0 0
      %318 = vmatprep.mubr.bf16.mxu0 0
      %319 = vmatmul.mubr.bf16.gmra.mrb[0].mxu0 %v277
      %v320 = vpop.f32.mrb[0].mxu0
      %v321 = vadd.f32 0.0, %v320
      %v322 = vpop.f32.mrb[0].mxu0
      %v323 = vadd.f32 0.0, %v322
      %v324 = vpop.f32.mrb[0].mxu0
      %v325 = vadd.f32 0.0, %v324
      %v326 = vpop.f32.mrb[0].mxu0
      %v327 = vadd.f32 0.0, %v326
      %328 = vdwg.mxu0
      %v329 = vpack.c.bf16 %v325, %v321
      %v330 = vpack.c.bf16 %v327, %v323
      %v333 = vunpack.c.l.b16 %v329
      %v334 = vunpack.c.l.b16 %v330
      %v335 = vunpack.c.h.b16 %v329
      %v336 = vunpack.c.h.b16 %v330
      %v337 = vpack.c.b16 %v334, %v333
      %v338 = vpack.c.b16 %v336, %v335
      %341 = vst [vmem:[%s249] sm:$0xff] %v337
      %vm342 = vcmask 1040384
      %vm343 = vsmask.f32 256
      %vm344 = vmand %vm342, %vm343
      %vm345 = vcmask 1044484
      %vm346 = vsmask.f32 4352
      %vm347 = vmand %vm345, %vm346
      %vm348 = vmor %vm347, %vm344
      %v349 = vld [vmem:[%s249 + $0x8] sm:$0x11]
      %v350 = vsel %vm348, %v338, %v349
      %351 = vst [vmem:[%s249 + $0x8] sm:$0x11] %v350
      %v352 = vld [vmem:[%s2] sm:$0xf]
      %v353 = vld [vmem:[%s2 + $0x4] sm:$0xf]
      %v354 = vld [vmem:[%s2 + $0x8] sm:$0xf]
      %v355 = vld [vmem:[%s2 + $0xc] sm:$0xf]
      %v360 = vunpack.c.l.b16 %v352
      %v361 = vunpack.c.l.b16 %v353
      %v362 = vunpack.c.l.b16 %v354
      %v363 = vunpack.c.l.b16 %v355
      %v364 = vpack.c.b16 %v361, %v360
      %v365 = vpack.c.b16 %v363, %v362
      %v367 = vsel %vm275, %v364, 0
      %v370 = vsel %vm275, %v365, 0
      %372 = vmatprep.subr.bf16.mxu0 %v284
      %373 = vmatpush1.bf16.msra.mxu0 %v281
      %374 = vmatprep.subr.bf16.mxu0 0
      %375 = vmatpush1.bf16.msra.mxu0 0
      %376 = vmatprep.subr.bf16.mxu0 0
      %377 = vmatpush1.bf16.msra.mxu0 0
      %378 = vmatprep.subr.bf16.mxu0 0
      %379 = vmatpush1.bf16.msra.mxu0 0
      %380 = vmatprep.subr.bf16.mxu0 0
      %381 = vmatpush1.bf16.msra.mxu0 0
      %382 = vmatprep.subr.bf16.mxu0 0
      %383 = vmatpush1.bf16.msra.mxu0 0
      %384 = vmatprep.subr.bf16.mxu0 0
      %385 = vmatpush1.bf16.msra.mxu0 0
      %386 = vmatprep.subr.bf16.mxu0 0
      %387 = vmatpush1.bf16.msra.mxu0 0
      %388 = vmatprep.subr.bf16.mxu0 0
      %389 = vmatpush1.bf16.msra.mxu0 0
      %390 = vmatprep.subr.bf16.mxu0 0
      %391 = vmatpush1.bf16.msra.mxu0 0
      %392 = vmatprep.subr.bf16.mxu0 0
      %393 = vmatpush1.bf16.msra.mxu0 0
      %394 = vmatprep.subr.bf16.mxu0 0
      %395 = vmatpush1.bf16.msra.mxu0 0
      %396 = vmatprep.subr.bf16.mxu0 0
      %397 = vmatpush1.bf16.msra.mxu0 0
      %398 = vmatprep.subr.bf16.mxu0 0
      %399 = vmatpush1.bf16.msra.mxu0 0
      %400 = vmatprep.subr.bf16.mxu0 0
      %401 = vmatpush1.bf16.msra.mxu0 0
      %402 = vmatprep.subr.bf16.mxu0 0
      %403 = vmatpush1.bf16.msra.mxu0 0
      %404 = vmatprep.mubr.bf16.mxu0 0
      %405 = vmatmul.mubr.bf16.gmra.mrb[0].mxu0 %v367
      %v406 = vpop.f32.mrb[0].mxu0
      %v407 = vadd.f32 0.0, %v406
      %v408 = vpop.f32.mrb[0].mxu0
      %v409 = vadd.f32 0.0, %v408
      %v410 = vpop.f32.mrb[0].mxu0
      %v411 = vadd.f32 0.0, %v410
      %v412 = vpop.f32.mrb[0].mxu0
      %v413 = vadd.f32 0.0, %v412
      %414 = vmatprep.mubr.bf16.mxu0 0
      %415 = vmatmul.mubr.bf16.gmra.mrb[0].mxu0 %v370
      %v416 = vpop.f32.mrb[0].mxu0
      %v417 = vadd.f32 0.0, %v416
      %v418 = vpop.f32.mrb[0].mxu0
      %v419 = vadd.f32 0.0, %v418
      %v420 = vpop.f32.mrb[0].mxu0
      %v421 = vadd.f32 0.0, %v420
      %v422 = vpop.f32.mrb[0].mxu0
      %v423 = vadd.f32 0.0, %v422
      %424 = vdwg.mxu0
      %v425 = vpack.c.bf16 %v411, %v407
      %v426 = vpack.c.bf16 %v413, %v409
      %v427 = vpack.c.bf16 %v421, %v417
      %v428 = vpack.c.bf16 %v423, %v419
      %v433 = vunpack.c.l.b16 %v425
      %v434 = vunpack.c.l.b16 %v426
      %v435 = vunpack.c.h.b16 %v425
      %v436 = vunpack.c.h.b16 %v426
      %v437 = vunpack.c.l.b16 %v427
      %v438 = vunpack.c.l.b16 %v428
      %v439 = vunpack.c.h.b16 %v427
      %v440 = vunpack.c.h.b16 %v428
      %v441 = vpack.c.b16 %v434, %v433
      %v442 = vpack.c.b16 %v436, %v435
      %v443 = vpack.c.b16 %v438, %v437
      %v444 = vpack.c.b16 %v440, %v439
      %449 = vst [vmem:[%s259] sm:$0xff] %v441
      %450 = vst [vmem:[%s259 + $0x8] sm:$0xff] %v442
      %451 = vst [vmem:[%s259 + $0x10] sm:$0xff] %v443
      %452 = vst [vmem:[%s259 + $0x18] sm:$0xff] %v444
      %s453 = smul.u32 2, %s21
      %p454 = scmp.lt.s32.totalorder %s20, 1
      %s455 = scalar_select %p454, %s20, 1
      %p456 = scmp.lt.s32.totalorder %s453, 1
      %s457 = scalar_select %p456, %s453, 1
      %s458 = smul.addr %s455, 4
      %s459 = sadd.s32 %s457, %s458
      %s460 = smul.addr %s459, 4
      %s461 = scalar_lea.vmem %s3, %s460
      %s462 = smul.u32 2, %s21
      %p463 = scmp.lt.s32.totalorder %s20, 1
      %s464 = scalar_select %p463, %s20, 1
      %p465 = scmp.lt.s32.totalorder %s462, 1
      %s466 = scalar_select %p465, %s462, 1
      %s467 = smul.addr %s464, 8
      %s468 = sadd.s32 %s466, %s467
      %s469 = smul.addr %s468, 4
      %s470 = scalar_lea.vmem %s4, %s469
      // Predicated region
      $region33: #{edge_module_forward.4} parent=31 // pred_check
        %p471 = pneg %p118
      $region34: #{edge_module_forward.4} parent=31 // pred_check_branch
        %473 = sbr.rel (%p471) target = $region36
      $region35: #{edge_module_forward.4} parent=31 // pred_region
        %s474 = smul.u32 2, %s21
      $region36: #{edge_module_forward.4} parent=31 // pred_fallthru
        _
      // Predicated region
      $region37: #{edge_module_forward.4} parent=31 // pred_check
        %p475 = pneg %p146
      $region38: #{edge_module_forward.4} parent=31 // pred_check_branch
        %477 = sbr.rel (%p475) target = $region40
      $region39: #{edge_module_forward.4} parent=31 // pred_region
        %s478 = smul.u32 2, %s21
      $region40: #{edge_module_forward.4} parent=31 // pred_fallthru
        _
    $region32: #{edge_module_forward.4} parent=5 // pred_fallthru
      _
    %p479 = scmp.le.s32.totalorder 2, %s11
    // Predicated region
    $region41: #{edge_module_forward.4} parent=5 // pred_check
      %p480 = pneg %p479
    $region42: #{edge_module_forward.4} parent=5 // pred_check_branch
      %482 = sbr.rel (%p480) target = $region44
    $region43: #{edge_module_forward.4} parent=5 // pred_region
      %s483 = ssub.s32 %s11, 2
      // Predicated region
      $region45: #{edge_module_forward.4} parent=43 // pred_check
        %p484 = pneg %p124
      $region46: #{edge_module_forward.4} parent=43 // pred_check_branch
        %486 = sbr.rel (%p484) target = $region48
      $region47: #{edge_module_forward.4} parent=43 // pred_region
        %s487 = smul.u32 2, %s23
        %p488 = scmp.lt.s32.totalorder %s22, 1
        %s489 = scalar_select %p488, %s22, 1
        %p490 = scmp.lt.s32.totalorder %s487, 1
        %s491 = scalar_select %p490, %s487, 1
        %s492 = smul.addr %s489, 4
        %s493 = sadd.s32 %s491, %s492
        %s494 = smul.addr %s493, 4
        %s495 = scalar_lea.vmem %s3, %s494
      $region48: #{edge_module_forward.4} parent=43 // pred_fallthru
        _
      // Predicated region
      $region49: #{edge_module_forward.4} parent=43 // pred_check
        %p496 = pneg %p152
      $region50: #{edge_module_forward.4} parent=43 // pred_check_branch
        %498 = sbr.rel (%p496) target = $region52
      $region51: #{edge_module_forward.4} parent=43 // pred_region
        %s499 = smul.u32 2, %s23
        %p500 = scmp.lt.s32.totalorder %s22, 1
        %s501 = scalar_select %p500, %s22, 1
        %p502 = scmp.lt.s32.totalorder %s499, 1
        %s503 = scalar_select %p502, %s499, 1
        %s504 = smul.addr %s501, 8
        %s505 = sadd.s32 %s503, %s504
        %s506 = smul.addr %s505, 4
        %s507 = scalar_lea.vmem %s4, %s506
      $region52: #{edge_module_forward.4} parent=43 // pred_fallthru
        _
    $region44: #{edge_module_forward.4} parent=5 // pred_fallthru
      _
  $region6: #{edge_module_forward.4} parent=0 // loop_footer
    %s15 = sadd.s32 1, %s11
  $region7: #{edge_module_forward.4} parent=0 // loop_footer_branch
    %10 = sbr.rel target = $region3
  $region8: #{edge_module_forward.4} parent=0 // loop_exit
    _

// kernel: edge_module_forward.7
$region0: #{edge_module_forward.7}
  #allocation0 [shape = 'u32[]', space=smem, size = 0x4, offset = 0x4, fixed_abs, tag = 'smem constant byte address 0x4 - core index']
  #allocation1 [shape = 'u32[144,128]{1,0:T(1,128)}', space=vmem, size = 0x12000, scoped, tag = 'internal scratch']
  #allocation2 [shape = 'f32[1,1,1]{2,1,0:T(1,128)S(1)}', space=vmem, size = 0x200, scoped, tag = 'scoped memory for edge_module_forward.7']
  %s0 = inlined_call_operand.vmem [shape: bf16[2,1,16,16], index: 0, kind: input, shape index: {}]
  %s1 = inlined_call_operand.vmem [shape: bf16[2,32,16,16], index: 1, kind: input, shape index: {}]
  %s2 = inlined_call_operand.vmem [shape: bf16[2,1,8,8], index: 2, kind: input, shape index: {}]
  %s3 = inlined_call_operand.vmem [shape: bf16[2,32,8,8], index: 3, kind: input, shape index: {}]
  %s4 = inlined_call_operand.vmem [shape: bf16[2,1,4,4], index: 4, kind: input, shape index: {}]
  %s5 = inlined_call_operand.vmem [shape: bf16[2,32,4,4], index: 5, kind: input, shape index: {}]
  %s6 = inlined_call_operand.vmem [shape: bf16[16,8], index: 6, kind: input, shape index: {}, may-alias: {6,7}]
  %s7 = inlined_call_operand.vmem [shape: bf16[16,8], index: 7, kind: input, shape index: {}, may-alias: {6,7}]
  %s8 = inlined_call_operand.vmem [shape: bf16[16,4], index: 8, kind: input, shape index: {}, may-alias: {8,9}]
  %s9 = inlined_call_operand.vmem [shape: bf16[16,4], index: 9, kind: input, shape index: {}, may-alias: {8,9}]
  %s10 = inlined_call_operand.<no memory space> [shape: f32[1,1,1], index: 10, kind: input, shape index: {}]
  %s11 = inlined_call_operand.vmem [shape: f32[32,1,1], index: 11, kind: input, shape index: {}]
  %s12 = inlined_call_operand.hbm [shape: f32[2,1,16,16], index: 12, kind: output, shape index: {0}]
  %s13 = inlined_call_operand.vmem [shape: f32[2,32,16,16], index: 13, kind: output, shape index: {1}]
  %14 = xla_tuple %s12, %s13
  %s15 = sld [smem:[#allocation0]]
  $region89: #{edge_module_forward.7} parent=0
    _
  %s17 = ssub.s32 1, %s15
  %s18 = scalar_select 0, %s17, %s15
  %v19 = vstv %s10
  %20 = vst [vmem:[#allocation2] sm:$0x1] %v19
  $region1: #{edge_module_forward.7} parent=0
    #allocation3 [shape = 'u8[16384]{0}', space=vmem, size = 0x4000, scoped, tag = 'output window, operand 0']
    #allocation4 [shape = 's32[2]{0}', space=sflag, size = 0x8, scoped, tag = 'scoped memory for edge_module_forward.7']
    %21 = vsyncpa [#allocation4], 0
    %s22 = scalar_lea.sflag [#allocation4], 1
    %23 = vsyncpa %s22, 0
    loop: start=0, step=1, limit=4
    $region2: #{edge_module_forward.7} parent=1 // loop_pre_header
      _
    $region3: #{edge_module_forward.7} parent=1 // loop_header
      %s25 = sphi 0, %s29
      %p26 = scmp.ge.s32.totalorder %s25, 4
      %s32 = sphi 0, %s44
      %s33 = sphi 0, %s40
      %s34 = sphi 0, %s32
      %s35 = sphi 0, %s33
      %s36 = sphi 0, %s34
      %s37 = sphi 0, %s35
      %s49 = sphi 0, %s51
      %s52 = sphi 0, %s49
      %s53 = sphi 0, %s52
      %s69 = sphi 0, %s53
      %s77 = sphi 0, %s79
      %s80 = sphi 0, %s77
      %s81 = sphi 0, %s80
      %s97 = sphi 0, %s81
      %s103 = sphi 0, %s105
      %s106 = sphi 0, %s103
      %s107 = sphi 0, %s106
      %s123 = sphi 0, %s107
      %s129 = sphi 0, %s131
      %s132 = sphi 0, %s129
      %s133 = sphi 0, %s132
      %s149 = sphi 0, %s133
      %s155 = sphi 0, %s157
      %s158 = sphi 0, %s155
      %s159 = sphi 0, %s158
      %s175 = sphi 0, %s159
      %s181 = sphi 0, %s183
      %s184 = sphi 0, %s181
      %s185 = sphi 0, %s184
      %s201 = sphi 0, %s185
      %s207 = sphi 0, %s209
      %s210 = sphi 0, %s207
      %s211 = sphi 0, %s210
      %s227 = sphi 0, %s211
      %s231 = sphi 0, %s231
      %s233 = sphi 0, %s231
      %s234 = sphi 0, %s233
      %s248 = sphi 0, %s234
      %s254 = sphi 0, %s256
      %s257 = sphi 0, %s254
      %s258 = sphi 0, %s257
      %s274 = sphi 0, %s258
      %s278 = sphi 0, %s278
      %s280 = sphi 0, %s278
      %s281 = sphi 0, %s280
      %s295 = sphi 0, %s281
      %s299 = sphi 0, %s299
      %s301 = sphi 0, %s299
      %s302 = sphi 0, %s301
      %s316 = sphi 0, %s302
      %s320 = sphi 0, %s320
      %s322 = sphi 0, %s320
      %s323 = sphi 0, %s322
      %s337 = sphi 0, %s323
      %s345 = sphi 0, %s347
      %s348 = sphi 0, %s345
      %s349 = sphi 0, %s348
      %s365 = sphi 0, %s349
      %s373 = sphi 0, %s375
      %s376 = sphi 0, %s373
      %s377 = sphi 0, %s376
      %s393 = sphi 0, %s377
    $region4: #{edge_module_forward.7} parent=1 // loop_header_branch
      %28 = sbr.rel (%p26) target = $region8
    $region5: #{edge_module_forward.7} parent=1 // loop_body
      %s30 = ssub.s32 %s25, 1
      %s31 = ssub.s32 %s25, 2
      %s38 = sadd.s32 1, %s33
      %p39 = scmp.ge.s32.totalorder %s38, 1
      %s40 = scalar_select %p39, 0, %s38
      %s41 = sadd.s32 1, %s32
      %s42 = scalar_select %p39, %s41, %s32
      %p43 = scmp.ge.s32.totalorder %s42, 2
      %s44 = scalar_select %p43, 0, %s42
      %s45 = ssub.s32 %s32, %s44
      %s46 = ssub.s32 %s33, %s40
      %s47 = sor.u32 %s45, %s46
      %p48 = scmp.eq.s32.totalorder %s47, 0
      %s50 = sadd.s32 %s49, 1
      %s51 = scalar_select %p48, %s49, %s50
      %p54 = pneg %p48
      %p55 = scmp.eq.s32.totalorder %s25, 1
      %p56 = por %p54, %p55
      %p57 = scmp.ne.s32.totalorder %s49, %s52
      %p58 = scmp.eq.s32.totalorder %s25, 0
      %p59 = por %p57, %p58
      %p60 = scmp.ne.s32.totalorder %s49, %s52
      %p61 = scmp.eq.s32.totalorder %s30, 1
      %p62 = por %p60, %p61
      %p63 = scmp.ne.s32.totalorder %s52, %s53
      %p64 = scmp.eq.s32.totalorder %s30, 0
      %p65 = por %p63, %p64
      %p66 = scmp.ne.s32.totalorder %s52, %s53
      %p67 = scmp.eq.s32.totalorder %s31, 1
      %p68 = por %p66, %p67
      %p70 = scmp.ne.s32.totalorder %s53, %s69
      %p71 = scmp.eq.s32.totalorder %s31, 0
      %p72 = por %p70, %p71
      %s73 = ssub.s32 %s32, %s44
      %s74 = ssub.s32 %s33, %s40
      %s75 = sor.u32 %s73, %s74
      %p76 = scmp.eq.s32.totalorder %s75, 0
      %s78 = sadd.s32 %s77, 1
      %s79 = scalar_select %p76, %s77, %s78
      %p82 = pneg %p76
      %p83 = scmp.eq.s32.totalorder %s25, 1
      %p84 = por %p82, %p83
      %p85 = scmp.ne.s32.totalorder %s77, %s80
      %p86 = scmp.eq.s32.totalorder %s25, 0
      %p87 = por %p85, %p86
      %p88 = scmp.ne.s32.totalorder %s77, %s80
      %p89 = scmp.eq.s32.totalorder %s30, 1
      %p90 = por %p88, %p89
      %p91 = scmp.ne.s32.totalorder %s80, %s81
      %p92 = scmp.eq.s32.totalorder %s30, 0
      %p93 = por %p91, %p92
      %p94 = scmp.ne.s32.totalorder %s80, %s81
      %p95 = scmp.eq.s32.totalorder %s31, 1
      %p96 = por %p94, %p95
      %p98 = scmp.ne.s32.totalorder %s81, %s97
      %p99 = scmp.eq.s32.totalorder %s31, 0
      %p100 = por %p98, %p99
      %s101 = ssub.s32 %s32, %s44
      %p102 = scmp.eq.s32.totalorder %s101, 0
      %s104 = sadd.s32 %s103, 1
      %s105 = scalar_select %p102, %s103, %s104
      %p108 = pneg %p102
      %p109 = scmp.eq.s32.totalorder %s25, 1
      %p110 = por %p108, %p109
      %p111 = scmp.ne.s32.totalorder %s103, %s106
      %p112 = scmp.eq.s32.totalorder %s25, 0
      %p113 = por %p111, %p112
      %p114 = scmp.ne.s32.totalorder %s103, %s106
      %p115 = scmp.eq.s32.totalorder %s30, 1
      %p116 = por %p114, %p115
      %p117 = scmp.ne.s32.totalorder %s106, %s107
      %p118 = scmp.eq.s32.totalorder %s30, 0
      %p119 = por %p117, %p118
      %p120 = scmp.ne.s32.totalorder %s106, %s107
      %p121 = scmp.eq.s32.totalorder %s31, 1
      %p122 = por %p120, %p121
      %p124 = scmp.ne.s32.totalorder %s107, %s123
      %p125 = scmp.eq.s32.totalorder %s31, 0
      %p126 = por %p124, %p125
      %s127 = ssub.s32 %s32, %s44
      %p128 = scmp.eq.s32.totalorder %s127, 0
      %s130 = sadd.s32 %s129, 1
      %s131 = scalar_select %p128, %s129, %s130
      %p134 = pneg %p128
      %p135 = scmp.eq.s32.totalorder %s25, 1
      %p136 = por %p134, %p135
      %p137 = scmp.ne.s32.totalorder %s129, %s132
      %p138 = scmp.eq.s32.totalorder %s25, 0
      %p139 = por %p137, %p138
      %p140 = scmp.ne.s32.totalorder %s129, %s132
      %p141 = scmp.eq.s32.totalorder %s30, 1
      %p142 = por %p140, %p141
      %p143 = scmp.ne.s32.totalorder %s132, %s133
      %p144 = scmp.eq.s32.totalorder %s30, 0
      %p145 = por %p143, %p144
      %p146 = scmp.ne.s32.totalorder %s132, %s133
      %p147 = scmp.eq.s32.totalorder %s31, 1
      %p148 = por %p146, %p147
      %p150 = scmp.ne.s32.totalorder %s133, %s149
      %p151 = scmp.eq.s32.totalorder %s31, 0
      %p152 = por %p150, %p151
      %s153 = ssub.s32 %s32, %s44
      %p154 = scmp.eq.s32.totalorder %s153, 0
      %s156 = sadd.s32 %s155, 1
      %s157 = scalar_select %p154, %s155, %s156
      %p160 = pneg %p154
      %p161 = scmp.eq.s32.totalorder %s25, 1
      %p162 = por %p160, %p161
      %p163 = scmp.ne.s32.totalorder %s155, %s158
      %p164 = scmp.eq.s32.totalorder %s25, 0
      %p165 = por %p163, %p164
      %p166 = scmp.ne.s32.totalorder %s155, %s158
      %p167 = scmp.eq.s32.totalorder %s30, 1
      %p168 = por %p166, %p167
      %p169 = scmp.ne.s32.totalorder %s158, %s159
      %p170 = scmp.eq.s32.totalorder %s30, 0
      %p171 = por %p169, %p170
      %p172 = scmp.ne.s32.totalorder %s158, %s159
      %p173 = scmp.eq.s32.totalorder %s31, 1
      %p174 = por %p172, %p173
      %p176 = scmp.ne.s32.totalorder %s159, %s175
      %p177 = scmp.eq.s32.totalorder %s31, 0
      %p178 = por %p176, %p177
      %s179 = ssub.s32 %s32, %s44
      %p180 = scmp.eq.s32.totalorder %s179, 0
      %s182 = sadd.s32 %s181, 1
      %s183 = scalar_select %p180, %s181, %s182
      %p186 = pneg %p180
      %p187 = scmp.eq.s32.totalorder %s25, 1
      %p188 = por %p186, %p187
      %p189 = scmp.ne.s32.totalorder %s181, %s184
      %p190 = scmp.eq.s32.totalorder %s25, 0
      %p191 = por %p189, %p190
      %p192 = scmp.ne.s32.totalorder %s181, %s184
      %p193 = scmp.eq.s32.totalorder %s30, 1
      %p194 = por %p192, %p193
      %p195 = scmp.ne.s32.totalorder %s184, %s185
      %p196 = scmp.eq.s32.totalorder %s30, 0
      %p197 = por %p195, %p196
      %p198 = scmp.ne.s32.totalorder %s184, %s185
      %p199 = scmp.eq.s32.totalorder %s31, 1
      %p200 = por %p198, %p199
      %p202 = scmp.ne.s32.totalorder %s185, %s201
      %p203 = scmp.eq.s32.totalorder %s31, 0
      %p204 = por %p202, %p203
      %s205 = ssub.s32 %s33, %s40
      %p206 = scmp.eq.s32.totalorder %s205, 0
      %s208 = sadd.s32 %s207, 1
      %s209 = scalar_select %p206, %s207, %s208
      %p212 = pneg %p206
      %p213 = scmp.eq.s32.totalorder %s25, 1
      %p214 = por %p212, %p213
      %p215 = scmp.ne.s32.totalorder %s207, %s210
      %p216 = scmp.eq.s32.totalorder %s25, 0
      %p217 = por %p215, %p216
      %p218 = scmp.ne.s32.totalorder %s207, %s210
      %p219 = scmp.eq.s32.totalorder %s30, 1
      %p220 = por %p218, %p219
      %p221 = scmp.ne.s32.totalorder %s210, %s211
      %p222 = scmp.eq.s32.totalorder %s30, 0
      %p223 = por %p221, %p222
      %p224 = scmp.ne.s32.totalorder %s210, %s211
      %p225 = scmp.eq.s32.totalorder %s31, 1
      %p226 = por %p224, %p225
      %p228 = scmp.ne.s32.totalorder %s211, %s227
      %p229 = scmp.eq.s32.totalorder %s31, 0
      %p230 = por %p228, %p229
      %s232 = sadd.s32 %s231, 1
      %p235 = scmp.eq.s32.totalorder %s25, 1
      %p236 = scmp.ne.s32.totalorder %s231, %s233
      %p237 = scmp.eq.s32.totalorder %s25, 0
      %p238 = por %p236, %p237
      %p239 = scmp.ne.s32.totalorder %s231, %s233
      %p240 = scmp.eq.s32.totalorder %s30, 1
      %p241 = por %p239, %p240
      %p242 = scmp.ne.s32.totalorder %s233, %s234
      %p243 = scmp.eq.s32.totalorder %s30, 0
      %p244 = por %p242, %p243
      %p245 = scmp.ne.s32.totalorder %s233, %s234
      %p246 = scmp.eq.s32.totalorder %s31, 1
      %p247 = por %p245, %p246
      %p249 = scmp.ne.s32.totalorder %s234, %s248
      %p250 = scmp.eq.s32.totalorder %s31, 0
      %p251 = por %p249, %p250
      %s252 = ssub.s32 %s33, %s40
      %p253 = scmp.eq.s32.totalorder %s252, 0
      %s255 = sadd.s32 %s254, 1
      %s256 = scalar_select %p253, %s254, %s255
      %p259 = pneg %p253
      %p260 = scmp.eq.s32.totalorder %s25, 1
      %p261 = por %p259, %p260
      %p262 = scmp.ne.s32.totalorder %s254, %s257
      %p263 = scmp.eq.s32.totalorder %s25, 0
      %p264 = por %p262, %p263
      %p265 = scmp.ne.s32.totalorder %s254, %s257
      %p266 = scmp.eq.s32.totalorder %s30, 1
      %p267 = por %p265, %p266
      %p268 = scmp.ne.s32.totalorder %s257, %s258
      %p269 = scmp.eq.s32.totalorder %s30, 0
      %p270 = por %p268, %p269
      %p271 = scmp.ne.s32.totalorder %s257, %s258
      %p272 = scmp.eq.s32.totalorder %s31, 1
      %p273 = por %p271, %p272
      %p275 = scmp.ne.s32.totalorder %s258, %s274
      %p276 = scmp.eq.s32.totalorder %s31, 0
      %p277 = por %p275, %p276
      %s279 = sadd.s32 %s278, 1
      %p282 = scmp.eq.s32.totalorder %s25, 1
      %p283 = scmp.ne.s32.totalorder %s278, %s280
      %p284 = scmp.eq.s32.totalorder %s25, 0
      %p285 = por %p283, %p284
      %p286 = scmp.ne.s32.totalorder %s278, %s280
      %p287 = scmp.eq.s32.totalorder %s30, 1
      %p288 = por %p286, %p287
      %p289 = scmp.ne.s32.totalorder %s280, %s281
      %p290 = scmp.eq.s32.totalorder %s30, 0
      %p291 = por %p289, %p290
      %p292 = scmp.ne.s32.totalorder %s280, %s281
      %p293 = scmp.eq.s32.totalorder %s31, 1
      %p294 = por %p292, %p293
      %p296 = scmp.ne.s32.totalorder %s281, %s295
      %p297 = scmp.eq.s32.totalorder %s31, 0
      %p298 = por %p296, %p297
      %s300 = sadd.s32 %s299, 1
      %p303 = scmp.eq.s32.totalorder %s25, 1
      %p304 = scmp.ne.s32.totalorder %s299, %s301
      %p305 = scmp.eq.s32.totalorder %s25, 0
      %p306 = por %p304, %p305
      %p307 = scmp.ne.s32.totalorder %s299, %s301
      %p308 = scmp.eq.s32.totalorder %s30, 1
      %p309 = por %p307, %p308
      %p310 = scmp.ne.s32.totalorder %s301, %s302
      %p311 = scmp.eq.s32.totalorder %s30, 0
      %p312 = por %p310, %p311
      %p313 = scmp.ne.s32.totalorder %s301, %s302
      %p314 = scmp.eq.s32.totalorder %s31, 1
      %p315 = por %p313, %p314
      %p317 = scmp.ne.s32.totalorder %s302, %s316
      %p318 = scmp.eq.s32.totalorder %s31, 0
      %p319 = por %p317, %p318
      %s321 = sadd.s32 %s320, 1
      %p324 = scmp.eq.s32.totalorder %s25, 1
      %p325 = scmp.ne.s32.totalorder %s320, %s322
      %p326 = scmp.eq.s32.totalorder %s25, 0
      %p327 = por %p325, %p326
      %p328 = scmp.ne.s32.totalorder %s320, %s322
      %p329 = scmp.eq.s32.totalorder %s30, 1
      %p330 = por %p328, %p329
      %p331 = scmp.ne.s32.totalorder %s322, %s323
      %p332 = scmp.eq.s32.totalorder %s30, 0
      %p333 = por %p331, %p332
      %p334 = scmp.ne.s32.totalorder %s322, %s323
      %p335 = scmp.eq.s32.totalorder %s31, 1
      %p336 = por %p334, %p335
      %p338 = scmp.ne.s32.totalorder %s323, %s337
      %p339 = scmp.eq.s32.totalorder %s31, 0
      %p340 = por %p338, %p339
      %s341 = ssub.s32 %s32, %s44
      %s342 = ssub.s32 %s33, %s40
      %s343 = sor.u32 %s341, %s342
      %p344 = scmp.eq.s32.totalorder %s343, 0
      %s346 = sadd.s32 %s345, 1
      %s347 = scalar_select %p344, %s345, %s346
      %p350 = pneg %p344
      %p351 = scmp.eq.s32.totalorder %s25, 1
      %p352 = por %p350, %p351
      %p353 = scmp.ne.s32.totalorder %s345, %s348
      %p354 = scmp.eq.s32.totalorder %s25, 0
      %p355 = por %p353, %p354
      %p356 = scmp.ne.s32.totalorder %s345, %s348
      %p357 = scmp.eq.s32.totalorder %s30, 1
      %p358 = por %p356, %p357
      %p359 = scmp.ne.s32.totalorder %s348, %s349
      %p360 = scmp.eq.s32.totalorder %s30, 0
      %p361 = por %p359, %p360
      %p362 = scmp.ne.s32.totalorder %s348, %s349
      %p363 = scmp.eq.s32.totalorder %s31, 1
      %p364 = por %p362, %p363
      %p366 = scmp.ne.s32.totalorder %s349, %s365
      %p367 = scmp.eq.s32.totalorder %s31, 0
      %p368 = por %p366, %p367
      %s369 = ssub.s32 %s32, %s44
      %s370 = ssub.s32 %s33, %s40
      %s371 = sor.u32 %s369, %s370
      %p372 = scmp.eq.s32.totalorder %s371, 0
      %s374 = sadd.s32 %s373, 1
      %s375 = scalar_select %p372, %s373, %s374
      %p378 = pneg %p372
      %p379 = scmp.eq.s32.totalorder %s25, 1
      %p380 = por %p378, %p379
      %p381 = scmp.ne.s32.totalorder %s373, %s376
      %p382 = scmp.eq.s32.totalorder %s25, 0
      %p383 = por %p381, %p382
      %p384 = scmp.ne.s32.totalorder %s373, %s376
      %p385 = scmp.eq.s32.totalorder %s30, 1
      %p386 = por %p384, %p385
      %p387 = scmp.ne.s32.totalorder %s376, %s377
      %p388 = scmp.eq.s32.totalorder %s30, 0
      %p389 = por %p387, %p388
      %p390 = scmp.ne.s32.totalorder %s376, %s377
      %p391 = scmp.eq.s32.totalorder %s31, 1
      %p392 = por %p390, %p391
      %p394 = scmp.ne.s32.totalorder %s377, %s393
      %p395 = scmp.eq.s32.totalorder %s31, 0
      %p396 = por %p394, %p395
      %p397 = scmp.le.s32.totalorder 1, %s25
      %p398 = scmp.lt.s32.totalorder %s25, 3
      %p399 = pnand %p397, %p398
      %p400 = pneg %p399
      // Predicated region
      $region9: #{edge_module_forward.7} parent=5 // pred_check
        _
      $region10: #{edge_module_forward.7} parent=5 // pred_check_branch
        %402 = sbr.rel (%p399) target = $region12
      $region11: #{edge_module_forward.7} parent=5 // pred_region
        %s403 = ssub.s32 %s25, 1
        // Predicated region
        $region13: #{edge_module_forward.7} parent=11 // pred_check
          %p404 = pneg %p223
        $region14: #{edge_module_forward.7} parent=11 // pred_check_branch
          %406 = sbr.rel (%p404) target = $region16
        $region15: #{edge_module_forward.7} parent=11 // pred_region
          %s407 = smul.u32 2, %s35
          %p408 = scmp.lt.s32.totalorder %s407, 1
          %s409 = scalar_select %p408, %s407, 1
          %s410 = smul.addr %s409, 4
          %s411 = scalar_lea.vmem %s6, %s410
          %s412 = smul.u32 2, %s35
        $region16: #{edge_module_forward.7} parent=11 // pred_fallthru
          _
        // Predicated region
        $region17: #{edge_module_forward.7} parent=11 // pred_check
          %p413 = pneg %p244
        $region18: #{edge_module_forward.7} parent=11 // pred_check_branch
          %415 = sbr.rel (%p413) target = $region20
        $region19: #{edge_module_forward.7} parent=11 // pred_region
          _
        $region20: #{edge_module_forward.7} parent=11 // pred_fallthru
          _
        // Predicated region
        $region21: #{edge_module_forward.7} parent=11 // pred_check
          %p416 = pneg %p270
        $region22: #{edge_module_forward.7} parent=11 // pred_check_branch
          %418 = sbr.rel (%p416) target = $region24
        $region23: #{edge_module_forward.7} parent=11 // pred_region
          %s419 = smul.u32 2, %s35
          %p420 = scmp.lt.s32.totalorder %s419, 1
          %s421 = scalar_select %p420, %s419, 1
          %s422 = smul.addr %s421, 4
          %s423 = scalar_lea.vmem %s8, %s422
          %s424 = smul.u32 2, %s35
        $region24: #{edge_module_forward.7} parent=11 // pred_fallthru
          _
        // Predicated region
        $region25: #{edge_module_forward.7} parent=11 // pred_check
          %p425 = pneg %p291
        $region26: #{edge_module_forward.7} parent=11 // pred_check_branch
          %427 = sbr.rel (%p425) target = $region28
        $region27: #{edge_module_forward.7} parent=11 // pred_region
          _
        $region28: #{edge_module_forward.7} parent=11 // pred_fallthru
          _
        // Predicated region
        $region29: #{edge_module_forward.7} parent=11 // pred_check
          %p428 = pneg %p312
        $region30: #{edge_module_forward.7} parent=11 // pred_check_branch
          %430 = sbr.rel (%p428) target = $region32
        $region31: #{edge_module_forward.7} parent=11 // pred_region
          _
        $region32: #{edge_module_forward.7} parent=11 // pred_fallthru
          _
        // Predicated region
        $region33: #{edge_module_forward.7} parent=11 // pred_check
          %p431 = pneg %p333
        $region34: #{edge_module_forward.7} parent=11 // pred_check_branch
          %433 = sbr.rel (%p431) target = $region36
        $region35: #{edge_module_forward.7} parent=11 // pred_region
          _
        $region36: #{edge_module_forward.7} parent=11 // pred_fallthru
          _
      $region12: #{edge_module_forward.7} parent=5 // pred_fallthru
        _
      %p434 = scmp.lt.s32.totalorder %s25, 2
      // Predicated region
      $region37: #{edge_module_forward.7} parent=5 // pred_check
        %p435 = pneg %p434
      $region38: #{edge_module_forward.7} parent=5 // pred_check_branch
        %437 = sbr.rel (%p435) target = $region40
      $region39: #{edge_module_forward.7} parent=5 // pred_region
        // Predicated region
        $region41: #{edge_module_forward.7} parent=39 // pred_check
          %p438 = pneg %p59
        $region42: #{edge_module_forward.7} parent=39 // pred_check_branch
          %440 = sbr.rel (%p438) target = $region44
        $region43: #{edge_module_forward.7} parent=39 // pred_region
          %s441 = smul.u32 2, %s33
          %p442 = scmp.lt.s32.totalorder %s32, 1
          %s443 = scalar_select %p442, %s32, 1
          %p444 = scmp.lt.s32.totalorder %s441, 1
          %s445 = scalar_select %p444, %s441, 1
          %s446 = smul.addr %s443, 2
          %s447 = sadd.s32 %s445, %s446
          %s448 = smul.addr %s447, 4
          %s449 = scalar_lea.vmem %s0, %s448
          %s450 = smul.u32 2, %s33
        $region44: #{edge_module_forward.7} parent=39 // pred_fallthru
          _
        // Predicated region
        $region45: #{edge_module_forward.7} parent=39 // pred_check
          %p451 = pneg %p87
        $region46: #{edge_module_forward.7} parent=39 // pred_check_branch
          %453 = sbr.rel (%p451) target = $region48
        $region47: #{edge_module_forward.7} parent=39 // pred_region
          %s454 = smul.u32 2, %s33
          %p455 = scmp.lt.s32.totalorder %s32, 1
          %s456 = scalar_select %p455, %s32, 1
          %p457 = scmp.lt.s32.totalorder %s454, 1
          %s458 = scalar_select %p457, %s454, 1
          %s459 = smul.addr %s456, 64
          %s460 = sadd.s32 %s458, %s459
          %s461 = smul.addr %s460, 4
          %s462 = scalar_lea.vmem %s1, %s461
          %s463 = smul.u32 2, %s33
        $region48: #{edge_module_forward.7} parent=39 // pred_fallthru
          _
        // Predicated region
        $region49: #{edge_module_forward.7} parent=39 // pred_check
          %p464 = pneg %p113
        $region50: #{edge_module_forward.7} parent=39 // pred_check_branch
          %466 = sbr.rel (%p464) target = $region52
        $region51: #{edge_module_forward.7} parent=39 // pred_region
          %p467 = scmp.lt.s32.totalorder %s32, 1
          %s468 = scalar_select %p467, %s32, 1
          %s469 = smul.addr %s468, 4
          %s470 = scalar_lea.vmem %s2, %s469
        $region52: #{edge_module_forward.7} parent=39 // pred_fallthru
          _
        // Predicated region
        $region53: #{edge_module_forward.7} parent=39 // pred_check
          %p471 = pneg %p139
        $region54: #{edge_module_forward.7} parent=39 // pred_check_branch
          %473 = sbr.rel (%p471) target = $region56
        $region55: #{edge_module_forward.7} parent=39 // pred_region
          %p474 = scmp.lt.s32.totalorder %s32, 1
          %s475 = scalar_select %p474, %s32, 1
          %s476 = smul.addr %s475, 32
          %s477 = smul.addr %s476, 4
          %s478 = scalar_lea.vmem %s3, %s477
        $region56: #{edge_module_forward.7} parent=39 // pred_fallthru
          _
        // Predicated region
        $region57: #{edge_module_forward.7} parent=39 // pred_check
          %p479 = pneg %p165
        $region58: #{edge_module_forward.7} parent=39 // pred_check_branch
          %481 = sbr.rel (%p479) target = $region60
        $region59: #{edge_module_forward.7} parent=39 // pred_region
          %p482 = scmp.lt.s32.totalorder %s32, 1
          %s483 = scalar_select %p482, %s32, 1
          %s484 = smul.addr %s483, 2
          %s485 = scalar_lea.vmem %s4, %s484
        $region60: #{edge_module_forward.7} parent=39 // pred_fallthru
          _
        // Predicated region
        $region61: #{edge_module_forward.7} parent=39 // pred_check
          %p486 = pneg %p191
        $region62: #{edge_module_forward.7} parent=39 // pred_check_branch
          %488 = sbr.rel (%p486) target = $region64
        $region63: #{edge_module_forward.7} parent=39 // pred_region
          %p489 = scmp.lt.s32.totalorder %s32, 1
          %s490 = scalar_select %p489, %s32, 1
          %s491 = smul.addr %s490, 32
          %s492 = smul.addr %s491, 2
          %s493 = scalar_lea.vmem %s5, %s492
        $region64: #{edge_module_forward.7} parent=39 // pred_fallthru
          _
      $region40: #{edge_module_forward.7} parent=5 // pred_fallthru
        _
      %p494 = scmp.le.s32.totalorder 1, %s25
      %p495 = scmp.lt.s32.totalorder %s25, 3
      %p496 = pnand %p494, %p495
      %p497 = pneg %p496
      // Predicated region
      $region65: #{edge_module_forward.7} parent=5 // pred_check
        _
      $region66: #{edge_module_forward.7} parent=5 // pred_check_branch
        %499 = sbr.rel (%p496) target = $region68
      $region67: #{edge_module_forward.7} parent=5 // pred_region
        %s500 = ssub.s32 %s25, 1
        %s501 = smul.u32 2, %s35
        %p502 = scmp.lt.s32.totalorder %s34, 1
        %s503 = scalar_select %p502, %s34, 1
        %p504 = scmp.lt.s32.totalorder %s501, 1
        %s505 = scalar_select %p504, %s501, 1
        %s506 = smul.addr %s503, 2
        %s507 = sadd.s32 %s505, %s506
        %s508 = smul.addr %s507, 4
        %s509 = scalar_lea.vmem %s0, %s508
        %p510 = pneg %p65
        %p511 = pneg %p62
        %s512 = smul.u32 2, %s35
        %p513 = scmp.lt.s32.totalorder %s34, 1
        %s514 = scalar_select %p513, %s34, 1
        %p515 = scmp.lt.s32.totalorder %s512, 1
        %s516 = scalar_select %p515, %s512, 1
        %s517 = smul.addr %s514, 64
        %s518 = sadd.s32 %s516, %s517
        %s519 = smul.addr %s518, 4
        %s520 = scalar_lea.vmem %s1, %s519
        %p521 = pneg %p93
        %p522 = pneg %p90
        %p523 = scmp.lt.s32.totalorder %s34, 1
        %s524 = scalar_select %p523, %s34, 1
        %s525 = smul.addr %s524, 4
        %s526 = scalar_lea.vmem %s2, %s525
        %p527 = pneg %p119
        %p528 = pneg %p116
        %p529 = scmp.lt.s32.totalorder %s34, 1
        %s530 = scalar_select %p529, %s34, 1
        %s531 = smul.addr %s530, 32
        %s532 = smul.addr %s531, 4
        %s533 = scalar_lea.vmem %s3, %s532
        %p534 = pneg %p145
        %p535 = pneg %p142
        %p536 = scmp.lt.s32.totalorder %s34, 1
        %s537 = scalar_select %p536, %s34, 1
        %s538 = smul.addr %s537, 2
        %s539 = scalar_lea.vmem %s4, %s538
        %p540 = pneg %p171
        %p541 = pneg %p168
        %p542 = scmp.lt.s32.totalorder %s34, 1
        %s543 = scalar_select %p542, %s34, 1
        %s544 = smul.addr %s543, 32
        %s545 = smul.addr %s544, 2
        %s546 = scalar_lea.vmem %s5, %s545
        %p547 = pneg %p197
        %p548 = pneg %p194
        %s549 = smul.u32 2, %s35
        %p550 = scmp.lt.s32.totalorder %s549, 1
        %s551 = scalar_select %p550, %s549, 1
        %s552 = smul.addr %s551, 4
        %s553 = scalar_lea.vmem %s6, %s552
        %p554 = pneg %p223
        %p555 = pneg %p220
        %p556 = pneg %p244
        %p557 = pneg %p241
        %s558 = smul.u32 2, %s35
        %p559 = scmp.lt.s32.totalorder %s558, 1
        %s560 = scalar_select %p559, %s558, 1
        %s561 = smul.addr %s560, 4
        %s562 = scalar_lea.vmem %s8, %s561
        %p563 = pneg %p270
        %p564 = pneg %p267
        %p565 = pneg %p291
        %p566 = pneg %p288
        %p567 = pneg %p312
        %p568 = pneg %p309
        %p569 = pneg %p333
        %p570 = pneg %p330
        %p571 = pneg %p361
        %p572 = pneg %p358
        %s573 = sand.u32 %s348, 1
        %s574 = scalar_lea.sflag [#allocation4], %s573
        %s575 = sand.u32 %s348, 1
        %s576 = smul.addr %s575, 16
        %s577 = scalar_lea.vmem [#allocation3], %s576
        %p578 = pneg %p389
        %p579 = pneg %p386
        %s580 = smul.u32 2, %s35
        %p581 = scmp.lt.s32.totalorder %s34, 1
        %s582 = scalar_select %p581, %s34, 1
        %p583 = scmp.lt.s32.totalorder %s580, 1
        %s584 = scalar_select %p583, %s580, 1
        %s585 = smul.addr %s582, 64
        %s586 = sadd.s32 %s584, %s585
        %s587 = smul.addr %s586, 8
        %s588 = scalar_lea.vmem %s13, %s587
        %s589 = smul.u32 2, %s35
        %p590 = scmp.lt.s32.totalorder %s34, 1
        %s591 = scalar_select %p590, %s34, 1
        %p592 = scmp.lt.s32.totalorder %s589, 1
        %s593 = scalar_select %p592, %s589, 1
        %s594 = smul.addr %s591, 2
        %s595 = sadd.s32 %s593, %s594
        %s596 = smul.addr %s595, 4
        %s597 = scalar_lea.vmem %s0, %s596
        %s598 = smul.u32 2, %s35
        %s599 = smul.u32 2, %s35
        %p600 = scmp.lt.s32.totalorder %s34, 1
        %s601 = scalar_select %p600, %s34, 1
        %p602 = scmp.lt.s32.totalorder %s599, 1
        %s603 = scalar_select %p602, %s599, 1
        %s604 = smul.addr %s601, 64
        %s605 = sadd.s32 %s603, %s604
        %s606 = smul.addr %s605, 4
        %s607 = scalar_lea.vmem %s1, %s606
        %s608 = smul.u32 2, %s35
        %p609 = scmp.lt.s32.totalorder %s34, 1
        %s610 = scalar_select %p609, %s34, 1
        %s611 = smul.addr %s610, 4
        %s612 = scalar_lea.vmem %s2, %s611
        %p613 = scmp.lt.s32.totalorder %s34, 1
        %s614 = scalar_select %p613, %s34, 1
        %s615 = smul.addr %s614, 32
        %s616 = smul.addr %s615, 4
        %s617 = scalar_lea.vmem %s3, %s616
        %p618 = scmp.lt.s32.totalorder %s34, 1
        %s619 = scalar_select %p618, %s34, 1
        %s620 = smul.addr %s619, 2
        %s621 = scalar_lea.vmem %s4, %s620
        %p622 = scmp.lt.s32.totalorder %s34, 1
        %s623 = scalar_select %p622, %s34, 1
        %s624 = smul.addr %s623, 32
        %s625 = smul.addr %s624, 2
        %s626 = scalar_lea.vmem %s5, %s625
        %s627 = smul.u32 2, %s35
        %p628 = scmp.lt.s32.totalorder %s627, 1
        %s629 = scalar_select %p628, %s627, 1
        %s630 = smul.addr %s629, 4
        %s631 = scalar_lea.vmem %s6, %s630
        %s632 = smul.u32 2, %s35
        %s633 = smul.u32 2, %s35
        %p634 = scmp.lt.s32.totalorder %s633, 1
        %s635 = scalar_select %p634, %s633, 1
        %s636 = smul.addr %s635, 4
        %s637 = scalar_lea.vmem %s8, %s636
        %s638 = smul.u32 2, %s35
        %s639 = smul.u32 2, %s35
        %s640 = smul.u32 2, %s35
        %p641 = scmp.lt.s32.totalorder %s34, 1
        %s642 = scalar_select %p641, %s34, 1
        %p643 = scmp.lt.s32.totalorder %s640, 1
        %s644 = scalar_select %p643, %s640, 1
        %s645 = smul.addr %s642, 64
        %s646 = sadd.s32 %s644, %s645
        %s647 = smul.addr %s646, 8
        %s648 = scalar_lea.vmem %s13, %s647
        %s649 = smul.u32 2, %s35
        %v651 = vld [vmem:[%s597] sm:$0xf]
        %v652 = vld [vmem:[%s597 + $0x4] sm:$0xf]
        %v653 = vunpack.c.l.bf16 %v651
        %v654 = vunpack.c.l.bf16 %v652
        %v655 = vld [vmem:[%s612] sm:$0xf]
        %v656 = vld [vmem:[%s631] sm:$0xf]
        %v657 = vld [vmem:[%s631 + $0x4] sm:$0xf]
        %v660 = vunpack.c.l.b16 %v656
        %v661 = vunpack.c.l.b16 %v657
        %v662 = vpack.c.b16 %v661, %v660
        %vm663 = vcmask 64512
        %v665 = vsel %vm663, %v662, 0
        %vm667 = vcmask 1043456
        %v669 = vsel %vm667, %v655, 0
        %671 = vmatprep.subr.bf16.mxu0 0
        %672 = vmatpush1.bf16.msra.mxu0 %v669
        %673 = vmatprep.subr.bf16.mxu0 0
        %674 = vmatpush1.bf16.msra.mxu0 0
        %675 = vmatprep.subr.bf16.mxu0 0
        %676 = vmatpush1.bf16.msra.mxu0 0
        %677 = vmatprep.subr.bf16.mxu0 0
        %678 = vmatpush1.bf16.msra.mxu0 0
        %679 = vmatprep.subr.bf16.mxu0 0
        %680 = vmatpush1.bf16.msra.mxu0 0
        %681 = vmatprep.subr.bf16.mxu0 0
        %682 = vmatpush1.bf16.msra.mxu0 0
        %683 = vmatprep.subr.bf16.mxu0 0
        %684 = vmatpush1.bf16.msra.mxu0 0
        %685 = vmatprep.subr.bf16.mxu0 0
        %686 = vmatpush1.bf16.msra.mxu0 0
        %687 = vmatprep.subr.bf16.mxu0 0
        %688 = vmatpush1.bf16.msra.mxu0 0
        %689 = vmatprep.subr.bf16.mxu0 0
        %690 = vmatpush1.bf16.msra.mxu0 0
        %691 = vmatprep.subr.bf16.mxu0 0
        %692 = vmatpush1.bf16.msra.mxu0 0
        %693 = vmatprep.subr.bf16.mxu0 0
        %694 = vmatpush1.bf16.msra.mxu0 0
        %695 = vmatprep.subr.bf16.mxu0 0
        %696 = vmatpush1.bf16.msra.mxu0 0
        %697 = vmatprep.subr.bf16.mxu0 0
        %698 = vmatpush1.bf16.msra.mxu0 0
        %699 = vmatprep.subr.bf16.mxu0 0
        %700 = vmatpush1.bf16.msra.mxu0 0
        %701 = vmatprep.subr.bf16.mxu0 0
        %702 = vmatpush1.bf16.msra.mxu0 0
        %703 = vmatprep.mubr.bf16.mxu0 0
        %704 = vmatmul.mubr.bf16.gmra.mrb[0].mxu0 %v665
        %v705 = vpop.f32.mrb[0].mxu0
        %v706 = vadd.f32 0.0, %v705
        %v707 = vpop.f32.mrb[0].mxu0
        %v708 = vpop.f32.mrb[0].mxu0
        %v709 = vadd.f32 0.0, %v708
        %v710 = vpop.f32.mrb[0].mxu0
        %711 = vdwg.mxu0
        %v712 = vld [vmem:[%s7] sm:$0xf]
        %v713 = vld [vmem:[%s7 + $0x4] sm:$0xf]
        %v714 = vpack.c.bf16 %v709, %v706
        %v717 = vunpack.c.l.b16 %v712
        %v718 = vunpack.c.l.b16 %v713
        %v719 = vpack.c.b16 %v718, %v717
        %v721 = vsel %vm663, %v714, 0
        %v724 = vsel %vm663, %v719, 0
        %726 = vmatprep.subr.bf16.mxu0 0
        %727 = vmatpush1.bf16.xpose.msra.mxu0 %v724
        %728 = vmatprep.subr.bf16.mxu0 0
        %729 = vmatpush1.bf16.xpose.msra.mxu0 0
        %730 = vmatprep.subr.bf16.mxu0 0
        %731 = vmatpush1.bf16.xpose.msra.mxu0 0
        %732 = vmatprep.subr.bf16.mxu0 0
        %733 = vmatpush1.bf16.xpose.msra.mxu0 0
        %734 = vmatprep.subr.bf16.mxu0 0
        %735 = vmatpush1.bf16.xpose.msra.mxu0 0
        %736 = vmatprep.subr.bf16.mxu0 0
        %737 = vmatpush1.bf16.xpose.msra.mxu0 0
        %738 = vmatprep.subr.bf16.mxu0 0
        %739 = vmatpush1.bf16.xpose.msra.mxu0 0
        %740 = vmatprep.subr.bf16.mxu0 0
        %741 = vmatpush1.bf16.xpose.msra.mxu0 0
        %742 = vmatprep.subr.bf16.mxu0 0
        %743 = vmatpush1.bf16.xpose.msra.mxu0 0
        %744 = vmatprep.subr.bf16.mxu0 0
        %745 = vmatpush1.bf16.xpose.msra.mxu0 0
        %746 = vmatprep.subr.bf16.mxu0 0
        %747 = vmatpush1.bf16.xpose.msra.mxu0 0
        %748 = vmatprep.subr.bf16.mxu0 0
        %749 = vmatpush1.bf16.xpose.msra.mxu0 0
        %750 = vmatprep.subr.bf16.mxu0 0
        %751 = vmatpush1.bf16.xpose.msra.mxu0 0
        %752 = vmatprep.subr.bf16.mxu0 0
        %753 = vmatpush1.bf16.xpose.msra.mxu0 0
        %754 = vmatprep.subr.bf16.mxu0 0
        %755 = vmatpush1.bf16.xpose.msra.mxu0 0
        %756 = vmatprep.subr.bf16.mxu0 0
        %757 = vmatpush1.bf16.xpose.msra.mxu0 0
        %758 = vmatprep.mubr.bf16.mxu0 0
        %759 = vmatmul.mubr.bf16.gmra.mrb[0].mxu0 %v721
        %v760 = vpop.f32.mrb[0].mxu0
        %v761 = vadd.f32 0.0, %v760
        %v762 = vpop.f32.mrb[0].mxu0
        %v763 = vpop.f32.mrb[0].mxu0
        %v764 = vadd.f32 0.0, %v763
        %v765 = vpop.f32.mrb[0].mxu0
        %766 = vdwg.mxu0
        %v767 = vadd.f32 %v653, %v761
        %v768 = vadd.f32 %v654, %v764
        %v769 = vld [vmem:[%s621] sm:$0x3]
        %v770 = vld [vmem:[%s637] sm:$0xf]
        %v771 = vld [vmem:[%s637 + $0x4] sm:$0xf]
        %v774 = vunpack.c.l.b16 %v770
        %v775 = vunpack.c.l.b16 %v771
        %v776 = vpack.c.b16 %v775, %v774
        %vm777 = vcmask 31744
        %v779 = vsel %vm777, %v776, 0
        %vm781 = vcmask 1041408
        %v783 = vsel %vm781, %v769, 0
        %785 = vmatprep.subr.bf16.mxu0 0
        %786 = vmatpush1.bf16.msra.mxu0 %v783
        %787 = vmatprep.subr.bf16.mxu0 0
        %788 = vmatpush1.bf16.msra.mxu0 0
        %789 = vmatprep.subr.bf16.mxu0 0
        %790 = vmatpush1.bf16.msra.mxu0 0
        %791 = vmatprep.subr.bf16.mxu0 0
        %792 = vmatpush1.bf16.msra.mxu0 0
        %793 = vmatprep.subr.bf16.mxu0 0
        %794 = vmatpush1.bf16.msra.mxu0 0
        %795 = vmatprep.subr.bf16.mxu0 0
        %796 = vmatpush1.bf16.msra.mxu0 0
        %797 = vmatprep.subr.bf16.mxu0 0
        %798 = vmatpush1.bf16.msra.mxu0 0
        %799 = vmatprep.subr.bf16.mxu0 0
        %800 = vmatpush1.bf16.msra.mxu0 0
        %801 = vmatprep.subr.bf16.mxu0 0
        %802 = vmatpush1.bf16.msra.mxu0 0
        %803 = vmatprep.subr.bf16.mxu0 0
        %804 = vmatpush1.bf16.msra.mxu0 0
        %805 = vmatprep.subr.bf16.mxu0 0
        %806 = vmatpush1.bf16.msra.mxu0 0
        %807 = vmatprep.subr.bf16.mxu0 0
        %808 = vmatpush1.bf16.msra.mxu0 0
        %809 = vmatprep.subr.bf16.mxu0 0
        %810 = vmatpush1.bf16.msra.mxu0 0
        %811 = vmatprep.subr.bf16.mxu0 0
        %812 = vmatpush1.bf16.msra.mxu0 0
        %813 = vmatprep.subr.bf16.mxu0 0
        %814 = vmatpush1.bf16.msra.mxu0 0
        %815 = vmatprep.subr.bf16.mxu0 0
        %816 = vmatpush1.bf16.msra.mxu0 0
        %817 = vmatprep.mubr.bf16.mxu0 0
        %818 = vmatmul.mubr.bf16.gmra.mrb[0].mxu0 %v779
        %v819 = vpop.f32.mrb[0].mxu0
        %v820 = vadd.f32 0.0, %v819
        %v821 = vpop.f32.mrb[0].mxu0
        %v822 = vpop.f32.mrb[0].mxu0
        %v823 = vadd.f32 0.0, %v822
        %v824 = vpop.f32.mrb[0].mxu0
        %825 = vdwg.mxu0
        %v826 = vld [vmem:[%s9] sm:$0xf]
        %v827 = vld [vmem:[%s9 + $0x4] sm:$0xf]
        %v828 = vpack.c.bf16 %v823, %v820
        %v831 = vunpack.c.l.b16 %v826
        %v832 = vunpack.c.l.b16 %v827
        %v833 = vpack.c.b16 %v832, %v831
        %v835 = vsel %vm777, %v828, 0
        %v838 = vsel %vm777, %v833, 0
        %840 = vmatprep.subr.bf16.mxu0 0
        %841 = vmatpush1.bf16.xpose.msra.mxu0 %v838
        %842 = vmatprep.subr.bf16.mxu0 0
        %843 = vmatpush1.bf16.xpose.msra.mxu0 0
        %844 = vmatprep.subr.bf16.mxu0 0
        %845 = vmatpush1.bf16.xpose.msra.mxu0 0
        %846 = vmatprep.subr.bf16.mxu0 0
        %847 = vmatpush1.bf16.xpose.msra.mxu0 0
        %848 = vmatprep.subr.bf16.mxu0 0
        %849 = vmatpush1.bf16.xpose.msra.mxu0 0
        %850 = vmatprep.subr.bf16.mxu0 0
        %851 = vmatpush1.bf16.xpose.msra.mxu0 0
        %852 = vmatprep.subr.bf16.mxu0 0
        %853 = vmatpush1.bf16.xpose.msra.mxu0 0
        %854 = vmatprep.subr.bf16.mxu0 0
        %855 = vmatpush1.bf16.xpose.msra.mxu0 0
        %856 = vmatprep.subr.bf16.mxu0 0
        %857 = vmatpush1.bf16.xpose.msra.mxu0 0
        %858 = vmatprep.subr.bf16.mxu0 0
        %859 = vmatpush1.bf16.xpose.msra.mxu0 0
        %860 = vmatprep.subr.bf16.mxu0 0
        %861 = vmatpush1.bf16.xpose.msra.mxu0 0
        %862 = vmatprep.subr.bf16.mxu0 0
        %863 = vmatpush1.bf16.xpose.msra.mxu0 0
        %864 = vmatprep.subr.bf16.mxu0 0
        %865 = vmatpush1.bf16.xpose.msra.mxu0 0
        %866 = vmatprep.subr.bf16.mxu0 0
        %867 = vmatpush1.bf16.xpose.msra.mxu0 0
        %868 = vmatprep.subr.bf16.mxu0 0
        %869 = vmatpush1.bf16.xpose.msra.mxu0 0
        %870 = vmatprep.subr.bf16.mxu0 0
        %871 = vmatpush1.bf16.xpose.msra.mxu0 0
        %872 = vmatprep.mubr.bf16.mxu0 0
        %873 = vmatmul.mubr.bf16.gmra.mrb[0].mxu0 %v835
        %v874 = vpop.f32.mrb[0].mxu0
        %v875 = vadd.f32 0.0, %v874
        %v876 = vpop.f32.mrb[0].mxu0
        %v877 = vpop.f32.mrb[0].mxu0
        %v878 = vadd.f32 0.0, %v877
        %v879 = vpop.f32.mrb[0].mxu0
        %880 = vdwg.mxu0
        %v881 = vadd.f32 %v767, %v875
        %v882 = vadd.f32 %v768, %v878
        %v883 = vld [vmem:[#allocation2] sm:$0x1]
        %v885 = vlaneseq
        %v886 = vshrl.u32 %v885, 7
        %v887 = vsub.s32 0, %v886
        %v888 = vrot.slane %v883, %v887
        %889 = vset.pattern.permute.xlu0 0
        %890 = vperm.xlu0 %889, %v888
        %v891 = vpop.permute.xlu0 %890
        %v893 = vadd.f32 %v881, %v891
        %v894 = vadd.f32 %v882, %v891
        %v895 = vld [vmem:[%s607] sm:$0xf]
        %v896 = vld [vmem:[%s607 + $0x4] sm:$0xf]
        %v897 = vld [vmem:[%s607 + $0x8] sm:$0xf]
        %v898 = vld [vmem:[%s607 + $0xc] sm:$0xf]
        %v899 = vld [vmem:[%s607 + $0x10] sm:$0xf]
        %v900 = vld [vmem:[%s607 + $0x14] sm:$0xf]
        %v901 = vld [vmem:[%s607 + $0x18] sm:$0xf]
        %v902 = vld [vmem:[%s607 + $0x1c] sm:$0xf]
        %v903 = vld [vmem:[%s607 + $0x20] sm:$0xf]
        %v904 = vld [vmem:[%s607 + $0x24] sm:$0xf]
        %v905 = vld [vmem:[%s607 + $0x28] sm:$0xf]
        %v906 = vld [vmem:[%s607 + $0x2c] sm:$0xf]
        %v907 = vld [vmem:[%s607 + $0x30] sm:$0xf]
        %v908 = vld [vmem:[%s607 + $0x34] sm:$0xf]
        %v909 = vld [vmem:[%s607 + $0x38] sm:$0xf]
        %v910 = vld [vmem:[%s607 + $0x3c] sm:$0xf]
        %v911 = vld [vmem:[%s607 + $0x40] sm:$0xf]
        %v912 = vld [vmem:[%s607 + $0x44] sm:$0xf]
        %v913 = vld [vmem:[%s607 + $0x48] sm:$0xf]
        %v914 = vld [vmem:[%s607 + $0x4c] sm:$0xf]
        %v915 = vld [vmem:[%s607 + $0x50] sm:$0xf]
        %v916 = vld [vmem:[%s607 + $0x54] sm:$0xf]
        %v917 = vld [vmem:[%s607 + $0x58] sm:$0xf]
        %v918 = vld [vmem:[%s607 + $0x5c] sm:$0xf]
        %v919 = vld [vmem:[%s607 + $0x60] sm:$0xf]
        %v920 = vld [vmem:[%s607 + $0x64] sm:$0xf]
        %v921 = vld [vmem:[%s607 + $0x68] sm:$0xf]
        %v922 = vld [vmem:[%s607 + $0x6c] sm:$0xf]
        %v923 = vld [vmem:[%s607 + $0x70] sm:$0xf]
        %v924 = vld [vmem:[%s607 + $0x74] sm:$0xf]
        %v925 = vld [vmem:[%s607 + $0x78] sm:$0xf]
        %v926 = vld [vmem:[%s607 + $0x7c] sm:$0xf]
        %v927 = vld [vmem:[%s607 + $0x80] sm:$0xf]
        %v928 = vld [vmem:[%s607 + $0x84] sm:$0xf]
        %v929 = vld [vmem:[%s607 + $0x88] sm:$0xf]
        %v930 = vld [vmem:[%s607 + $0x8c] sm:$0xf]
        %v931 = vld [vmem:[%s607 + $0x90] sm:$0xf]
        %v932 = vld [vmem:[%s607 + $0x94] sm:$0xf]
        %v933 = vld [vmem:[%s607 + $0x98] sm:$0xf]
        %v934 = vld [vmem:[%s607 + $0x9c] sm:$0xf]
        %v935 = vld [vmem:[%s607 + $0xa0] sm:$0xf]
        %v936 = vld [vmem:[%s607 + $0xa4] sm:$0xf]
        %v937 = vld [vmem:[%s607 + $0xa8] sm:$0xf]
        %v938 = vld [vmem:[%s607 + $0xac] sm:$0xf]
        %v939 = vld [vmem:[%s607 + $0xb0] sm:$0xf]
        %v940 = vld [vmem:[%s607 + $0xb4] sm:$0xf]
        %v941 = vld [vmem:[%s607 + $0xb8] sm:$0xf]
        %v942 = vld [vmem:[%s607 + $0xbc] sm:$0xf]
        %v943 = vld [vmem:[%s607 + $0xc0] sm:$0xf]
        %v944 = vld [vmem:[%s607 + $0xc4] sm:$0xf]
        %v945 = vld [vmem:[%s607 + $0xc8] sm:$0xf]
        %v946 = vld [vmem:[%s607 + $0xcc] sm:$0xf]
        %v947 = vld [vmem:[%s607 + $0xd0] sm:$0xf]
        %v948 = vld [vmem:[%s607 + $0xd4] sm:$0xf]
        %v949 = vld [vmem:[%s607 + $0xd8] sm:$0xf]
        %v950 = vld [vmem:[%s607 + $0xdc] sm:$0xf]
        %v951 = vld [vmem:[%s607 + $0xe0] sm:$0xf]
        %v952 = vld [vmem:[%s607 + $0xe4] sm:$0xf]
        %v953 = vld [vmem:[%s607 + $0xe8] sm:$0xf]
        %v954 = vld [vmem:[%s607 + $0xec] sm:$0xf]
        %v955 = vld [vmem:[%s607 + $0xf0] sm:$0xf]
        %v956 = vld [vmem:[%s607 + $0xf4] sm:$0xf]
        %v957 = vld [vmem:[%s607 + $0xf8] sm:$0xf]
        %v958 = vld [vmem:[%s607 + $0xfc] sm:$0xf]
        %v959 = vunpack.c.l.bf16 %v895
        %v960 = vunpack.c.l.bf16 %v896
        %v961 = vunpack.c.l.bf16 %v897
        %v962 = vunpack.c.l.bf16 %v898
        %v963 = vunpack.c.l.bf16 %v899
        %v964 = vunpack.c.l.bf16 %v900
        %v965 = vunpack.c.l.bf16 %v901
        %v966 = vunpack.c.l.bf16 %v902
        %v967 = vunpack.c.l.bf16 %v903
        %v968 = vunpack.c.l.bf16 %v904
        %v969 = vunpack.c.l.bf16 %v905
        %v970 = vunpack.c.l.bf16 %v906
        %v971 = vunpack.c.l.bf16 %v907
        %v972 = vunpack.c.l.bf16 %v908
        %v973 = vunpack.c.l.bf16 %v909
        %v974 = vunpack.c.l.bf16 %v910
        %v975 = vunpack.c.l.bf16 %v911
        %v976 = vunpack.c.l.bf16 %v912
        %v977 = vunpack.c.l.bf16 %v913
        %v978 = vunpack.c.l.bf16 %v914
        %v979 = vunpack.c.l.bf16 %v915
        %v980 = vunpack.c.l.bf16 %v916
        %v981 = vunpack.c.l.bf16 %v917
        %v982 = vunpack.c.l.bf16 %v918
        %v983 = vunpack.c.l.bf16 %v919
        %v984 = vunpack.c.l.bf16 %v920
        %v985 = vunpack.c.l.bf16 %v921
        %v986 = vunpack.c.l.bf16 %v922
        %v987 = vunpack.c.l.bf16 %v923
        %v988 = vunpack.c.l.bf16 %v924
        %v989 = vunpack.c.l.bf16 %v925
        %v990 = vunpack.c.l.bf16 %v926
        %v991 = vunpack.c.l.bf16 %v927
        %v992 = vunpack.c.l.bf16 %v928
        %v993 = vunpack.c.l.bf16 %v929
        %v994 = vunpack.c.l.bf16 %v930
        %v995 = vunpack.c.l.bf16 %v931
        %v996 = vunpack.c.l.bf16 %v932
        %v997 = vunpack.c.l.bf16 %v933
        %v998 = vunpack.c.l.bf16 %v934
        %v999 = vunpack.c.l.bf16 %v935
        %v1000 = vunpack.c.l.bf16 %v936
        %v1001 = vunpack.c.l.bf16 %v937
        %v1002 = vunpack.c.l.bf16 %v938
        %v1003 = vunpack.c.l.bf16 %v939
        %v1004 = vunpack.c.l.bf16 %v940
        %v1005 = vunpack.c.l.bf16 %v941
        %v1006 = vunpack.c.l.bf16 %v942
        %v1007 = vunpack.c.l.bf16 %v943
        %v1008 = vunpack.c.l.bf16 %v944
        %v1009 = vunpack.c.l.bf16 %v945
        %v1010 = vunpack.c.l.bf16 %v946
        %v1011 = vunpack.c.l.bf16 %v947
        %v1012 = vunpack.c.l.bf16 %v948
        %v1013 = vunpack.c.l.bf16 %v949
        %v1014 = vunpack.c.l.bf16 %v950
        %v1015 = vunpack.c.l.bf16 %v951
        %v1016 = vunpack.c.l.bf16 %v952
        %v1017 = vunpack.c.l.bf16 %v953
        %v1018 = vunpack.c.l.bf16 %v954
        %v1019 = vunpack.c.l.bf16 %v955
        %v1020 = vunpack.c.l.bf16 %v956
        %v1021 = vunpack.c.l.bf16 %v957
        %v1022 = vunpack.c.l.bf16 %v958
        %v1023 = vld [vmem:[%s617] sm:$0xf]
        %v1024 = vld [vmem:[%s617 + $0x4] sm:$0xf]
        %v1025 = vld [vmem:[%s617 + $0x8] sm:$0xf]
        %v1026 = vld [vmem:[%s617 + $0xc] sm:$0xf]
        %v1027 = vld [vmem:[%s617 + $0x10] sm:$0xf]
        %v1028 = vld [vmem:[%s617 + $0x14] sm:$0xf]
        %v1029 = vld [vmem:[%s617 + $0x18] sm:$0xf]
        %v1030 = vld [vmem:[%s617 + $0x1c] sm:$0xf]
        %v1031 = vld [vmem:[%s617 + $0x20] sm:$0xf]
        %v1032 = vld [vmem:[%s617 + $0x24] sm:$0xf]
        %v1033 = vld [vmem:[%s617 + $0x28] sm:$0xf]
        %v1034 = vld [vmem:[%s617 + $0x2c] sm:$0xf]
        %v1035 = vld [vmem:[%s617 + $0x30] sm:$0xf]
        %v1036 = vld [vmem:[%s617 + $0x34] sm:$0xf]
        %v1037 = vld [vmem:[%s617 + $0x38] sm:$0xf]
        %v1038 = vld [vmem:[%s617 + $0x3c] sm:$0xf]
        %v1039 = vld [vmem:[%s617 + $0x40] sm:$0xf]
        %v1040 = vld [vmem:[%s617 + $0x44] sm:$0xf]
        %v1041 = vld [vmem:[%s617 + $0x48] sm:$0xf]
        %v1042 = vld [vmem:[%s617 + $0x4c] sm:$0xf]
        %v1043 = vld [vmem:[%s617 + $0x50] sm:$0xf]
        %v1044 = vld [vmem:[%s617 + $0x54] sm:$0xf]
        %v1045 = vld [vmem:[%s617 + $0x58] sm:$0xf]
        %v1046 = vld [vmem:[%s617 + $0x5c] sm:$0xf]
        %v1047 = vld [vmem:[%s617 + $0x60] sm:$0xf]
        %v1048 = vld [vmem:[%s617 + $0x64] sm:$0xf]
        %v1049 = vld [vmem:[%s617 + $0x68] sm:$0xf]
        %v1050 = vld [vmem:[%s617 + $0x6c] sm:$0xf]
        %v1051 = vld [vmem:[%s617 + $0x70] sm:$0xf]
        %v1052 = vld [vmem:[%s617 + $0x74] sm:$0xf]
        %v1053 = vld [vmem:[%s617 + $0x78] sm:$0xf]
        %v1054 = vld [vmem:[%s617 + $0x7c] sm:$0xf]
        %v1055 = vld [vmem:[%s631] sm:$0xf]
        %v1056 = vld [vmem:[%s631 + $0x4] sm:$0xf]
        %v1059 = vunpack.c.l.b16 %v1055
        %v1060 = vunpack.c.l.b16 %v1056
        %v1061 = vpack.c.b16 %v1060, %v1059
        %v1063 = vsel %vm663, %v1061, 0
        %v1066 = vsel %vm667, %v1023, 0
        %1068 = vmatprep.subr.bf16.mxu0 0
        %1069 = vmatpush1.bf16.msra.mxu0 %v1066
        %1070 = vmatprep.subr.bf16.mxu0 0
        %1071 = vmatpush1.bf16.msra.mxu0 0
        %1072 = vmatprep.subr.bf16.mxu0 0
        %1073 = vmatpush1.bf16.msra.mxu0 0
        %1074 = vmatprep.subr.bf16.mxu0 0
        %1075 = vmatpush1.bf16.msra.mxu0 0
        %1076 = vmatprep.subr.bf16.mxu0 0
        %1077 = vmatpush1.bf16.msra.mxu0 0
        %1078 = vmatprep.subr.bf16.mxu0 0
        %1079 = vmatpush1.bf16.msra.mxu0 0
        %1080 = vmatprep.subr.bf16.mxu0 0
        %1081 = vmatpush1.bf16.msra.mxu0 0
        %1082 = vmatprep.subr.bf16.mxu0 0
        %1083 = vmatpush1.bf16.msra.mxu0 0
        %1084 = vmatprep.subr.bf16.mxu0 0
        %1085 = vmatpush1.bf16.msra.mxu0 0
        %1086 = vmatprep.subr.bf16.mxu0 0
        %1087 = vmatpush1.bf16.msra.mxu0 0
        %1088 = vmatprep.subr.bf16.mxu0 0
        %1089 = vmatpush1.bf16.msra.mxu0 0
        %1090 = vmatprep.subr.bf16.mxu0 0
        %1091 = vmatpush1.bf16.msra.mxu0 0
        %1092 = vmatprep.subr.bf16.mxu0 0
        %1093 = vmatpush1.bf16.msra.mxu0 0
        %1094 = vmatprep.subr.bf16.mxu0 0
        %1095 = vmatpush1.bf16.msra.mxu0 0
        %1096 = vmatprep.subr.bf16.mxu0 0
        %1097 = vmatpush1.bf16.msra.mxu0 0
        %1098 = vmatprep.subr.bf16.mxu0 0
        %1099 = vmatpush1.bf16.msra.mxu0 0
        %1100 = vmatprep.mubr.bf16.mxu0 0
        %1101 = vmatmul.mubr.bf16.gmra.mrb[0].mxu0 %v1063
        %v1102 = vpop.f32.mrb[0].mxu0
        %v1103 = vadd.f32 0.0, %v1102
        %v1104 = vpop.f32.mrb[0].mxu0
        %v1105 = vpop.f32.mrb[0].mxu0
        %v1106 = vadd.f32 0.0, %v1105
        %v1107 = vpop.f32.mrb[0].mxu0
        %1108 = vdwg.mxu0
        %v1110 = vsel %vm667, %v1024, 0
        %1112 = vmatprep.subr.bf16.mxu0 0
        %1113 = vmatpush1.bf16.msra.mxu0 %v1110
        %1114 = vmatprep.subr.bf16.mxu0 0
        %1115 = vmatpush1.bf16.msra.mxu0 0
        %1116 = vmatprep.subr.bf16.mxu0 0
        %1117 = vmatpush1.bf16.msra.mxu0 0
        %1118 = vmatprep.subr.bf16.mxu0 0
        %1119 = vmatpush1.bf16.msra.mxu0 0
        %1120 = vmatprep.subr.bf16.mxu0 0
        %1121 = vmatpush1.bf16.msra.mxu0 0
        %1122 = vmatprep.subr.bf16.mxu0 0
        %1123 = vmatpush1.bf16.msra.mxu0 0
        %1124 = vmatprep.subr.bf16.mxu0 0
        %1125 = vmatpush1.bf16.msra.mxu0 0
        %1126 = vmatprep.subr.bf16.mxu0 0
        %1127 = vmatpush1.bf16.msra.mxu0 0
        %1128 = vmatprep.subr.bf16.mxu0 0
        %1129 = vmatpush1.bf16.msra.mxu0 0
        %1130 = vmatprep.subr.bf16.mxu0 0
        %1131 = vmatpush1.bf16.msra.mxu0 0
        %1132 = vmatprep.subr.bf16.mxu0 0
        %1133 = vmatpush1.bf16.msra.mxu0 0
        %1134 = vmatprep.subr.bf16.mxu0 0
        %1135 = vmatpush1.bf16.msra.mxu0 0
        %1136 = vmatprep.subr.bf16.mxu0 0
        %1137 = vmatpush1.bf16.msra.mxu0 0
        %1138 = vmatprep.subr.bf16.mxu0 0
        %1139 = vmatpush1.bf16.msra.mxu0 0
        %1140 = vmatprep.subr.bf16.mxu0 0
        %1141 = vmatpush1.bf16.msra.mxu0 0
        %1142 = vmatprep.subr.bf16.mxu0 0
        %1143 = vmatpush1.bf16.msra.mxu0 0
        %1144 = vmatprep.mubr.bf16.mxu0 0
        %1145 = vmatmul.mubr.bf16.gmra.mrb[0].mxu0 %v1063
        %v1146 = vpop.f32.mrb[0].mxu0
        %v1147 = vadd.f32 0.0, %v1146
        %v1148 = vpop.f32.mrb[0].mxu0
        %v1149 = vpop.f32.mrb[0].mxu0
        %v1150 = vadd.f32 0.0, %v1149
        %v1151 = vpop.f32.mrb[0].mxu0
        %1152 = vdwg.mxu0
        %v1154 = vsel %vm667, %v1025, 0
        %1156 = vmatprep.subr.bf16.mxu0 0
        %1157 = vmatpush1.bf16.msra.mxu0 %v1154
        %1158 = vmatprep.subr.bf16.mxu0 0
        %1159 = vmatpush1.bf16.msra.mxu0 0
        %1160 = vmatprep.subr.bf16.mxu0 0
        %1161 = vmatpush1.bf16.msra.mxu0 0
        %1162 = vmatprep.subr.bf16.mxu0 0
        %1163 = vmatpush1.bf16.msra.mxu0 0
        %1164 = vmatprep.subr.bf16.mxu0 0
        %1165 = vmatpush1.bf16.msra.mxu0 0
        %1166 = vmatprep.subr.bf16.mxu0 0
        %1167 = vmatpush1.bf16.msra.mxu0 0
        %1168 = vmatprep.subr.bf16.mxu0 0
        %1169 = vmatpush1.bf16.msra.mxu0 0
        %1170 = vmatprep.subr.bf16.mxu0 0
        %1171 = vmatpush1.bf16.msra.mxu0 0
        %1172 = vmatprep.subr.bf16.mxu0 0
        %1173 = vmatpush1.bf16.msra.mxu0 0
        %1174 = vmatprep.subr.bf16.mxu0 0
        %1175 = vmatpush1.bf16.msra.mxu0 0
        %1176 = vmatprep.subr.bf16.mxu0 0
        %1177 = vmatpush1.bf16.msra.mxu0 0
        %1178 = vmatprep.subr.bf16.mxu0 0
        %1179 = vmatpush1.bf16.msra.mxu0 0
        %1180 = vmatprep.subr.bf16.mxu0 0
        %1181 = vmatpush1.bf16.msra.mxu0 0
        %1182 = vmatprep.subr.bf16.mxu0 0
        %1183 = vmatpush1.bf16.msra.mxu0 0
        %1184 = vmatprep.subr.bf16.mxu0 0
        %1185 = vmatpush1.bf16.msra.mxu0 0
        %1186 = vmatprep.subr.bf16.mxu0 0
        %1187 = vmatpush1.bf16.msra.mxu0 0
        %1188 = vmatprep.mubr.bf16.mxu0 0
        %1189 = vmatmul.mubr.bf16.gmra.mrb[0].mxu0 %v1063
        %v1190 = vpop.f32.mrb[0].mxu0
        %v1191 = vadd.f32 0.0, %v1190
        %v1192 = vpop.f32.mrb[0].mxu0
        %v1193 = vpop.f32.mrb[0].mxu0
        %v1194 = vadd.f32 0.0, %v1193
        %v1195 = vpop.f32.mrb[0].mxu0
        %1196 = vdwg.mxu0
        %v1198 = vsel %vm667, %v1026, 0
        %1200 = vmatprep.subr.bf16.mxu0 0
        %1201 = vmatpush1.bf16.msra.mxu0 %v1198
        %1202 = vmatprep.subr.bf16.mxu0 0
        %1203 = vmatpush1.bf16.msra.mxu0 0
        %1204 = vmatprep.subr.bf16.mxu0 0
        %1205 = vmatpush1.bf16.msra.mxu0 0
        %1206 = vmatprep.subr.bf16.mxu0 0
        %1207 = vmatpush1.bf16.msra.mxu0 0
        %1208 = vmatprep.subr.bf16.mxu0 0
        %1209 = vmatpush1.bf16.msra.mxu0 0
        %1210 = vmatprep.subr.bf16.mxu0 0
        %1211 = vmatpush1.bf16.msra.mxu0 0
        %1212 = vmatprep.subr.bf16.mxu0 0
        %1213 = vmatpush1.bf16.msra.mxu0 0
        %1214 = vmatprep.subr.bf16.mxu0 0
        %1215 = vmatpush1.bf16.msra.mxu0 0
        %1216 = vmatprep.subr.bf16.mxu0 0
        %1217 = vmatpush1.bf16.msra.mxu0 0
        %1218 = vmatprep.subr.bf16.mxu0 0
        %1219 = vmatpush1.bf16.msra.mxu0 0
        %1220 = vmatprep.subr.bf16.mxu0 0
        %1221 = vmatpush1.bf16.msra.mxu0 0
        %1222 = vmatprep.subr.bf16.mxu0 0
        %1223 = vmatpush1.bf16.msra.mxu0 0
        %1224 = vmatprep.subr.bf16.mxu0 0
        %1225 = vmatpush1.bf16.msra.mxu0 0
        %1226 = vmatprep.subr.bf16.mxu0 0
        %1227 = vmatpush1.bf16.msra.mxu0 0
        %1228 = vmatprep.subr.bf16.mxu0 0
        %1229 = vmatpush1.bf16.msra.mxu0 0
        %1230 = vmatprep.subr.bf16.mxu0 0
        %1231 = vmatpush1.bf16.msra.mxu0 0
        %1232 = vmatprep.mubr.bf16.mxu0 0
        %1233 = vmatmul.mubr.bf16.gmra.mrb[0].mxu0 %v1063
        %v1234 = vpop.f32.mrb[0].mxu0
        %v1235 = vadd.f32 0.0, %v1234
        %v1236 = vpop.f32.mrb[0].mxu0
        %v1237 = vpop.f32.mrb[0].mxu0
        %v1238 = vadd.f32 0.0, %v1237
        %v1239 = vpop.f32.mrb[0].mxu0
        %1240 = vdwg.mxu0
        %v1242 = vsel %vm667, %v1027, 0
        %1244 = vmatprep.subr.bf16.mxu0 0
        %1245 = vmatpush1.bf16.msra.mxu0 %v1242
        %1246 = vmatprep.subr.bf16.mxu0 0
        %1247 = vmatpush1.bf16.msra.mxu0 0
        %1248 = vmatprep.subr.bf16.mxu0 0
        %1249 = vmatpush1.bf16.msra.mxu0 0
        %1250 = vmatprep.subr.bf16.mxu0 0
        %1251 = vmatpush1.bf16.msra.mxu0 0
        %1252 = vmatprep.subr.bf16.mxu0 0
        %1253 = vmatpush1.bf16.msra.mxu0 0
        %1254 = vmatprep.subr.bf16.mxu0 0
        %1255 = vmatpush1.bf16.msra.mxu0 0
        %1256 = vmatprep.subr.bf16.mxu0 0
        %1257 = vmatpush1.bf16.msra.mxu0 0
        %1258 = vmatprep.subr.bf16.mxu0 0
        %1259 = vmatpush1.bf16.msra.mxu0 0
        %1260 = vmatprep.subr.bf16.mxu0 0
        %1261 = vmatpush1.bf16.msra.mxu0 0
        %1262 = vmatprep.subr.bf16.mxu0 0
        %1263 = vmatpush1.bf16.msra.mxu0 0
        %1264 = vmatprep.subr.bf16.mxu0 0
        %1265 = vmatpush1.bf16.msra.mxu0 0
        %1266 = vmatprep.subr.bf16.mxu0 0
        %1267 = vmatpush1.bf16.msra.mxu0 0
        %1268 = vmatprep.subr.bf16.mxu0 0
        %1269 = vmatpush1.bf16.msra.mxu0 0
        %1270 = vmatprep.subr.bf16.mxu0 0
        %1271 = vmatpush1.bf16.msra.mxu0 0
        %1272 = vmatprep.subr.bf16.mxu0 0
        %1273 = vmatpush1.bf16.msra.mxu0 0
        %1274 = vmatprep.subr.bf16.mxu0 0
        %1275 = vmatpush1.bf16.msra.mxu0 0
        %1276 = vmatprep.mubr.bf16.mxu0 0
        %1277 = vmatmul.mubr.bf16.gmra.mrb[0].mxu0 %v1063
        %v1278 = vpop.f32.mrb[0].mxu0
        %v1279 = vadd.f32 0.0, %v1278
        %v1280 = vpop.f32.mrb[0].mxu0
        %v1281 = vpop.f32.mrb[0].mxu0
        %v1282 = vadd.f32 0.0, %v1281
        %v1283 = vpop.f32.mrb[0].mxu0
        %1284 = vdwg.mxu0
        %v1286 = vsel %vm667, %v1028, 0
        %1288 = vmatprep.subr.bf16.mxu0 0
        %1289 = vmatpush1.bf16.msra.mxu0 %v1286
        %1290 = vmatprep.subr.bf16.mxu0 0
        %1291 = vmatpush1.bf16.msra.mxu0 0
        %1292 = vmatprep.subr.bf16.mxu0 0
        %1293 = vmatpush1.bf16.msra.mxu0 0
        %1294 = vmatprep.subr.bf16.mxu0 0
        %1295 = vmatpush1.bf16.msra.mxu0 0
        %1296 = vmatprep.subr.bf16.mxu0 0
        %1297 = vmatpush1.bf16.msra.mxu0 0
        %1298 = vmatprep.subr.bf16.mxu0 0
        %1299 = vmatpush1.bf16.msra.mxu0 0
        %1300 = vmatprep.subr.bf16.mxu0 0
        %1301 = vmatpush1.bf16.msra.mxu0 0
        %1302 = vmatprep.subr.bf16.mxu0 0
        %1303 = vmatpush1.bf16.msra.mxu0 0
        %1304 = vmatprep.subr.bf16.mxu0 0
        %1305 = vmatpush1.bf16.msra.mxu0 0
        %1306 = vmatprep.subr.bf16.mxu0 0
        %1307 = vmatpush1.bf16.msra.mxu0 0
        %1308 = vmatprep.subr.bf16.mxu0 0
        %1309 = vmatpush1.bf16.msra.mxu0 0
        %1310 = vmatprep.subr.bf16.mxu0 0
        %1311 = vmatpush1.bf16.msra.mxu0 0
        %1312 = vmatprep.subr.bf16.mxu0 0
        %1313 = vmatpush1.bf16.msra.mxu0 0
        %1314 = vmatprep.subr.bf16.mxu0 0
        %1315 = vmatpush1.bf16.msra.mxu0 0
        %1316 = vmatprep.subr.bf16.mxu0 0
        %1317 = vmatpush1.bf16.msra.mxu0 0
        %1318 = vmatprep.subr.bf16.mxu0 0
        %1319 = vmatpush1.bf16.msra.mxu0 0
        %1320 = vmatprep.mubr.bf16.mxu0 0
        %1321 = vmatmul.mubr.bf16.gmra.mrb[0].mxu0 %v1063
        %v1322 = vpop.f32.mrb[0].mxu0
        %v1323 = vadd.f32 0.0, %v1322
        %v1324 = vpop.f32.mrb[0].mxu0
        %v1325 = vpop.f32.mrb[0].mxu0
        %v1326 = vadd.f32 0.0, %v1325
        %v1327 = vpop.f32.mrb[0].mxu0
        %1328 = vdwg.mxu0
        %v1330 = vsel %vm667, %v1029, 0
        %1332 = vmatprep.subr.bf16.mxu0 0
        %1333 = vmatpush1.bf16.msra.mxu0 %v1330
        %1334 = vmatprep.subr.bf16.mxu0 0
        %1335 = vmatpush1.bf16.msra.mxu0 0
        %1336 = vmatprep.subr.bf16.mxu0 0
        %1337 = vmatpush1.bf16.msra.mxu0 0
        %1338 = vmatprep.subr.bf16.mxu0 0
        %1339 = vmatpush1.bf16.msra.mxu0 0
        %1340 = vmatprep.subr.bf16.mxu0 0
        %1341 = vmatpush1.bf16.msra.mxu0 0
        %1342 = vmatprep.subr.bf16.mxu0 0
        %1343 = vmatpush1.bf16.msra.mxu0 0
        %1344 = vmatprep.subr.bf16.mxu0 0
        %1345 = vmatpush1.bf16.msra.mxu0 0
        %1346 = vmatprep.subr.bf16.mxu0 0
        %1347 = vmatpush1.bf16.msra.mxu0 0
        %1348 = vmatprep.subr.bf16.mxu0 0
        %1349 = vmatpush1.bf16.msra.mxu0 0
        %1350 = vmatprep.subr.bf16.mxu0 0
        %1351 = vmatpush1.bf16.msra.mxu0 0
        %1352 = vmatprep.subr.bf16.mxu0 0
        %1353 = vmatpush1.bf16.msra.mxu0 0
        %1354 = vmatprep.subr.bf16.mxu0 0
        %1355 = vmatpush1.bf16.msra.mxu0 0
        %1356 = vmatprep.subr.bf16.mxu0 0
        %1357 = vmatpush1.bf16.msra.mxu0 0
        %1358 = vmatprep.subr.bf16.mxu0 0
        %1359 = vmatpush1.bf16.msra.mxu0 0
        %1360 = vmatprep.subr.bf16.mxu0 0
        %1361 = vmatpush1.bf16.msra.mxu0 0
        %1362 = vmatprep.subr.bf16.mxu0 0
        %1363 = vmatpush1.bf16.msra.mxu0 0
        %1364 = vmatprep.mubr.bf16.mxu0 0
        %1365 = vmatmul.mubr.bf16.gmra.mrb[0].mxu0 %v1063
        %v1366 = vpop.f32.mrb[0].mxu0
        %v1367 = vadd.f32 0.0, %v1366
        %v1368 = vpop.f32.mrb[0].mxu0
        %v1369 = vpop.f32.mrb[0].mxu0
        %v1370 = vadd.f32 0.0, %v1369
        %v1371 = vpop.f32.mrb[0].mxu0
        %1372 = vdwg.mxu0
        %v1374 = vsel %vm667, %v1030, 0
        %1376 = vmatprep.subr.bf16.mxu0 0
        %1377 = vmatpush1.bf16.msra.mxu0 %v1374
        %1378 = vmatprep.subr.bf16.mxu0 0
        %1379 = vmatpush1.bf16.msra.mxu0 0
        %1380 = vmatprep.subr.bf16.mxu0 0
        %1381 = vmatpush1.bf16.msra.mxu0 0
        %1382 = vmatprep.subr.bf16.mxu0 0
        %1383 = vmatpush1.bf16.msra.mxu0 0
        %1384 = vmatprep.subr.bf16.mxu0 0
        %1385 = vmatpush1.bf16.msra.mxu0 0
        %1386 = vmatprep.subr.bf16.mxu0 0
        %1387 = vmatpush1.bf16.msra.mxu0 0
        %1388 = vmatprep.subr.bf16.mxu0 0
        %1389 = vmatpush1.bf16.msra.mxu0 0
        %1390 = vmatprep.subr.bf16.mxu0 0
        %1391 = vmatpush1.bf16.msra.mxu0 0
        %1392 = vmatprep.subr.bf16.mxu0 0
        %1393 = vmatpush1.bf16.msra.mxu0 0
        %1394 = vmatprep.subr.bf16.mxu0 0
        %1395 = vmatpush1.bf16.msra.mxu0 0
        %1396 = vmatprep.subr.bf16.mxu0 0
        %1397 = vmatpush1.bf16.msra.mxu0 0
        %1398 = vmatprep.subr.bf16.mxu0 0
        %1399 = vmatpush1.bf16.msra.mxu0 0
        %1400 = vmatprep.subr.bf16.mxu0 0
        %1401 = vmatpush1.bf16.msra.mxu0 0
        %1402 = vmatprep.subr.bf16.mxu0 0
        %1403 = vmatpush1.bf16.msra.mxu0 0
        %1404 = vmatprep.subr.bf16.mxu0 0
        %1405 = vmatpush1.bf16.msra.mxu0 0
        %1406 = vmatprep.subr.bf16.mxu0 0
        %1407 = vmatpush1.bf16.msra.mxu0 0
        %1408 = vmatprep.mubr.bf16.mxu0 0
        %1409 = vmatmul.mubr.bf16.gmra.mrb[0].mxu0 %v1063
        %v1410 = vpop.f32.mrb[0].mxu0
        %v1411 = vadd.f32 0.0, %v1410
        %v1412 = vpop.f32.mrb[0].mxu0
        %v1413 = vpop.f32.mrb[0].mxu0
        %v1414 = vadd.f32 0.0, %v1413
        %v1415 = vpop.f32.mrb[0].mxu0
        %1416 = vdwg.mxu0
        %v1418 = vsel %vm667, %v1031, 0
        %1420 = vmatprep.subr.bf16.mxu0 0
        %1421 = vmatpush1.bf16.msra.mxu0 %v1418
        %1422 = vmatprep.subr.bf16.mxu0 0
        %1423 = vmatpush1.bf16.msra.mxu0 0
        %1424 = vmatprep.subr.bf16.mxu0 0
        %1425 = vmatpush1.bf16.msra.mxu0 0
        %1426 = vmatprep.subr.bf16.mxu0 0
        %1427 = vmatpush1.bf16.msra.mxu0 0
        %1428 = vmatprep.subr.bf16.mxu0 0
        %1429 = vmatpush1.bf16.msra.mxu0 0
        %1430 = vmatprep.subr.bf16.mxu0 0
        %1431 = vmatpush1.bf16.msra.mxu0 0
        %1432 = vmatprep.subr.bf16.mxu0 0
        %1433 = vmatpush1.bf16.msra.mxu0 0
        %1434 = vmatprep.subr.bf16.mxu0 0
        %1435 = vmatpush1.bf16.msra.mxu0 0
        %1436 = vmatprep.subr.bf16.mxu0 0
        %1437 = vmatpush1.bf16.msra.mxu0 0
        %1438 = vmatprep.subr.bf16.mxu0 0
        %1439 = vmatpush1.bf16.msra.mxu0 0
        %1440 = vmatprep.subr.bf16.mxu0 0
        %1441 = vmatpush1.bf16.msra.mxu0 0
        %1442 = vmatprep.subr.bf16.mxu0 0
        %1443 = vmatpush1.bf16.msra.mxu0 0
        %1444 = vmatprep.subr.bf16.mxu0 0
        %1445 = vmatpush1.bf16.msra.mxu0 0
        %1446 = vmatprep.subr.bf16.mxu0 0
        %1447 = vmatpush1.bf16.msra.mxu0 0
        %1448 = vmatprep.subr.bf16.mxu0 0
        %1449 = vmatpush1.bf16.msra.mxu0 0
        %1450 = vmatprep.subr.bf16.mxu0 0
        %1451 = vmatpush1.bf16.msra.mxu0 0
        %1452 = vmatprep.mubr.bf16.mxu0 0
        %1453 = vmatmul.mubr.bf16.gmra.mrb[0].mxu0 %v1063
        %v1454 = vpop.f32.mrb[0].mxu0
        %v1455 = vadd.f32 0.0, %v1454
        %v1456 = vpop.f32.mrb[0].mxu0
        %v1457 = vpop.f32.mrb[0].mxu0
        %v1458 = vadd.f32 0.0, %v1457
        %v1459 = vpop.f32.mrb[0].mxu0
        %1460 = vdwg.mxu0
        %v1462 = vsel %vm667, %v1032, 0
        %1464 = vmatprep.subr.bf16.mxu0 0
        %1465 = vmatpush1.bf16.msra.mxu0 %v1462
        %1466 = vmatprep.subr.bf16.mxu0 0
        %1467 = vmatpush1.bf16.msra.mxu0 0
        %1468 = vmatprep.subr.bf16.mxu0 0
        %1469 = vmatpush1.bf16.msra.mxu0 0
        %1470 = vmatprep.subr.bf16.mxu0 0
        %1471 = vmatpush1.bf16.msra.mxu0 0
        %1472 = vmatprep.subr.bf16.mxu0 0
        %1473 = vmatpush1.bf16.msra.mxu0 0
        %1474 = vmatprep.subr.bf16.mxu0 0
        %1475 = vmatpush1.bf16.msra.mxu0 0
        %1476 = vmatprep.subr.bf16.mxu0 0
        %1477 = vmatpush1.bf16.msra.mxu0 0
        %1478 = vmatprep.subr.bf16.mxu0 0
        %1479 = vmatpush1.bf16.msra.mxu0 0
        %1480 = vmatprep.subr.bf16.mxu0 0
        %1481 = vmatpush1.bf16.msra.mxu0 0
        %1482 = vmatprep.subr.bf16.mxu0 0
        %1483 = vmatpush1.bf16.msra.mxu0 0
        %1484 = vmatprep.subr.bf16.mxu0 0
        %1485 = vmatpush1.bf16.msra.mxu0 0
        %1486 = vmatprep.subr.bf16.mxu0 0
        %1487 = vmatpush1.bf16.msra.mxu0 0
        %1488 = vmatprep.subr.bf16.mxu0 0
        %1489 = vmatpush1.bf16.msra.mxu0 0
        %1490 = vmatprep.subr.bf16.mxu0 0
        %1491 = vmatpush1.bf16.msra.mxu0 0
        %1492 = vmatprep.subr.bf16.mxu0 0
        %1493 = vmatpush1.bf16.msra.mxu0 0
        %1494 = vmatprep.subr.bf16.mxu0 0
        %1495 = vmatpush1.bf16.msra.mxu0 0
        %1496 = vmatprep.mubr.bf16.mxu0 0
        %1497 = vmatmul.mubr.bf16.gmra.mrb[0].mxu0 %v1063
        %v1498 = vpop.f32.mrb[0].mxu0
        %v1499 = vadd.f32 0.0, %v1498
        %v1500 = vpop.f32.mrb[0].mxu0
        %v1501 = vpop.f32.mrb[0].mxu0
        %v1502 = vadd.f32 0.0, %v1501
        %v1503 = vpop.f32.mrb[0].mxu0
        %1504 = vdwg.mxu0
        %v1506 = vsel %vm667, %v1033, 0
        %1508 = vmatprep.subr.bf16.mxu0 0
        %1509 = vmatpush1.bf16.msra.mxu0 %v1506
        %1510 = vmatprep.subr.bf16.mxu0 0
        %1511 = vmatpush1.bf16.msra.mxu0 0
        %1512 = vmatprep.subr.bf16.mxu0 0
        %1513 = vmatpush1.bf16.msra.mxu0 0
        %1514 = vmatprep.subr.bf16.mxu0 0
        %1515 = vmatpush1.bf16.msra.mxu0 0
        %1516 = vmatprep.subr.bf16.mxu0 0
        %1517 = vmatpush1.bf16.msra.mxu0 0
        %1518 = vmatprep.subr.bf16.mxu0 0
        %1519 = vmatpush1.bf16.msra.mxu0 0
        %1520 = vmatprep.subr.bf16.mxu0 0
        %1521 = vmatpush1.bf16.msra.mxu0 0
        %1522 = vmatprep.subr.bf16.mxu0 0
        %1523 = vmatpush1.bf16.msra.mxu0 0
        %1524 = vmatprep.subr.bf16.mxu0 0
        %1525 = vmatpush1.bf16.msra.mxu0 0
        %1526 = vmatprep.subr.bf16.mxu0 0
        %1527 = vmatpush1.bf16.msra.mxu0 0
        %1528 = vmatprep.subr.bf16.mxu0 0
        %1529 = vmatpush1.bf16.msra.mxu0 0
        %1530 = vmatprep.subr.bf16.mxu0 0
        %1531 = vmatpush1.bf16.msra.mxu0 0
        %1532 = vmatprep.subr.bf16.mxu0 0
        %1533 = vmatpush1.bf16.msra.mxu0 0
        %1534 = vmatprep.subr.bf16.mxu0 0
        %1535 = vmatpush1.bf16.msra.mxu0 0
        %1536 = vmatprep.subr.bf16.mxu0 0
        %1537 = vmatpush1.bf16.msra.mxu0 0
        %1538 = vmatprep.subr.bf16.mxu0 0
        %1539 = vmatpush1.bf16.msra.mxu0 0
        %1540 = vmatprep.mubr.bf16.mxu0 0
        %1541 = vmatmul.mubr.bf16.gmra.mrb[0].mxu0 %v1063
        %v1542 = vpop.f32.mrb[0].mxu0
        %v1543 = vadd.f32 0.0, %v1542
        %v1544 = vpop.f32.mrb[0].mxu0
        %v1545 = vpop.f32.mrb[0].mxu0
        %v1546 = vadd.f32 0.0, %v1545
        %v1547 = vpop.f32.mrb[0].mxu0
        %1548 = vdwg.mxu0
        %v1550 = vsel %vm667, %v1034, 0
        %1552 = vmatprep.subr.bf16.mxu0 0
        %1553 = vmatpush1.bf16.msra.mxu0 %v1550
        %1554 = vmatprep.subr.bf16.mxu0 0
        %1555 = vmatpush1.bf16.msra.mxu0 0
        %1556 = vmatprep.subr.bf16.mxu0 0
        %1557 = vmatpush1.bf16.msra.mxu0 0
        %1558 = vmatprep.subr.bf16.mxu0 0
        %1559 = vmatpush1.bf16.msra.mxu0 0
        %1560 = vmatprep.subr.bf16.mxu0 0
        %1561 = vmatpush1.bf16.msra.mxu0 0
        %1562 = vmatprep.subr.bf16.mxu0 0
        %1563 = vmatpush1.bf16.msra.mxu0 0
        %1564 = vmatprep.subr.bf16.mxu0 0
        %1565 = vmatpush1.bf16.msra.mxu0 0
        %1566 = vmatprep.subr.bf16.mxu0 0
        %1567 = vmatpush1.bf16.msra.mxu0 0
        %1568 = vmatprep.subr.bf16.mxu0 0
        %1569 = vmatpush1.bf16.msra.mxu0 0
        %1570 = vmatprep.subr.bf16.mxu0 0
        %1571 = vmatpush1.bf16.msra.mxu0 0
        %1572 = vmatprep.subr.bf16.mxu0 0
        %1573 = vmatpush1.bf16.msra.mxu0 0
        %1574 = vmatprep.subr.bf16.mxu0 0
        %1575 = vmatpush1.bf16.msra.mxu0 0
        %1576 = vmatprep.subr.bf16.mxu0 0
        %1577 = vmatpush1.bf16.msra.mxu0 0
        %1578 = vmatprep.subr.bf16.mxu0 0
        %1579 = vmatpush1.bf16.msra.mxu0 0
        %1580 = vmatprep.subr.bf16.mxu0 0
        %1581 = vmatpush1.bf16.msra.mxu0 0
        %1582 = vmatprep.subr.bf16.mxu0 0
        %1583 = vmatpush1.bf16.msra.mxu0 0
        %1584 = vmatprep.mubr.bf16.mxu0 0
        %1585 = vmatmul.mubr.bf16.gmra.mrb[0].mxu0 %v1063
        %v1586 = vpop.f32.mrb[0].mxu0
        %v1587 = vadd.f32 0.0, %v1586
        %v1588 = vpop.f32.mrb[0].mxu0
        %v1589 = vpop.f32.mrb[0].mxu0
        %v1590 = vadd.f32 0.0, %v1589
        %v1591 = vpop.f32.mrb[0].mxu0
        %1592 = vdwg.mxu0
        %v1594 = vsel %vm667, %v1035, 0
        %1596 = vmatprep.subr.bf16.mxu0 0
        %1597 = vmatpush1.bf16.msra.mxu0 %v1594
        %1598 = vmatprep.subr.bf16.mxu0 0
        %1599 = vmatpush1.bf16.msra.mxu0 0
        %1600 = vmatprep.subr.bf16.mxu0 0
        %1601 = vmatpush1.bf16.msra.mxu0 0
        %1602 = vmatprep.subr.bf16.mxu0 0
        %1603 = vmatpush1.bf16.msra.mxu0 0
        %1604 = vmatprep.subr.bf16.mxu0 0
        %1605 = vmatpush1.bf16.msra.mxu0 0
        %1606 = vmatprep.subr.bf16.mxu0 0
        %1607 = vmatpush1.bf16.msra.mxu0 0
        %1608 = vmatprep.subr.bf16.mxu0 0
        %1609 = vmatpush1.bf16.msra.mxu0 0
        %1610 = vmatprep.subr.bf16.mxu0 0
        %1611 = vmatpush1.bf16.msra.mxu0 0
        %1612 = vmatprep.subr.bf16.mxu0 0
        %1613 = vmatpush1.bf16.msra.mxu0 0
        %1614 = vmatprep.subr.bf16.mxu0 0
        %1615 = vmatpush1.bf16.msra.mxu0 0
        %1616 = vmatprep.subr.bf16.mxu0 0
        %1617 = vmatpush1.bf16.msra.mxu0 0
        %1618 = vmatprep.subr.bf16.mxu0 0
        %1619 = vmatpush1.bf16.msra.mxu0 0
        %1620 = vmatprep.subr.bf16.mxu0 0
        %1621 = vmatpush1.bf16.msra.mxu0 0
        %1622 = vmatprep.subr.bf16.mxu0 0
        %1623 = vmatpush1.bf16.msra.mxu0 0
        %1624 = vmatprep.subr.bf16.mxu0 0
        %1625 = vmatpush1.bf16.msra.mxu0 0
        %1626 = vmatprep.subr.bf16.mxu0 0
        %1627 = vmatpush1.bf16.msra.mxu0 0
        %1628 = vmatprep.mubr.bf16.mxu0 0
        %1629 = vmatmul.mubr.bf16.gmra.mrb[0].mxu0 %v1063
        %v1630 = vpop.f32.mrb[0].mxu0
        %v1631 = vadd.f32 0.0, %v1630
        %v1632 = vpop.f32.mrb[0].mxu0
        %v1633 = vpop.f32.mrb[0].mxu0
        %v1634 = vadd.f32 0.0, %v1633
        %v1635 = vpop.f32.mrb[0].mxu0
        %1636 = vdwg.mxu0
        %v1638 = vsel %vm667, %v1036, 0
        %1640 = vmatprep.subr.bf16.mxu0 0
        %1641 = vmatpush1.bf16.msra.mxu0 %v1638
        %1642 = vmatprep.subr.bf16.mxu0 0
        %1643 = vmatpush1.bf16.msra.mxu0 0
        %1644 = vmatprep.subr.bf16.mxu0 0
        %1645 = vmatpush1.bf16.msra.mxu0 0
        %1646 = vmatprep.subr.bf16.mxu0 0
        %1647 = vmatpush1.bf16.msra.mxu0 0
        %1648 = vmatprep.subr.bf16.mxu0 0
        %1649 = vmatpush1.bf16.msra.mxu0 0
        %1650 = vmatprep.subr.bf16.mxu0 0
        %1651 = vmatpush1.bf16.msra.mxu0 0
        %1652 = vmatprep.subr.bf16.mxu0 0
        %1653 = vmatpush1.bf16.msra.mxu0 0
        %1654 = vmatprep.subr.bf16.mxu0 0
        %1655 = vmatpush1.bf16.msra.mxu0 0
        %1656 = vmatprep.subr.bf16.mxu0 0
        %1657 = vmatpush1.bf16.msra.mxu0 0
        %1658 = vmatprep.subr.bf16.mxu0 0
        %1659 = vmatpush1.bf16.msra.mxu0 0
        %1660 = vmatprep.subr.bf16.mxu0 0
        %1661 = vmatpush1.bf16.msra.mxu0 0
        %1662 = vmatprep.subr.bf16.mxu0 0
        %1663 = vmatpush1.bf16.msra.mxu0 0
        %1664 = vmatprep.subr.bf16.mxu0 0
        %1665 = vmatpush1.bf16.msra.mxu0 0
        %1666 = vmatprep.subr.bf16.mxu0 0
        %1667 = vmatpush1.bf16.msra.mxu0 0
        %1668 = vmatprep.subr.bf16.mxu0 0
        %1669 = vmatpush1.bf16.msra.mxu0 0
        %1670 = vmatprep.subr.bf16.mxu0 0
        %1671 = vmatpush1.bf16.msra.mxu0 0
        %1672 = vmatprep.mubr.bf16.mxu0 0
        %1673 = vmatmul.mubr.bf16.gmra.mrb[0].mxu0 %v1063
        %v1674 = vpop.f32.mrb[0].mxu0
        %v1675 = vadd.f32 0.0, %v1674
        %v1676 = vpop.f32.mrb[0].mxu0
        %v1677 = vpop.f32.mrb[0].mxu0
        %v1678 = vadd.f32 0.0, %v1677
        %v1679 = vpop.f32.mrb[0].mxu0
        %1680 = vdwg.mxu0
        %v1682 = vsel %vm667, %v1037, 0
        %1684 = vmatprep.subr.bf16.mxu0 0
        %1685 = vmatpush1.bf16.msra.mxu0 %v1682
        %1686 = vmatprep.subr.bf16.mxu0 0
        %1687 = vmatpush1.bf16.msra.mxu0 0
        %1688 = vmatprep.subr.bf16.mxu0 0
        %1689 = vmatpush1.bf16.msra.mxu0 0
        %1690 = vmatprep.subr.bf16.mxu0 0
        %1691 = vmatpush1.bf16.msra.mxu0 0
        %1692 = vmatprep.subr.bf16.mxu0 0
        %1693 = vmatpush1.bf16.msra.mxu0 0
        %1694 = vmatprep.subr.bf16.mxu0 0
        %1695 = vmatpush1.bf16.msra.mxu0 0
        %1696 = vmatprep.subr.bf16.mxu0 0
        %1697 = vmatpush1.bf16.msra.mxu0 0
        %1698 = vmatprep.subr.bf16.mxu0 0
        %1699 = vmatpush1.bf16.msra.mxu0 0
        %1700 = vmatprep.subr.bf16.mxu0 0
        %1701 = vmatpush1.bf16.msra.mxu0 0
        %1702 = vmatprep.subr.bf16.mxu0 0
        %1703 = vmatpush1.bf16.msra.mxu0 0
        %1704 = vmatprep.subr.bf16.mxu0 0
        %1705 = vmatpush1.bf16.msra.mxu0 0
        %1706 = vmatprep.subr.bf16.mxu0 0
        %1707 = vmatpush1.bf16.msra.mxu0 0
        %1708 = vmatprep.subr.bf16.mxu0 0
        %1709 = vmatpush1.bf16.msra.mxu0 0
        %1710 = vmatprep.subr.bf16.mxu0 0
        %1711 = vmatpush1.bf16.msra.mxu0 0
        %1712 = vmatprep.subr.bf16.mxu0 0
        %1713 = vmatpush1.bf16.msra.mxu0 0
        %1714 = vmatprep.subr.bf16.mxu0 0
        %1715 = vmatpush1.bf16.msra.mxu0 0
        %1716 = vmatprep.mubr.bf16.mxu0 0
        %1717 = vmatmul.mubr.bf16.gmra.mrb[0].mxu0 %v1063
        %v1718 = vpop.f32.mrb[0].mxu0
        %v1719 = vadd.f32 0.0, %v1718
        %v1720 = vpop.f32.mrb[0].mxu0
        %v1721 = vpop.f32.mrb[0].mxu0
        %v1722 = vadd.f32 0.0, %v1721
        %v1723 = vpop.f32.mrb[0].mxu0
        %1724 = vdwg.mxu0
        %v1726 = vsel %vm667, %v1038, 0
        %1728 = vmatprep.subr.bf16.mxu0 0
        %1729 = vmatpush1.bf16.msra.mxu0 %v1726
        %1730 = vmatprep.subr.bf16.mxu0 0
        %1731 = vmatpush1.bf16.msra.mxu0 0
        %1732 = vmatprep.subr.bf16.mxu0 0
        %1733 = vmatpush1.bf16.msra.mxu0 0
        %1734 = vmatprep.subr.bf16.mxu0 0
        %1735 = vmatpush1.bf16.msra.mxu0 0
        %1736 = vmatprep.subr.bf16.mxu0 0
        %1737 = vmatpush1.bf16.msra.mxu0 0
        %1738 = vmatprep.subr.bf16.mxu0 0
        %1739 = vmatpush1.bf16.msra.mxu0 0
        %1740 = vmatprep.subr.bf16.mxu0 0
        %1741 = vmatpush1.bf16.msra.mxu0 0
        %1742 = vmatprep.subr.bf16.mxu0 0
        %1743 = vmatpush1.bf16.msra.mxu0 0
        %1744 = vmatprep.subr.bf16.mxu0 0
        %1745 = vmatpush1.bf16.msra.mxu0 0
        %1746 = vmatprep.subr.bf16.mxu0 0
        %1747 = vmatpush1.bf16.msra.mxu0 0
        %1748 = vmatprep.subr.bf16.mxu0 0
        %1749 = vmatpush1.bf16.msra.mxu0 0
        %1750 = vmatprep.subr.bf16.mxu0 0
        %1751 = vmatpush1.bf16.msra.mxu0 0
        %1752 = vmatprep.subr.bf16.mxu0 0
        %1753 = vmatpush1.bf16.msra.mxu0 0
        %1754 = vmatprep.subr.bf16.mxu0 0
        %1755 = vmatpush1.bf16.msra.mxu0 0
        %1756 = vmatprep.subr.bf16.mxu0 0
        %1757 = vmatpush1.bf16.msra.mxu0 0
        %1758 = vmatprep.subr.bf16.mxu0 0
        %1759 = vmatpush1.bf16.msra.mxu0 0
        %1760 = vmatprep.mubr.bf16.mxu0 0
        %1761 = vmatmul.mubr.bf16.gmra.mrb[0].mxu0 %v1063
        %v1762 = vpop.f32.mrb[0].mxu0
        %v1763 = vadd.f32 0.0, %v1762
        %v1764 = vpop.f32.mrb[0].mxu0
        %v1765 = vpop.f32.mrb[0].mxu0
        %v1766 = vadd.f32 0.0, %v1765
        %v1767 = vpop.f32.mrb[0].mxu0
        %1768 = vdwg.mxu0
        %v1770 = vsel %vm667, %v1039, 0
        %1772 = vmatprep.subr.bf16.mxu0 0
        %1773 = vmatpush1.bf16.msra.mxu0 %v1770
        %1774 = vmatprep.subr.bf16.mxu0 0
        %1775 = vmatpush1.bf16.msra.mxu0 0
        %1776 = vmatprep.subr.bf16.mxu0 0
        %1777 = vmatpush1.bf16.msra.mxu0 0
        %1778 = vmatprep.subr.bf16.mxu0 0
        %1779 = vmatpush1.bf16.msra.mxu0 0
        %1780 = vmatprep.subr.bf16.mxu0 0
        %1781 = vmatpush1.bf16.msra.mxu0 0
        %1782 = vmatprep.subr.bf16.mxu0 0
        %1783 = vmatpush1.bf16.msra.mxu0 0
        %1784 = vmatprep.subr.bf16.mxu0 0
        %1785 = vmatpush1.bf16.msra.mxu0 0
        %1786 = vmatprep.subr.bf16.mxu0 0
        %1787 = vmatpush1.bf16.msra.mxu0 0
        %1788 = vmatprep.subr.bf16.mxu0 0
        %1789 = vmatpush1.bf16.msra.mxu0 0
        %1790 = vmatprep.subr.bf16.mxu0 0
        %1791 = vmatpush1.bf16.msra.mxu0 0
        %1792 = vmatprep.subr.bf16.mxu0 0
        %1793 = vmatpush1.bf16.msra.mxu0 0
        %1794 = vmatprep.subr.bf16.mxu0 0
        %1795 = vmatpush1.bf16.msra.mxu0 0
        %1796 = vmatprep.subr.bf16.mxu0 0
        %1797 = vmatpush1.bf16.msra.mxu0 0
        %1798 = vmatprep.subr.bf16.mxu0 0
        %1799 = vmatpush1.bf16.msra.mxu0 0
        %1800 = vmatprep.subr.bf16.mxu0 0
        %1801 = vmatpush1.bf16.msra.mxu0 0
        %1802 = vmatprep.subr.bf16.mxu0 0
        %1803 = vmatpush1.bf16.msra.mxu0 0
        %1804 = vmatprep.mubr.bf16.mxu0 0
        %1805 = vmatmul.mubr.bf16.gmra.mrb[0].mxu0 %v1063
        %v1806 = vpop.f32.mrb[0].mxu0
        %v1807 = vadd.f32 0.0, %v1806
        %v1808 = vpop.f32.mrb[0].mxu0
        %v1809 = vpop.f32.mrb[0].mxu0
        %v1810 = vadd.f32 0.0, %v1809
        %v1811 = vpop.f32.mrb[0].mxu0
        %1812 = vdwg.mxu0
        %v1814 = vsel %vm667, %v1040, 0
        %1816 = vmatprep.subr.bf16.mxu0 0
        %1817 = vmatpush1.bf16.msra.mxu0 %v1814
        %1818 = vmatprep.subr.bf16.mxu0 0
        %1819 = vmatpush1.bf16.msra.mxu0 0
        %1820 = vmatprep.subr.bf16.mxu0 0
        %1821 = vmatpush1.bf16.msra.mxu0 0
        %1822 = vmatprep.subr.bf16.mxu0 0
        %1823 = vmatpush1.bf16.msra.mxu0 0
        %1824 = vmatprep.subr.bf16.mxu0 0
        %1825 = vmatpush1.bf16.msra.mxu0 0
        %1826 = vmatprep.subr.bf16.mxu0 0
        %1827 = vmatpush1.bf16.msra.mxu0 0
        %1828 = vmatprep.subr.bf16.mxu0 0
        %1829 = vmatpush1.bf16.msra.mxu0 0
        %1830 = vmatprep.subr.bf16.mxu0 0
        %1831 = vmatpush1.bf16.msra.mxu0 0
        %1832 = vmatprep.subr.bf16.mxu0 0
        %1833 = vmatpush1.bf16.msra.mxu0 0
        %1834 = vmatprep.subr.bf16.mxu0 0
        %1835 = vmatpush1.bf16.msra.mxu0 0
        %1836 = vmatprep.subr.bf16.mxu0 0
        %1837 = vmatpush1.bf16.msra.mxu0 0
        %1838 = vmatprep.subr.bf16.mxu0 0
        %1839 = vmatpush1.bf16.msra.mxu0 0
        %1840 = vmatprep.subr.bf16.mxu0 0
        %1841 = vmatpush1.bf16.msra.mxu0 0
        %1842 = vmatprep.subr.bf16.mxu0 0
        %1843 = vmatpush1.bf16.msra.mxu0 0
        %1844 = vmatprep.subr.bf16.mxu0 0
        %1845 = vmatpush1.bf16.msra.mxu0 0
        %1846 = vmatprep.subr.bf16.mxu0 0
        %1847 = vmatpush1.bf16.msra.mxu0 0
        %1848 = vmatprep.mubr.bf16.mxu0 0
        %1849 = vmatmul.mubr.bf16.gmra.mrb[0].mxu0 %v1063
        %v1850 = vpop.f32.mrb[0].mxu0
        %v1851 = vadd.f32 0.0, %v1850
        %v1852 = vpop.f32.mrb[0].mxu0
        %v1853 = vpop.f32.mrb[0].mxu0
        %v1854 = vadd.f32 0.0, %v1853
        %v1855 = vpop.f32.mrb[0].mxu0
        %1856 = vdwg.mxu0
        %v1858 = vsel %vm667, %v1041, 0
        %1860 = vmatprep.subr.bf16.mxu0 0
        %1861 = vmatpush1.bf16.msra.mxu0 %v1858
        %1862 = vmatprep.subr.bf16.mxu0 0
        %1863 = vmatpush1.bf16.msra.mxu0 0
        %1864 = vmatprep.subr.bf16.mxu0 0
        %1865 = vmatpush1.bf16.msra.mxu0 0
        %1866 = vmatprep.subr.bf16.mxu0 0
        %1867 = vmatpush1.bf16.msra.mxu0 0
        %1868 = vmatprep.subr.bf16.mxu0 0
        %1869 = vmatpush1.bf16.msra.mxu0 0
        %1870 = vmatprep.subr.bf16.mxu0 0
        %1871 = vmatpush1.bf16.msra.mxu0 0
        %1872 = vmatprep.subr.bf16.mxu0 0
        %1873 = vmatpush1.bf16.msra.mxu0 0
        %1874 = vmatprep.subr.bf16.mxu0 0
        %1875 = vmatpush1.bf16.msra.mxu0 0
        %1876 = vmatprep.subr.bf16.mxu0 0
        %1877 = vmatpush1.bf16.msra.mxu0 0
        %1878 = vmatprep.subr.bf16.mxu0 0
        %1879 = vmatpush1.bf16.msra.mxu0 0
        %1880 = vmatprep.subr.bf16.mxu0 0
        %1881 = vmatpush1.bf16.msra.mxu0 0
        %1882 = vmatprep.subr.bf16.mxu0 0
        %1883 = vmatpush1.bf16.msra.mxu0 0
        %1884 = vmatprep.subr.bf16.mxu0 0
        %1885 = vmatpush1.bf16.msra.mxu0 0
        %1886 = vmatprep.subr.bf16.mxu0 0
        %1887 = vmatpush1.bf16.msra.mxu0 0
        %1888 = vmatprep.subr.bf16.mxu0 0
        %1889 = vmatpush1.bf16.msra.mxu0 0
        %1890 = vmatprep.subr.bf16.mxu0 0
        %1891 = vmatpush1.bf16.msra.mxu0 0
        %1892 = vmatprep.mubr.bf16.mxu0 0
        %1893 = vmatmul.mubr.bf16.gmra.mrb[0].mxu0 %v1063
        %v1894 = vpop.f32.mrb[0].mxu0
        %v1895 = vadd.f32 0.0, %v1894
        %v1896 = vpop.f32.mrb[0].mxu0
        %v1897 = vpop.f32.mrb[0].mxu0
        %v1898 = vadd.f32 0.0, %v1897
        %v1899 = vpop.f32.mrb[0].mxu0
        %1900 = vdwg.mxu0
        %v1902 = vsel %vm667, %v1042, 0
        %1904 = vmatprep.subr.bf16.mxu0 0
        %1905 = vmatpush1.bf16.msra.mxu0 %v1902
        %1906 = vmatprep.subr.bf16.mxu0 0
        %1907 = vmatpush1.bf16.msra.mxu0 0
        %1908 = vmatprep.subr.bf16.mxu0 0
        %1909 = vmatpush1.bf16.msra.mxu0 0
        %1910 = vmatprep.subr.bf16.mxu0 0
        %1911 = vmatpush1.bf16.msra.mxu0 0
        %1912 = vmatprep.subr.bf16.mxu0 0
        %1913 = vmatpush1.bf16.msra.mxu0 0
        %1914 = vmatprep.subr.bf16.mxu0 0
        %1915 = vmatpush1.bf16.msra.mxu0 0
        %1916 = vmatprep.subr.bf16.mxu0 0
        %1917 = vmatpush1.bf16.msra.mxu0 0
        %1918 = vmatprep.subr.bf16.mxu0 0
        %1919 = vmatpush1.bf16.msra.mxu0 0
        %1920 = vmatprep.subr.bf16.mxu0 0
        %1921 = vmatpush1.bf16.msra.mxu0 0
        %1922 = vmatprep.subr.bf16.mxu0 0
        %1923 = vmatpush1.bf16.msra.mxu0 0
        %1924 = vmatprep.subr.bf16.mxu0 0
        %1925 = vmatpush1.bf16.msra.mxu0 0
        %1926 = vmatprep.subr.bf16.mxu0 0
        %1927 = vmatpush1.bf16.msra.mxu0 0
        %1928 = vmatprep.subr.bf16.mxu0 0
        %1929 = vmatpush1.bf16.msra.mxu0 0
        %1930 = vmatprep.subr.bf16.mxu0 0
        %1931 = vmatpush1.bf16.msra.mxu0 0
        %1932 = vmatprep.subr.bf16.mxu0 0
        %1933 = vmatpush1.bf16.msra.mxu0 0
        %1934 = vmatprep.subr.bf16.mxu0 0
        %1935 = vmatpush1.bf16.msra.mxu0 0
        %1936 = vmatprep.mubr.bf16.mxu0 0
        %1937 = vmatmul.mubr.bf16.gmra.mrb[0].mxu0 %v1063
        %v1938 = vpop.f32.mrb[0].mxu0
        %v1939 = vadd.f32 0.0, %v1938
        %v1940 = vpop.f32.mrb[0].mxu0
        %v1941 = vpop.f32.mrb[0].mxu0
        %v1942 = vadd.f32 0.0, %v1941
        %v1943 = vpop.f32.mrb[0].mxu0
        %1944 = vdwg.mxu0
        %v1946 = vsel %vm667, %v1043, 0
        %1948 = vmatprep.subr.bf16.mxu0 0
        %1949 = vmatpush1.bf16.msra.mxu0 %v1946
        %1950 = vmatprep.subr.bf16.mxu0 0
        %1951 = vmatpush1.bf16.msra.mxu0 0
        %1952 = vmatprep.subr.bf16.mxu0 0
        %1953 = vmatpush1.bf16.msra.mxu0 0
        %1954 = vmatprep.subr.bf16.mxu0 0
        %1955 = vmatpush1.bf16.msra.mxu0 0
        %1956 = vmatprep.subr.bf16.mxu0 0
        %1957 = vmatpush1.bf16.msra.mxu0 0
        %1958 = vmatprep.subr.bf16.mxu0 0
        %1959 = vmatpush1.bf16.msra.mxu0 0
        %1960 = vmatprep.subr.bf16.mxu0 0
        %1961 = vmatpush1.bf16.msra.mxu0 0
        %1962 = vmatprep.subr.bf16.mxu0 0
        %1963 = vmatpush1.bf16.msra.mxu0 0
        %1964 = vmatprep.subr.bf16.mxu0 0
        %1965 = vmatpush1.bf16.msra.mxu0 0
        %1966 = vmatprep.subr.bf16.mxu0 0
        %1967 = vmatpush1.bf16.msra.mxu0 0
        %1968 = vmatprep.subr.bf16.mxu0 0
        %1969 = vmatpush1.bf16.msra.mxu0 0
        %1970 = vmatprep.subr.bf16.mxu0 0
        %1971 = vmatpush1.bf16.msra.mxu0 0
        %1972 = vmatprep.subr.bf16.mxu0 0
        %1973 = vmatpush1.bf16.msra.mxu0 0
        %1974 = vmatprep.subr.bf16.mxu0 0
        %1975 = vmatpush1.bf16.msra.mxu0 0
        %1976 = vmatprep.subr.bf16.mxu0 0
        %1977 = vmatpush1.bf16.msra.mxu0 0
        %1978 = vmatprep.subr.bf16.mxu0 0
        %1979 = vmatpush1.bf16.msra.mxu0 0
        %1980 = vmatprep.mubr.bf16.mxu0 0
        %1981 = vmatmul.mubr.bf16.gmra.mrb[0].mxu0 %v1063
        %v1982 = vpop.f32.mrb[0].mxu0
        %v1983 = vadd.f32 0.0, %v1982
        %v1984 = vpop.f32.mrb[0].mxu0
        %v1985 = vpop.f32.mrb[0].mxu0
        %v1986 = vadd.f32 0.0, %v1985
        %v1987 = vpop.f32.mrb[0].mxu0
        %1988 = vdwg.mxu0
        %v1990 = vsel %vm667, %v1044, 0
        %1992 = vmatprep.subr.bf16.mxu0 0
        %1993 = vmatpush1.bf16.msra.mxu0 %v1990
        %1994 = vmatprep.subr.bf16.mxu0 0
        %1995 = vmatpush1.bf16.msra.mxu0 0
        %1996 = vmatprep.subr.bf16.mxu0 0
        %1997 = vmatpush1.bf16.msra.mxu0 0
        %1998 = vmatprep.subr.bf16.mxu0 0
        %1999 = vmatpush1.bf16.msra.mxu0 0
        %2000 = vmatprep.subr.bf16.mxu0 0
        %2001 = vmatpush1.bf16.msra.mxu0 0
        %2002 = vmatprep.subr.bf16.mxu0 0
        %2003 = vmatpush1.bf16.msra.mxu0 0
        %2004 = vmatprep.subr.bf16.mxu0 0
        %2005 = vmatpush1.bf16.msra.mxu0 0
        %2006 = vmatprep.subr.bf16.mxu0 0
        %2007 = vmatpush1.bf16.msra.mxu0 0
        %2008 = vmatprep.subr.bf16.mxu0 0
        %2009 = vmatpush1.bf16.msra.mxu0 0
        %2010 = vmatprep.subr.bf16.mxu0 0
        %2011 = vmatpush1.bf16.msra.mxu0 0
        %2012 = vmatprep.subr.bf16.mxu0 0
        %2013 = vmatpush1.bf16.msra.mxu0 0
        %2014 = vmatprep.subr.bf16.mxu0 0
        %2015 = vmatpush1.bf16.msra.mxu0 0
        %2016 = vmatprep.subr.bf16.mxu0 0
        %2017 = vmatpush1.bf16.msra.mxu0 0
        %2018 = vmatprep.subr.bf16.mxu0 0
        %2019 = vmatpush1.bf16.msra.mxu0 0
        %2020 = vmatprep.subr.bf16.mxu0 0
        %2021 = vmatpush1.bf16.msra.mxu0 0
        %2022 = vmatprep.subr.bf16.mxu0 0
        %2023 = vmatpush1.bf16.msra.mxu0 0
        %2024 = vmatprep.mubr.bf16.mxu0 0
        %2025 = vmatmul.mubr.bf16.gmra.mrb[0].mxu0 %v1063
        %v2026 = vpop.f32.mrb[0].mxu0
        %v2027 = vadd.f32 0.0, %v2026
        %v2028 = vpop.f32.mrb[0].mxu0
        %v2029 = vpop.f32.mrb[0].mxu0
        %v2030 = vadd.f32 0.0, %v2029
        %v2031 = vpop.f32.mrb[0].mxu0
        %2032 = vdwg.mxu0
        %v2034 = vsel %vm667, %v1045, 0
        %2036 = vmatprep.subr.bf16.mxu0 0
        %2037 = vmatpush1.bf16.msra.mxu0 %v2034
        %2038 = vmatprep.subr.bf16.mxu0 0
        %2039 = vmatpush1.bf16.msra.mxu0 0
        %2040 = vmatprep.subr.bf16.mxu0 0
        %2041 = vmatpush1.bf16.msra.mxu0 0
        %2042 = vmatprep.subr.bf16.mxu0 0
        %2043 = vmatpush1.bf16.msra.mxu0 0
        %2044 = vmatprep.subr.bf16.mxu0 0
        %2045 = vmatpush1.bf16.msra.mxu0 0
        %2046 = vmatprep.subr.bf16.mxu0 0
        %2047 = vmatpush1.bf16.msra.mxu0 0
        %2048 = vmatprep.subr.bf16.mxu0 0
        %2049 = vmatpush1.bf16.msra.mxu0 0
        %2050 = vmatprep.subr.bf16.mxu0 0
        %2051 = vmatpush1.bf16.msra.mxu0 0
        %2052 = vmatprep.subr.bf16.mxu0 0
        %2053 = vmatpush1.bf16.msra.mxu0 0
        %2054 = vmatprep.subr.bf16.mxu0 0
        %2055 = vmatpush1.bf16.msra.mxu0 0
        %2056 = vmatprep.subr.bf16.mxu0 0
        %2057 = vmatpush1.bf16.msra.mxu0 0
        %2058 = vmatprep.subr.bf16.mxu0 0
        %2059 = vmatpush1.bf16.msra.mxu0 0
        %2060 = vmatprep.subr.bf16.mxu0 0
        %2061 = vmatpush1.bf16.msra.mxu0 0
        %2062 = vmatprep.subr.bf16.mxu0 0
        %2063 = vmatpush1.bf16.msra.mxu0 0
        %2064 = vmatprep.subr.bf16.mxu0 0
        %2065 = vmatpush1.bf16.msra.mxu0 0
        %2066 = vmatprep.subr.bf16.mxu0 0
        %2067 = vmatpush1.bf16.msra.mxu0 0
        %2068 = vmatprep.mubr.bf16.mxu0 0
        %2069 = vmatmul.mubr.bf16.gmra.mrb[0].mxu0 %v1063
        %v2070 = vpop.f32.mrb[0].mxu0
        %v2071 = vadd.f32 0.0, %v2070
        %v2072 = vpop.f32.mrb[0].mxu0
        %v2073 = vpop.f32.mrb[0].mxu0
        %v2074 = vadd.f32 0.0, %v2073
        %v2075 = vpop.f32.mrb[0].mxu0
        %2076 = vdwg.mxu0
        %v2078 = vsel %vm667, %v1046, 0
        %2080 = vmatprep.subr.bf16.mxu0 0
        %2081 = vmatpush1.bf16.msra.mxu0 %v2078
        %2082 = vmatprep.subr.bf16.mxu0 0
        %2083 = vmatpush1.bf16.msra.mxu0 0
        %2084 = vmatprep.subr.bf16.mxu0 0
        %2085 = vmatpush1.bf16.msra.mxu0 0
        %2086 = vmatprep.subr.bf16.mxu0 0
        %2087 = vmatpush1.bf16.msra.mxu0 0
        %2088 = vmatprep.subr.bf16.mxu0 0
        %2089 = vmatpush1.bf16.msra.mxu0 0
        %2090 = vmatprep.subr.bf16.mxu0 0
        %2091 = vmatpush1.bf16.msra.mxu0 0
        %2092 = vmatprep.subr.bf16.mxu0 0
        %2093 = vmatpush1.bf16.msra.mxu0 0
        %2094 = vmatprep.subr.bf16.mxu0 0
        %2095 = vmatpush1.bf16.msra.mxu0 0
        %2096 = vmatprep.subr.bf16.mxu0 0
        %2097 = vmatpush1.bf16.msra.mxu0 0
        %2098 = vmatprep.subr.bf16.mxu0 0
        %2099 = vmatpush1.bf16.msra.mxu0 0
        %2100 = vmatprep.subr.bf16.mxu0 0
        %2101 = vmatpush1.bf16.msra.mxu0 0
        %2102 = vmatprep.subr.bf16.mxu0 0
        %2103 = vmatpush1.bf16.msra.mxu0 0
        %2104 = vmatprep.subr.bf16.mxu0 0
        %2105 = vmatpush1.bf16.msra.mxu0 0
        %2106 = vmatprep.subr.bf16.mxu0 0
        %2107 = vmatpush1.bf16.msra.mxu0 0
        %2108 = vmatprep.subr.bf16.mxu0 0
        %2109 = vmatpush1.bf16.msra.mxu0 0
        %2110 = vmatprep.subr.bf16.mxu0 0
        %2111 = vmatpush1.bf16.msra.mxu0 0
        %2112 = vmatprep.mubr.bf16.mxu0 0
        %2113 = vmatmul.mubr.bf16.gmra.mrb[0].mxu0 %v1063
        %v2114 = vpop.f32.mrb[0].mxu0
        %v2115 = vadd.f32 0.0, %v2114
        %v2116 = vpop.f32.mrb[0].mxu0
        %v2117 = vpop.f32.mrb[0].mxu0
        %v2118 = vadd.f32 0.0, %v2117
        %v2119 = vpop.f32.mrb[0].mxu0
        %2120 = vdwg.mxu0
        %v2122 = vsel %vm667, %v1047, 0
        %2124 = vmatprep.subr.bf16.mxu0 0
        %2125 = vmatpush1.bf16.msra.mxu0 %v2122
        %2126 = vmatprep.subr.bf16.mxu0 0
        %2127 = vmatpush1.bf16.msra.mxu0 0
        %2128 = vmatprep.subr.bf16.mxu0 0
        %2129 = vmatpush1.bf16.msra.mxu0 0
        %2130 = vmatprep.subr.bf16.mxu0 0
        %2131 = vmatpush1.bf16.msra.mxu0 0
        %2132 = vmatprep.subr.bf16.mxu0 0
        %2133 = vmatpush1.bf16.msra.mxu0 0
        %2134 = vmatprep.subr.bf16.mxu0 0
        %2135 = vmatpush1.bf16.msra.mxu0 0
        %2136 = vmatprep.subr.bf16.mxu0 0
        %2137 = vmatpush1.bf16.msra.mxu0 0
        %2138 = vmatprep.subr.bf16.mxu0 0
        %2139 = vmatpush1.bf16.msra.mxu0 0
        %2140 = vmatprep.subr.bf16.mxu0 0
        %2141 = vmatpush1.bf16.msra.mxu0 0
        %2142 = vmatprep.subr.bf16.mxu0 0
        %2143 = vmatpush1.bf16.msra.mxu0 0
        %2144 = vmatprep.subr.bf16.mxu0 0
        %2145 = vmatpush1.bf16.msra.mxu0 0
        %2146 = vmatprep.subr.bf16.mxu0 0
        %2147 = vmatpush1.bf16.msra.mxu0 0
        %2148 = vmatprep.subr.bf16.mxu0 0
        %2149 = vmatpush1.bf16.msra.mxu0 0
        %2150 = vmatprep.subr.bf16.mxu0 0
        %2151 = vmatpush1.bf16.msra.mxu0 0
        %2152 = vmatprep.subr.bf16.mxu0 0
        %2153 = vmatpush1.bf16.msra.mxu0 0
        %2154 = vmatprep.subr.bf16.mxu0 0
        %2155 = vmatpush1.bf16.msra.mxu0 0
        %2156 = vmatprep.mubr.bf16.mxu0 0
        %2157 = vmatmul.mubr.bf16.gmra.mrb[0].mxu0 %v1063
        %v2158 = vpop.f32.mrb[0].mxu0
        %v2159 = vadd.f32 0.0, %v2158
        %v2160 = vpop.f32.mrb[0].mxu0
        %v2161 = vpop.f32.mrb[0].mxu0
        %v2162 = vadd.f32 0.0, %v2161
        %v2163 = vpop.f32.mrb[0].mxu0
        %2164 = vdwg.mxu0
        %v2166 = vsel %vm667, %v1048, 0
        %2168 = vmatprep.subr.bf16.mxu0 0
        %2169 = vmatpush1.bf16.msra.mxu0 %v2166
        %2170 = vmatprep.subr.bf16.mxu0 0
        %2171 = vmatpush1.bf16.msra.mxu0 0
        %2172 = vmatprep.subr.bf16.mxu0 0
        %2173 = vmatpush1.bf16.msra.mxu0 0
        %2174 = vmatprep.subr.bf16.mxu0 0
        %2175 = vmatpush1.bf16.msra.mxu0 0
        %2176 = vmatprep.subr.bf16.mxu0 0
        %2177 = vmatpush1.bf16.msra.mxu0 0
        %2178 = vmatprep.subr.bf16.mxu0 0
        %2179 = vmatpush1.bf16.msra.mxu0 0
        %2180 = vmatprep.subr.bf16.mxu0 0
        %2181 = vmatpush1.bf16.msra.mxu0 0
        %2182 = vmatprep.subr.bf16.mxu0 0
        %2183 = vmatpush1.bf16.msra.mxu0 0
        %2184 = vmatprep.subr.bf16.mxu0 0
        %2185 = vmatpush1.bf16.msra.mxu0 0
        %2186 = vmatprep.subr.bf16.mxu0 0
        %2187 = vmatpush1.bf16.msra.mxu0 0
        %2188 = vmatprep.subr.bf16.mxu0 0
        %2189 = vmatpush1.bf16.msra.mxu0 0
        %2190 = vmatprep.subr.bf16.mxu0 0
        %2191 = vmatpush1.bf16.msra.mxu0 0
        %2192 = vmatprep.subr.bf16.mxu0 0
        %2193 = vmatpush1.bf16.msra.mxu0 0
        %2194 = vmatprep.subr.bf16.mxu0 0
        %2195 = vmatpush1.bf16.msra.mxu0 0
        %2196 = vmatprep.subr.bf16.mxu0 0
        %2197 = vmatpush1.bf16.msra.mxu0 0
        %2198 = vmatprep.subr.bf16.mxu0 0
        %2199 = vmatpush1.bf16.msra.mxu0 0
        %2200 = vmatprep.mubr.bf16.mxu0 0
        %2201 = vmatmul.mubr.bf16.gmra.mrb[0].mxu0 %v1063
        %v2202 = vpop.f32.mrb[0].mxu0
        %v2203 = vadd.f32 0.0, %v2202
        %v2204 = vpop.f32.mrb[0].mxu0
        %v2205 = vpop.f32.mrb[0].mxu0
        %v2206 = vadd.f32 0.0, %v2205
        %v2207 = vpop.f32.mrb[0].mxu0
        %2208 = vdwg.mxu0
        %v2210 = vsel %vm667, %v1049, 0
        %2212 = vmatprep.subr.bf16.mxu0 0
        %2213 = vmatpush1.bf16.msra.mxu0 %v2210
        %2214 = vmatprep.subr.bf16.mxu0 0
        %2215 = vmatpush1.bf16.msra.mxu0 0
        %2216 = vmatprep.subr.bf16.mxu0 0
        %2217 = vmatpush1.bf16.msra.mxu0 0
        %2218 = vmatprep.subr.bf16.mxu0 0
        %2219 = vmatpush1.bf16.msra.mxu0 0
        %2220 = vmatprep.subr.bf16.mxu0 0
        %2221 = vmatpush1.bf16.msra.mxu0 0
        %2222 = vmatprep.subr.bf16.mxu0 0
        %2223 = vmatpush1.bf16.msra.mxu0 0
        %2224 = vmatprep.subr.bf16.mxu0 0
        %2225 = vmatpush1.bf16.msra.mxu0 0
        %2226 = vmatprep.subr.bf16.mxu0 0
        %2227 = vmatpush1.bf16.msra.mxu0 0
        %2228 = vmatprep.subr.bf16.mxu0 0
        %2229 = vmatpush1.bf16.msra.mxu0 0
        %2230 = vmatprep.subr.bf16.mxu0 0
        %2231 = vmatpush1.bf16.msra.mxu0 0
        %2232 = vmatprep.subr.bf16.mxu0 0
        %2233 = vmatpush1.bf16.msra.mxu0 0
        %2234 = vmatprep.subr.bf16.mxu0 0
        %2235 = vmatpush1.bf16.msra.mxu0 0
        %2236 = vmatprep.subr.bf16.mxu0 0
        %2237 = vmatpush1.bf16.msra.mxu0 0
        %2238 = vmatprep.subr.bf16.mxu0 0
        %2239 = vmatpush1.bf16.msra.mxu0 0
        %2240 = vmatprep.subr.bf16.mxu0 0
        %2241 = vmatpush1.bf16.msra.mxu0 0
        %2242 = vmatprep.subr.bf16.mxu0 0
        %2243 = vmatpush1.bf16.msra.mxu0 0
        %2244 = vmatprep.mubr.bf16.mxu0 0
        %2245 = vmatmul.mubr.bf16.gmra.mrb[0].mxu0 %v1063
        %v2246 = vpop.f32.mrb[0].mxu0
        %v2247 = vadd.f32 0.0, %v2246
        %v2248 = vpop.f32.mrb[0].mxu0
        %v2249 = vpop.f32.mrb[0].mxu0
        %v2250 = vadd.f32 0.0, %v2249
        %v2251 = vpop.f32.mrb[0].mxu0
        %2252 = vdwg.mxu0
        %v2254 = vsel %vm667, %v1050, 0
        %2256 = vmatprep.subr.bf16.mxu0 0
        %2257 = vmatpush1.bf16.msra.mxu0 %v2254
        %2258 = vmatprep.subr.bf16.mxu0 0
        %2259 = vmatpush1.bf16.msra.mxu0 0
        %2260 = vmatprep.subr.bf16.mxu0 0
        %2261 = vmatpush1.bf16.msra.mxu0 0
        %2262 = vmatprep.subr.bf16.mxu0 0
        %2263 = vmatpush1.bf16.msra.mxu0 0
        %2264 = vmatprep.subr.bf16.mxu0 0
        %2265 = vmatpush1.bf16.msra.mxu0 0
        %2266 = vmatprep.subr.bf16.mxu0 0
        %2267 = vmatpush1.bf16.msra.mxu0 0
        %2268 = vmatprep.subr.bf16.mxu0 0
        %2269 = vmatpush1.bf16.msra.mxu0 0
        %2270 = vmatprep.subr.bf16.mxu0 0
        %2271 = vmatpush1.bf16.msra.mxu0 0
        %2272 = vmatprep.subr.bf16.mxu0 0
        %2273 = vmatpush1.bf16.msra.mxu0 0
        %2274 = vmatprep.subr.bf16.mxu0 0
        %2275 = vmatpush1.bf16.msra.mxu0 0
        %2276 = vmatprep.subr.bf16.mxu0 0
        %2277 = vmatpush1.bf16.msra.mxu0 0
        %2278 = vmatprep.subr.bf16.mxu0 0
        %2279 = vmatpush1.bf16.msra.mxu0 0
        %2280 = vmatprep.subr.bf16.mxu0 0
        %2281 = vmatpush1.bf16.msra.mxu0 0
        %2282 = vmatprep.subr.bf16.mxu0 0
        %2283 = vmatpush1.bf16.msra.mxu0 0
        %2284 = vmatprep.subr.bf16.mxu0 0
        %2285 = vmatpush1.bf16.msra.mxu0 0
        %2286 = vmatprep.subr.bf16.mxu0 0
        %2287 = vmatpush1.bf16.msra.mxu0 0
        %2288 = vmatprep.mubr.bf16.mxu0 0
        %2289 = vmatmul.mubr.bf16.gmra.mrb[0].mxu0 %v1063
        %v2290 = vpop.f32.mrb[0].mxu0
        %v2291 = vadd.f32 0.0, %v2290
        %v2292 = vpop.f32.mrb[0].mxu0
        %v2293 = vpop.f32.mrb[0].mxu0
        %v2294 = vadd.f32 0.0, %v2293
        %v2295 = vpop.f32.mrb[0].mxu0
        %2296 = vdwg.mxu0
        %v2298 = vsel %vm667, %v1051, 0
        %2300 = vmatprep.subr.bf16.mxu0 0
        %2301 = vmatpush1.bf16.msra.mxu0 %v2298
        %2302 = vmatprep.subr.bf16.mxu0 0
        %2303 = vmatpush1.bf16.msra.mxu0 0
        %2304 = vmatprep.subr.bf16.mxu0 0
        %2305 = vmatpush1.bf16.msra.mxu0 0
        %2306 = vmatprep.subr.bf16.mxu0 0
        %2307 = vmatpush1.bf16.msra.mxu0 0
        %2308 = vmatprep.subr.bf16.mxu0 0
        %2309 = vmatpush1.bf16.msra.mxu0 0
        %2310 = vmatprep.subr.bf16.mxu0 0
        %2311 = vmatpush1.bf16.msra.mxu0 0
        %2312 = vmatprep.subr.bf16.mxu0 0
        %2313 = vmatpush1.bf16.msra.mxu0 0
        %2314 = vmatprep.subr.bf16.mxu0 0
        %2315 = vmatpush1.bf16.msra.mxu0 0
        %2316 = vmatprep.subr.bf16.mxu0 0
        %2317 = vmatpush1.bf16.msra.mxu0 0
        %2318 = vmatprep.subr.bf16.mxu0 0
        %2319 = vmatpush1.bf16.msra.mxu0 0
        %2320 = vmatprep.subr.bf16.mxu0 0
        %2321 = vmatpush1.bf16.msra.mxu0 0
        %2322 = vmatprep.subr.bf16.mxu0 0
        %2323 = vmatpush1.bf16.msra.mxu0 0
        %2324 = vmatprep.subr.bf16.mxu0 0
        %2325 = vmatpush1.bf16.msra.mxu0 0
        %2326 = vmatprep.subr.bf16.mxu0 0
        %2327 = vmatpush1.bf16.msra.mxu0 0
        %2328 = vmatprep.subr.bf16.mxu0 0
        %2329 = vmatpush1.bf16.msra.mxu0 0
        %2330 = vmatprep.subr.bf16.mxu0 0
        %2331 = vmatpush1.bf16.msra.mxu0 0
        %2332 = vmatprep.mubr.bf16.mxu0 0
        %2333 = vmatmul.mubr.bf16.gmra.mrb[0].mxu0 %v1063
        %v2334 = vpop.f32.mrb[0].mxu0
        %v2335 = vadd.f32 0.0, %v2334
        %v2336 = vpop.f32.mrb[0].mxu0
        %v2337 = vpop.f32.mrb[0].mxu0
        %v2338 = vadd.f32 0.0, %v2337
        %v2339 = vpop.f32.mrb[0].mxu0
        %2340 = vdwg.mxu0
        %v2342 = vsel %vm667, %v1052, 0
        %2344 = vmatprep.subr.bf16.mxu0 0
        %2345 = vmatpush1.bf16.msra.mxu0 %v2342
        %2346 = vmatprep.subr.bf16.mxu0 0
        %2347 = vmatpush1.bf16.msra.mxu0 0
        %2348 = vmatprep.subr.bf16.mxu0 0
        %2349 = vmatpush1.bf16.msra.mxu0 0
        %2350 = vmatprep.subr.bf16.mxu0 0
        %2351 = vmatpush1.bf16.msra.mxu0 0
        %2352 = vmatprep.subr.bf16.mxu0 0
        %2353 = vmatpush1.bf16.msra.mxu0 0
        %2354 = vmatprep.subr.bf16.mxu0 0
        %2355 = vmatpush1.bf16.msra.mxu0 0
        %2356 = vmatprep.subr.bf16.mxu0 0
        %2357 = vmatpush1.bf16.msra.mxu0 0
        %2358 = vmatprep.subr.bf16.mxu0 0
        %2359 = vmatpush1.bf16.msra.mxu0 0
        %2360 = vmatprep.subr.bf16.mxu0 0
        %2361 = vmatpush1.bf16.msra.mxu0 0
        %2362 = vmatprep.subr.bf16.mxu0 0
        %2363 = vmatpush1.bf16.msra.mxu0 0
        %2364 = vmatprep.subr.bf16.mxu0 0
        %2365 = vmatpush1.bf16.msra.mxu0 0
        %2366 = vmatprep.subr.bf16.mxu0 0
        %2367 = vmatpush1.bf16.msra.mxu0 0
        %2368 = vmatprep.subr.bf16.mxu0 0
        %2369 = vmatpush1.bf16.msra.mxu0 0
        %2370 = vmatprep.subr.bf16.mxu0 0
        %2371 = vmatpush1.bf16.msra.mxu0 0
        %2372 = vmatprep.subr.bf16.mxu0 0
        %2373 = vmatpush1.bf16.msra.mxu0 0
        %2374 = vmatprep.subr.bf16.mxu0 0
        %2375 = vmatpush1.bf16.msra.mxu0 0
        %2376 = vmatprep.mubr.bf16.mxu0 0
        %2377 = vmatmul.mubr.bf16.gmra.mrb[0].mxu0 %v1063
        %v2378 = vpop.f32.mrb[0].mxu0
        %v2379 = vadd.f32 0.0, %v2378
        %v2380 = vpop.f32.mrb[0].mxu0
        %v2381 = vpop.f32.mrb[0].mxu0
        %v2382 = vadd.f32 0.0, %v2381
        %v2383 = vpop.f32.mrb[0].mxu0
        %2384 = vdwg.mxu0
        %v2386 = vsel %vm667, %v1053, 0
        %2388 = vmatprep.subr.bf16.mxu0 0
        %2389 = vmatpush1.bf16.msra.mxu0 %v2386
        %2390 = vmatprep.subr.bf16.mxu0 0
        %2391 = vmatpush1.bf16.msra.mxu0 0
        %2392 = vmatprep.subr.bf16.mxu0 0
        %2393 = vmatpush1.bf16.msra.mxu0 0
        %2394 = vmatprep.subr.bf16.mxu0 0
        %2395 = vmatpush1.bf16.msra.mxu0 0
        %2396 = vmatprep.subr.bf16.mxu0 0
        %2397 = vmatpush1.bf16.msra.mxu0 0
        %2398 = vmatprep.subr.bf16.mxu0 0
        %2399 = vmatpush1.bf16.msra.mxu0 0
        %2400 = vmatprep.subr.bf16.mxu0 0
        %2401 = vmatpush1.bf16.msra.mxu0 0
        %2402 = vmatprep.subr.bf16.mxu0 0
        %2403 = vmatpush1.bf16.msra.mxu0 0
        %2404 = vmatprep.subr.bf16.mxu0 0
        %2405 = vmatpush1.bf16.msra.mxu0 0
        %2406 = vmatprep.subr.bf16.mxu0 0
        %2407 = vmatpush1.bf16.msra.mxu0 0
        %2408 = vmatprep.subr.bf16.mxu0 0
        %2409 = vmatpush1.bf16.msra.mxu0 0
        %2410 = vmatprep.subr.bf16.mxu0 0
        %2411 = vmatpush1.bf16.msra.mxu0 0
        %2412 = vmatprep.subr.bf16.mxu0 0
        %2413 = vmatpush1.bf16.msra.mxu0 0
        %2414 = vmatprep.subr.bf16.mxu0 0
        %2415 = vmatpush1.bf16.msra.mxu0 0
        %2416 = vmatprep.subr.bf16.mxu0 0
        %2417 = vmatpush1.bf16.msra.mxu0 0
        %2418 = vmatprep.subr.bf16.mxu0 0
        %2419 = vmatpush1.bf16.msra.mxu0 0
        %2420 = vmatprep.mubr.bf16.mxu0 0
        %2421 = vmatmul.mubr.bf16.gmra.mrb[0].mxu0 %v1063
        %v2422 = vpop.f32.mrb[0].mxu0
        %v2423 = vadd.f32 0.0, %v2422
        %v2424 = vpop.f32.mrb[0].mxu0
        %v2425 = vpop.f32.mrb[0].mxu0
        %v2426 = vadd.f32 0.0, %v2425
        %v2427 = vpop.f32.mrb[0].mxu0
        %2428 = vdwg.mxu0
        %v2430 = vsel %vm667, %v1054, 0
        %2432 = vmatprep.subr.bf16.mxu0 0
        %2433 = vmatpush1.bf16.msra.mxu0 %v2430
        %2434 = vmatprep.subr.bf16.mxu0 0
        %2435 = vmatpush1.bf16.msra.mxu0 0
        %2436 = vmatprep.subr.bf16.mxu0 0
        %2437 = vmatpush1.bf16.msra.mxu0 0
        %2438 = vmatprep.subr.bf16.mxu0 0
        %2439 = vmatpush1.bf16.msra.mxu0 0
        %2440 = vmatprep.subr.bf16.mxu0 0
        %2441 = vmatpush1.bf16.msra.mxu0 0
        %2442 = vmatprep.subr.bf16.mxu0 0
        %2443 = vmatpush1.bf16.msra.mxu0 0
        %2444 = vmatprep.subr.bf16.mxu0 0
        %2445 = vmatpush1.bf16.msra.mxu0 0
        %2446 = vmatprep.subr.bf16.mxu0 0
        %2447 = vmatpush1.bf16.msra.mxu0 0
        %2448 = vmatprep.subr.bf16.mxu0 0
        %2449 = vmatpush1.bf16.msra.mxu0 0
        %2450 = vmatprep.subr.bf16.mxu0 0
        %2451 = vmatpush1.bf16.msra.mxu0 0
        %2452 = vmatprep.subr.bf16.mxu0 0
        %2453 = vmatpush1.bf16.msra.mxu0 0
        %2454 = vmatprep.subr.bf16.mxu0 0
        %2455 = vmatpush1.bf16.msra.mxu0 0
        %2456 = vmatprep.subr.bf16.mxu0 0
        %2457 = vmatpush1.bf16.msra.mxu0 0
        %2458 = vmatprep.subr.bf16.mxu0 0
        %2459 = vmatpush1.bf16.msra.mxu0 0
        %2460 = vmatprep.subr.bf16.mxu0 0
        %2461 = vmatpush1.bf16.msra.mxu0 0
        %2462 = vmatprep.subr.bf16.mxu0 0
        %2463 = vmatpush1.bf16.msra.mxu0 0
        %2464 = vmatprep.mubr.bf16.mxu0 0
        %2465 = vmatmul.mubr.bf16.gmra.mrb[0].mxu0 %v1063
        %v2466 = vpop.f32.mrb[0].mxu0
        %v2467 = vadd.f32 0.0, %v2466
        %v2468 = vpop.f32.mrb[0].mxu0
        %v2469 = vpop.f32.mrb[0].mxu0
        %v2470 = vadd.f32 0.0, %v2469
        %v2471 = vpop.f32.mrb[0].mxu0
        %2472 = vdwg.mxu0
        %v2473 = vld [vmem:[%s7] sm:$0xf]
        %v2474 = vld [vmem:[%s7 + $0x4] sm:$0xf]
        %v2475 = vpack.c.bf16 %v1106, %v1103
        %v2476 = vpack.c.bf16 %v1150, %v1147
        %v2477 = vpack.c.bf16 %v1194, %v1191
        %v2478 = vpack.c.bf16 %v1238, %v1235
        %v2479 = vpack.c.bf16 %v1282, %v1279
        %v2480 = vpack.c.bf16 %v1326, %v1323
        %v2481 = vpack.c.bf16 %v1370, %v1367
        %v2482 = vpack.c.bf16 %v1414, %v1411
        %v2483 = vpack.c.bf16 %v1458, %v1455
        %v2484 = vpack.c.bf16 %v1502, %v1499
        %v2485 = vpack.c.bf16 %v1546, %v1543
        %v2486 = vpack.c.bf16 %v1590, %v1587
        %v2487 = vpack.c.bf16 %v1634, %v1631
        %v2488 = vpack.c.bf16 %v1678, %v1675
        %v2489 = vpack.c.bf16 %v1722, %v1719
        %v2490 = vpack.c.bf16 %v1766, %v1763
        %v2491 = vpack.c.bf16 %v1810, %v1807
        %v2492 = vpack.c.bf16 %v1854, %v1851
        %v2493 = vpack.c.bf16 %v1898, %v1895
        %v2494 = vpack.c.bf16 %v1942, %v1939
        %v2495 = vpack.c.bf16 %v1986, %v1983
        %v2496 = vpack.c.bf16 %v2030, %v2027
        %v2497 = vpack.c.bf16 %v2074, %v2071
        %v2498 = vpack.c.bf16 %v2118, %v2115
        %v2499 = vpack.c.bf16 %v2162, %v2159
        %v2500 = vpack.c.bf16 %v2206, %v2203
        %v2501 = vpack.c.bf16 %v2250, %v2247
        %v2502 = vpack.c.bf16 %v2294, %v2291
        %v2503 = vpack.c.bf16 %v2338, %v2335
        %v2504 = vpack.c.bf16 %v2382, %v2379
        %v2505 = vpack.c.bf16 %v2426, %v2423
        %v2506 = vpack.c.bf16 %v2470, %v2467
        %v2509 = vunpack.c.l.b16 %v2473
        %v2510 = vunpack.c.l.b16 %v2474
        %v2511 = vpack.c.b16 %v2510, %v2509
        %v2513 = vsel %vm663, %v2475, 0
        %v2516 = vsel %vm663, %v2511, 0
        %2518 = vmatprep.subr.bf16.mxu0 0
        %2519 = vmatpush1.bf16.xpose.msra.mxu0 %v2516
        %2520 = vmatprep.subr.bf16.mxu0 0
        %2521 = vmatpush1.bf16.xpose.msra.mxu0 0
        %2522 = vmatprep.subr.bf16.mxu0 0
        %2523 = vmatpush1.bf16.xpose.msra.mxu0 0
        %2524 = vmatprep.subr.bf16.mxu0 0
        %2525 = vmatpush1.bf16.xpose.msra.mxu0 0
        %2526 = vmatprep.subr.bf16.mxu0 0
        %2527 = vmatpush1.bf16.xpose.msra.mxu0 0
        %2528 = vmatprep.subr.bf16.mxu0 0
        %2529 = vmatpush1.bf16.xpose.msra.mxu0 0
        %2530 = vmatprep.subr.bf16.mxu0 0
        %2531 = vmatpush1.bf16.xpose.msra.mxu0 0
        %2532 = vmatprep.subr.bf16.mxu0 0
        %2533 = vmatpush1.bf16.xpose.msra.mxu0 0
        %2534 = vmatprep.subr.bf16.mxu0 0
        %2535 = vmatpush1.bf16.xpose.msra.mxu0 0
        %2536 = vmatprep.subr.bf16.mxu0 0
        %2537 = vmatpush1.bf16.xpose.msra.mxu0 0
        %2538 = vmatprep.subr.bf16.mxu0 0
        %2539 = vmatpush1.bf16.xpose.msra.mxu0 0
        %2540 = vmatprep.subr.bf16.mxu0 0
        %2541 = vmatpush1.bf16.xpose.msra.mxu0 0
        %2542 = vmatprep.subr.bf16.mxu0 0
        %2543 = vmatpush1.bf16.xpose.msra.mxu0 0
        %2544 = vmatprep.subr.bf16.mxu0 0
        %2545 = vmatpush1.bf16.xpose.msra.mxu0 0
        %2546 = vmatprep.subr.bf16.mxu0 0
        %2547 = vmatpush1.bf16.xpose.msra.mxu0 0
        %2548 = vmatprep.subr.bf16.mxu0 0
        %2549 = vmatpush1.bf16.xpose.msra.mxu0 0
        %2550 = vmatprep.mubr.bf16.mxu0 0
        %2551 = vmatmul.mubr.bf16.gmra.mrb[0].mxu0 %v2513
        %v2552 = vpop.f32.mrb[0].mxu0
        %v2553 = vadd.f32 0.0, %v2552
        %v2554 = vpop.f32.mrb[0].mxu0
        %v2555 = vpop.f32.mrb[0].mxu0
        %v2556 = vadd.f32 0.0, %v2555
        %v2557 = vpop.f32.mrb[0].mxu0
        %2558 = vdwg.mxu0
        %v2560 = vsel %vm663, %v2476, 0
        %2562 = vmatprep.subr.bf16.mxu0 0
        %2563 = vmatpush1.bf16.xpose.msra.mxu0 %v2516
        %2564 = vmatprep.subr.bf16.mxu0 0
        %2565 = vmatpush1.bf16.xpose.msra.mxu0 0
        %2566 = vmatprep.subr.bf16.mxu0 0
        %2567 = vmatpush1.bf16.xpose.msra.mxu0 0
        %2568 = vmatprep.subr.bf16.mxu0 0
        %2569 = vmatpush1.bf16.xpose.msra.mxu0 0
        %2570 = vmatprep.subr.bf16.mxu0 0
        %2571 = vmatpush1.bf16.xpose.msra.mxu0 0
        %2572 = vmatprep.subr.bf16.mxu0 0
        %2573 = vmatpush1.bf16.xpose.msra.mxu0 0
        %2574 = vmatprep.subr.bf16.mxu0 0
        %2575 = vmatpush1.bf16.xpose.msra.mxu0 0
        %2576 = vmatprep.subr.bf16.mxu0 0
        %2577 = vmatpush1.bf16.xpose.msra.mxu0 0
        %2578 = vmatprep.subr.bf16.mxu0 0
        %2579 = vmatpush1.bf16.xpose.msra.mxu0 0
        %2580 = vmatprep.subr.bf16.mxu0 0
        %2581 = vmatpush1.bf16.xpose.msra.mxu0 0
        %2582 = vmatprep.subr.bf16.mxu0 0
        %2583 = vmatpush1.bf16.xpose.msra.mxu0 0
        %2584 = vmatprep.subr.bf16.mxu0 0
        %2585 = vmatpush1.bf16.xpose.msra.mxu0 0
        %2586 = vmatprep.subr.bf16.mxu0 0
        %2587 = vmatpush1.bf16.xpose.msra.mxu0 0
        %2588 = vmatprep.subr.bf16.mxu0 0
        %2589 = vmatpush1.bf16.xpose.msra.mxu0 0
        %2590 = vmatprep.subr.bf16.mxu0 0
        %2591 = vmatpush1.bf16.xpose.msra.mxu0 0
        %2592 = vmatprep.subr.bf16.mxu0 0
        %2593 = vmatpush1.bf16.xpose.msra.mxu0 0
        %2594 = vmatprep.mubr.bf16.mxu0 0
        %2595 = vmatmul.mubr.bf16.gmra.mrb[0].mxu0 %v2560
        %v2596 = vpop.f32.mrb[0].mxu0
        %v2597 = vadd.f32 0.0, %v2596
        %v2598 = vpop.f32.mrb[0].mxu0
        %v2599 = vpop.f32.mrb[0].mxu0
        %v2600 = vadd.f32 0.0, %v2599
        %v2601 = vpop.f32.mrb[0].mxu0
        %2602 = vdwg.mxu0
        %v2604 = vsel %vm663, %v2477, 0
        %2606 = vmatprep.subr.bf16.mxu0 0
        %2607 = vmatpush1.bf16.xpose.msra.mxu0 %v2516
        %2608 = vmatprep.subr.bf16.mxu0 0
        %2609 = vmatpush1.bf16.xpose.msra.mxu0 0
        %2610 = vmatprep.subr.bf16.mxu0 0
        %2611 = vmatpush1.bf16.xpose.msra.mxu0 0
        %2612 = vmatprep.subr.bf16.mxu0 0
        %2613 = vmatpush1.bf16.xpose.msra.mxu0 0
        %2614 = vmatprep.subr.bf16.mxu0 0
        %2615 = vmatpush1.bf16.xpose.msra.mxu0 0
        %2616 = vmatprep.subr.bf16.mxu0 0
        %2617 = vmatpush1.bf16.xpose.msra.mxu0 0
        %2618 = vmatprep.subr.bf16.mxu0 0
        %2619 = vmatpush1.bf16.xpose.msra.mxu0 0
        %2620 = vmatprep.subr.bf16.mxu0 0
        %2621 = vmatpush1.bf16.xpose.msra.mxu0 0
        %2622 = vmatprep.subr.bf16.mxu0 0
        %2623 = vmatpush1.bf16.xpose.msra.mxu0 0
        %2624 = vmatprep.subr.bf16.mxu0 0
        %2625 = vmatpush1.bf16.xpose.msra.mxu0 0
        %2626 = vmatprep.subr.bf16.mxu0 0
        %2627 = vmatpush1.bf16.xpose.msra.mxu0 0
        %2628 = vmatprep.subr.bf16.mxu0 0
        %2629 = vmatpush1.bf16.xpose.msra.mxu0 0
        %2630 = vmatprep.subr.bf16.mxu0 0
        %2631 = vmatpush1.bf16.xpose.msra.mxu0 0
        %2632 = vmatprep.subr.bf16.mxu0 0
        %2633 = vmatpush1.bf16.xpose.msra.mxu0 0
        %2634 = vmatprep.subr.bf16.mxu0 0
        %2635 = vmatpush1.bf16.xpose.msra.mxu0 0
        %2636 = vmatprep.subr.bf16.mxu0 0
        %2637 = vmatpush1.bf16.xpose.msra.mxu0 0
        %2638 = vmatprep.mubr.bf16.mxu0 0
        %2639 = vmatmul.mubr.bf16.gmra.mrb[0].mxu0 %v2604
        %v2640 = vpop.f32.mrb[0].mxu0
        %v2641 = vadd.f32 0.0, %v2640
        %v2642 = vpop.f32.mrb[0].mxu0
        %v2643 = vpop.f32.mrb[0].mxu0
        %v2644 = vadd.f32 0.0, %v2643
        %v2645 = vpop.f32.mrb[0].mxu0
        %2646 = vdwg.mxu0
        %v2648 = vsel %vm663, %v2478, 0
        %2650 = vmatprep.subr.bf16.mxu0 0
        %2651 = vmatpush1.bf16.xpose.msra.mxu0 %v2516
        %2652 = vmatprep.subr.bf16.mxu0 0
        %2653 = vmatpush1.bf16.xpose.msra.mxu0 0
        %2654 = vmatprep.subr.bf16.mxu0 0
        %2655 = vmatpush1.bf16.xpose.msra.mxu0 0
        %2656 = vmatprep.subr.bf16.mxu0 0
        %2657 = vmatpush1.bf16.xpose.msra.mxu0 0
        %2658 = vmatprep.subr.bf16.mxu0 0
        %2659 = vmatpush1.bf16.xpose.msra.mxu0 0
        %2660 = vmatprep.subr.bf16.mxu0 0
        %2661 = vmatpush1.bf16.xpose.msra.mxu0 0
        %2662 = vmatprep.subr.bf16.mxu0 0
        %2663 = vmatpush1.bf16.xpose.msra.mxu0 0
        %2664 = vmatprep.subr.bf16.mxu0 0
        %2665 = vmatpush1.bf16.xpose.msra.mxu0 0
        %2666 = vmatprep.subr.bf16.mxu0 0
        %2667 = vmatpush1.bf16.xpose.msra.mxu0 0
        %2668 = vmatprep.subr.bf16.mxu0 0
        %2669 = vmatpush1.bf16.xpose.msra.mxu0 0
        %2670 = vmatprep.subr.bf16.mxu0 0
        %2671 = vmatpush1.bf16.xpose.msra.mxu0 0
        %2672 = vmatprep.subr.bf16.mxu0 0
        %2673 = vmatpush1.bf16.xpose.msra.mxu0 0
        %2674 = vmatprep.subr.bf16.mxu0 0
        %2675 = vmatpush1.bf16.xpose.msra.mxu0 0
        %2676 = vmatprep.subr.bf16.mxu0 0
        %2677 = vmatpush1.bf16.xpose.msra.mxu0 0
        %2678 = vmatprep.subr.bf16.mxu0 0
        %2679 = vmatpush1.bf16.xpose.msra.mxu0 0
        %2680 = vmatprep.subr.bf16.mxu0 0
        %2681 = vmatpush1.bf16.xpose.msra.mxu0 0
        %2682 = vmatprep.mubr.bf16.mxu0 0
        %2683 = vmatmul.mubr.bf16.gmra.mrb[0].mxu0 %v2648
        %v2684 = vpop.f32.mrb[0].mxu0
        %v2685 = vadd.f32 0.0, %v2684
        %v2686 = vpop.f32.mrb[0].mxu0
        %v2687 = vpop.f32.mrb[0].mxu0
        %v2688 = vadd.f32 0.0, %v2687
        %v2689 = vpop.f32.mrb[0].mxu0
        %2690 = vdwg.mxu0
        %v2692 = vsel %vm663, %v2479, 0
        %2694 = vmatprep.subr.bf16.mxu0 0
        %2695 = vmatpush1.bf16.xpose.msra.mxu0 %v2516
        %2696 = vmatprep.subr.bf16.mxu0 0
        %2697 = vmatpush1.bf16.xpose.msra.mxu0 0
        %2698 = vmatprep.subr.bf16.mxu0 0
        %2699 = vmatpush1.bf16.xpose.msra.mxu0 0
        %2700 = vmatprep.subr.bf16.mxu0 0
        %2701 = vmatpush1.bf16.xpose.msra.mxu0 0
        %2702 = vmatprep.subr.bf16.mxu0 0
        %2703 = vmatpush1.bf16.xpose.msra.mxu0 0
        %2704 = vmatprep.subr.bf16.mxu0 0
        %2705 = vmatpush1.bf16.xpose.msra.mxu0 0
        %2706 = vmatprep.subr.bf16.mxu0 0
        %2707 = vmatpush1.bf16.xpose.msra.mxu0 0
        %2708 = vmatprep.subr.bf16.mxu0 0
        %2709 = vmatpush1.bf16.xpose.msra.mxu0 0
        %2710 = vmatprep.subr.bf16.mxu0 0
        %2711 = vmatpush1.bf16.xpose.msra.mxu0 0
        %2712 = vmatprep.subr.bf16.mxu0 0
        %2713 = vmatpush1.bf16.xpose.msra.mxu0 0
        %2714 = vmatprep.subr.bf16.mxu0 0
        %2715 = vmatpush1.bf16.xpose.msra.mxu0 0
        %2716 = vmatprep.subr.bf16.mxu0 0
        %2717 = vmatpush1.bf16.xpose.msra.mxu0 0
        %2718 = vmatprep.subr.bf16.mxu0 0
        %2719 = vmatpush1.bf16.xpose.msra.mxu0 0
        %2720 = vmatprep.subr.bf16.mxu0 0
        %2721 = vmatpush1.bf16.xpose.msra.mxu0 0
        %2722 = vmatprep.subr.bf16.mxu0 0
        %2723 = vmatpush1.bf16.xpose.msra.mxu0 0
        %2724 = vmatprep.subr.bf16.mxu0 0
        %2725 = vmatpush1.bf16.xpose.msra.mxu0 0
        %2726 = vmatprep.mubr.bf16.mxu0 0
        %2727 = vmatmul.mubr.bf16.gmra.mrb[0].mxu0 %v2692
        %v2728 = vpop.f32.mrb[0].mxu0
        %v2729 = vadd.f32 0.0, %v2728
        %v2730 = vpop.f32.mrb[0].mxu0
        %v2731 = vpop.f32.mrb[0].mxu0
        %v2732 = vadd.f32 0.0, %v2731
        %v2733 = vpop.f32.mrb[0].mxu0
        %2734 = vdwg.mxu0
        %v2736 = vsel %vm663, %v2480, 0
        %2738 = vmatprep.subr.bf16.mxu0 0
        %2739 = vmatpush1.bf16.xpose.msra.mxu0 %v2516
        %2740 = vmatprep.subr.bf16.mxu0 0
        %2741 = vmatpush1.bf16.xpose.msra.mxu0 0
        %2742 = vmatprep.subr.bf16.mxu0 0
        %2743 = vmatpush1.bf16.xpose.msra.mxu0 0
        %2744 = vmatprep.subr.bf16.mxu0 0
        %2745 = vmatpush1.bf16.xpose.msra.mxu0 0
        %2746 = vmatprep.subr.bf16.mxu0 0
        %2747 = vmatpush1.bf16.xpose.msra.mxu0 0
        %2748 = vmatprep.subr.bf16.mxu0 0
        %2749 = vmatpush1.bf16.xpose.msra.mxu0 0
        %2750 = vmatprep.subr.bf16.mxu0 0
        %2751 = vmatpush1.bf16.xpose.msra.mxu0 0
        %2752 = vmatprep.subr.bf16.mxu0 0
        %2753 = vmatpush1.bf16.xpose.msra.mxu0 0
        %2754 = vmatprep.subr.bf16.mxu0 0
        %2755 = vmatpush1.bf16.xpose.msra.mxu0 0
        %2756 = vmatprep.subr.bf16.mxu0 0
        %2757 = vmatpush1.bf16.xpose.msra.mxu0 0
        %2758 = vmatprep.subr.bf16.mxu0 0
        %2759 = vmatpush1.bf16.xpose.msra.mxu0 0
        %2760 = vmatprep.subr.bf16.mxu0 0
        %2761 = vmatpush1.bf16.xpose.msra.mxu0 0
        %2762 = vmatprep.subr.bf16.mxu0 0
        %2763 = vmatpush1.bf16.xpose.msra.mxu0 0
        %2764 = vmatprep.subr.bf16.mxu0 0
        %2765 = vmatpush1.bf16.xpose.msra.mxu0 0
        %2766 = vmatprep.subr.bf16.mxu0 0
        %2767 = vmatpush1.bf16.xpose.msra.mxu0 0
        %2768 = vmatprep.subr.bf16.mxu0 0
        %2769 = vmatpush1.bf16.xpose.msra.mxu0 0
        %2770 = vmatprep.mubr.bf16.mxu0 0
        %2771 = vmatmul.mubr.bf16.gmra.mrb[0].mxu0 %v2736
        %v2772 = vpop.f32.mrb[0].mxu0
        %v2773 = vadd.f32 0.0, %v2772
        %v2774 = vpop.f32.mrb[0].mxu0
        %v2775 = vpop.f32.mrb[0].mxu0
        %v2776 = vadd.f32 0.0, %v2775
        %v2777 = vpop.f32.mrb[0].mxu0
        %2778 = vdwg.mxu0
        %v2780 = vsel %vm663, %v2481, 0
        %2782 = vmatprep.subr.bf16.mxu0 0
        %2783 = vmatpush1.bf16.xpose.msra.mxu0 %v2516
        %2784 = vmatprep.subr.bf16.mxu0 0
        %2785 = vmatpush1.bf16.xpose.msra.mxu0 0
        %2786 = vmatprep.subr.bf16.mxu0 0
        %2787 = vmatpush1.bf16.xpose.msra.mxu0 0
        %2788 = vmatprep.subr.bf16.mxu0 0
        %2789 = vmatpush1.bf16.xpose.msra.mxu0 0
        %2790 = vmatprep.subr.bf16.mxu0 0
        %2791 = vmatpush1.bf16.xpose.msra.mxu0 0
        %2792 = vmatprep.subr.bf16.mxu0 0
        %2793 = vmatpush1.bf16.xpose.msra.mxu0 0
        %2794 = vmatprep.subr.bf16.mxu0 0
        %2795 = vmatpush1.bf16.xpose.msra.mxu0 0
        %2796 = vmatprep.subr.bf16.mxu0 0
        %2797 = vmatpush1.bf16.xpose.msra.mxu0 0
        %2798 = vmatprep.subr.bf16.mxu0 0
        %2799 = vmatpush1.bf16.xpose.msra.mxu0 0
        %2800 = vmatprep.subr.bf16.mxu0 0
        %2801 = vmatpush1.bf16.xpose.msra.mxu0 0
        %2802 = vmatprep.subr.bf16.mxu0 0
        %2803 = vmatpush1.bf16.xpose.msra.mxu0 0
        %2804 = vmatprep.subr.bf16.mxu0 0
        %2805 = vmatpush1.bf16.xpose.msra.mxu0 0
        %2806 = vmatprep.subr.bf16.mxu0 0
        %2807 = vmatpush1.bf16.xpose.msra.mxu0 0
        %2808 = vmatprep.subr.bf16.mxu0 0
        %2809 = vmatpush1.bf16.xpose.msra.mxu0 0
        %2810 = vmatprep.subr.bf16.mxu0 0
        %2811 = vmatpush1.bf16.xpose.msra.mxu0 0
        %2812 = vmatprep.subr.bf16.mxu0 0
        %2813 = vmatpush1.bf16.xpose.msra.mxu0 0
        %2814 = vmatprep.mubr.bf16.mxu0 0
        %2815 = vmatmul.mubr.bf16.gmra.mrb[0].mxu0 %v2780
        %v2816 = vpop.f32.mrb[0].mxu0
        %v2817 = vadd.f32 0.0, %v2816
        %v2818 = vpop.f32.mrb[0].mxu0
        %v2819 = vpop.f32.mrb[0].mxu0
        %v2820 = vadd.f32 0.0, %v2819
        %v2821 = vpop.f32.mrb[0].mxu0
        %2822 = vdwg.mxu0
        %v2824 = vsel %vm663, %v2482, 0
        %2826 = vmatprep.subr.bf16.mxu0 0
        %2827 = vmatpush1.bf16.xpose.msra.mxu0 %v2516
        %2828 = vmatprep.subr.bf16.mxu0 0
        %2829 = vmatpush1.bf16.xpose.msra.mxu0 0
        %2830 = vmatprep.subr.bf16.mxu0 0
        %2831 = vmatpush1.bf16.xpose.msra.mxu0 0
        %2832 = vmatprep.subr.bf16.mxu0 0
        %2833 = vmatpush1.bf16.xpose.msra.mxu0 0
        %2834 = vmatprep.subr.bf16.mxu0 0
        %2835 = vmatpush1.bf16.xpose.msra.mxu0 0
        %2836 = vmatprep.subr.bf16.mxu0 0
        %2837 = vmatpush1.bf16.xpose.msra.mxu0 0
        %2838 = vmatprep.subr.bf16.mxu0 0
        %2839 = vmatpush1.bf16.xpose.msra.mxu0 0
        %2840 = vmatprep.subr.bf16.mxu0 0
        %2841 = vmatpush1.bf16.xpose.msra.mxu0 0
        %2842 = vmatprep.subr.bf16.mxu0 0
        %2843 = vmatpush1.bf16.xpose.msra.mxu0 0
        %2844 = vmatprep.subr.bf16.mxu0 0
        %2845 = vmatpush1.bf16.xpose.msra.mxu0 0
        %2846 = vmatprep.subr.bf16.mxu0 0
        %2847 = vmatpush1.bf16.xpose.msra.mxu0 0
        %2848 = vmatprep.subr.bf16.mxu0 0
        %2849 = vmatpush1.bf16.xpose.msra.mxu0 0
        %2850 = vmatprep.subr.bf16.mxu0 0
        %2851 = vmatpush1.bf16.xpose.msra.mxu0 0
        %2852 = vmatprep.subr.bf16.mxu0 0
        %2853 = vmatpush1.bf16.xpose.msra.mxu0 0
        %2854 = vmatprep.subr.bf16.mxu0 0
        %2855 = vmatpush1.bf16.xpose.msra.mxu0 0
        %2856 = vmatprep.subr.bf16.mxu0 0
        %2857 = vmatpush1.bf16.xpose.msra.mxu0 0
        %2858 = vmatprep.mubr.bf16.mxu0 0
        %2859 = vmatmul.mubr.bf16.gmra.mrb[0].mxu0 %v2824
        %v2860 = vpop.f32.mrb[0].mxu0
        %v2861 = vadd.f32 0.0, %v2860
        %v2862 = vpop.f32.mrb[0].mxu0
        %v2863 = vpop.f32.mrb[0].mxu0
        %v2864 = vadd.f32 0.0, %v2863
        %v2865 = vpop.f32.mrb[0].mxu0
        %2866 = vdwg.mxu0
        %v2868 = vsel %vm663, %v2483, 0
        %2870 = vmatprep.subr.bf16.mxu0 0
        %2871 = vmatpush1.bf16.xpose.msra.mxu0 %v2516
        %2872 = vmatprep.subr.bf16.mxu0 0
        %2873 = vmatpush1.bf16.xpose.msra.mxu0 0
        %2874 = vmatprep.subr.bf16.mxu0 0
        %2875 = vmatpush1.bf16.xpose.msra.mxu0 0
        %2876 = vmatprep.subr.bf16.mxu0 0
        %2877 = vmatpush1.bf16.xpose.msra.mxu0 0
        %2878 = vmatprep.subr.bf16.mxu0 0
        %2879 = vmatpush1.bf16.xpose.msra.mxu0 0
        %2880 = vmatprep.subr.bf16.mxu0 0
        %2881 = vmatpush1.bf16.xpose.msra.mxu0 0
        %2882 = vmatprep.subr.bf16.mxu0 0
        %2883 = vmatpush1.bf16.xpose.msra.mxu0 0
        %2884 = vmatprep.subr.bf16.mxu0 0
        %2885 = vmatpush1.bf16.xpose.msra.mxu0 0
        %2886 = vmatprep.subr.bf16.mxu0 0
        %2887 = vmatpush1.bf16.xpose.msra.mxu0 0
        %2888 = vmatprep.subr.bf16.mxu0 0
        %2889 = vmatpush1.bf16.xpose.msra.mxu0 0
        %2890 = vmatprep.subr.bf16.mxu0 0
        %2891 = vmatpush1.bf16.xpose.msra.mxu0 0
        %2892 = vmatprep.subr.bf16.mxu0 0
        %2893 = vmatpush1.bf16.xpose.msra.mxu0 0
        %2894 = vmatprep.subr.bf16.mxu0 0
        %2895 = vmatpush1.bf16.xpose.msra.mxu0 0
        %2896 = vmatprep.subr.bf16.mxu0 0
        %2897 = vmatpush1.bf16.xpose.msra.mxu0 0
        %2898 = vmatprep.subr.bf16.mxu0 0
        %2899 = vmatpush1.bf16.xpose.msra.mxu0 0
        %2900 = vmatprep.subr.bf16.mxu0 0
        %2901 = vmatpush1.bf16.xpose.msra.mxu0 0
        %2902 = vmatprep.mubr.bf16.mxu0 0
        %2903 = vmatmul.mubr.bf16.gmra.mrb[0].mxu0 %v2868
        %v2904 = vpop.f32.mrb[0].mxu0
        %v2905 = vadd.f32 0.0, %v2904
        %v2906 = vpop.f32.mrb[0].mxu0
        %v2907 = vpop.f32.mrb[0].mxu0
        %v2908 = vadd.f32 0.0, %v2907
        %v2909 = vpop.f32.mrb[0].mxu0
        %2910 = vdwg.mxu0
        %v2912 = vsel %vm663, %v2484, 0
        %2914 = vmatprep.subr.bf16.mxu0 0
        %2915 = vmatpush1.bf16.xpose.msra.mxu0 %v2516
        %2916 = vmatprep.subr.bf16.mxu0 0
        %2917 = vmatpush1.bf16.xpose.msra.mxu0 0
        %2918 = vmatprep.subr.bf16.mxu0 0
        %2919 = vmatpush1.bf16.xpose.msra.mxu0 0
        %2920 = vmatprep.subr.bf16.mxu0 0
        %2921 = vmatpush1.bf16.xpose.msra.mxu0 0
        %2922 = vmatprep.subr.bf16.mxu0 0
        %2923 = vmatpush1.bf16.xpose.msra.mxu0 0
        %2924 = vmatprep.subr.bf16.mxu0 0
        %2925 = vmatpush1.bf16.xpose.msra.mxu0 0
        %2926 = vmatprep.subr.bf16.mxu0 0
        %2927 = vmatpush1.bf16.xpose.msra.mxu0 0
        %2928 = vmatprep.subr.bf16.mxu0 0
        %2929 = vmatpush1.bf16.xpose.msra.mxu0 0
        %2930 = vmatprep.subr.bf16.mxu0 0
        %2931 = vmatpush1.bf16.xpose.msra.mxu0 0
        %2932 = vmatprep.subr.bf16.mxu0 0
        %2933 = vmatpush1.bf16.xpose.msra.mxu0 0
        %2934 = vmatprep.subr.bf16.mxu0 0
        %2935 = vmatpush1.bf16.xpose.msra.mxu0 0
        %2936 = vmatprep.subr.bf16.mxu0 0
        %2937 = vmatpush1.bf16.xpose.msra.mxu0 0
        %2938 = vmatprep.subr.bf16.mxu0 0
        %2939 = vmatpush1.bf16.xpose.msra.mxu0 0
        %2940 = vmatprep.subr.bf16.mxu0 0
        %2941 = vmatpush1.bf16.xpose.msra.mxu0 0
        %2942 = vmatprep.subr.bf16.mxu0 0
        %2943 = vmatpush1.bf16.xpose.msra.mxu0 0
        %2944 = vmatprep.subr.bf16.mxu0 0
        %2945 = vmatpush1.bf16.xpose.msra.mxu0 0
        %2946 = vmatprep.mubr.bf16.mxu0 0
        %2947 = vmatmul.mubr.bf16.gmra.mrb[0].mxu0 %v2912
        %v2948 = vpop.f32.mrb[0].mxu0
        %v2949 = vadd.f32 0.0, %v2948
        %v2950 = vpop.f32.mrb[0].mxu0
        %v2951 = vpop.f32.mrb[0].mxu0
        %v2952 = vadd.f32 0.0, %v2951
        %v2953 = vpop.f32.mrb[0].mxu0
        %2954 = vdwg.mxu0
        %v2956 = vsel %vm663, %v2485, 0
        %2958 = vmatprep.subr.bf16.mxu0 0
        %2959 = vmatpush1.bf16.xpose.msra.mxu0 %v2516
        %2960 = vmatprep.subr.bf16.mxu0 0
        %2961 = vmatpush1.bf16.xpose.msra.mxu0 0
        %2962 = vmatprep.subr.bf16.mxu0 0
        %2963 = vmatpush1.bf16.xpose.msra.mxu0 0
        %2964 = vmatprep.subr.bf16.mxu0 0
        %2965 = vmatpush1.bf16.xpose.msra.mxu0 0
        %2966 = vmatprep.subr.bf16.mxu0 0
        %2967 = vmatpush1.bf16.xpose.msra.mxu0 0
        %2968 = vmatprep.subr.bf16.mxu0 0
        %2969 = vmatpush1.bf16.xpose.msra.mxu0 0
        %2970 = vmatprep.subr.bf16.mxu0 0
        %2971 = vmatpush1.bf16.xpose.msra.mxu0 0
        %2972 = vmatprep.subr.bf16.mxu0 0
        %2973 = vmatpush1.bf16.xpose.msra.mxu0 0
        %2974 = vmatprep.subr.bf16.mxu0 0
        %2975 = vmatpush1.bf16.xpose.msra.mxu0 0
        %2976 = vmatprep.subr.bf16.mxu0 0
        %2977 = vmatpush1.bf16.xpose.msra.mxu0 0
        %2978 = vmatprep.subr.bf16.mxu0 0
        %2979 = vmatpush1.bf16.xpose.msra.mxu0 0
        %2980 = vmatprep.subr.bf16.mxu0 0
        %2981 = vmatpush1.bf16.xpose.msra.mxu0 0
        %2982 = vmatprep.subr.bf16.mxu0 0
        %2983 = vmatpush1.bf16.xpose.msra.mxu0 0
        %2984 = vmatprep.subr.bf16.mxu0 0
        %2985 = vmatpush1.bf16.xpose.msra.mxu0 0
        %2986 = vmatprep.subr.bf16.mxu0 0
        %2987 = vmatpush1.bf16.xpose.msra.mxu0 0
        %2988 = vmatprep.subr.bf16.mxu0 0
        %2989 = vmatpush1.bf16.xpose.msra.mxu0 0
        %2990 = vmatprep.mubr.bf16.mxu0 0
        %2991 = vmatmul.mubr.bf16.gmra.mrb[0].mxu0 %v2956
        %v2992 = vpop.f32.mrb[0].mxu0
        %v2993 = vadd.f32 0.0, %v2992
        %v2994 = vpop.f32.mrb[0].mxu0
        %v2995 = vpop.f32.mrb[0].mxu0
        %v2996 = vadd.f32 0.0, %v2995
        %v2997 = vpop.f32.mrb[0].mxu0
        %2998 = vdwg.mxu0
        %v3000 = vsel %vm663, %v2486, 0
        %3002 = vmatprep.subr.bf16.mxu0 0
        %3003 = vmatpush1.bf16.xpose.msra.mxu0 %v2516
        %3004 = vmatprep.subr.bf16.mxu0 0
        %3005 = vmatpush1.bf16.xpose.msra.mxu0 0
        %3006 = vmatprep.subr.bf16.mxu0 0
        %3007 = vmatpush1.bf16.xpose.msra.mxu0 0
        %3008 = vmatprep.subr.bf16.mxu0 0
        %3009 = vmatpush1.bf16.xpose.msra.mxu0 0
        %3010 = vmatprep.subr.bf16.mxu0 0
        %3011 = vmatpush1.bf16.xpose.msra.mxu0 0
        %3012 = vmatprep.subr.bf16.mxu0 0
        %3013 = vmatpush1.bf16.xpose.msra.mxu0 0
        %3014 = vmatprep.subr.bf16.mxu0 0
        %3015 = vmatpush1.bf16.xpose.msra.mxu0 0
        %3016 = vmatprep.subr.bf16.mxu0 0
        %3017 = vmatpush1.bf16.xpose.msra.mxu0 0
        %3018 = vmatprep.subr.bf16.mxu0 0
        %3019 = vmatpush1.bf16.xpose.msra.mxu0 0
        %3020 = vmatprep.subr.bf16.mxu0 0
        %3021 = vmatpush1.bf16.xpose.msra.mxu0 0
        %3022 = vmatprep.subr.bf16.mxu0 0
        %3023 = vmatpush1.bf16.xpose.msra.mxu0 0
        %3024 = vmatprep.subr.bf16.mxu0 0
        %3025 = vmatpush1.bf16.xpose.msra.mxu0 0
        %3026 = vmatprep.subr.bf16.mxu0 0
        %3027 = vmatpush1.bf16.xpose.msra.mxu0 0
        %3028 = vmatprep.subr.bf16.mxu0 0
        %3029 = vmatpush1.bf16.xpose.msra.mxu0 0
        %3030 = vmatprep.subr.bf16.mxu0 0
        %3031 = vmatpush1.bf16.xpose.msra.mxu0 0
        %3032 = vmatprep.subr.bf16.mxu0 0
        %3033 = vmatpush1.bf16.xpose.msra.mxu0 0
        %3034 = vmatprep.mubr.bf16.mxu0 0
        %3035 = vmatmul.mubr.bf16.gmra.mrb[0].mxu0 %v3000
        %v3036 = vpop.f32.mrb[0].mxu0
        %v3037 = vadd.f32 0.0, %v3036
        %v3038 = vpop.f32.mrb[0].mxu0
        %v3039 = vpop.f32.mrb[0].mxu0
        %v3040 = vadd.f32 0.0, %v3039
        %v3041 = vpop.f32.mrb[0].mxu0
        %3042 = vdwg.mxu0
        %v3044 = vsel %vm663, %v2487, 0
        %3046 = vmatprep.subr.bf16.mxu0 0
        %3047 = vmatpush1.bf16.xpose.msra.mxu0 %v2516
        %3048 = vmatprep.subr.bf16.mxu0 0
        %3049 = vmatpush1.bf16.xpose.msra.mxu0 0
        %3050 = vmatprep.subr.bf16.mxu0 0
        %3051 = vmatpush1.bf16.xpose.msra.mxu0 0
        %3052 = vmatprep.subr.bf16.mxu0 0
        %3053 = vmatpush1.bf16.xpose.msra.mxu0 0
        %3054 = vmatprep.subr.bf16.mxu0 0
        %3055 = vmatpush1.bf16.xpose.msra.mxu0 0
        %3056 = vmatprep.subr.bf16.mxu0 0
        %3057 = vmatpush1.bf16.xpose.msra.mxu0 0
        %3058 = vmatprep.subr.bf16.mxu0 0
        %3059 = vmatpush1.bf16.xpose.msra.mxu0 0
        %3060 = vmatprep.subr.bf16.mxu0 0
        %3061 = vmatpush1.bf16.xpose.msra.mxu0 0
        %3062 = vmatprep.subr.bf16.mxu0 0
        %3063 = vmatpush1.bf16.xpose.msra.mxu0 0
        %3064 = vmatprep.subr.bf16.mxu0 0
        %3065 = vmatpush1.bf16.xpose.msra.mxu0 0
        %3066 = vmatprep.subr.bf16.mxu0 0
        %3067 = vmatpush1.bf16.xpose.msra.mxu0 0
        %3068 = vmatprep.subr.bf16.mxu0 0
        %3069 = vmatpush1.bf16.xpose.msra.mxu0 0
        %3070 = vmatprep.subr.bf16.mxu0 0
        %3071 = vmatpush1.bf16.xpose.msra.mxu0 0
        %3072 = vmatprep.subr.bf16.mxu0 0
        %3073 = vmatpush1.bf16.xpose.msra.mxu0 0
        %3074 = vmatprep.subr.bf16.mxu0 0
        %3075 = vmatpush1.bf16.xpose.msra.mxu0 0
        %3076 = vmatprep.subr.bf16.mxu0 0
        %3077 = vmatpush1.bf16.xpose.msra.mxu0 0
        %3078 = vmatprep.mubr.bf16.mxu0 0
        %3079 = vmatmul.mubr.bf16.gmra.mrb[0].mxu0 %v3044
        %v3080 = vpop.f32.mrb[0].mxu0
        %v3081 = vadd.f32 0.0, %v3080
        %v3082 = vpop.f32.mrb[0].mxu0
        %v3083 = vpop.f32.mrb[0].mxu0
        %v3084 = vadd.f32 0.0, %v3083
        %v3085 = vpop.f32.mrb[0].mxu0
        %3086 = vdwg.mxu0
        %v3088 = vsel %vm663, %v2488, 0
        %3090 = vmatprep.subr.bf16.mxu0 0
        %3091 = vmatpush1.bf16.xpose.msra.mxu0 %v2516
        %3092 = vmatprep.subr.bf16.mxu0 0
        %3093 = vmatpush1.bf16.xpose.msra.mxu0 0
        %3094 = vmatprep.subr.bf16.mxu0 0
        %3095 = vmatpush1.bf16.xpose.msra.mxu0 0
        %3096 = vmatprep.subr.bf16.mxu0 0
        %3097 = vmatpush1.bf16.xpose.msra.mxu0 0
        %3098 = vmatprep.subr.bf16.mxu0 0
        %3099 = vmatpush1.bf16.xpose.msra.mxu0 0
        %3100 = vmatprep.subr.bf16.mxu0 0
        %3101 = vmatpush1.bf16.xpose.msra.mxu0 0
        %3102 = vmatprep.subr.bf16.mxu0 0
        %3103 = vmatpush1.bf16.xpose.msra.mxu0 0
        %3104 = vmatprep.subr.bf16.mxu0 0
        %3105 = vmatpush1.bf16.xpose.msra.mxu0 0
        %3106 = vmatprep.subr.bf16.mxu0 0
        %3107 = vmatpush1.bf16.xpose.msra.mxu0 0
        %3108 = vmatprep.subr.bf16.mxu0 0
        %3109 = vmatpush1.bf16.xpose.msra.mxu0 0
        %3110 = vmatprep.subr.bf16.mxu0 0
        %3111 = vmatpush1.bf16.xpose.msra.mxu0 0
        %3112 = vmatprep.subr.bf16.mxu0 0
        %3113 = vmatpush1.bf16.xpose.msra.mxu0 0
        %3114 = vmatprep.subr.bf16.mxu0 0
        %3115 = vmatpush1.bf16.xpose.msra.mxu0 0
        %3116 = vmatprep.subr.bf16.mxu0 0
        %3117 = vmatpush1.bf16.xpose.msra.mxu0 0
        %3118 = vmatprep.subr.bf16.mxu0 0
        %3119 = vmatpush1.bf16.xpose.msra.mxu0 0
        %3120 = vmatprep.subr.bf16.mxu0 0
        %3121 = vmatpush1.bf16.xpose.msra.mxu0 0
        %3122 = vmatprep.mubr.bf16.mxu0 0
        %3123 = vmatmul.mubr.bf16.gmra.mrb[0].mxu0 %v3088
        %v3124 = vpop.f32.mrb[0].mxu0
        %v3125 = vadd.f32 0.0, %v3124
        %v3126 = vpop.f32.mrb[0].mxu0
        %v3127 = vpop.f32.mrb[0].mxu0
        %v3128 = vadd.f32 0.0, %v3127
        %v3129 = vpop.f32.mrb[0].mxu0
        %3130 = vdwg.mxu0
        %v3132 = vsel %vm663, %v2489, 0
        %3134 = vmatprep.subr.bf16.mxu0 0
        %3135 = vmatpush1.bf16.xpose.msra.mxu0 %v2516
        %3136 = vmatprep.subr.bf16.mxu0 0
        %3137 = vmatpush1.bf16.xpose.msra.mxu0 0
        %3138 = vmatprep.subr.bf16.mxu0 0
        %3139 = vmatpush1.bf16.xpose.msra.mxu0 0
        %3140 = vmatprep.subr.bf16.mxu0 0
        %3141 = vmatpush1.bf16.xpose.msra.mxu0 0
        %3142 = vmatprep.subr.bf16.mxu0 0
        %3143 = vmatpush1.bf16.xpose.msra.mxu0 0
        %3144 = vmatprep.subr.bf16.mxu0 0
        %3145 = vmatpush1.bf16.xpose.msra.mxu0 0
        %3146 = vmatprep.subr.bf16.mxu0 0
        %3147 = vmatpush1.bf16.xpose.msra.mxu0 0
        %3148 = vmatprep.subr.bf16.mxu0 0
        %3149 = vmatpush1.bf16.xpose.msra.mxu0 0
        %3150 = vmatprep.subr.bf16.mxu0 0
        %3151 = vmatpush1.bf16.xpose.msra.mxu0 0
        %3152 = vmatprep.subr.bf16.mxu0 0
        %3153 = vmatpush1.bf16.xpose.msra.mxu0 0
        %3154 = vmatprep.subr.bf16.mxu0 0
        %3155 = vmatpush1.bf16.xpose.msra.mxu0 0
        %3156 = vmatprep.subr.bf16.mxu0 0
        %3157 = vmatpush1.bf16.xpose.msra.mxu0 0
        %3158 = vmatprep.subr.bf16.mxu0 0
        %3159 = vmatpush1.bf16.xpose.msra.mxu0 0
        %3160 = vmatprep.subr.bf16.mxu0 0
        %3161 = vmatpush1.bf16.xpose.msra.mxu0 0
        %3162 = vmatprep.subr.bf16.mxu0 0
        %3163 = vmatpush1.bf16.xpose.msra.mxu0 0
        %3164 = vmatprep.subr.bf16.mxu0 0
        %3165 = vmatpush1.bf16.xpose.msra.mxu0 0
        %3166 = vmatprep.mubr.bf16.mxu0 0
        %3167 = vmatmul.mubr.bf16.gmra.mrb[0].mxu0 %v3132
        %v3168 = vpop.f32.mrb[0].mxu0
        %v3169 = vadd.f32 0.0, %v3168
        %v3170 = vpop.f32.mrb[0].mxu0
        %v3171 = vpop.f32.mrb[0].mxu0
        %v3172 = vadd.f32 0.0, %v3171
        %v3173 = vpop.f32.mrb[0].mxu0
        %3174 = vdwg.mxu0
        %v3176 = vsel %vm663, %v2490, 0
        %3178 = vmatprep.subr.bf16.mxu0 0
        %3179 = vmatpush1.bf16.xpose.msra.mxu0 %v2516
        %3180 = vmatprep.subr.bf16.mxu0 0
        %3181 = vmatpush1.bf16.xpose.msra.mxu0 0
        %3182 = vmatprep.subr.bf16.mxu0 0
        %3183 = vmatpush1.bf16.xpose.msra.mxu0 0
        %3184 = vmatprep.subr.bf16.mxu0 0
        %3185 = vmatpush1.bf16.xpose.msra.mxu0 0
        %3186 = vmatprep.subr.bf16.mxu0 0
        %3187 = vmatpush1.bf16.xpose.msra.mxu0 0
        %3188 = vmatprep.subr.bf16.mxu0 0
        %3189 = vmatpush1.bf16.xpose.msra.mxu0 0
        %3190 = vmatprep.subr.bf16.mxu0 0
        %3191 = vmatpush1.bf16.xpose.msra.mxu0 0
        %3192 = vmatprep.subr.bf16.mxu0 0
        %3193 = vmatpush1.bf16.xpose.msra.mxu0 0
        %3194 = vmatprep.subr.bf16.mxu0 0
        %3195 = vmatpush1.bf16.xpose.msra.mxu0 0
        %3196 = vmatprep.subr.bf16.mxu0 0
        %3197 = vmatpush1.bf16.xpose.msra.mxu0 0
        %3198 = vmatprep.subr.bf16.mxu0 0
        %3199 = vmatpush1.bf16.xpose.msra.mxu0 0
        %3200 = vmatprep.subr.bf16.mxu0 0
        %3201 = vmatpush1.bf16.xpose.msra.mxu0 0
        %3202 = vmatprep.subr.bf16.mxu0 0
        %3203 = vmatpush1.bf16.xpose.msra.mxu0 0
        %3204 = vmatprep.subr.bf16.mxu0 0
        %3205 = vmatpush1.bf16.xpose.msra.mxu0 0
        %3206 = vmatprep.subr.bf16.mxu0 0
        %3207 = vmatpush1.bf16.xpose.msra.mxu0 0
        %3208 = vmatprep.subr.bf16.mxu0 0
        %3209 = vmatpush1.bf16.xpose.msra.mxu0 0
        %3210 = vmatprep.mubr.bf16.mxu0 0
        %3211 = vmatmul.mubr.bf16.gmra.mrb[0].mxu0 %v3176
        %v3212 = vpop.f32.mrb[0].mxu0
        %v3213 = vadd.f32 0.0, %v3212
        %v3214 = vpop.f32.mrb[0].mxu0
        %v3215 = vpop.f32.mrb[0].mxu0
        %v3216 = vadd.f32 0.0, %v3215
        %v3217 = vpop.f32.mrb[0].mxu0
        %3218 = vdwg.mxu0
        %v3220 = vsel %vm663, %v2491, 0
        %3222 = vmatprep.subr.bf16.mxu0 0
        %3223 = vmatpush1.bf16.xpose.msra.mxu0 %v2516
        %3224 = vmatprep.subr.bf16.mxu0 0
        %3225 = vmatpush1.bf16.xpose.msra.mxu0 0
        %3226 = vmatprep.subr.bf16.mxu0 0
        %3227 = vmatpush1.bf16.xpose.msra.mxu0 0
        %3228 = vmatprep.subr.bf16.mxu0 0
        %3229 = vmatpush1.bf16.xpose.msra.mxu0 0
        %3230 = vmatprep.subr.bf16.mxu0 0
        %3231 = vmatpush1.bf16.xpose.msra.mxu0 0
        %3232 = vmatprep.subr.bf16.mxu0 0
        %3233 = vmatpush1.bf16.xpose.msra.mxu0 0
        %3234 = vmatprep.subr.bf16.mxu0 0
        %3235 = vmatpush1.bf16.xpose.msra.mxu0 0
        %3236 = vmatprep.subr.bf16.mxu0 0
        %3237 = vmatpush1.bf16.xpose.msra.mxu0 0
        %3238 = vmatprep.subr.bf16.mxu0 0
        %3239 = vmatpush1.bf16.xpose.msra.mxu0 0
        %3240 = vmatprep.subr.bf16.mxu0 0
        %3241 = vmatpush1.bf16.xpose.msra.mxu0 0
        %3242 = vmatprep.subr.bf16.mxu0 0
        %3243 = vmatpush1.bf16.xpose.msra.mxu0 0
        %3244 = vmatprep.subr.bf16.mxu0 0
        %3245 = vmatpush1.bf16.xpose.msra.mxu0 0
        %3246 = vmatprep.subr.bf16.mxu0 0
        %3247 = vmatpush1.bf16.xpose.msra.mxu0 0
        %3248 = vmatprep.subr.bf16.mxu0 0
        %3249 = vmatpush1.bf16.xpose.msra.mxu0 0
        %3250 = vmatprep.subr.bf16.mxu0 0
        %3251 = vmatpush1.bf16.xpose.msra.mxu0 0
        %3252 = vmatprep.subr.bf16.mxu0 0
        %3253 = vmatpush1.bf16.xpose.msra.mxu0 0
        %3254 = vmatprep.mubr.bf16.mxu0 0
        %3255 = vmatmul.mubr.bf16.gmra.mrb[0].mxu0 %v3220
        %v3256 = vpop.f32.mrb[0].mxu0
        %v3257 = vadd.f32 0.0, %v3256
        %v3258 = vpop.f32.mrb[0].mxu0
        %v3259 = vpop.f32.mrb[0].mxu0
        %v3260 = vadd.f32 0.0, %v3259
        %v3261 = vpop.f32.mrb[0].mxu0
        %3262 = vdwg.mxu0
        %v3264 = vsel %vm663, %v2492, 0
        %3266 = vmatprep.subr.bf16.mxu0 0
        %3267 = vmatpush1.bf16.xpose.msra.mxu0 %v2516
        %3268 = vmatprep.subr.bf16.mxu0 0
        %3269 = vmatpush1.bf16.xpose.msra.mxu0 0
        %3270 = vmatprep.subr.bf16.mxu0 0
        %3271 = vmatpush1.bf16.xpose.msra.mxu0 0
        %3272 = vmatprep.subr.bf16.mxu0 0
        %3273 = vmatpush1.bf16.xpose.msra.mxu0 0
        %3274 = vmatprep.subr.bf16.mxu0 0
        %3275 = vmatpush1.bf16.xpose.msra.mxu0 0
        %3276 = vmatprep.subr.bf16.mxu0 0
        %3277 = vmatpush1.bf16.xpose.msra.mxu0 0
        %3278 = vmatprep.subr.bf16.mxu0 0
        %3279 = vmatpush1.bf16.xpose.msra.mxu0 0
        %3280 = vmatprep.subr.bf16.mxu0 0
        %3281 = vmatpush1.bf16.xpose.msra.mxu0 0
        %3282 = vmatprep.subr.bf16.mxu0 0
        %3283 = vmatpush1.bf16.xpose.msra.mxu0 0
        %3284 = vmatprep.subr.bf16.mxu0 0
        %3285 = vmatpush1.bf16.xpose.msra.mxu0 0
        %3286 = vmatprep.subr.bf16.mxu0 0
        %3287 = vmatpush1.bf16.xpose.msra.mxu0 0
        %3288 = vmatprep.subr.bf16.mxu0 0
        %3289 = vmatpush1.bf16.xpose.msra.mxu0 0
        %3290 = vmatprep.subr.bf16.mxu0 0
        %3291 = vmatpush1.bf16.xpose.msra.mxu0 0
        %3292 = vmatprep.subr.bf16.mxu0 0
        %3293 = vmatpush1.bf16.xpose.msra.mxu0 0
        %3294 = vmatprep.subr.bf16.mxu0 0
        %3295 = vmatpush1.bf16.xpose.msra.mxu0 0
        %3296 = vmatprep.subr.bf16.mxu0 0
        %3297 = vmatpush1.bf16.xpose.msra.mxu0 0
        %3298 = vmatprep.mubr.bf16.mxu0 0
        %3299 = vmatmul.mubr.bf16.gmra.mrb[0].mxu0 %v3264
        %v3300 = vpop.f32.mrb[0].mxu0
        %v3301 = vadd.f32 0.0, %v3300
        %v3302 = vpop.f32.mrb[0].mxu0
        %v3303 = vpop.f32.mrb[0].mxu0
        %v3304 = vadd.f32 0.0, %v3303
        %v3305 = vpop.f32.mrb[0].mxu0
        %3306 = vdwg.mxu0
        %v3308 = vsel %vm663, %v2493, 0
        %3310 = vmatprep.subr.bf16.mxu0 0
        %3311 = vmatpush1.bf16.xpose.msra.mxu0 %v2516
        %3312 = vmatprep.subr.bf16.mxu0 0
        %3313 = vmatpush1.bf16.xpose.msra.mxu0 0
        %3314 = vmatprep.subr.bf16.mxu0 0
        %3315 = vmatpush1.bf16.xpose.msra.mxu0 0
        %3316 = vmatprep.subr.bf16.mxu0 0
        %3317 = vmatpush1.bf16.xpose.msra.mxu0 0
        %3318 = vmatprep.subr.bf16.mxu0 0
        %3319 = vmatpush1.bf16.xpose.msra.mxu0 0
        %3320 = vmatprep.subr.bf16.mxu0 0
        %3321 = vmatpush1.bf16.xpose.msra.mxu0 0
        %3322 = vmatprep.subr.bf16.mxu0 0
        %3323 = vmatpush1.bf16.xpose.msra.mxu0 0
        %3324 = vmatprep.subr.bf16.mxu0 0
        %3325 = vmatpush1.bf16.xpose.msra.mxu0 0
        %3326 = vmatprep.subr.bf16.mxu0 0
        %3327 = vmatpush1.bf16.xpose.msra.mxu0 0
        %3328 = vmatprep.subr.bf16.mxu0 0
        %3329 = vmatpush1.bf16.xpose.msra.mxu0 0
        %3330 = vmatprep.subr.bf16.mxu0 0
        %3331 = vmatpush1.bf16.xpose.msra.mxu0 0
        %3332 = vmatprep.subr.bf16.mxu0 0
        %3333 = vmatpush1.bf16.xpose.msra.mxu0 0
        %3334 = vmatprep.subr.bf16.mxu0 0
        %3335 = vmatpush1.bf16.xpose.msra.mxu0 0
        %3336 = vmatprep.subr.bf16.mxu0 0
        %3337 = vmatpush1.bf16.xpose.msra.mxu0 0
        %3338 = vmatprep.subr.bf16.mxu0 0
        %3339 = vmatpush1.bf16.xpose.msra.mxu0 0
        %3340 = vmatprep.subr.bf16.mxu0 0
        %3341 = vmatpush1.bf16.xpose.msra.mxu0 0
        %3342 = vmatprep.mubr.bf16.mxu0 0
        %3343 = vmatmul.mubr.bf16.gmra.mrb[0].mxu0 %v3308
        %v3344 = vpop.f32.mrb[0].mxu0
        %v3345 = vadd.f32 0.0, %v3344
        %v3346 = vpop.f32.mrb[0].mxu0
        %v3347 = vpop.f32.mrb[0].mxu0
        %v3348 = vadd.f32 0.0, %v3347
        %v3349 = vpop.f32.mrb[0].mxu0
        %3350 = vdwg.mxu0
        %v3352 = vsel %vm663, %v2494, 0
        %3354 = vmatprep.subr.bf16.mxu0 0
        %3355 = vmatpush1.bf16.xpose.msra.mxu0 %v2516
        %3356 = vmatprep.subr.bf16.mxu0 0
        %3357 = vmatpush1.bf16.xpose.msra.mxu0 0
        %3358 = vmatprep.subr.bf16.mxu0 0
        %3359 = vmatpush1.bf16.xpose.msra.mxu0 0
        %3360 = vmatprep.subr.bf16.mxu0 0
        %3361 = vmatpush1.bf16.xpose.msra.mxu0 0
        %3362 = vmatprep.subr.bf16.mxu0 0
        %3363 = vmatpush1.bf16.xpose.msra.mxu0 0
        %3364 = vmatprep.subr.bf16.mxu0 0
        %3365 = vmatpush1.bf16.xpose.msra.mxu0 0
        %3366 = vmatprep.subr.bf16.mxu0 0
        %3367 = vmatpush1.bf16.xpose.msra.mxu0 0
        %3368 = vmatprep.subr.bf16.mxu0 0
        %3369 = vmatpush1.bf16.xpose.msra.mxu0 0
        %3370 = vmatprep.subr.bf16.mxu0 0
        %3371 = vmatpush1.bf16.xpose.msra.mxu0 0
        %3372 = vmatprep.subr.bf16.mxu0 0
        %3373 = vmatpush1.bf16.xpose.msra.mxu0 0
        %3374 = vmatprep.subr.bf16.mxu0 0
        %3375 = vmatpush1.bf16.xpose.msra.mxu0 0
        %3376 = vmatprep.subr.bf16.mxu0 0
        %3377 = vmatpush1.bf16.xpose.msra.mxu0 0
        %3378 = vmatprep.subr.bf16.mxu0 0
        %3379 = vmatpush1.bf16.xpose.msra.mxu0 0
        %3380 = vmatprep.subr.bf16.mxu0 0
        %3381 = vmatpush1.bf16.xpose.msra.mxu0 0
        %3382 = vmatprep.subr.bf16.mxu0 0
        %3383 = vmatpush1.bf16.xpose.msra.mxu0 0
        %3384 = vmatprep.subr.bf16.mxu0 0
        %3385 = vmatpush1.bf16.xpose.msra.mxu0 0
        %3386 = vmatprep.mubr.bf16.mxu0 0
        %3387 = vmatmul.mubr.bf16.gmra.mrb[0].mxu0 %v3352
        %v3388 = vpop.f32.mrb[0].mxu0
        %v3389 = vadd.f32 0.0, %v3388
        %v3390 = vpop.f32.mrb[0].mxu0
        %v3391 = vpop.f32.mrb[0].mxu0
        %v3392 = vadd.f32 0.0, %v3391
        %v3393 = vpop.f32.mrb[0].mxu0
        %3394 = vdwg.mxu0
        %v3396 = vsel %vm663, %v2495, 0
        %3398 = vmatprep.subr.bf16.mxu0 0
        %3399 = vmatpush1.bf16.xpose.msra.mxu0 %v2516
        %3400 = vmatprep.subr.bf16.mxu0 0
        %3401 = vmatpush1.bf16.xpose.msra.mxu0 0
        %3402 = vmatprep.subr.bf16.mxu0 0
        %3403 = vmatpush1.bf16.xpose.msra.mxu0 0
        %3404 = vmatprep.subr.bf16.mxu0 0
        %3405 = vmatpush1.bf16.xpose.msra.mxu0 0
        %3406 = vmatprep.subr.bf16.mxu0 0
        %3407 = vmatpush1.bf16.xpose.msra.mxu0 0
        %3408 = vmatprep.subr.bf16.mxu0 0
        %3409 = vmatpush1.bf16.xpose.msra.mxu0 0
        %3410 = vmatprep.subr.bf16.mxu0 0
        %3411 = vmatpush1.bf16.xpose.msra.mxu0 0
        %3412 = vmatprep.subr.bf16.mxu0 0
        %3413 = vmatpush1.bf16.xpose.msra.mxu0 0
        %3414 = vmatprep.subr.bf16.mxu0 0
        %3415 = vmatpush1.bf16.xpose.msra.mxu0 0
        %3416 = vmatprep.subr.bf16.mxu0 0
        %3417 = vmatpush1.bf16.xpose.msra.mxu0 0
        %3418 = vmatprep.subr.bf16.mxu0 0
        %3419 = vmatpush1.bf16.xpose.msra.mxu0 0
        %3420 = vmatprep.subr.bf16.mxu0 0
        %3421 = vmatpush1.bf16.xpose.msra.mxu0 0
        %3422 = vmatprep.subr.bf16.mxu0 0
        %3423 = vmatpush1.bf16.xpose.msra.mxu0 0
        %3424 = vmatprep.subr.bf16.mxu0 0
        %3425 = vmatpush1.bf16.xpose.msra.mxu0 0
        %3426 = vmatprep.subr.bf16.mxu0 0
        %3427 = vmatpush1.bf16.xpose.msra.mxu0 0
        %3428 = vmatprep.subr.bf16.mxu0 0
        %3429 = vmatpush1.bf16.xpose.msra.mxu0 0
        %3430 = vmatprep.mubr.bf16.mxu0 0
        %3431 = vmatmul.mubr.bf16.gmra.mrb[0].mxu0 %v3396
        %v3432 = vpop.f32.mrb[0].mxu0
        %v3433 = vadd.f32 0.0, %v3432
        %v3434 = vpop.f32.mrb[0].mxu0
        %v3435 = vpop.f32.mrb[0].mxu0
        %v3436 = vadd.f32 0.0, %v3435
        %v3437 = vpop.f32.mrb[0].mxu0
        %3438 = vdwg.mxu0
        %v3440 = vsel %vm663, %v2496, 0
        %3442 = vmatprep.subr.bf16.mxu0 0
        %3443 = vmatpush1.bf16.xpose.msra.mxu0 %v2516
        %3444 = vmatprep.subr.bf16.mxu0 0
        %3445 = vmatpush1.bf16.xpose.msra.mxu0 0
        %3446 = vmatprep.subr.bf16.mxu0 0
        %3447 = vmatpush1.bf16.xpose.msra.mxu0 0
        %3448 = vmatprep.subr.bf16.mxu0 0
        %3449 = vmatpush1.bf16.xpose.msra.mxu0 0
        %3450 = vmatprep.subr.bf16.mxu0 0
        %3451 = vmatpush1.bf16.xpose.msra.mxu0 0
        %3452 = vmatprep.subr.bf16.mxu0 0
        %3453 = vmatpush1.bf16.xpose.msra.mxu0 0
        %3454 = vmatprep.subr.bf16.mxu0 0
        %3455 = vmatpush1.bf16.xpose.msra.mxu0 0
        %3456 = vmatprep.subr.bf16.mxu0 0
        %3457 = vmatpush1.bf16.xpose.msra.mxu0 0
        %3458 = vmatprep.subr.bf16.mxu0 0
        %3459 = vmatpush1.bf16.xpose.msra.mxu0 0
        %3460 = vmatprep.subr.bf16.mxu0 0
        %3461 = vmatpush1.bf16.xpose.msra.mxu0 0
        %3462 = vmatprep.subr.bf16.mxu0 0
        %3463 = vmatpush1.bf16.xpose.msra.mxu0 0
        %3464 = vmatprep.subr.bf16.mxu0 0
        %3465 = vmatpush1.bf16.xpose.msra.mxu0 0
        %3466 = vmatprep.subr.bf16.mxu0 0
        %3467 = vmatpush1.bf16.xpose.msra.mxu0 0
        %3468 = vmatprep.subr.bf16.mxu0 0
        %3469 = vmatpush1.bf16.xpose.msra.mxu0 0
        %3470 = vmatprep.subr.bf16.mxu0 0
        %3471 = vmatpush1.bf16.xpose.msra.mxu0 0
        %3472 = vmatprep.subr.bf16.mxu0 0
        %3473 = vmatpush1.bf16.xpose.msra.mxu0 0
        %3474 = vmatprep.mubr.bf16.mxu0 0
        %3475 = vmatmul.mubr.bf16.gmra.mrb[0].mxu0 %v3440
        %v3476 = vpop.f32.mrb[0].mxu0
        %v3477 = vadd.f32 0.0, %v3476
        %v3478 = vpop.f32.mrb[0].mxu0
        %v3479 = vpop.f32.mrb[0].mxu0
        %v3480 = vadd.f32 0.0, %v3479
        %v3481 = vpop.f32.mrb[0].mxu0
        %3482 = vdwg.mxu0
        %v3484 = vsel %vm663, %v2497, 0
        %3486 = vmatprep.subr.bf16.mxu0 0
        %3487 = vmatpush1.bf16.xpose.msra.mxu0 %v2516
        %3488 = vmatprep.subr.bf16.mxu0 0
        %3489 = vmatpush1.bf16.xpose.msra.mxu0 0
        %3490 = vmatprep.subr.bf16.mxu0 0
        %3491 = vmatpush1.bf16.xpose.msra.mxu0 0
        %3492 = vmatprep.subr.bf16.mxu0 0
        %3493 = vmatpush1.bf16.xpose.msra.mxu0 0
        %3494 = vmatprep.subr.bf16.mxu0 0
        %3495 = vmatpush1.bf16.xpose.msra.mxu0 0
        %3496 = vmatprep.subr.bf16.mxu0 0
        %3497 = vmatpush1.bf16.xpose.msra.mxu0 0
        %3498 = vmatprep.subr.bf16.mxu0 0
        %3499 = vmatpush1.bf16.xpose.msra.mxu0 0
        %3500 = vmatprep.subr.bf16.mxu0 0
        %3501 = vmatpush1.bf16.xpose.msra.mxu0 0
        %3502 = vmatprep.subr.bf16.mxu0 0
        %3503 = vmatpush1.bf16.xpose.msra.mxu0 0
        %3504 = vmatprep.subr.bf16.mxu0 0
        %3505 = vmatpush1.bf16.xpose.msra.mxu0 0
        %3506 = vmatprep.subr.bf16.mxu0 0
        %3507 = vmatpush1.bf16.xpose.msra.mxu0 0
        %3508 = vmatprep.subr.bf16.mxu0 0
        %3509 = vmatpush1.bf16.xpose.msra.mxu0 0
        %3510 = vmatprep.subr.bf16.mxu0 0
        %3511 = vmatpush1.bf16.xpose.msra.mxu0 0
        %3512 = vmatprep.subr.bf16.mxu0 0
        %3513 = vmatpush1.bf16.xpose.msra.mxu0 0
        %3514 = vmatprep.subr.bf16.mxu0 0
        %3515 = vmatpush1.bf16.xpose.msra.mxu0 0
        %3516 = vmatprep.subr.bf16.mxu0 0
        %3517 = vmatpush1.bf16.xpose.msra.mxu0 0
        %3518 = vmatprep.mubr.bf16.mxu0 0
        %3519 = vmatmul.mubr.bf16.gmra.mrb[0].mxu0 %v3484
        %v3520 = vpop.f32.mrb[0].mxu0
        %v3521 = vadd.f32 0.0, %v3520
        %v3522 = vpop.f32.mrb[0].mxu0
        %v3523 = vpop.f32.mrb[0].mxu0
        %v3524 = vadd.f32 0.0, %v3523
        %v3525 = vpop.f32.mrb[0].mxu0
        %3526 = vdwg.mxu0
        %v3528 = vsel %vm663, %v2498, 0
        %3530 = vmatprep.subr.bf16.mxu0 0
        %3531 = vmatpush1.bf16.xpose.msra.mxu0 %v2516
        %3532 = vmatprep.subr.bf16.mxu0 0
        %3533 = vmatpush1.bf16.xpose.msra.mxu0 0
        %3534 = vmatprep.subr.bf16.mxu0 0
        %3535 = vmatpush1.bf16.xpose.msra.mxu0 0
        %3536 = vmatprep.subr.bf16.mxu0 0
        %3537 = vmatpush1.bf16.xpose.msra.mxu0 0
        %3538 = vmatprep.subr.bf16.mxu0 0
        %3539 = vmatpush1.bf16.xpose.msra.mxu0 0
        %3540 = vmatprep.subr.bf16.mxu0 0
        %3541 = vmatpush1.bf16.xpose.msra.mxu0 0
        %3542 = vmatprep.subr.bf16.mxu0 0
        %3543 = vmatpush1.bf16.xpose.msra.mxu0 0
        %3544 = vmatprep.subr.bf16.mxu0 0
        %3545 = vmatpush1.bf16.xpose.msra.mxu0 0
        %3546 = vmatprep.subr.bf16.mxu0 0
        %3547 = vmatpush1.bf16.xpose.msra.mxu0 0
        %3548 = vmatprep.subr.bf16.mxu0 0
        %3549 = vmatpush1.bf16.xpose.msra.mxu0 0
        %3550 = vmatprep.subr.bf16.mxu0 0
        %3551 = vmatpush1.bf16.xpose.msra.mxu0 0
        %3552 = vmatprep.subr.bf16.mxu0 0
        %3553 = vmatpush1.bf16.xpose.msra.mxu0 0
        %3554 = vmatprep.subr.bf16.mxu0 0
        %3555 = vmatpush1.bf16.xpose.msra.mxu0 0
        %3556 = vmatprep.subr.bf16.mxu0 0
        %3557 = vmatpush1.bf16.xpose.msra.mxu0 0
        %3558 = vmatprep.subr.bf16.mxu0 0
        %3559 = vmatpush1.bf16.xpose.msra.mxu0 0
        %3560 = vmatprep.subr.bf16.mxu0 0
        %3561 = vmatpush1.bf16.xpose.msra.mxu0 0
        %3562 = vmatprep.mubr.bf16.mxu0 0
        %3563 = vmatmul.mubr.bf16.gmra.mrb[0].mxu0 %v3528
        %v3564 = vpop.f32.mrb[0].mxu0
        %v3565 = vadd.f32 0.0, %v3564
        %v3566 = vpop.f32.mrb[0].mxu0
        %v3567 = vpop.f32.mrb[0].mxu0
        %v3568 = vadd.f32 0.0, %v3567
        %v3569 = vpop.f32.mrb[0].mxu0
        %3570 = vdwg.mxu0
        %v3572 = vsel %vm663, %v2499, 0
        %3574 = vmatprep.subr.bf16.mxu0 0
        %3575 = vmatpush1.bf16.xpose.msra.mxu0 %v2516
        %3576 = vmatprep.subr.bf16.mxu0 0
        %3577 = vmatpush1.bf16.xpose.msra.mxu0 0
        %3578 = vmatprep.subr.bf16.mxu0 0
        %3579 = vmatpush1.bf16.xpose.msra.mxu0 0
        %3580 = vmatprep.subr.bf16.mxu0 0
        %3581 = vmatpush1.bf16.xpose.msra.mxu0 0
        %3582 = vmatprep.subr.bf16.mxu0 0
        %3583 = vmatpush1.bf16.xpose.msra.mxu0 0
        %3584 = vmatprep.subr.bf16.mxu0 0
        %3585 = vmatpush1.bf16.xpose.msra.mxu0 0
        %3586 = vmatprep.subr.bf16.mxu0 0
        %3587 = vmatpush1.bf16.xpose.msra.mxu0 0
        %3588 = vmatprep.subr.bf16.mxu0 0
        %3589 = vmatpush1.bf16.xpose.msra.mxu0 0
        %3590 = vmatprep.subr.bf16.mxu0 0
        %3591 = vmatpush1.bf16.xpose.msra.mxu0 0
        %3592 = vmatprep.subr.bf16.mxu0 0
        %3593 = vmatpush1.bf16.xpose.msra.mxu0 0
        %3594 = vmatprep.subr.bf16.mxu0 0
        %3595 = vmatpush1.bf16.xpose.msra.mxu0 0
        %3596 = vmatprep.subr.bf16.mxu0 0
        %3597 = vmatpush1.bf16.xpose.msra.mxu0 0
        %3598 = vmatprep.subr.bf16.mxu0 0
        %3599 = vmatpush1.bf16.xpose.msra.mxu0 0
        %3600 = vmatprep.subr.bf16.mxu0 0
        %3601 = vmatpush1.bf16.xpose.msra.mxu0 0
        %3602 = vmatprep.subr.bf16.mxu0 0
        %3603 = vmatpush1.bf16.xpose.msra.mxu0 0
        %3604 = vmatprep.subr.bf16.mxu0 0
        %3605 = vmatpush1.bf16.xpose.msra.mxu0 0
        %3606 = vmatprep.mubr.bf16.mxu0 0
        %3607 = vmatmul.mubr.bf16.gmra.mrb[0].mxu0 %v3572
        %v3608 = vpop.f32.mrb[0].mxu0
        %v3609 = vadd.f32 0.0, %v3608
        %v3610 = vpop.f32.mrb[0].mxu0
        %v3611 = vpop.f32.mrb[0].mxu0
        %v3612 = vadd.f32 0.0, %v3611
        %v3613 = vpop.f32.mrb[0].mxu0
        %3614 = vdwg.mxu0
        %v3616 = vsel %vm663, %v2500, 0
        %3618 = vmatprep.subr.bf16.mxu0 0
        %3619 = vmatpush1.bf16.xpose.msra.mxu0 %v2516
        %3620 = vmatprep.subr.bf16.mxu0 0
        %3621 = vmatpush1.bf16.xpose.msra.mxu0 0
        %3622 = vmatprep.subr.bf16.mxu0 0
        %3623 = vmatpush1.bf16.xpose.msra.mxu0 0
        %3624 = vmatprep.subr.bf16.mxu0 0
        %3625 = vmatpush1.bf16.xpose.msra.mxu0 0
        %3626 = vmatprep.subr.bf16.mxu0 0
        %3627 = vmatpush1.bf16.xpose.msra.mxu0 0
        %3628 = vmatprep.subr.bf16.mxu0 0
        %3629 = vmatpush1.bf16.xpose.msra.mxu0 0
        %3630 = vmatprep.subr.bf16.mxu0 0
        %3631 = vmatpush1.bf16.xpose.msra.mxu0 0
        %3632 = vmatprep.subr.bf16.mxu0 0
        %3633 = vmatpush1.bf16.xpose.msra.mxu0 0
        %3634 = vmatprep.subr.bf16.mxu0 0
        %3635 = vmatpush1.bf16.xpose.msra.mxu0 0
        %3636 = vmatprep.subr.bf16.mxu0 0
        %3637 = vmatpush1.bf16.xpose.msra.mxu0 0
        %3638 = vmatprep.subr.bf16.mxu0 0
        %3639 = vmatpush1.bf16.xpose.msra.mxu0 0
        %3640 = vmatprep.subr.bf16.mxu0 0
        %3641 = vmatpush1.bf16.xpose.msra.mxu0 0
        %3642 = vmatprep.subr.bf16.mxu0 0
        %3643 = vmatpush1.bf16.xpose.msra.mxu0 0
        %3644 = vmatprep.subr.bf16.mxu0 0
        %3645 = vmatpush1.bf16.xpose.msra.mxu0 0
        %3646 = vmatprep.subr.bf16.mxu0 0
        %3647 = vmatpush1.bf16.xpose.msra.mxu0 0
        %3648 = vmatprep.subr.bf16.mxu0 0
        %3649 = vmatpush1.bf16.xpose.msra.mxu0 0
        %3650 = vmatprep.mubr.bf16.mxu0 0
        %3651 = vmatmul.mubr.bf16.gmra.mrb[0].mxu0 %v3616
        %v3652 = vpop.f32.mrb[0].mxu0
        %v3653 = vadd.f32 0.0, %v3652
        %v3654 = vpop.f32.mrb[0].mxu0
        %v3655 = vpop.f32.mrb[0].mxu0
        %v3656 = vadd.f32 0.0, %v3655
        %v3657 = vpop.f32.mrb[0].mxu0
        %3658 = vdwg.mxu0
        %v3660 = vsel %vm663, %v2501, 0
        %3662 = vmatprep.subr.bf16.mxu0 0
        %3663 = vmatpush1.bf16.xpose.msra.mxu0 %v2516
        %3664 = vmatprep.subr.bf16.mxu0 0
        %3665 = vmatpush1.bf16.xpose.msra.mxu0 0
        %3666 = vmatprep.subr.bf16.mxu0 0
        %3667 = vmatpush1.bf16.xpose.msra.mxu0 0
        %3668 = vmatprep.subr.bf16.mxu0 0
        %3669 = vmatpush1.bf16.xpose.msra.mxu0 0
        %3670 = vmatprep.subr.bf16.mxu0 0
        %3671 = vmatpush1.bf16.xpose.msra.mxu0 0
        %3672 = vmatprep.subr.bf16.mxu0 0
        %3673 = vmatpush1.bf16.xpose.msra.mxu0 0
        %3674 = vmatprep.subr.bf16.mxu0 0
        %3675 = vmatpush1.bf16.xpose.msra.mxu0 0
        %3676 = vmatprep.subr.bf16.mxu0 0
        %3677 = vmatpush1.bf16.xpose.msra.mxu0 0
        %3678 = vmatprep.subr.bf16.mxu0 0
        %3679 = vmatpush1.bf16.xpose.msra.mxu0 0
        %3680 = vmatprep.subr.bf16.mxu0 0
        %3681 = vmatpush1.bf16.xpose.msra.mxu0 0
        %3682 = vmatprep.subr.bf16.mxu0 0
        %3683 = vmatpush1.bf16.xpose.msra.mxu0 0
        %3684 = vmatprep.subr.bf16.mxu0 0
        %3685 = vmatpush1.bf16.xpose.msra.mxu0 0
        %3686 = vmatprep.subr.bf16.mxu0 0
        %3687 = vmatpush1.bf16.xpose.msra.mxu0 0
        %3688 = vmatprep.subr.bf16.mxu0 0
        %3689 = vmatpush1.bf16.xpose.msra.mxu0 0
        %3690 = vmatprep.subr.bf16.mxu0 0
        %3691 = vmatpush1.bf16.xpose.msra.mxu0 0
        %3692 = vmatprep.subr.bf16.mxu0 0
        %3693 = vmatpush1.bf16.xpose.msra.mxu0 0
        %3694 = vmatprep.mubr.bf16.mxu0 0
        %3695 = vmatmul.mubr.bf16.gmra.mrb[0].mxu0 %v3660
        %v3696 = vpop.f32.mrb[0].mxu0
        %v3697 = vadd.f32 0.0, %v3696
        %v3698 = vpop.f32.mrb[0].mxu0
        %v3699 = vpop.f32.mrb[0].mxu0
        %v3700 = vadd.f32 0.0, %v3699
        %v3701 = vpop.f32.mrb[0].mxu0
        %3702 = vdwg.mxu0
        %v3704 = vsel %vm663, %v2502, 0
        %3706 = vmatprep.subr.bf16.mxu0 0
        %3707 = vmatpush1.bf16.xpose.msra.mxu0 %v2516
        %3708 = vmatprep.subr.bf16.mxu0 0
        %3709 = vmatpush1.bf16.xpose.msra.mxu0 0
        %3710 = vmatprep.subr.bf16.mxu0 0
        %3711 = vmatpush1.bf16.xpose.msra.mxu0 0
        %3712 = vmatprep.subr.bf16.mxu0 0
        %3713 = vmatpush1.bf16.xpose.msra.mxu0 0
        %3714 = vmatprep.subr.bf16.mxu0 0
        %3715 = vmatpush1.bf16.xpose.msra.mxu0 0
        %3716 = vmatprep.subr.bf16.mxu0 0
        %3717 = vmatpush1.bf16.xpose.msra.mxu0 0
        %3718 = vmatprep.subr.bf16.mxu0 0
        %3719 = vmatpush1.bf16.xpose.msra.mxu0 0
        %3720 = vmatprep.subr.bf16.mxu0 0
        %3721 = vmatpush1.bf16.xpose.msra.mxu0 0
        %3722 = vmatprep.subr.bf16.mxu0 0
        %3723 = vmatpush1.bf16.xpose.msra.mxu0 0
        %3724 = vmatprep.subr.bf16.mxu0 0
        %3725 = vmatpush1.bf16.xpose.msra.mxu0 0
        %3726 = vmatprep.subr.bf16.mxu0 0
        %3727 = vmatpush1.bf16.xpose.msra.mxu0 0
        %3728 = vmatprep.subr.bf16.mxu0 0
        %3729 = vmatpush1.bf16.xpose.msra.mxu0 0
        %3730 = vmatprep.subr.bf16.mxu0 0
        %3731 = vmatpush1.bf16.xpose.msra.mxu0 0
        %3732 = vmatprep.subr.bf16.mxu0 0
        %3733 = vmatpush1.bf16.xpose.msra.mxu0 0
        %3734 = vmatprep.subr.bf16.mxu0 0
        %3735 = vmatpush1.bf16.xpose.msra.mxu0 0
        %3736 = vmatprep.subr.bf16.mxu0 0
        %3737 = vmatpush1.bf16.xpose.msra.mxu0 0
        %3738 = vmatprep.mubr.bf16.mxu0 0
        %3739 = vmatmul.mubr.bf16.gmra.mrb[0].mxu0 %v3704
        %v3740 = vpop.f32.mrb[0].mxu0
        %v3741 = vadd.f32 0.0, %v3740
        %v3742 = vpop.f32.mrb[0].mxu0
        %v3743 = vpop.f32.mrb[0].mxu0
        %v3744 = vadd.f32 0.0, %v3743
        %v3745 = vpop.f32.mrb[0].mxu0
        %3746 = vdwg.mxu0
        %v3748 = vsel %vm663, %v2503, 0
        %3750 = vmatprep.subr.bf16.mxu0 0
        %3751 = vmatpush1.bf16.xpose.msra.mxu0 %v2516
        %3752 = vmatprep.subr.bf16.mxu0 0
        %3753 = vmatpush1.bf16.xpose.msra.mxu0 0
        %3754 = vmatprep.subr.bf16.mxu0 0
        %3755 = vmatpush1.bf16.xpose.msra.mxu0 0
        %3756 = vmatprep.subr.bf16.mxu0 0
        %3757 = vmatpush1.bf16.xpose.msra.mxu0 0
        %3758 = vmatprep.subr.bf16.mxu0 0
        %3759 = vmatpush1.bf16.xpose.msra.mxu0 0
        %3760 = vmatprep.subr.bf16.mxu0 0
        %3761 = vmatpush1.bf16.xpose.msra.mxu0 0
        %3762 = vmatprep.subr.bf16.mxu0 0
        %3763 = vmatpush1.bf16.xpose.msra.mxu0 0
        %3764 = vmatprep.subr.bf16.mxu0 0
        %3765 = vmatpush1.bf16.xpose.msra.mxu0 0
        %3766 = vmatprep.subr.bf16.mxu0 0
        %3767 = vmatpush1.bf16.xpose.msra.mxu0 0
        %3768 = vmatprep.subr.bf16.mxu0 0
        %3769 = vmatpush1.bf16.xpose.msra.mxu0 0
        %3770 = vmatprep.subr.bf16.mxu0 0
        %3771 = vmatpush1.bf16.xpose.msra.mxu0 0
        %3772 = vmatprep.subr.bf16.mxu0 0
        %3773 = vmatpush1.bf16.xpose.msra.mxu0 0
        %3774 = vmatprep.subr.bf16.mxu0 0
        %3775 = vmatpush1.bf16.xpose.msra.mxu0 0
        %3776 = vmatprep.subr.bf16.mxu0 0
        %3777 = vmatpush1.bf16.xpose.msra.mxu0 0
        %3778 = vmatprep.subr.bf16.mxu0 0
        %3779 = vmatpush1.bf16.xpose.msra.mxu0 0
        %3780 = vmatprep.subr.bf16.mxu0 0
        %3781 = vmatpush1.bf16.xpose.msra.mxu0 0
        %3782 = vmatprep.mubr.bf16.mxu0 0
        %3783 = vmatmul.mubr.bf16.gmra.mrb[0].mxu0 %v3748
        %v3784 = vpop.f32.mrb[0].mxu0
        %v3785 = vadd.f32 0.0, %v3784
        %v3786 = vpop.f32.mrb[0].mxu0
        %v3787 = vpop.f32.mrb[0].mxu0
        %v3788 = vadd.f32 0.0, %v3787
        %v3789 = vpop.f32.mrb[0].mxu0
        %3790 = vdwg.mxu0
        %v3792 = vsel %vm663, %v2504, 0
        %3794 = vmatprep.subr.bf16.mxu0 0
        %3795 = vmatpush1.bf16.xpose.msra.mxu0 %v2516
        %3796 = vmatprep.subr.bf16.mxu0 0
        %3797 = vmatpush1.bf16.xpose.msra.mxu0 0
        %3798 = vmatprep.subr.bf16.mxu0 0
        %3799 = vmatpush1.bf16.xpose.msra.mxu0 0
        %3800 = vmatprep.subr.bf16.mxu0 0
        %3801 = vmatpush1.bf16.xpose.msra.mxu0 0
        %3802 = vmatprep.subr.bf16.mxu0 0
        %3803 = vmatpush1.bf16.xpose.msra.mxu0 0
        %3804 = vmatprep.subr.bf16.mxu0 0
        %3805 = vmatpush1.bf16.xpose.msra.mxu0 0
        %3806 = vmatprep.subr.bf16.mxu0 0
        %3807 = vmatpush1.bf16.xpose.msra.mxu0 0
        %3808 = vmatprep.subr.bf16.mxu0 0
        %3809 = vmatpush1.bf16.xpose.msra.mxu0 0
        %3810 = vmatprep.subr.bf16.mxu0 0
        %3811 = vmatpush1.bf16.xpose.msra.mxu0 0
        %3812 = vmatprep.subr.bf16.mxu0 0
        %3813 = vmatpush1.bf16.xpose.msra.mxu0 0
        %3814 = vmatprep.subr.bf16.mxu0 0
        %3815 = vmatpush1.bf16.xpose.msra.mxu0 0
        %3816 = vmatprep.subr.bf16.mxu0 0
        %3817 = vmatpush1.bf16.xpose.msra.mxu0 0
        %3818 = vmatprep.subr.bf16.mxu0 0
        %3819 = vmatpush1.bf16.xpose.msra.mxu0 0
        %3820 = vmatprep.subr.bf16.mxu0 0
        %3821 = vmatpush1.bf16.xpose.msra.mxu0 0
        %3822 = vmatprep.subr.bf16.mxu0 0
        %3823 = vmatpush1.bf16.xpose.msra.mxu0 0
        %3824 = vmatprep.subr.bf16.mxu0 0
        %3825 = vmatpush1.bf16.xpose.msra.mxu0 0
        %3826 = vmatprep.mubr.bf16.mxu0 0
        %3827 = vmatmul.mubr.bf16.gmra.mrb[0].mxu0 %v3792
        %v3828 = vpop.f32.mrb[0].mxu0
        %v3829 = vadd.f32 0.0, %v3828
        %v3830 = vpop.f32.mrb[0].mxu0
        %v3831 = vpop.f32.mrb[0].mxu0
        %v3832 = vadd.f32 0.0, %v3831
        %v3833 = vpop.f32.mrb[0].mxu0
        %3834 = vdwg.mxu0
        %v3836 = vsel %vm663, %v2505, 0
        %3838 = vmatprep.subr.bf16.mxu0 0
        %3839 = vmatpush1.bf16.xpose.msra.mxu0 %v2516
        %3840 = vmatprep.subr.bf16.mxu0 0
        %3841 = vmatpush1.bf16.xpose.msra.mxu0 0
        %3842 = vmatprep.subr.bf16.mxu0 0
        %3843 = vmatpush1.bf16.xpose.msra.mxu0 0
        %3844 = vmatprep.subr.bf16.mxu0 0
        %3845 = vmatpush1.bf16.xpose.msra.mxu0 0
        %3846 = vmatprep.subr.bf16.mxu0 0
        %3847 = vmatpush1.bf16.xpose.msra.mxu0 0
        %3848 = vmatprep.subr.bf16.mxu0 0
        %3849 = vmatpush1.bf16.xpose.msra.mxu0 0
        %3850 = vmatprep.subr.bf16.mxu0 0
        %3851 = vmatpush1.bf16.xpose.msra.mxu0 0
        %3852 = vmatprep.subr.bf16.mxu0 0
        %3853 = vmatpush1.bf16.xpose.msra.mxu0 0
        %3854 = vmatprep.subr.bf16.mxu0 0
        %3855 = vmatpush1.bf16.xpose.msra.mxu0 0
        %3856 = vmatprep.subr.bf16.mxu0 0
        %3857 = vmatpush1.bf16.xpose.msra.mxu0 0
        %3858 = vmatprep.subr.bf16.mxu0 0
        %3859 = vmatpush1.bf16.xpose.msra.mxu0 0
        %3860 = vmatprep.subr.bf16.mxu0 0
        %3861 = vmatpush1.bf16.xpose.msra.mxu0 0
        %3862 = vmatprep.subr.bf16.mxu0 0
        %3863 = vmatpush1.bf16.xpose.msra.mxu0 0
        %3864 = vmatprep.subr.bf16.mxu0 0
        %3865 = vmatpush1.bf16.xpose.msra.mxu0 0
        %3866 = vmatprep.subr.bf16.mxu0 0
        %3867 = vmatpush1.bf16.xpose.msra.mxu0 0
        %3868 = vmatprep.subr.bf16.mxu0 0
        %3869 = vmatpush1.bf16.xpose.msra.mxu0 0
        %3870 = vmatprep.mubr.bf16.mxu0 0
        %3871 = vmatmul.mubr.bf16.gmra.mrb[0].mxu0 %v3836
        %v3872 = vpop.f32.mrb[0].mxu0
        %v3873 = vadd.f32 0.0, %v3872
        %v3874 = vpop.f32.mrb[0].mxu0
        %v3875 = vpop.f32.mrb[0].mxu0
        %v3876 = vadd.f32 0.0, %v3875
        %v3877 = vpop.f32.mrb[0].mxu0
        %3878 = vdwg.mxu0
        %v3880 = vsel %vm663, %v2506, 0
        %3882 = vmatprep.subr.bf16.mxu0 0
        %3883 = vmatpush1.bf16.xpose.msra.mxu0 %v2516
        %3884 = vmatprep.subr.bf16.mxu0 0
        %3885 = vmatpush1.bf16.xpose.msra.mxu0 0
        %3886 = vmatprep.subr.bf16.mxu0 0
        %3887 = vmatpush1.bf16.xpose.msra.mxu0 0
        %3888 = vmatprep.subr.bf16.mxu0 0
        %3889 = vmatpush1.bf16.xpose.msra.mxu0 0
        %3890 = vmatprep.subr.bf16.mxu0 0
        %3891 = vmatpush1.bf16.xpose.msra.mxu0 0
        %3892 = vmatprep.subr.bf16.mxu0 0
        %3893 = vmatpush1.bf16.xpose.msra.mxu0 0
        %3894 = vmatprep.subr.bf16.mxu0 0
        %3895 = vmatpush1.bf16.xpose.msra.mxu0 0
        %3896 = vmatprep.subr.bf16.mxu0 0
        %3897 = vmatpush1.bf16.xpose.msra.mxu0 0
        %3898 = vmatprep.subr.bf16.mxu0 0
        %3899 = vmatpush1.bf16.xpose.msra.mxu0 0
        %3900 = vmatprep.subr.bf16.mxu0 0
        %3901 = vmatpush1.bf16.xpose.msra.mxu0 0
        %3902 = vmatprep.subr.bf16.mxu0 0
        %3903 = vmatpush1.bf16.xpose.msra.mxu0 0
        %3904 = vmatprep.subr.bf16.mxu0 0
        %3905 = vmatpush1.bf16.xpose.msra.mxu0 0
        %3906 = vmatprep.subr.bf16.mxu0 0
        %3907 = vmatpush1.bf16.xpose.msra.mxu0 0
        %3908 = vmatprep.subr.bf16.mxu0 0
        %3909 = vmatpush1.bf16.xpose.msra.mxu0 0
        %3910 = vmatprep.subr.bf16.mxu0 0
        %3911 = vmatpush1.bf16.xpose.msra.mxu0 0
        %3912 = vmatprep.subr.bf16.mxu0 0
        %3913 = vmatpush1.bf16.xpose.msra.mxu0 0
        %3914 = vmatprep.mubr.bf16.mxu0 0
        %3915 = vmatmul.mubr.bf16.gmra.mrb[0].mxu0 %v3880
        %v3916 = vpop.f32.mrb[0].mxu0
        %v3917 = vadd.f32 0.0, %v3916
        %v3918 = vpop.f32.mrb[0].mxu0
        %v3919 = vpop.f32.mrb[0].mxu0
        %v3920 = vadd.f32 0.0, %v3919
        %v3921 = vpop.f32.mrb[0].mxu0
        %3922 = vdwg.mxu0
        %v3923 = vadd.f32 %v959, %v2553
        %v3924 = vadd.f32 %v960, %v2556
        %v3925 = vadd.f32 %v961, %v2597
        %v3926 = vadd.f32 %v962, %v2600
        %v3927 = vadd.f32 %v963, %v2641
        %v3928 = vadd.f32 %v964, %v2644
        %v3929 = vadd.f32 %v965, %v2685
        %v3930 = vadd.f32 %v966, %v2688
        %v3931 = vadd.f32 %v967, %v2729
        %v3932 = vadd.f32 %v968, %v2732
        %v3933 = vadd.f32 %v969, %v2773
        %v3934 = vadd.f32 %v970, %v2776
        %v3935 = vadd.f32 %v971, %v2817
        %v3936 = vadd.f32 %v972, %v2820
        %v3937 = vadd.f32 %v973, %v2861
        %v3938 = vadd.f32 %v974, %v2864
        %v3939 = vadd.f32 %v975, %v2905
        %v3940 = vadd.f32 %v976, %v2908
        %v3941 = vadd.f32 %v977, %v2949
        %v3942 = vadd.f32 %v978, %v2952
        %v3943 = vadd.f32 %v979, %v2993
        %v3944 = vadd.f32 %v980, %v2996
        %v3945 = vadd.f32 %v981, %v3037
        %v3946 = vadd.f32 %v982, %v3040
        %v3947 = vadd.f32 %v983, %v3081
        %v3948 = vadd.f32 %v984, %v3084
        %v3949 = vadd.f32 %v985, %v3125
        %v3950 = vadd.f32 %v986, %v3128
        %v3951 = vadd.f32 %v987, %v3169
        %v3952 = vadd.f32 %v988, %v3172
        %v3953 = vadd.f32 %v989, %v3213
        %v3954 = vadd.f32 %v990, %v3216
        %v3955 = vadd.f32 %v991, %v3257
        %v3956 = vadd.f32 %v992, %v3260
        %v3957 = vadd.f32 %v993, %v3301
        %v3958 = vadd.f32 %v994, %v3304
        %v3959 = vadd.f32 %v995, %v3345
        %v3960 = vadd.f32 %v996, %v3348
        %v3961 = vadd.f32 %v997, %v3389
        %v3962 = vadd.f32 %v998, %v3392
        %v3963 = vadd.f32 %v999, %v3433
        %v3964 = vadd.f32 %v1000, %v3436
        %v3965 = vadd.f32 %v1001, %v3477
        %v3966 = vadd.f32 %v1002, %v3480
        %v3967 = vadd.f32 %v1003, %v3521
        %v3968 = vadd.f32 %v1004, %v3524
        %v3969 = vadd.f32 %v1005, %v3565
        %v3970 = vadd.f32 %v1006, %v3568
        %v3971 = vadd.f32 %v1007, %v3609
        %v3972 = vadd.f32 %v1008, %v3612
        %v3973 = vadd.f32 %v1009, %v3653
        %v3974 = vadd.f32 %v1010, %v3656
        %v3975 = vadd.f32 %v1011, %v3697
        %v3976 = vadd.f32 %v1012, %v3700
        %v3977 = vadd.f32 %v1013, %v3741
        %v3978 = vadd.f32 %v1014, %v3744
        %v3979 = vadd.f32 %v1015, %v3785
        %v3980 = vadd.f32 %v1016, %v3788
        %v3981 = vadd.f32 %v1017, %v3829
        %v3982 = vadd.f32 %v1018, %v3832
        %v3983 = vadd.f32 %v1019, %v3873
        %v3984 = vadd.f32 %v1020, %v3876
        %v3985 = vadd.f32 %v1021, %v3917
        %v3986 = vadd.f32 %v1022, %v3920
        %v3987 = vld [vmem:[%s626] sm:$0x3]
        %v3988 = vld [vmem:[%s626 + $0x2] sm:$0x3]
        %v3989 = vld [vmem:[%s626 + $0x4] sm:$0x3]
        %v3990 = vld [vmem:[%s626 + $0x6] sm:$0x3]
        %v3991 = vld [vmem:[%s626 + $0x8] sm:$0x3]
        %v3992 = vld [vmem:[%s626 + $0xa] sm:$0x3]
        %v3993 = vld [vmem:[%s626 + $0xc] sm:$0x3]
        %v3994 = vld [vmem:[%s626 + $0xe] sm:$0x3]
        %v3995 = vld [vmem:[%s626 + $0x10] sm:$0x3]
        %v3996 = vld [vmem:[%s626 + $0x12] sm:$0x3]
        %v3997 = vld [vmem:[%s626 + $0x14] sm:$0x3]
        %v3998 = vld [vmem:[%s626 + $0x16] sm:$0x3]
        %v3999 = vld [vmem:[%s626 + $0x18] sm:$0x3]
        %v4000 = vld [vmem:[%s626 + $0x1a] sm:$0x3]
        %v4001 = vld [vmem:[%s626 + $0x1c] sm:$0x3]
        %v4002 = vld [vmem:[%s626 + $0x1e] sm:$0x3]
        %v4003 = vld [vmem:[%s626 + $0x20] sm:$0x3]
        %v4004 = vld [vmem:[%s626 + $0x22] sm:$0x3]
        %v4005 = vld [vmem:[%s626 + $0x24] sm:$0x3]
        %v4006 = vld [vmem:[%s626 + $0x26] sm:$0x3]
        %v4007 = vld [vmem:[%s626 + $0x28] sm:$0x3]
        %v4008 = vld [vmem:[%s626 + $0x2a] sm:$0x3]
        %v4009 = vld [vmem:[%s626 + $0x2c] sm:$0x3]
        %v4010 = vld [vmem:[%s626 + $0x2e] sm:$0x3]
        %v4011 = vld [vmem:[%s626 + $0x30] sm:$0x3]
        %v4012 = vld [vmem:[%s626 + $0x32] sm:$0x3]
        %v4013 = vld [vmem:[%s626 + $0x34] sm:$0x3]
        %v4014 = vld [vmem:[%s626 + $0x36] sm:$0x3]
        %v4015 = vld [vmem:[%s626 + $0x38] sm:$0x3]
        %v4016 = vld [vmem:[%s626 + $0x3a] sm:$0x3]
        %v4017 = vld [vmem:[%s626 + $0x3c] sm:$0x3]
        %v4018 = vld [vmem:[%s626 + $0x3e] sm:$0x3]
        %v4019 = vld [vmem:[%s637] sm:$0xf]
        %v4020 = vld [vmem:[%s637 + $0x4] sm:$0xf]
        %v4023 = vunpack.c.l.b16 %v4019
        %v4024 = vunpack.c.l.b16 %v4020
        %v4025 = vpack.c.b16 %v4024, %v4023
        %v4027 = vsel %vm777, %v4025, 0
        %v4030 = vsel %vm781, %v3987, 0
        %4032 = vmatprep.subr.bf16.mxu0 0
        %4033 = vmatpush1.bf16.msra.mxu0 %v4030
        %4034 = vmatprep.subr.bf16.mxu0 0
        %4035 = vmatpush1.bf16.msra.mxu0 0
        %4036 = vmatprep.subr.bf16.mxu0 0
        %4037 = vmatpush1.bf16.msra.mxu0 0
        %4038 = vmatprep.subr.bf16.mxu0 0
        %4039 = vmatpush1.bf16.msra.mxu0 0
        %4040 = vmatprep.subr.bf16.mxu0 0
        %4041 = vmatpush1.bf16.msra.mxu0 0
        %4042 = vmatprep.subr.bf16.mxu0 0
        %4043 = vmatpush1.bf16.msra.mxu0 0
        %4044 = vmatprep.subr.bf16.mxu0 0
        %4045 = vmatpush1.bf16.msra.mxu0 0
        %4046 = vmatprep.subr.bf16.mxu0 0
        %4047 = vmatpush1.bf16.msra.mxu0 0
        %4048 = vmatprep.subr.bf16.mxu0 0
        %4049 = vmatpush1.bf16.msra.mxu0 0
        %4050 = vmatprep.subr.bf16.mxu0 0
        %4051 = vmatpush1.bf16.msra.mxu0 0
        %4052 = vmatprep.subr.bf16.mxu0 0
        %4053 = vmatpush1.bf16.msra.mxu0 0
        %4054 = vmatprep.subr.bf16.mxu0 0
        %4055 = vmatpush1.bf16.msra.mxu0 0
        %4056 = vmatprep.subr.bf16.mxu0 0
        %4057 = vmatpush1.bf16.msra.mxu0 0
        %4058 = vmatprep.subr.bf16.mxu0 0
        %4059 = vmatpush1.bf16.msra.mxu0 0
        %4060 = vmatprep.subr.bf16.mxu0 0
        %4061 = vmatpush1.bf16.msra.mxu0 0
        %4062 = vmatprep.subr.bf16.mxu0 0
        %4063 = vmatpush1.bf16.msra.mxu0 0
        %4064 = vmatprep.mubr.bf16.mxu0 0
        %4065 = vmatmul.mubr.bf16.gmra.mrb[0].mxu0 %v4027
        %v4066 = vpop.f32.mrb[0].mxu0
        %v4067 = vadd.f32 0.0, %v4066
        %v4068 = vpop.f32.mrb[0].mxu0
        %v4069 = vpop.f32.mrb[0].mxu0
        %v4070 = vadd.f32 0.0, %v4069
        %v4071 = vpop.f32.mrb[0].mxu0
        %4072 = vdwg.mxu0
        %v4074 = vsel %vm781, %v3988, 0
        %4076 = vmatprep.subr.bf16.mxu0 0
        %4077 = vmatpush1.bf16.msra.mxu0 %v4074
        %4078 = vmatprep.subr.bf16.mxu0 0
        %4079 = vmatpush1.bf16.msra.mxu0 0
        %4080 = vmatprep.subr.bf16.mxu0 0
        %4081 = vmatpush1.bf16.msra.mxu0 0
        %4082 = vmatprep.subr.bf16.mxu0 0
        %4083 = vmatpush1.bf16.msra.mxu0 0
        %4084 = vmatprep.subr.bf16.mxu0 0
        %4085 = vmatpush1.bf16.msra.mxu0 0
        %4086 = vmatprep.subr.bf16.mxu0 0
        %4087 = vmatpush1.bf16.msra.mxu0 0
        %4088 = vmatprep.subr.bf16.mxu0 0
        %4089 = vmatpush1.bf16.msra.mxu0 0
        %4090 = vmatprep.subr.bf16.mxu0 0
        %4091 = vmatpush1.bf16.msra.mxu0 0
        %4092 = vmatprep.subr.bf16.mxu0 0
        %4093 = vmatpush1.bf16.msra.mxu0 0
        %4094 = vmatprep.subr.bf16.mxu0 0
        %4095 = vmatpush1.bf16.msra.mxu0 0
        %4096 = vmatprep.subr.bf16.mxu0 0
        %4097 = vmatpush1.bf16.msra.mxu0 0
        %4098 = vmatprep.subr.bf16.mxu0 0
        %4099 = vmatpush1.bf16.msra.mxu0 0
        %4100 = vmatprep.subr.bf16.mxu0 0
        %4101 = vmatpush1.bf16.msra.mxu0 0
        %4102 = vmatprep.subr.bf16.mxu0 0
        %4103 = vmatpush1.bf16.msra.mxu0 0
        %4104 = vmatprep.subr.bf16.mxu0 0
        %4105 = vmatpush1.bf16.msra.mxu0 0
        %4106 = vmatprep.subr.bf16.mxu0 0
        %4107 = vmatpush1.bf16.msra.mxu0 0
        %4108 = vmatprep.mubr.bf16.mxu0 0
        %4109 = vmatmul.mubr.bf16.gmra.mrb[0].mxu0 %v4027
        %v4110 = vpop.f32.mrb[0].mxu0
        %v4111 = vadd.f32 0.0, %v4110
        %v4112 = vpop.f32.mrb[0].mxu0
        %v4113 = vpop.f32.mrb[0].mxu0
        %v4114 = vadd.f32 0.0, %v4113
        %v4115 = vpop.f32.mrb[0].mxu0
        %4116 = vdwg.mxu0
        %v4118 = vsel %vm781, %v3989, 0
        %4120 = vmatprep.subr.bf16.mxu0 0
        %4121 = vmatpush1.bf16.msra.mxu0 %v4118
        %4122 = vmatprep.subr.bf16.mxu0 0
        %4123 = vmatpush1.bf16.msra.mxu0 0
        %4124 = vmatprep.subr.bf16.mxu0 0
        %4125 = vmatpush1.bf16.msra.mxu0 0
        %4126 = vmatprep.subr.bf16.mxu0 0
        %4127 = vmatpush1.bf16.msra.mxu0 0
        %4128 = vmatprep.subr.bf16.mxu0 0
        %4129 = vmatpush1.bf16.msra.mxu0 0
        %4130 = vmatprep.subr.bf16.mxu0 0
        %4131 = vmatpush1.bf16.msra.mxu0 0
        %4132 = vmatprep.subr.bf16.mxu0 0
        %4133 = vmatpush1.bf16.msra.mxu0 0
        %4134 = vmatprep.subr.bf16.mxu0 0
        %4135 = vmatpush1.bf16.msra.mxu0 0
        %4136 = vmatprep.subr.bf16.mxu0 0
        %4137 = vmatpush1.bf16.msra.mxu0 0
        %4138 = vmatprep.subr.bf16.mxu0 0
        %4139 = vmatpush1.bf16.msra.mxu0 0
        %4140 = vmatprep.subr.bf16.mxu0 0
        %4141 = vmatpush1.bf16.msra.mxu0 0
        %4142 = vmatprep.subr.bf16.mxu0 0
        %4143 = vmatpush1.bf16.msra.mxu0 0
        %4144 = vmatprep.subr.bf16.mxu0 0
        %4145 = vmatpush1.bf16.msra.mxu0 0
        %4146 = vmatprep.subr.bf16.mxu0 0
        %4147 = vmatpush1.bf16.msra.mxu0 0
        %4148 = vmatprep.subr.bf16.mxu0 0
        %4149 = vmatpush1.bf16.msra.mxu0 0
        %4150 = vmatprep.subr.bf16.mxu0 0
        %4151 = vmatpush1.bf16.msra.mxu0 0
        %4152 = vmatprep.mubr.bf16.mxu0 0
        %4153 = vmatmul.mubr.bf16.gmra.mrb[0].mxu0 %v4027
        %v4154 = vpop.f32.mrb[0].mxu0
        %v4155 = vadd.f32 0.0, %v4154
        %v4156 = vpop.f32.mrb[0].mxu0
        %v4157 = vpop.f32.mrb[0].mxu0
        %v4158 = vadd.f32 0.0, %v4157
        %v4159 = vpop.f32.mrb[0].mxu0
        %4160 = vdwg.mxu0
        %v4162 = vsel %vm781, %v3990, 0
        %4164 = vmatprep.subr.bf16.mxu0 0
        %4165 = vmatpush1.bf16.msra.mxu0 %v4162
        %4166 = vmatprep.subr.bf16.mxu0 0
        %4167 = vmatpush1.bf16.msra.mxu0 0
        %4168 = vmatprep.subr.bf16.mxu0 0
        %4169 = vmatpush1.bf16.msra.mxu0 0
        %4170 = vmatprep.subr.bf16.mxu0 0
        %4171 = vmatpush1.bf16.msra.mxu0 0
        %4172 = vmatprep.subr.bf16.mxu0 0
        %4173 = vmatpush1.bf16.msra.mxu0 0
        %4174 = vmatprep.subr.bf16.mxu0 0
        %4175 = vmatpush1.bf16.msra.mxu0 0
        %4176 = vmatprep.subr.bf16.mxu0 0
        %4177 = vmatpush1.bf16.msra.mxu0 0
        %4178 = vmatprep.subr.bf16.mxu0 0
        %4179 = vmatpush1.bf16.msra.mxu0 0
        %4180 = vmatprep.subr.bf16.mxu0 0
        %4181 = vmatpush1.bf16.msra.mxu0 0
        %4182 = vmatprep.subr.bf16.mxu0 0
        %4183 = vmatpush1.bf16.msra.mxu0 0
        %4184 = vmatprep.subr.bf16.mxu0 0
        %4185 = vmatpush1.bf16.msra.mxu0 0
        %4186 = vmatprep.subr.bf16.mxu0 0
        %4187 = vmatpush1.bf16.msra.mxu0 0
        %4188 = vmatprep.subr.bf16.mxu0 0
        %4189 = vmatpush1.bf16.msra.mxu0 0
        %4190 = vmatprep.subr.bf16.mxu0 0
        %4191 = vmatpush1.bf16.msra.mxu0 0
        %4192 = vmatprep.subr.bf16.mxu0 0
        %4193 = vmatpush1.bf16.msra.mxu0 0
        %4194 = vmatprep.subr.bf16.mxu0 0
        %4195 = vmatpush1.bf16.msra.mxu0 0
        %4196 = vmatprep.mubr.bf16.mxu0 0
        %4197 = vmatmul.mubr.bf16.gmra.mrb[0].mxu0 %v4027
        %v4198 = vpop.f32.mrb[0].mxu0
        %v4199 = vadd.f32 0.0, %v4198
        %v4200 = vpop.f32.mrb[0].mxu0
        %v4201 = vpop.f32.mrb[0].mxu0
        %v4202 = vadd.f32 0.0, %v4201
        %v4203 = vpop.f32.mrb[0].mxu0
        %4204 = vdwg.mxu0
        %v4206 = vsel %vm781, %v3991, 0
        %4208 = vmatprep.subr.bf16.mxu0 0
        %4209 = vmatpush1.bf16.msra.mxu0 %v4206
        %4210 = vmatprep.subr.bf16.mxu0 0
        %4211 = vmatpush1.bf16.msra.mxu0 0
        %4212 = vmatprep.subr.bf16.mxu0 0
        %4213 = vmatpush1.bf16.msra.mxu0 0
        %4214 = vmatprep.subr.bf16.mxu0 0
        %4215 = vmatpush1.bf16.msra.mxu0 0
        %4216 = vmatprep.subr.bf16.mxu0 0
        %4217 = vmatpush1.bf16.msra.mxu0 0
        %4218 = vmatprep.subr.bf16.mxu0 0
        %4219 = vmatpush1.bf16.msra.mxu0 0
        %4220 = vmatprep.subr.bf16.mxu0 0
        %4221 = vmatpush1.bf16.msra.mxu0 0
        %4222 = vmatprep.subr.bf16.mxu0 0
        %4223 = vmatpush1.bf16.msra.mxu0 0
        %4224 = vmatprep.subr.bf16.mxu0 0
        %4225 = vmatpush1.bf16.msra.mxu0 0
        %4226 = vmatprep.subr.bf16.mxu0 0
        %4227 = vmatpush1.bf16.msra.mxu0 0
        %4228 = vmatprep.subr.bf16.mxu0 0
        %4229 = vmatpush1.bf16.msra.mxu0 0
        %4230 = vmatprep.subr.bf16.mxu0 0
        %4231 = vmatpush1.bf16.msra.mxu0 0
        %4232 = vmatprep.subr.bf16.mxu0 0
        %4233 = vmatpush1.bf16.msra.mxu0 0
        %4234 = vmatprep.subr.bf16.mxu0 0
        %4235 = vmatpush1.bf16.msra.mxu0 0
        %4236 = vmatprep.subr.bf16.mxu0 0
        %4237 = vmatpush1.bf16.msra.mxu0 0
        %4238 = vmatprep.subr.bf16.mxu0 0
        %4239 = vmatpush1.bf16.msra.mxu0 0
        %4240 = vmatprep.mubr.bf16.mxu0 0
        %4241 = vmatmul.mubr.bf16.gmra.mrb[0].mxu0 %v4027
        %v4242 = vpop.f32.mrb[0].mxu0
        %v4243 = vadd.f32 0.0, %v4242
        %v4244 = vpop.f32.mrb[0].mxu0
        %v4245 = vpop.f32.mrb[0].mxu0
        %v4246 = vadd.f32 0.0, %v4245
        %v4247 = vpop.f32.mrb[0].mxu0
        %4248 = vdwg.mxu0
        %v4250 = vsel %vm781, %v3992, 0
        %4252 = vmatprep.subr.bf16.mxu0 0
        %4253 = vmatpush1.bf16.msra.mxu0 %v4250
        %4254 = vmatprep.subr.bf16.mxu0 0
        %4255 = vmatpush1.bf16.msra.mxu0 0
        %4256 = vmatprep.subr.bf16.mxu0 0
        %4257 = vmatpush1.bf16.msra.mxu0 0
        %4258 = vmatprep.subr.bf16.mxu0 0
        %4259 = vmatpush1.bf16.msra.mxu0 0
        %4260 = vmatprep.subr.bf16.mxu0 0
        %4261 = vmatpush1.bf16.msra.mxu0 0
        %4262 = vmatprep.subr.bf16.mxu0 0
        %4263 = vmatpush1.bf16.msra.mxu0 0
        %4264 = vmatprep.subr.bf16.mxu0 0
        %4265 = vmatpush1.bf16.msra.mxu0 0
        %4266 = vmatprep.subr.bf16.mxu0 0
        %4267 = vmatpush1.bf16.msra.mxu0 0
        %4268 = vmatprep.subr.bf16.mxu0 0
        %4269 = vmatpush1.bf16.msra.mxu0 0
        %4270 = vmatprep.subr.bf16.mxu0 0
        %4271 = vmatpush1.bf16.msra.mxu0 0
        %4272 = vmatprep.subr.bf16.mxu0 0
        %4273 = vmatpush1.bf16.msra.mxu0 0
        %4274 = vmatprep.subr.bf16.mxu0 0
        %4275 = vmatpush1.bf16.msra.mxu0 0
        %4276 = vmatprep.subr.bf16.mxu0 0
        %4277 = vmatpush1.bf16.msra.mxu0 0
        %4278 = vmatprep.subr.bf16.mxu0 0
        %4279 = vmatpush1.bf16.msra.mxu0 0
        %4280 = vmatprep.subr.bf16.mxu0 0
        %4281 = vmatpush1.bf16.msra.mxu0 0
        %4282 = vmatprep.subr.bf16.mxu0 0
        %4283 = vmatpush1.bf16.msra.mxu0 0
        %4284 = vmatprep.mubr.bf16.mxu0 0
        %4285 = vmatmul.mubr.bf16.gmra.mrb[0].mxu0 %v4027
        %v4286 = vpop.f32.mrb[0].mxu0
        %v4287 = vadd.f32 0.0, %v4286
        %v4288 = vpop.f32.mrb[0].mxu0
        %v4289 = vpop.f32.mrb[0].mxu0
        %v4290 = vadd.f32 0.0, %v4289
        %v4291 = vpop.f32.mrb[0].mxu0
        %4292 = vdwg.mxu0
        %v4294 = vsel %vm781, %v3993, 0
        %4296 = vmatprep.subr.bf16.mxu0 0
        %4297 = vmatpush1.bf16.msra.mxu0 %v4294
        %4298 = vmatprep.subr.bf16.mxu0 0
        %4299 = vmatpush1.bf16.msra.mxu0 0
        %4300 = vmatprep.subr.bf16.mxu0 0
        %4301 = vmatpush1.bf16.msra.mxu0 0
        %4302 = vmatprep.subr.bf16.mxu0 0
        %4303 = vmatpush1.bf16.msra.mxu0 0
        %4304 = vmatprep.subr.bf16.mxu0 0
        %4305 = vmatpush1.bf16.msra.mxu0 0
        %4306 = vmatprep.subr.bf16.mxu0 0
        %4307 = vmatpush1.bf16.msra.mxu0 0
        %4308 = vmatprep.subr.bf16.mxu0 0
        %4309 = vmatpush1.bf16.msra.mxu0 0
        %4310 = vmatprep.subr.bf16.mxu0 0
        %4311 = vmatpush1.bf16.msra.mxu0 0
        %4312 = vmatprep.subr.bf16.mxu0 0
        %4313 = vmatpush1.bf16.msra.mxu0 0
        %4314 = vmatprep.subr.bf16.mxu0 0
        %4315 = vmatpush1.bf16.msra.mxu0 0
        %4316 = vmatprep.subr.bf16.mxu0 0
        %4317 = vmatpush1.bf16.msra.mxu0 0
        %4318 = vmatprep.subr.bf16.mxu0 0
        %4319 = vmatpush1.bf16.msra.mxu0 0
        %4320 = vmatprep.subr.bf16.mxu0 0
        %4321 = vmatpush1.bf16.msra.mxu0 0
        %4322 = vmatprep.subr.bf16.mxu0 0
        %4323 = vmatpush1.bf16.msra.mxu0 0
        %4324 = vmatprep.subr.bf16.mxu0 0
        %4325 = vmatpush1.bf16.msra.mxu0 0
        %4326 = vmatprep.subr.bf16.mxu0 0
        %4327 = vmatpush1.bf16.msra.mxu0 0
        %4328 = vmatprep.mubr.bf16.mxu0 0
        %4329 = vmatmul.mubr.bf16.gmra.mrb[0].mxu0 %v4027
        %v4330 = vpop.f32.mrb[0].mxu0
        %v4331 = vadd.f32 0.0, %v4330
        %v4332 = vpop.f32.mrb[0].mxu0
        %v4333 = vpop.f32.mrb[0].mxu0
        %v4334 = vadd.f32 0.0, %v4333
        %v4335 = vpop.f32.mrb[0].mxu0
        %4336 = vdwg.mxu0
        %v4338 = vsel %vm781, %v3994, 0
        %4340 = vmatprep.subr.bf16.mxu0 0
        %4341 = vmatpush1.bf16.msra.mxu0 %v4338
        %4342 = vmatprep.subr.bf16.mxu0 0
        %4343 = vmatpush1.bf16.msra.mxu0 0
        %4344 = vmatprep.subr.bf16.mxu0 0
        %4345 = vmatpush1.bf16.msra.mxu0 0
        %4346 = vmatprep.subr.bf16.mxu0 0
        %4347 = vmatpush1.bf16.msra.mxu0 0
        %4348 = vmatprep.subr.bf16.mxu0 0
        %4349 = vmatpush1.bf16.msra.mxu0 0
        %4350 = vmatprep.subr.bf16.mxu0 0
        %4351 = vmatpush1.bf16.msra.mxu0 0
        %4352 = vmatprep.subr.bf16.mxu0 0
        %4353 = vmatpush1.bf16.msra.mxu0 0
        %4354 = vmatprep.subr.bf16.mxu0 0
        %4355 = vmatpush1.bf16.msra.mxu0 0
        %4356 = vmatprep.subr.bf16.mxu0 0
        %4357 = vmatpush1.bf16.msra.mxu0 0
        %4358 = vmatprep.subr.bf16.mxu0 0
        %4359 = vmatpush1.bf16.msra.mxu0 0
        %4360 = vmatprep.subr.bf16.mxu0 0
        %4361 = vmatpush1.bf16.msra.mxu0 0
        %4362 = vmatprep.subr.bf16.mxu0 0
        %4363 = vmatpush1.bf16.msra.mxu0 0
        %4364 = vmatprep.subr.bf16.mxu0 0
        %4365 = vmatpush1.bf16.msra.mxu0 0
        %4366 = vmatprep.subr.bf16.mxu0 0
        %4367 = vmatpush1.bf16.msra.mxu0 0
        %4368 = vmatprep.subr.bf16.mxu0 0
        %4369 = vmatpush1.bf16.msra.mxu0 0
        %4370 = vmatprep.subr.bf16.mxu0 0
        %4371 = vmatpush1.bf16.msra.mxu0 0
        %4372 = vmatprep.mubr.bf16.mxu0 0
        %4373 = vmatmul.mubr.bf16.gmra.mrb[0].mxu0 %v4027
        %v4374 = vpop.f32.mrb[0].mxu0
        %v4375 = vadd.f32 0.0, %v4374
        %v4376 = vpop.f32.mrb[0].mxu0
        %v4377 = vpop.f32.mrb[0].mxu0
        %v4378 = vadd.f32 0.0, %v4377
        %v4379 = vpop.f32.mrb[0].mxu0
        %4380 = vdwg.mxu0
        %v4382 = vsel %vm781, %v3995, 0
        %4384 = vmatprep.subr.bf16.mxu0 0
        %4385 = vmatpush1.bf16.msra.mxu0 %v4382
        %4386 = vmatprep.subr.bf16.mxu0 0
        %4387 = vmatpush1.bf16.msra.mxu0 0
        %4388 = vmatprep.subr.bf16.mxu0 0
        %4389 = vmatpush1.bf16.msra.mxu0 0
        %4390 = vmatprep.subr.bf16.mxu0 0
        %4391 = vmatpush1.bf16.msra.mxu0 0
        %4392 = vmatprep.subr.bf16.mxu0 0
        %4393 = vmatpush1.bf16.msra.mxu0 0
        %4394 = vmatprep.subr.bf16.mxu0 0
        %4395 = vmatpush1.bf16.msra.mxu0 0
        %4396 = vmatprep.subr.bf16.mxu0 0
        %4397 = vmatpush1.bf16.msra.mxu0 0
        %4398 = vmatprep.subr.bf16.mxu0 0
        %4399 = vmatpush1.bf16.msra.mxu0 0
        %4400 = vmatprep.subr.bf16.mxu0 0
        %4401 = vmatpush1.bf16.msra.mxu0 0
        %4402 = vmatprep.subr.bf16.mxu0 0
        %4403 = vmatpush1.bf16.msra.mxu0 0
        %4404 = vmatprep.subr.bf16.mxu0 0
        %4405 = vmatpush1.bf16.msra.mxu0 0
        %4406 = vmatprep.subr.bf16.mxu0 0
        %4407 = vmatpush1.bf16.msra.mxu0 0
        %4408 = vmatprep.subr.bf16.mxu0 0
        %4409 = vmatpush1.bf16.msra.mxu0 0
        %4410 = vmatprep.subr.bf16.mxu0 0
        %4411 = vmatpush1.bf16.msra.mxu0 0
        %4412 = vmatprep.subr.bf16.mxu0 0
        %4413 = vmatpush1.bf16.msra.mxu0 0
        %4414 = vmatprep.subr.bf16.mxu0 0
        %4415 = vmatpush1.bf16.msra.mxu0 0
        %4416 = vmatprep.mubr.bf16.mxu0 0
        %4417 = vmatmul.mubr.bf16.gmra.mrb[0].mxu0 %v4027
        %v4418 = vpop.f32.mrb[0].mxu0
        %v4419 = vadd.f32 0.0, %v4418
        %v4420 = vpop.f32.mrb[0].mxu0
        %v4421 = vpop.f32.mrb[0].mxu0
        %v4422 = vadd.f32 0.0, %v4421
        %v4423 = vpop.f32.mrb[0].mxu0
        %4424 = vdwg.mxu0
        %v4426 = vsel %vm781, %v3996, 0
        %4428 = vmatprep.subr.bf16.mxu0 0
        %4429 = vmatpush1.bf16.msra.mxu0 %v4426
        %4430 = vmatprep.subr.bf16.mxu0 0
        %4431 = vmatpush1.bf16.msra.mxu0 0
        %4432 = vmatprep.subr.bf16.mxu0 0
        %4433 = vmatpush1.bf16.msra.mxu0 0
        %4434 = vmatprep.subr.bf16.mxu0 0
        %4435 = vmatpush1.bf16.msra.mxu0 0
        %4436 = vmatprep.subr.bf16.mxu0 0
        %4437 = vmatpush1.bf16.msra.mxu0 0
        %4438 = vmatprep.subr.bf16.mxu0 0
        %4439 = vmatpush1.bf16.msra.mxu0 0
        %4440 = vmatprep.subr.bf16.mxu0 0
        %4441 = vmatpush1.bf16.msra.mxu0 0
        %4442 = vmatprep.subr.bf16.mxu0 0
        %4443 = vmatpush1.bf16.msra.mxu0 0
        %4444 = vmatprep.subr.bf16.mxu0 0
        %4445 = vmatpush1.bf16.msra.mxu0 0
        %4446 = vmatprep.subr.bf16.mxu0 0
        %4447 = vmatpush1.bf16.msra.mxu0 0
        %4448 = vmatprep.subr.bf16.mxu0 0
        %4449 = vmatpush1.bf16.msra.mxu0 0
        %4450 = vmatprep.subr.bf16.mxu0 0
        %4451 = vmatpush1.bf16.msra.mxu0 0
        %4452 = vmatprep.subr.bf16.mxu0 0
        %4453 = vmatpush1.bf16.msra.mxu0 0
        %4454 = vmatprep.subr.bf16.mxu0 0
        %4455 = vmatpush1.bf16.msra.mxu0 0
        %4456 = vmatprep.subr.bf16.mxu0 0
        %4457 = vmatpush1.bf16.msra.mxu0 0
        %4458 = vmatprep.subr.bf16.mxu0 0
        %4459 = vmatpush1.bf16.msra.mxu0 0
        %4460 = vmatprep.mubr.bf16.mxu0 0
        %4461 = vmatmul.mubr.bf16.gmra.mrb[0].mxu0 %v4027
        %v4462 = vpop.f32.mrb[0].mxu0
        %v4463 = vadd.f32 0.0, %v4462
        %v4464 = vpop.f32.mrb[0].mxu0
        %v4465 = vpop.f32.mrb[0].mxu0
        %v4466 = vadd.f32 0.0, %v4465
        %v4467 = vpop.f32.mrb[0].mxu0
        %4468 = vdwg.mxu0
        %v4470 = vsel %vm781, %v3997, 0
        %4472 = vmatprep.subr.bf16.mxu0 0
        %4473 = vmatpush1.bf16.msra.mxu0 %v4470
        %4474 = vmatprep.subr.bf16.mxu0 0
        %4475 = vmatpush1.bf16.msra.mxu0 0
        %4476 = vmatprep.subr.bf16.mxu0 0
        %4477 = vmatpush1.bf16.msra.mxu0 0
        %4478 = vmatprep.subr.bf16.mxu0 0
        %4479 = vmatpush1.bf16.msra.mxu0 0
        %4480 = vmatprep.subr.bf16.mxu0 0
        %4481 = vmatpush1.bf16.msra.mxu0 0
        %4482 = vmatprep.subr.bf16.mxu0 0
        %4483 = vmatpush1.bf16.msra.mxu0 0
        %4484 = vmatprep.subr.bf16.mxu0 0
        %4485 = vmatpush1.bf16.msra.mxu0 0
        %4486 = vmatprep.subr.bf16.mxu0 0
        %4487 = vmatpush1.bf16.msra.mxu0 0
        %4488 = vmatprep.subr.bf16.mxu0 0
        %4489 = vmatpush1.bf16.msra.mxu0 0
        %4490 = vmatprep.subr.bf16.mxu0 0
        %4491 = vmatpush1.bf16.msra.mxu0 0
        %4492 = vmatprep.subr.bf16.mxu0 0
        %4493 = vmatpush1.bf16.msra.mxu0 0
        %4494 = vmatprep.subr.bf16.mxu0 0
        %4495 = vmatpush1.bf16.msra.mxu0 0
        %4496 = vmatprep.subr.bf16.mxu0 0
        %4497 = vmatpush1.bf16.msra.mxu0 0
        %4498 = vmatprep.subr.bf16.mxu0 0
        %4499 = vmatpush1.bf16.msra.mxu0 0
        %4500 = vmatprep.subr.bf16.mxu0 0
        %4501 = vmatpush1.bf16.msra.mxu0 0
        %4502 = vmatprep.subr.bf16.mxu0 0
        %4503 = vmatpush1.bf16.msra.mxu0 0
        %4504 = vmatprep.mubr.bf16.mxu0 0
        %4505 = vmatmul.mubr.bf16.gmra.mrb[0].mxu0 %v4027
        %v4506 = vpop.f32.mrb[0].mxu0
        %v4507 = vadd.f32 0.0, %v4506
        %v4508 = vpop.f32.mrb[0].mxu0
        %v4509 = vpop.f32.mrb[0].mxu0
        %v4510 = vadd.f32 0.0, %v4509
        %v4511 = vpop.f32.mrb[0].mxu0
        %4512 = vdwg.mxu0
        %v4514 = vsel %vm781, %v3998, 0
        %4516 = vmatprep.subr.bf16.mxu0 0
        %4517 = vmatpush1.bf16.msra.mxu0 %v4514
        %4518 = vmatprep.subr.bf16.mxu0 0
        %4519 = vmatpush1.bf16.msra.mxu0 0
        %4520 = vmatprep.subr.bf16.mxu0 0
        %4521 = vmatpush1.bf16.msra.mxu0 0
        %4522 = vmatprep.subr.bf16.mxu0 0
        %4523 = vmatpush1.bf16.msra.mxu0 0
        %4524 = vmatprep.subr.bf16.mxu0 0
        %4525 = vmatpush1.bf16.msra.mxu0 0
        %4526 = vmatprep.subr.bf16.mxu0 0
        %4527 = vmatpush1.bf16.msra.mxu0 0
        %4528 = vmatprep.subr.bf16.mxu0 0
        %4529 = vmatpush1.bf16.msra.mxu0 0
        %4530 = vmatprep.subr.bf16.mxu0 0
        %4531 = vmatpush1.bf16.msra.mxu0 0
        %4532 = vmatprep.subr.bf16.mxu0 0
        %4533 = vmatpush1.bf16.msra.mxu0 0
        %4534 = vmatprep.subr.bf16.mxu0 0
        %4535 = vmatpush1.bf16.msra.mxu0 0
        %4536 = vmatprep.subr.bf16.mxu0 0
        %4537 = vmatpush1.bf16.msra.mxu0 0
        %4538 = vmatprep.subr.bf16.mxu0 0
        %4539 = vmatpush1.bf16.msra.mxu0 0
        %4540 = vmatprep.subr.bf16.mxu0 0
        %4541 = vmatpush1.bf16.msra.mxu0 0
        %4542 = vmatprep.subr.bf16.mxu0 0
        %4543 = vmatpush1.bf16.msra.mxu0 0
        %4544 = vmatprep.subr.bf16.mxu0 0
        %4545 = vmatpush1.bf16.msra.mxu0 0
        %4546 = vmatprep.subr.bf16.mxu0 0
        %4547 = vmatpush1.bf16.msra.mxu0 0
        %4548 = vmatprep.mubr.bf16.mxu0 0
        %4549 = vmatmul.mubr.bf16.gmra.mrb[0].mxu0 %v4027
        %v4550 = vpop.f32.mrb[0].mxu0
        %v4551 = vadd.f32 0.0, %v4550
        %v4552 = vpop.f32.mrb[0].mxu0
        %v4553 = vpop.f32.mrb[0].mxu0
        %v4554 = vadd.f32 0.0, %v4553
        %v4555 = vpop.f32.mrb[0].mxu0
        %4556 = vdwg.mxu0
        %v4558 = vsel %vm781, %v3999, 0
        %4560 = vmatprep.subr.bf16.mxu0 0
        %4561 = vmatpush1.bf16.msra.mxu0 %v4558
        %4562 = vmatprep.subr.bf16.mxu0 0
        %4563 = vmatpush1.bf16.msra.mxu0 0
        %4564 = vmatprep.subr.bf16.mxu0 0
        %4565 = vmatpush1.bf16.msra.mxu0 0
        %4566 = vmatprep.subr.bf16.mxu0 0
        %4567 = vmatpush1.bf16.msra.mxu0 0
        %4568 = vmatprep.subr.bf16.mxu0 0
        %4569 = vmatpush1.bf16.msra.mxu0 0
        %4570 = vmatprep.subr.bf16.mxu0 0
        %4571 = vmatpush1.bf16.msra.mxu0 0
        %4572 = vmatprep.subr.bf16.mxu0 0
        %4573 = vmatpush1.bf16.msra.mxu0 0
        %4574 = vmatprep.subr.bf16.mxu0 0
        %4575 = vmatpush1.bf16.msra.mxu0 0
        %4576 = vmatprep.subr.bf16.mxu0 0
        %4577 = vmatpush1.bf16.msra.mxu0 0
        %4578 = vmatprep.subr.bf16.mxu0 0
        %4579 = vmatpush1.bf16.msra.mxu0 0
        %4580 = vmatprep.subr.bf16.mxu0 0
        %4581 = vmatpush1.bf16.msra.mxu0 0
        %4582 = vmatprep.subr.bf16.mxu0 0
        %4583 = vmatpush1.bf16.msra.mxu0 0
        %4584 = vmatprep.subr.bf16.mxu0 0
        %4585 = vmatpush1.bf16.msra.mxu0 0
        %4586 = vmatprep.subr.bf16.mxu0 0
        %4587 = vmatpush1.bf16.msra.mxu0 0
        %4588 = vmatprep.subr.bf16.mxu0 0
        %4589 = vmatpush1.bf16.msra.mxu0 0
        %4590 = vmatprep.subr.bf16.mxu0 0
        %4591 = vmatpush1.bf16.msra.mxu0 0
        %4592 = vmatprep.mubr.bf16.mxu0 0
        %4593 = vmatmul.mubr.bf16.gmra.mrb[0].mxu0 %v4027
        %v4594 = vpop.f32.mrb[0].mxu0
        %v4595 = vadd.f32 0.0, %v4594
        %v4596 = vpop.f32.mrb[0].mxu0
        %v4597 = vpop.f32.mrb[0].mxu0
        %v4598 = vadd.f32 0.0, %v4597
        %v4599 = vpop.f32.mrb[0].mxu0
        %4600 = vdwg.mxu0
        %v4602 = vsel %vm781, %v4000, 0
        %4604 = vmatprep.subr.bf16.mxu0 0
        %4605 = vmatpush1.bf16.msra.mxu0 %v4602
        %4606 = vmatprep.subr.bf16.mxu0 0
        %4607 = vmatpush1.bf16.msra.mxu0 0
        %4608 = vmatprep.subr.bf16.mxu0 0
        %4609 = vmatpush1.bf16.msra.mxu0 0
        %4610 = vmatprep.subr.bf16.mxu0 0
        %4611 = vmatpush1.bf16.msra.mxu0 0
        %4612 = vmatprep.subr.bf16.mxu0 0
        %4613 = vmatpush1.bf16.msra.mxu0 0
        %4614 = vmatprep.subr.bf16.mxu0 0
        %4615 = vmatpush1.bf16.msra.mxu0 0
        %4616 = vmatprep.subr.bf16.mxu0 0
        %4617 = vmatpush1.bf16.msra.mxu0 0
        %4618 = vmatprep.subr.bf16.mxu0 0
        %4619 = vmatpush1.bf16.msra.mxu0 0
        %4620 = vmatprep.subr.bf16.mxu0 0
        %4621 = vmatpush1.bf16.msra.mxu0 0
        %4622 = vmatprep.subr.bf16.mxu0 0
        %4623 = vmatpush1.bf16.msra.mxu0 0
        %4624 = vmatprep.subr.bf16.mxu0 0
        %4625 = vmatpush1.bf16.msra.mxu0 0
        %4626 = vmatprep.subr.bf16.mxu0 0
        %4627 = vmatpush1.bf16.msra.mxu0 0
        %4628 = vmatprep.subr.bf16.mxu0 0
        %4629 = vmatpush1.bf16.msra.mxu0 0
        %4630 = vmatprep.subr.bf16.mxu0 0
        %4631 = vmatpush1.bf16.msra.mxu0 0
        %4632 = vmatprep.subr.bf16.mxu0 0
        %4633 = vmatpush1.bf16.msra.mxu0 0
        %4634 = vmatprep.subr.bf16.mxu0 0
        %4635 = vmatpush1.bf16.msra.mxu0 0
        %4636 = vmatprep.mubr.bf16.mxu0 0
        %4637 = vmatmul.mubr.bf16.gmra.mrb[0].mxu0 %v4027
        %v4638 = vpop.f32.mrb[0].mxu0
        %v4639 = vadd.f32 0.0, %v4638
        %v4640 = vpop.f32.mrb[0].mxu0
        %v4641 = vpop.f32.mrb[0].mxu0
        %v4642 = vadd.f32 0.0, %v4641
        %v4643 = vpop.f32.mrb[0].mxu0
        %4644 = vdwg.mxu0
        %v4646 = vsel %vm781, %v4001, 0
        %4648 = vmatprep.subr.bf16.mxu0 0
        %4649 = vmatpush1.bf16.msra.mxu0 %v4646
        %4650 = vmatprep.subr.bf16.mxu0 0
        %4651 = vmatpush1.bf16.msra.mxu0 0
        %4652 = vmatprep.subr.bf16.mxu0 0
        %4653 = vmatpush1.bf16.msra.mxu0 0
        %4654 = vmatprep.subr.bf16.mxu0 0
        %4655 = vmatpush1.bf16.msra.mxu0 0
        %4656 = vmatprep.subr.bf16.mxu0 0
        %4657 = vmatpush1.bf16.msra.mxu0 0
        %4658 = vmatprep.subr.bf16.mxu0 0
        %4659 = vmatpush1.bf16.msra.mxu0 0
        %4660 = vmatprep.subr.bf16.mxu0 0
        %4661 = vmatpush1.bf16.msra.mxu0 0
        %4662 = vmatprep.subr.bf16.mxu0 0
        %4663 = vmatpush1.bf16.msra.mxu0 0
        %4664 = vmatprep.subr.bf16.mxu0 0
        %4665 = vmatpush1.bf16.msra.mxu0 0
        %4666 = vmatprep.subr.bf16.mxu0 0
        %4667 = vmatpush1.bf16.msra.mxu0 0
        %4668 = vmatprep.subr.bf16.mxu0 0
        %4669 = vmatpush1.bf16.msra.mxu0 0
        %4670 = vmatprep.subr.bf16.mxu0 0
        %4671 = vmatpush1.bf16.msra.mxu0 0
        %4672 = vmatprep.subr.bf16.mxu0 0
        %4673 = vmatpush1.bf16.msra.mxu0 0
        %4674 = vmatprep.subr.bf16.mxu0 0
        %4675 = vmatpush1.bf16.msra.mxu0 0
        %4676 = vmatprep.subr.bf16.mxu0 0
        %4677 = vmatpush1.bf16.msra.mxu0 0
        %4678 = vmatprep.subr.bf16.mxu0 0
        %4679 = vmatpush1.bf16.msra.mxu0 0
        %4680 = vmatprep.mubr.bf16.mxu0 0
        %4681 = vmatmul.mubr.bf16.gmra.mrb[0].mxu0 %v4027
        %v4682 = vpop.f32.mrb[0].mxu0
        %v4683 = vadd.f32 0.0, %v4682
        %v4684 = vpop.f32.mrb[0].mxu0
        %v4685 = vpop.f32.mrb[0].mxu0
        %v4686 = vadd.f32 0.0, %v4685
        %v4687 = vpop.f32.mrb[0].mxu0
        %4688 = vdwg.mxu0
        %v4690 = vsel %vm781, %v4002, 0
        %4692 = vmatprep.subr.bf16.mxu0 0
        %4693 = vmatpush1.bf16.msra.mxu0 %v4690
        %4694 = vmatprep.subr.bf16.mxu0 0
        %4695 = vmatpush1.bf16.msra.mxu0 0
        %4696 = vmatprep.subr.bf16.mxu0 0
        %4697 = vmatpush1.bf16.msra.mxu0 0
        %4698 = vmatprep.subr.bf16.mxu0 0
        %4699 = vmatpush1.bf16.msra.mxu0 0
        %4700 = vmatprep.subr.bf16.mxu0 0
        %4701 = vmatpush1.bf16.msra.mxu0 0
        %4702 = vmatprep.subr.bf16.mxu0 0
        %4703 = vmatpush1.bf16.msra.mxu0 0
        %4704 = vmatprep.subr.bf16.mxu0 0
        %4705 = vmatpush1.bf16.msra.mxu0 0
        %4706 = vmatprep.subr.bf16.mxu0 0
        %4707 = vmatpush1.bf16.msra.mxu0 0
        %4708 = vmatprep.subr.bf16.mxu0 0
        %4709 = vmatpush1.bf16.msra.mxu0 0
        %4710 = vmatprep.subr.bf16.mxu0 0
        %4711 = vmatpush1.bf16.msra.mxu0 0
        %4712 = vmatprep.subr.bf16.mxu0 0
        %4713 = vmatpush1.bf16.msra.mxu0 0
        %4714 = vmatprep.subr.bf16.mxu0 0
        %4715 = vmatpush1.bf16.msra.mxu0 0
        %4716 = vmatprep.subr.bf16.mxu0 0
        %4717 = vmatpush1.bf16.msra.mxu0 0
        %4718 = vmatprep.subr.bf16.mxu0 0
        %4719 = vmatpush1.bf16.msra.mxu0 0
        %4720 = vmatprep.subr.bf16.mxu0 0
        %4721 = vmatpush1.bf16.msra.mxu0 0
        %4722 = vmatprep.subr.bf16.mxu0 0
        %4723 = vmatpush1.bf16.msra.mxu0 0
        %4724 = vmatprep.mubr.bf16.mxu0 0
        %4725 = vmatmul.mubr.bf16.gmra.mrb[0].mxu0 %v4027
        %v4726 = vpop.f32.mrb[0].mxu0
        %v4727 = vadd.f32 0.0, %v4726
        %v4728 = vpop.f32.mrb[0].mxu0
        %v4729 = vpop.f32.mrb[0].mxu0
        %v4730 = vadd.f32 0.0, %v4729
        %v4731 = vpop.f32.mrb[0].mxu0
        %4732 = vdwg.mxu0
        %v4734 = vsel %vm781, %v4003, 0
        %4736 = vmatprep.subr.bf16.mxu0 0
        %4737 = vmatpush1.bf16.msra.mxu0 %v4734
        %4738 = vmatprep.subr.bf16.mxu0 0
        %4739 = vmatpush1.bf16.msra.mxu0 0
        %4740 = vmatprep.subr.bf16.mxu0 0
        %4741 = vmatpush1.bf16.msra.mxu0 0
        %4742 = vmatprep.subr.bf16.mxu0 0
        %4743 = vmatpush1.bf16.msra.mxu0 0
        %4744 = vmatprep.subr.bf16.mxu0 0
        %4745 = vmatpush1.bf16.msra.mxu0 0
        %4746 = vmatprep.subr.bf16.mxu0 0
        %4747 = vmatpush1.bf16.msra.mxu0 0
        %4748 = vmatprep.subr.bf16.mxu0 0
        %4749 = vmatpush1.bf16.msra.mxu0 0
        %4750 = vmatprep.subr.bf16.mxu0 0
        %4751 = vmatpush1.bf16.msra.mxu0 0
        %4752 = vmatprep.subr.bf16.mxu0 0
        %4753 = vmatpush1.bf16.msra.mxu0 0
        %4754 = vmatprep.subr.bf16.mxu0 0
        %4755 = vmatpush1.bf16.msra.mxu0 0
        %4756 = vmatprep.subr.bf16.mxu0 0
        %4757 = vmatpush1.bf16.msra.mxu0 0
        %4758 = vmatprep.subr.bf16.mxu0 0
        %4759 = vmatpush1.bf16.msra.mxu0 0
        %4760 = vmatprep.subr.bf16.mxu0 0
        %4761 = vmatpush1.bf16.msra.mxu0 0
        %4762 = vmatprep.subr.bf16.mxu0 0
        %4763 = vmatpush1.bf16.msra.mxu0 0
        %4764 = vmatprep.subr.bf16.mxu0 0
        %4765 = vmatpush1.bf16.msra.mxu0 0
        %4766 = vmatprep.subr.bf16.mxu0 0
        %4767 = vmatpush1.bf16.msra.mxu0 0
        %4768 = vmatprep.mubr.bf16.mxu0 0
        %4769 = vmatmul.mubr.bf16.gmra.mrb[0].mxu0 %v4027
        %v4770 = vpop.f32.mrb[0].mxu0
        %v4771 = vadd.f32 0.0, %v4770
        %v4772 = vpop.f32.mrb[0].mxu0
        %v4773 = vpop.f32.mrb[0].mxu0
        %v4774 = vadd.f32 0.0, %v4773
        %v4775 = vpop.f32.mrb[0].mxu0
        %4776 = vdwg.mxu0
        %v4778 = vsel %vm781, %v4004, 0
        %4780 = vmatprep.subr.bf16.mxu0 0
        %4781 = vmatpush1.bf16.msra.mxu0 %v4778
        %4782 = vmatprep.subr.bf16.mxu0 0
        %4783 = vmatpush1.bf16.msra.mxu0 0
        %4784 = vmatprep.subr.bf16.mxu0 0
        %4785 = vmatpush1.bf16.msra.mxu0 0
        %4786 = vmatprep.subr.bf16.mxu0 0
        %4787 = vmatpush1.bf16.msra.mxu0 0
        %4788 = vmatprep.subr.bf16.mxu0 0
        %4789 = vmatpush1.bf16.msra.mxu0 0
        %4790 = vmatprep.subr.bf16.mxu0 0
        %4791 = vmatpush1.bf16.msra.mxu0 0
        %4792 = vmatprep.subr.bf16.mxu0 0
        %4793 = vmatpush1.bf16.msra.mxu0 0
        %4794 = vmatprep.subr.bf16.mxu0 0
        %4795 = vmatpush1.bf16.msra.mxu0 0
        %4796 = vmatprep.subr.bf16.mxu0 0
        %4797 = vmatpush1.bf16.msra.mxu0 0
        %4798 = vmatprep.subr.bf16.mxu0 0
        %4799 = vmatpush1.bf16.msra.mxu0 0
        %4800 = vmatprep.subr.bf16.mxu0 0
        %4801 = vmatpush1.bf16.msra.mxu0 0
        %4802 = vmatprep.subr.bf16.mxu0 0
        %4803 = vmatpush1.bf16.msra.mxu0 0
        %4804 = vmatprep.subr.bf16.mxu0 0
        %4805 = vmatpush1.bf16.msra.mxu0 0
        %4806 = vmatprep.subr.bf16.mxu0 0
        %4807 = vmatpush1.bf16.msra.mxu0 0
        %4808 = vmatprep.subr.bf16.mxu0 0
        %4809 = vmatpush1.bf16.msra.mxu0 0
        %4810 = vmatprep.subr.bf16.mxu0 0
        %4811 = vmatpush1.bf16.msra.mxu0 0
        %4812 = vmatprep.mubr.bf16.mxu0 0
        %4813 = vmatmul.mubr.bf16.gmra.mrb[0].mxu0 %v4027
        %v4814 = vpop.f32.mrb[0].mxu0
        %v4815 = vadd.f32 0.0, %v4814
        %v4816 = vpop.f32.mrb[0].mxu0
        %v4817 = vpop.f32.mrb[0].mxu0
        %v4818 = vadd.f32 0.0, %v4817
        %v4819 = vpop.f32.mrb[0].mxu0
        %4820 = vdwg.mxu0
        %v4822 = vsel %vm781, %v4005, 0
        %4824 = vmatprep.subr.bf16.mxu0 0
        %4825 = vmatpush1.bf16.msra.mxu0 %v4822
        %4826 = vmatprep.subr.bf16.mxu0 0
        %4827 = vmatpush1.bf16.msra.mxu0 0
        %4828 = vmatprep.subr.bf16.mxu0 0
        %4829 = vmatpush1.bf16.msra.mxu0 0
        %4830 = vmatprep.subr.bf16.mxu0 0
        %4831 = vmatpush1.bf16.msra.mxu0 0
        %4832 = vmatprep.subr.bf16.mxu0 0
        %4833 = vmatpush1.bf16.msra.mxu0 0
        %4834 = vmatprep.subr.bf16.mxu0 0
        %4835 = vmatpush1.bf16.msra.mxu0 0
        %4836 = vmatprep.subr.bf16.mxu0 0
        %4837 = vmatpush1.bf16.msra.mxu0 0
        %4838 = vmatprep.subr.bf16.mxu0 0
        %4839 = vmatpush1.bf16.msra.mxu0 0
        %4840 = vmatprep.subr.bf16.mxu0 0
        %4841 = vmatpush1.bf16.msra.mxu0 0
        %4842 = vmatprep.subr.bf16.mxu0 0
        %4843 = vmatpush1.bf16.msra.mxu0 0
        %4844 = vmatprep.subr.bf16.mxu0 0
        %4845 = vmatpush1.bf16.msra.mxu0 0
        %4846 = vmatprep.subr.bf16.mxu0 0
        %4847 = vmatpush1.bf16.msra.mxu0 0
        %4848 = vmatprep.subr.bf16.mxu0 0
        %4849 = vmatpush1.bf16.msra.mxu0 0
        %4850 = vmatprep.subr.bf16.mxu0 0
        %4851 = vmatpush1.bf16.msra.mxu0 0
        %4852 = vmatprep.subr.bf16.mxu0 0
        %4853 = vmatpush1.bf16.msra.mxu0 0
        %4854 = vmatprep.subr.bf16.mxu0 0
        %4855 = vmatpush1.bf16.msra.mxu0 0
        %4856 = vmatprep.mubr.bf16.mxu0 0
        %4857 = vmatmul.mubr.bf16.gmra.mrb[0].mxu0 %v4027
        %v4858 = vpop.f32.mrb[0].mxu0
        %v4859 = vadd.f32 0.0, %v4858
        %v4860 = vpop.f32.mrb[0].mxu0
        %v4861 = vpop.f32.mrb[0].mxu0
        %v4862 = vadd.f32 0.0, %v4861
        %v4863 = vpop.f32.mrb[0].mxu0
        %4864 = vdwg.mxu0
        %v4866 = vsel %vm781, %v4006, 0
        %4868 = vmatprep.subr.bf16.mxu0 0
        %4869 = vmatpush1.bf16.msra.mxu0 %v4866
        %4870 = vmatprep.subr.bf16.mxu0 0
        %4871 = vmatpush1.bf16.msra.mxu0 0
        %4872 = vmatprep.subr.bf16.mxu0 0
        %4873 = vmatpush1.bf16.msra.mxu0 0
        %4874 = vmatprep.subr.bf16.mxu0 0
        %4875 = vmatpush1.bf16.msra.mxu0 0
        %4876 = vmatprep.subr.bf16.mxu0 0
        %4877 = vmatpush1.bf16.msra.mxu0 0
        %4878 = vmatprep.subr.bf16.mxu0 0
        %4879 = vmatpush1.bf16.msra.mxu0 0
        %4880 = vmatprep.subr.bf16.mxu0 0
        %4881 = vmatpush1.bf16.msra.mxu0 0
        %4882 = vmatprep.subr.bf16.mxu0 0
        %4883 = vmatpush1.bf16.msra.mxu0 0
        %4884 = vmatprep.subr.bf16.mxu0 0
        %4885 = vmatpush1.bf16.msra.mxu0 0
        %4886 = vmatprep.subr.bf16.mxu0 0
        %4887 = vmatpush1.bf16.msra.mxu0 0
        %4888 = vmatprep.subr.bf16.mxu0 0
        %4889 = vmatpush1.bf16.msra.mxu0 0
        %4890 = vmatprep.subr.bf16.mxu0 0
        %4891 = vmatpush1.bf16.msra.mxu0 0
        %4892 = vmatprep.subr.bf16.mxu0 0
        %4893 = vmatpush1.bf16.msra.mxu0 0
        %4894 = vmatprep.subr.bf16.mxu0 0
        %4895 = vmatpush1.bf16.msra.mxu0 0
        %4896 = vmatprep.subr.bf16.mxu0 0
        %4897 = vmatpush1.bf16.msra.mxu0 0
        %4898 = vmatprep.subr.bf16.mxu0 0
        %4899 = vmatpush1.bf16.msra.mxu0 0
        %4900 = vmatprep.mubr.bf16.mxu0 0
        %4901 = vmatmul.mubr.bf16.gmra.mrb[0].mxu0 %v4027
        %v4902 = vpop.f32.mrb[0].mxu0
        %v4903 = vadd.f32 0.0, %v4902
        %v4904 = vpop.f32.mrb[0].mxu0
        %v4905 = vpop.f32.mrb[0].mxu0
        %v4906 = vadd.f32 0.0, %v4905
        %v4907 = vpop.f32.mrb[0].mxu0
        %4908 = vdwg.mxu0
        %v4910 = vsel %vm781, %v4007, 0
        %4912 = vmatprep.subr.bf16.mxu0 0
        %4913 = vmatpush1.bf16.msra.mxu0 %v4910
        %4914 = vmatprep.subr.bf16.mxu0 0
        %4915 = vmatpush1.bf16.msra.mxu0 0
        %4916 = vmatprep.subr.bf16.mxu0 0
        %4917 = vmatpush1.bf16.msra.mxu0 0
        %4918 = vmatprep.subr.bf16.mxu0 0
        %4919 = vmatpush1.bf16.msra.mxu0 0
        %4920 = vmatprep.subr.bf16.mxu0 0
        %4921 = vmatpush1.bf16.msra.mxu0 0
        %4922 = vmatprep.subr.bf16.mxu0 0
        %4923 = vmatpush1.bf16.msra.mxu0 0
        %4924 = vmatprep.subr.bf16.mxu0 0
        %4925 = vmatpush1.bf16.msra.mxu0 0
        %4926 = vmatprep.subr.bf16.mxu0 0
        %4927 = vmatpush1.bf16.msra.mxu0 0
        %4928 = vmatprep.subr.bf16.mxu0 0
        %4929 = vmatpush1.bf16.msra.mxu0 0
        %4930 = vmatprep.subr.bf16.mxu0 0
        %4931 = vmatpush1.bf16.msra.mxu0 0
        %4932 = vmatprep.subr.bf16.mxu0 0
        %4933 = vmatpush1.bf16.msra.mxu0 0
        %4934 = vmatprep.subr.bf16.mxu0 0
        %4935 = vmatpush1.bf16.msra.mxu0 0
        %4936 = vmatprep.subr.bf16.mxu0 0
        %4937 = vmatpush1.bf16.msra.mxu0 0
        %4938 = vmatprep.subr.bf16.mxu0 0
        %4939 = vmatpush1.bf16.msra.mxu0 0
        %4940 = vmatprep.subr.bf16.mxu0 0
        %4941 = vmatpush1.bf16.msra.mxu0 0
        %4942 = vmatprep.subr.bf16.mxu0 0
        %4943 = vmatpush1.bf16.msra.mxu0 0
        %4944 = vmatprep.mubr.bf16.mxu0 0
        %4945 = vmatmul.mubr.bf16.gmra.mrb[0].mxu0 %v4027
        %v4946 = vpop.f32.mrb[0].mxu0
        %v4947 = vadd.f32 0.0, %v4946
        %v4948 = vpop.f32.mrb[0].mxu0
        %v4949 = vpop.f32.mrb[0].mxu0
        %v4950 = vadd.f32 0.0, %v4949
        %v4951 = vpop.f32.mrb[0].mxu0
        %4952 = vdwg.mxu0
        %v4954 = vsel %vm781, %v4008, 0
        %4956 = vmatprep.subr.bf16.mxu0 0
        %4957 = vmatpush1.bf16.msra.mxu0 %v4954
        %4958 = vmatprep.subr.bf16.mxu0 0
        %4959 = vmatpush1.bf16.msra.mxu0 0
        %4960 = vmatprep.subr.bf16.mxu0 0
        %4961 = vmatpush1.bf16.msra.mxu0 0
        %4962 = vmatprep.subr.bf16.mxu0 0
        %4963 = vmatpush1.bf16.msra.mxu0 0
        %4964 = vmatprep.subr.bf16.mxu0 0
        %4965 = vmatpush1.bf16.msra.mxu0 0
        %4966 = vmatprep.subr.bf16.mxu0 0
        %4967 = vmatpush1.bf16.msra.mxu0 0
        %4968 = vmatprep.subr.bf16.mxu0 0
        %4969 = vmatpush1.bf16.msra.mxu0 0
        %4970 = vmatprep.subr.bf16.mxu0 0
        %4971 = vmatpush1.bf16.msra.mxu0 0
        %4972 = vmatprep.subr.bf16.mxu0 0
        %4973 = vmatpush1.bf16.msra.mxu0 0
        %4974 = vmatprep.subr.bf16.mxu0 0
        %4975 = vmatpush1.bf16.msra.mxu0 0
        %4976 = vmatprep.subr.bf16.mxu0 0
        %4977 = vmatpush1.bf16.msra.mxu0 0
        %4978 = vmatprep.subr.bf16.mxu0 0
        %4979 = vmatpush1.bf16.msra.mxu0 0
        %4980 = vmatprep.subr.bf16.mxu0 0
        %4981 = vmatpush1.bf16.msra.mxu0 0
        %4982 = vmatprep.subr.bf16.mxu0 0
        %4983 = vmatpush1.bf16.msra.mxu0 0
        %4984 = vmatprep.subr.bf16.mxu0 0
        %4985 = vmatpush1.bf16.msra.mxu0 0
        %4986 = vmatprep.subr.bf16.mxu0 0
        %4987 = vmatpush1.bf16.msra.mxu0 0
        %4988 = vmatprep.mubr.bf16.mxu0 0
        %4989 = vmatmul.mubr.bf16.gmra.mrb[0].mxu0 %v4027
        %v4990 = vpop.f32.mrb[0].mxu0
        %v4991 = vadd.f32 0.0, %v4990
        %v4992 = vpop.f32.mrb[0].mxu0
        %v4993 = vpop.f32.mrb[0].mxu0
        %v4994 = vadd.f32 0.0, %v4993
        %v4995 = vpop.f32.mrb[0].mxu0
        %4996 = vdwg.mxu0
        %v4998 = vsel %vm781, %v4009, 0
        %5000 = vmatprep.subr.bf16.mxu0 0
        %5001 = vmatpush1.bf16.msra.mxu0 %v4998
        %5002 = vmatprep.subr.bf16.mxu0 0
        %5003 = vmatpush1.bf16.msra.mxu0 0
        %5004 = vmatprep.subr.bf16.mxu0 0
        %5005 = vmatpush1.bf16.msra.mxu0 0
        %5006 = vmatprep.subr.bf16.mxu0 0
        %5007 = vmatpush1.bf16.msra.mxu0 0
        %5008 = vmatprep.subr.bf16.mxu0 0
        %5009 = vmatpush1.bf16.msra.mxu0 0
        %5010 = vmatprep.subr.bf16.mxu0 0
        %5011 = vmatpush1.bf16.msra.mxu0 0
        %5012 = vmatprep.subr.bf16.mxu0 0
        %5013 = vmatpush1.bf16.msra.mxu0 0
        %5014 = vmatprep.subr.bf16.mxu0 0
        %5015 = vmatpush1.bf16.msra.mxu0 0
        %5016 = vmatprep.subr.bf16.mxu0 0
        %5017 = vmatpush1.bf16.msra.mxu0 0
        %5018 = vmatprep.subr.bf16.mxu0 0
        %5019 = vmatpush1.bf16.msra.mxu0 0
        %5020 = vmatprep.subr.bf16.mxu0 0
        %5021 = vmatpush1.bf16.msra.mxu0 0
        %5022 = vmatprep.subr.bf16.mxu0 0
        %5023 = vmatpush1.bf16.msra.mxu0 0
        %5024 = vmatprep.subr.bf16.mxu0 0
        %5025 = vmatpush1.bf16.msra.mxu0 0
        %5026 = vmatprep.subr.bf16.mxu0 0
        %5027 = vmatpush1.bf16.msra.mxu0 0
        %5028 = vmatprep.subr.bf16.mxu0 0
        %5029 = vmatpush1.bf16.msra.mxu0 0
        %5030 = vmatprep.subr.bf16.mxu0 0
        %5031 = vmatpush1.bf16.msra.mxu0 0
        %5032 = vmatprep.mubr.bf16.mxu0 0
        %5033 = vmatmul.mubr.bf16.gmra.mrb[0].mxu0 %v4027
        %v5034 = vpop.f32.mrb[0].mxu0
        %v5035 = vadd.f32 0.0, %v5034
        %v5036 = vpop.f32.mrb[0].mxu0
        %v5037 = vpop.f32.mrb[0].mxu0
        %v5038 = vadd.f32 0.0, %v5037
        %v5039 = vpop.f32.mrb[0].mxu0
        %5040 = vdwg.mxu0
        %v5042 = vsel %vm781, %v4010, 0
        %5044 = vmatprep.subr.bf16.mxu0 0
        %5045 = vmatpush1.bf16.msra.mxu0 %v5042
        %5046 = vmatprep.subr.bf16.mxu0 0
        %5047 = vmatpush1.bf16.msra.mxu0 0
        %5048 = vmatprep.subr.bf16.mxu0 0
        %5049 = vmatpush1.bf16.msra.mxu0 0
        %5050 = vmatprep.subr.bf16.mxu0 0
        %5051 = vmatpush1.bf16.msra.mxu0 0
        %5052 = vmatprep.subr.bf16.mxu0 0
        %5053 = vmatpush1.bf16.msra.mxu0 0
        %5054 = vmatprep.subr.bf16.mxu0 0
        %5055 = vmatpush1.bf16.msra.mxu0 0
        %5056 = vmatprep.subr.bf16.mxu0 0
        %5057 = vmatpush1.bf16.msra.mxu0 0
        %5058 = vmatprep.subr.bf16.mxu0 0
        %5059 = vmatpush1.bf16.msra.mxu0 0
        %5060 = vmatprep.subr.bf16.mxu0 0
        %5061 = vmatpush1.bf16.msra.mxu0 0
        %5062 = vmatprep.subr.bf16.mxu0 0
        %5063 = vmatpush1.bf16.msra.mxu0 0
        %5064 = vmatprep.subr.bf16.mxu0 0
        %5065 = vmatpush1.bf16.msra.mxu0 0
        %5066 = vmatprep.subr.bf16.mxu0 0
        %5067 = vmatpush1.bf16.msra.mxu0 0
        %5068 = vmatprep.subr.bf16.mxu0 0
        %5069 = vmatpush1.bf16.msra.mxu0 0
        %5070 = vmatprep.subr.bf16.mxu0 0
        %5071 = vmatpush1.bf16.msra.mxu0 0
        %5072 = vmatprep.subr.bf16.mxu0 0
        %5073 = vmatpush1.bf16.msra.mxu0 0
        %5074 = vmatprep.subr.bf16.mxu0 0
        %5075 = vmatpush1.bf16.msra.mxu0 0
        %5076 = vmatprep.mubr.bf16.mxu0 0
        %5077 = vmatmul.mubr.bf16.gmra.mrb[0].mxu0 %v4027
        %v5078 = vpop.f32.mrb[0].mxu0
        %v5079 = vadd.f32 0.0, %v5078
        %v5080 = vpop.f32.mrb[0].mxu0
        %v5081 = vpop.f32.mrb[0].mxu0
        %v5082 = vadd.f32 0.0, %v5081
        %v5083 = vpop.f32.mrb[0].mxu0
        %5084 = vdwg.mxu0
        %v5086 = vsel %vm781, %v4011, 0
        %5088 = vmatprep.subr.bf16.mxu0 0
        %5089 = vmatpush1.bf16.msra.mxu0 %v5086
        %5090 = vmatprep.subr.bf16.mxu0 0
        %5091 = vmatpush1.bf16.msra.mxu0 0
        %5092 = vmatprep.subr.bf16.mxu0 0
        %5093 = vmatpush1.bf16.msra.mxu0 0
        %5094 = vmatprep.subr.bf16.mxu0 0
        %5095 = vmatpush1.bf16.msra.mxu0 0
        %5096 = vmatprep.subr.bf16.mxu0 0
        %5097 = vmatpush1.bf16.msra.mxu0 0
        %5098 = vmatprep.subr.bf16.mxu0 0
        %5099 = vmatpush1.bf16.msra.mxu0 0
        %5100 = vmatprep.subr.bf16.mxu0 0
        %5101 = vmatpush1.bf16.msra.mxu0 0
        %5102 = vmatprep.subr.bf16.mxu0 0
        %5103 = vmatpush1.bf16.msra.mxu0 0
        %5104 = vmatprep.subr.bf16.mxu0 0
        %5105 = vmatpush1.bf16.msra.mxu0 0
        %5106 = vmatprep.subr.bf16.mxu0 0
        %5107 = vmatpush1.bf16.msra.mxu0 0
        %5108 = vmatprep.subr.bf16.mxu0 0
        %5109 = vmatpush1.bf16.msra.mxu0 0
        %5110 = vmatprep.subr.bf16.mxu0 0
        %5111 = vmatpush1.bf16.msra.mxu0 0
        %5112 = vmatprep.subr.bf16.mxu0 0
        %5113 = vmatpush1.bf16.msra.mxu0 0
        %5114 = vmatprep.subr.bf16.mxu0 0
        %5115 = vmatpush1.bf16.msra.mxu0 0
        %5116 = vmatprep.subr.bf16.mxu0 0
        %5117 = vmatpush1.bf16.msra.mxu0 0
        %5118 = vmatprep.subr.bf16.mxu0 0
        %5119 = vmatpush1.bf16.msra.mxu0 0
        %5120 = vmatprep.mubr.bf16.mxu0 0
        %5121 = vmatmul.mubr.bf16.gmra.mrb[0].mxu0 %v4027
        %v5122 = vpop.f32.mrb[0].mxu0
        %v5123 = vadd.f32 0.0, %v5122
        %v5124 = vpop.f32.mrb[0].mxu0
        %v5125 = vpop.f32.mrb[0].mxu0
        %v5126 = vadd.f32 0.0, %v5125
        %v5127 = vpop.f32.mrb[0].mxu0
        %5128 = vdwg.mxu0
        %v5130 = vsel %vm781, %v4012, 0
        %5132 = vmatprep.subr.bf16.mxu0 0
        %5133 = vmatpush1.bf16.msra.mxu0 %v5130
        %5134 = vmatprep.subr.bf16.mxu0 0
        %5135 = vmatpush1.bf16.msra.mxu0 0
        %5136 = vmatprep.subr.bf16.mxu0 0
        %5137 = vmatpush1.bf16.msra.mxu0 0
        %5138 = vmatprep.subr.bf16.mxu0 0
        %5139 = vmatpush1.bf16.msra.mxu0 0
        %5140 = vmatprep.subr.bf16.mxu0 0
        %5141 = vmatpush1.bf16.msra.mxu0 0
        %5142 = vmatprep.subr.bf16.mxu0 0
        %5143 = vmatpush1.bf16.msra.mxu0 0
        %5144 = vmatprep.subr.bf16.mxu0 0
        %5145 = vmatpush1.bf16.msra.mxu0 0
        %5146 = vmatprep.subr.bf16.mxu0 0
        %5147 = vmatpush1.bf16.msra.mxu0 0
        %5148 = vmatprep.subr.bf16.mxu0 0
        %5149 = vmatpush1.bf16.msra.mxu0 0
        %5150 = vmatprep.subr.bf16.mxu0 0
        %5151 = vmatpush1.bf16.msra.mxu0 0
        %5152 = vmatprep.subr.bf16.mxu0 0
        %5153 = vmatpush1.bf16.msra.mxu0 0
        %5154 = vmatprep.subr.bf16.mxu0 0
        %5155 = vmatpush1.bf16.msra.mxu0 0
        %5156 = vmatprep.subr.bf16.mxu0 0
        %5157 = vmatpush1.bf16.msra.mxu0 0
        %5158 = vmatprep.subr.bf16.mxu0 0
        %5159 = vmatpush1.bf16.msra.mxu0 0
        %5160 = vmatprep.subr.bf16.mxu0 0
        %5161 = vmatpush1.bf16.msra.mxu0 0
        %5162 = vmatprep.subr.bf16.mxu0 0
        %5163 = vmatpush1.bf16.msra.mxu0 0
        %5164 = vmatprep.mubr.bf16.mxu0 0
        %5165 = vmatmul.mubr.bf16.gmra.mrb[0].mxu0 %v4027
        %v5166 = vpop.f32.mrb[0].mxu0
        %v5167 = vadd.f32 0.0, %v5166
        %v5168 = vpop.f32.mrb[0].mxu0
        %v5169 = vpop.f32.mrb[0].mxu0
        %v5170 = vadd.f32 0.0, %v5169
        %v5171 = vpop.f32.mrb[0].mxu0
        %5172 = vdwg.mxu0
        %v5174 = vsel %vm781, %v4013, 0
        %5176 = vmatprep.subr.bf16.mxu0 0
        %5177 = vmatpush1.bf16.msra.mxu0 %v5174
        %5178 = vmatprep.subr.bf16.mxu0 0
        %5179 = vmatpush1.bf16.msra.mxu0 0
        %5180 = vmatprep.subr.bf16.mxu0 0
        %5181 = vmatpush1.bf16.msra.mxu0 0
        %5182 = vmatprep.subr.bf16.mxu0 0
        %5183 = vmatpush1.bf16.msra.mxu0 0
        %5184 = vmatprep.subr.bf16.mxu0 0
        %5185 = vmatpush1.bf16.msra.mxu0 0
        %5186 = vmatprep.subr.bf16.mxu0 0
        %5187 = vmatpush1.bf16.msra.mxu0 0
        %5188 = vmatprep.subr.bf16.mxu0 0
        %5189 = vmatpush1.bf16.msra.mxu0 0
        %5190 = vmatprep.subr.bf16.mxu0 0
        %5191 = vmatpush1.bf16.msra.mxu0 0
        %5192 = vmatprep.subr.bf16.mxu0 0
        %5193 = vmatpush1.bf16.msra.mxu0 0
        %5194 = vmatprep.subr.bf16.mxu0 0
        %5195 = vmatpush1.bf16.msra.mxu0 0
        %5196 = vmatprep.subr.bf16.mxu0 0
        %5197 = vmatpush1.bf16.msra.mxu0 0
        %5198 = vmatprep.subr.bf16.mxu0 0
        %5199 = vmatpush1.bf16.msra.mxu0 0
        %5200 = vmatprep.subr.bf16.mxu0 0
        %5201 = vmatpush1.bf16.msra.mxu0 0
        %5202 = vmatprep.subr.bf16.mxu0 0
        %5203 = vmatpush1.bf16.msra.mxu0 0
        %5204 = vmatprep.subr.bf16.mxu0 0
        %5205 = vmatpush1.bf16.msra.mxu0 0
        %5206 = vmatprep.subr.bf16.mxu0 0
        %5207 = vmatpush1.bf16.msra.mxu0 0
        %5208 = vmatprep.mubr.bf16.mxu0 0
        %5209 = vmatmul.mubr.bf16.gmra.mrb[0].mxu0 %v4027
        %v5210 = vpop.f32.mrb[0].mxu0
        %v5211 = vadd.f32 0.0, %v5210
        %v5212 = vpop.f32.mrb[0].mxu0
        %v5213 = vpop.f32.mrb[0].mxu0
        %v5214 = vadd.f32 0.0, %v5213
        %v5215 = vpop.f32.mrb[0].mxu0
        %5216 = vdwg.mxu0
        %v5218 = vsel %vm781, %v4014, 0
        %5220 = vmatprep.subr.bf16.mxu0 0
        %5221 = vmatpush1.bf16.msra.mxu0 %v5218
        %5222 = vmatprep.subr.bf16.mxu0 0
        %5223 = vmatpush1.bf16.msra.mxu0 0
        %5224 = vmatprep.subr.bf16.mxu0 0
        %5225 = vmatpush1.bf16.msra.mxu0 0
        %5226 = vmatprep.subr.bf16.mxu0 0
        %5227 = vmatpush1.bf16.msra.mxu0 0
        %5228 = vmatprep.subr.bf16.mxu0 0
        %5229 = vmatpush1.bf16.msra.mxu0 0
        %5230 = vmatprep.subr.bf16.mxu0 0
        %5231 = vmatpush1.bf16.msra.mxu0 0
        %5232 = vmatprep.subr.bf16.mxu0 0
        %5233 = vmatpush1.bf16.msra.mxu0 0
        %5234 = vmatprep.subr.bf16.mxu0 0
        %5235 = vmatpush1.bf16.msra.mxu0 0
        %5236 = vmatprep.subr.bf16.mxu0 0
        %5237 = vmatpush1.bf16.msra.mxu0 0
        %5238 = vmatprep.subr.bf16.mxu0 0
        %5239 = vmatpush1.bf16.msra.mxu0 0
        %5240 = vmatprep.subr.bf16.mxu0 0
        %5241 = vmatpush1.bf16.msra.mxu0 0
        %5242 = vmatprep.subr.bf16.mxu0 0
        %5243 = vmatpush1.bf16.msra.mxu0 0
        %5244 = vmatprep.subr.bf16.mxu0 0
        %5245 = vmatpush1.bf16.msra.mxu0 0
        %5246 = vmatprep.subr.bf16.mxu0 0
        %5247 = vmatpush1.bf16.msra.mxu0 0
        %5248 = vmatprep.subr.bf16.mxu0 0
        %5249 = vmatpush1.bf16.msra.mxu0 0
        %5250 = vmatprep.subr.bf16.mxu0 0
        %5251 = vmatpush1.bf16.msra.mxu0 0
        %5252 = vmatprep.mubr.bf16.mxu0 0
        %5253 = vmatmul.mubr.bf16.gmra.mrb[0].mxu0 %v4027
        %v5254 = vpop.f32.mrb[0].mxu0
        %v5255 = vadd.f32 0.0, %v5254
        %v5256 = vpop.f32.mrb[0].mxu0
        %v5257 = vpop.f32.mrb[0].mxu0
        %v5258 = vadd.f32 0.0, %v5257
        %v5259 = vpop.f32.mrb[0].mxu0
        %5260 = vdwg.mxu0
        %v5262 = vsel %vm781, %v4015, 0
        %5264 = vmatprep.subr.bf16.mxu0 0
        %5265 = vmatpush1.bf16.msra.mxu0 %v5262
        %5266 = vmatprep.subr.bf16.mxu0 0
        %5267 = vmatpush1.bf16.msra.mxu0 0
        %5268 = vmatprep.subr.bf16.mxu0 0
        %5269 = vmatpush1.bf16.msra.mxu0 0
        %5270 = vmatprep.subr.bf16.mxu0 0
        %5271 = vmatpush1.bf16.msra.mxu0 0
        %5272 = vmatprep.subr.bf16.mxu0 0
        %5273 = vmatpush1.bf16.msra.mxu0 0
        %5274 = vmatprep.subr.bf16.mxu0 0
        %5275 = vmatpush1.bf16.msra.mxu0 0
        %5276 = vmatprep.subr.bf16.mxu0 0
        %5277 = vmatpush1.bf16.msra.mxu0 0
        %5278 = vmatprep.subr.bf16.mxu0 0
        %5279 = vmatpush1.bf16.msra.mxu0 0
        %5280 = vmatprep.subr.bf16.mxu0 0
        %5281 = vmatpush1.bf16.msra.mxu0 0
        %5282 = vmatprep.subr.bf16.mxu0 0
        %5283 = vmatpush1.bf16.msra.mxu0 0
        %5284 = vmatprep.subr.bf16.mxu0 0
        %5285 = vmatpush1.bf16.msra.mxu0 0
        %5286 = vmatprep.subr.bf16.mxu0 0
        %5287 = vmatpush1.bf16.msra.mxu0 0
        %5288 = vmatprep.subr.bf16.mxu0 0
        %5289 = vmatpush1.bf16.msra.mxu0 0
        %5290 = vmatprep.subr.bf16.mxu0 0
        %5291 = vmatpush1.bf16.msra.mxu0 0
        %5292 = vmatprep.subr.bf16.mxu0 0
        %5293 = vmatpush1.bf16.msra.mxu0 0
        %5294 = vmatprep.subr.bf16.mxu0 0
        %5295 = vmatpush1.bf16.msra.mxu0 0
        %5296 = vmatprep.mubr.bf16.mxu0 0
        %5297 = vmatmul.mubr.bf16.gmra.mrb[0].mxu0 %v4027
        %v5298 = vpop.f32.mrb[0].mxu0
        %v5299 = vadd.f32 0.0, %v5298
        %v5300 = vpop.f32.mrb[0].mxu0
        %v5301 = vpop.f32.mrb[0].mxu0
        %v5302 = vadd.f32 0.0, %v5301
        %v5303 = vpop.f32.mrb[0].mxu0
        %5304 = vdwg.mxu0
        %v5306 = vsel %vm781, %v4016, 0
        %5308 = vmatprep.subr.bf16.mxu0 0
        %5309 = vmatpush1.bf16.msra.mxu0 %v5306
        %5310 = vmatprep.subr.bf16.mxu0 0
        %5311 = vmatpush1.bf16.msra.mxu0 0
        %5312 = vmatprep.subr.bf16.mxu0 0
        %5313 = vmatpush1.bf16.msra.mxu0 0
        %5314 = vmatprep.subr.bf16.mxu0 0
        %5315 = vmatpush1.bf16.msra.mxu0 0
        %5316 = vmatprep.subr.bf16.mxu0 0
        %5317 = vmatpush1.bf16.msra.mxu0 0
        %5318 = vmatprep.subr.bf16.mxu0 0
        %5319 = vmatpush1.bf16.msra.mxu0 0
        %5320 = vmatprep.subr.bf16.mxu0 0
        %5321 = vmatpush1.bf16.msra.mxu0 0
        %5322 = vmatprep.subr.bf16.mxu0 0
        %5323 = vmatpush1.bf16.msra.mxu0 0
        %5324 = vmatprep.subr.bf16.mxu0 0
        %5325 = vmatpush1.bf16.msra.mxu0 0
        %5326 = vmatprep.subr.bf16.mxu0 0
        %5327 = vmatpush1.bf16.msra.mxu0 0
        %5328 = vmatprep.subr.bf16.mxu0 0
        %5329 = vmatpush1.bf16.msra.mxu0 0
        %5330 = vmatprep.subr.bf16.mxu0 0
        %5331 = vmatpush1.bf16.msra.mxu0 0
        %5332 = vmatprep.subr.bf16.mxu0 0
        %5333 = vmatpush1.bf16.msra.mxu0 0
        %5334 = vmatprep.subr.bf16.mxu0 0
        %5335 = vmatpush1.bf16.msra.mxu0 0
        %5336 = vmatprep.subr.bf16.mxu0 0
        %5337 = vmatpush1.bf16.msra.mxu0 0
        %5338 = vmatprep.subr.bf16.mxu0 0
        %5339 = vmatpush1.bf16.msra.mxu0 0
        %5340 = vmatprep.mubr.bf16.mxu0 0
        %5341 = vmatmul.mubr.bf16.gmra.mrb[0].mxu0 %v4027
        %v5342 = vpop.f32.mrb[0].mxu0
        %v5343 = vadd.f32 0.0, %v5342
        %v5344 = vpop.f32.mrb[0].mxu0
        %v5345 = vpop.f32.mrb[0].mxu0
        %v5346 = vadd.f32 0.0, %v5345
        %v5347 = vpop.f32.mrb[0].mxu0
        %5348 = vdwg.mxu0
        %v5350 = vsel %vm781, %v4017, 0
        %5352 = vmatprep.subr.bf16.mxu0 0
        %5353 = vmatpush1.bf16.msra.mxu0 %v5350
        %5354 = vmatprep.subr.bf16.mxu0 0
        %5355 = vmatpush1.bf16.msra.mxu0 0
        %5356 = vmatprep.subr.bf16.mxu0 0
        %5357 = vmatpush1.bf16.msra.mxu0 0
        %5358 = vmatprep.subr.bf16.mxu0 0
        %5359 = vmatpush1.bf16.msra.mxu0 0
        %5360 = vmatprep.subr.bf16.mxu0 0
        %5361 = vmatpush1.bf16.msra.mxu0 0
        %5362 = vmatprep.subr.bf16.mxu0 0
        %5363 = vmatpush1.bf16.msra.mxu0 0
        %5364 = vmatprep.subr.bf16.mxu0 0
        %5365 = vmatpush1.bf16.msra.mxu0 0
        %5366 = vmatprep.subr.bf16.mxu0 0
        %5367 = vmatpush1.bf16.msra.mxu0 0
        %5368 = vmatprep.subr.bf16.mxu0 0
        %5369 = vmatpush1.bf16.msra.mxu0 0
        %5370 = vmatprep.subr.bf16.mxu0 0
        %5371 = vmatpush1.bf16.msra.mxu0 0
        %5372 = vmatprep.subr.bf16.mxu0 0
        %5373 = vmatpush1.bf16.msra.mxu0 0
        %5374 = vmatprep.subr.bf16.mxu0 0
        %5375 = vmatpush1.bf16.msra.mxu0 0
        %5376 = vmatprep.subr.bf16.mxu0 0
        %5377 = vmatpush1.bf16.msra.mxu0 0
        %5378 = vmatprep.subr.bf16.mxu0 0
        %5379 = vmatpush1.bf16.msra.mxu0 0
        %5380 = vmatprep.subr.bf16.mxu0 0
        %5381 = vmatpush1.bf16.msra.mxu0 0
        %5382 = vmatprep.subr.bf16.mxu0 0
        %5383 = vmatpush1.bf16.msra.mxu0 0
        %5384 = vmatprep.mubr.bf16.mxu0 0
        %5385 = vmatmul.mubr.bf16.gmra.mrb[0].mxu0 %v4027
        %v5386 = vpop.f32.mrb[0].mxu0
        %v5387 = vadd.f32 0.0, %v5386
        %v5388 = vpop.f32.mrb[0].mxu0
        %v5389 = vpop.f32.mrb[0].mxu0
        %v5390 = vadd.f32 0.0, %v5389
        %v5391 = vpop.f32.mrb[0].mxu0
        %5392 = vdwg.mxu0
        %v5394 = vsel %vm781, %v4018, 0
        %5396 = vmatprep.subr.bf16.mxu0 0
        %5397 = vmatpush1.bf16.msra.mxu0 %v5394
        %5398 = vmatprep.subr.bf16.mxu0 0
        %5399 = vmatpush1.bf16.msra.mxu0 0
        %5400 = vmatprep.subr.bf16.mxu0 0
        %5401 = vmatpush1.bf16.msra.mxu0 0
        %5402 = vmatprep.subr.bf16.mxu0 0
        %5403 = vmatpush1.bf16.msra.mxu0 0
        %5404 = vmatprep.subr.bf16.mxu0 0
        %5405 = vmatpush1.bf16.msra.mxu0 0
        %5406 = vmatprep.subr.bf16.mxu0 0
        %5407 = vmatpush1.bf16.msra.mxu0 0
        %5408 = vmatprep.subr.bf16.mxu0 0
        %5409 = vmatpush1.bf16.msra.mxu0 0
        %5410 = vmatprep.subr.bf16.mxu0 0
        %5411 = vmatpush1.bf16.msra.mxu0 0
        %5412 = vmatprep.subr.bf16.mxu0 0
        %5413 = vmatpush1.bf16.msra.mxu0 0
        %5414 = vmatprep.subr.bf16.mxu0 0
        %5415 = vmatpush1.bf16.msra.mxu0 0
        %5416 = vmatprep.subr.bf16.mxu0 0
        %5417 = vmatpush1.bf16.msra.mxu0 0
        %5418 = vmatprep.subr.bf16.mxu0 0
        %5419 = vmatpush1.bf16.msra.mxu0 0
        %5420 = vmatprep.subr.bf16.mxu0 0
        %5421 = vmatpush1.bf16.msra.mxu0 0
        %5422 = vmatprep.subr.bf16.mxu0 0
        %5423 = vmatpush1.bf16.msra.mxu0 0
        %5424 = vmatprep.subr.bf16.mxu0 0
        %5425 = vmatpush1.bf16.msra.mxu0 0
        %5426 = vmatprep.subr.bf16.mxu0 0
        %5427 = vmatpush1.bf16.msra.mxu0 0
        %5428 = vmatprep.mubr.bf16.mxu0 0
        %5429 = vmatmul.mubr.bf16.gmra.mrb[0].mxu0 %v4027
        %v5430 = vpop.f32.mrb[0].mxu0
        %v5431 = vadd.f32 0.0, %v5430
        %v5432 = vpop.f32.mrb[0].mxu0
        %v5433 = vpop.f32.mrb[0].mxu0
        %v5434 = vadd.f32 0.0, %v5433
        %v5435 = vpop.f32.mrb[0].mxu0
        %5436 = vdwg.mxu0
        %v5437 = vld [vmem:[%s9] sm:$0xf]
        %v5438 = vld [vmem:[%s9 + $0x4] sm:$0xf]
        %v5439 = vpack.c.bf16 %v4070, %v4067
        %v5440 = vpack.c.bf16 %v4114, %v4111
        %v5441 = vpack.c.bf16 %v4158, %v4155
        %v5442 = vpack.c.bf16 %v4202, %v4199
        %v5443 = vpack.c.bf16 %v4246, %v4243
        %v5444 = vpack.c.bf16 %v4290, %v4287
        %v5445 = vpack.c.bf16 %v4334, %v4331
        %v5446 = vpack.c.bf16 %v4378, %v4375
        %v5447 = vpack.c.bf16 %v4422, %v4419
        %v5448 = vpack.c.bf16 %v4466, %v4463
        %v5449 = vpack.c.bf16 %v4510, %v4507
        %v5450 = vpack.c.bf16 %v4554, %v4551
        %v5451 = vpack.c.bf16 %v4598, %v4595
        %v5452 = vpack.c.bf16 %v4642, %v4639
        %v5453 = vpack.c.bf16 %v4686, %v4683
        %v5454 = vpack.c.bf16 %v4730, %v4727
        %v5455 = vpack.c.bf16 %v4774, %v4771
        %v5456 = vpack.c.bf16 %v4818, %v4815
        %v5457 = vpack.c.bf16 %v4862, %v4859
        %v5458 = vpack.c.bf16 %v4906, %v4903
        %v5459 = vpack.c.bf16 %v4950, %v4947
        %v5460 = vpack.c.bf16 %v4994, %v4991
        %v5461 = vpack.c.bf16 %v5038, %v5035
        %v5462 = vpack.c.bf16 %v5082, %v5079
        %v5463 = vpack.c.bf16 %v5126, %v5123
        %v5464 = vpack.c.bf16 %v5170, %v5167
        %v5465 = vpack.c.bf16 %v5214, %v5211
        %v5466 = vpack.c.bf16 %v5258, %v5255
        %v5467 = vpack.c.bf16 %v5302, %v5299
        %v5468 = vpack.c.bf16 %v5346, %v5343
        %v5469 = vpack.c.bf16 %v5390, %v5387
        %v5470 = vpack.c.bf16 %v5434, %v5431
        %v5473 = vunpack.c.l.b16 %v5437
        %v5474 = vunpack.c.l.b16 %v5438
        %v5475 = vpack.c.b16 %v5474, %v5473
        %v5477 = vsel %vm777, %v5439, 0
        %v5480 = vsel %vm777, %v5475, 0
        %5482 = vmatprep.subr.bf16.mxu0 0
        %5483 = vmatpush1.bf16.xpose.msra.mxu0 %v5480
        %5484 = vmatprep.subr.bf16.mxu0 0
        %5485 = vmatpush1.bf16.xpose.msra.mxu0 0
        %5486 = vmatprep.subr.bf16.mxu0 0
        %5487 = vmatpush1.bf16.xpose.msra.mxu0 0
        %5488 = vmatprep.subr.bf16.mxu0 0
        %5489 = vmatpush1.bf16.xpose.msra.mxu0 0
        %5490 = vmatprep.subr.bf16.mxu0 0
        %5491 = vmatpush1.bf16.xpose.msra.mxu0 0
        %5492 = vmatprep.subr.bf16.mxu0 0
        %5493 = vmatpush1.bf16.xpose.msra.mxu0 0
        %5494 = vmatprep.subr.bf16.mxu0 0
        %5495 = vmatpush1.bf16.xpose.msra.mxu0 0
        %5496 = vmatprep.subr.bf16.mxu0 0
        %5497 = vmatpush1.bf16.xpose.msra.mxu0 0
        %5498 = vmatprep.subr.bf16.mxu0 0
        %5499 = vmatpush1.bf16.xpose.msra.mxu0 0
        %5500 = vmatprep.subr.bf16.mxu0 0
        %5501 = vmatpush1.bf16.xpose.msra.mxu0 0
        %5502 = vmatprep.subr.bf16.mxu0 0
        %5503 = vmatpush1.bf16.xpose.msra.mxu0 0
        %5504 = vmatprep.subr.bf16.mxu0 0
        %5505 = vmatpush1.bf16.xpose.msra.mxu0 0
        %5506 = vmatprep.subr.bf16.mxu0 0
        %5507 = vmatpush1.bf16.xpose.msra.mxu0 0
        %5508 = vmatprep.subr.bf16.mxu0 0
        %5509 = vmatpush1.bf16.xpose.msra.mxu0 0
        %5510 = vmatprep.subr.bf16.mxu0 0
        %5511 = vmatpush1.bf16.xpose.msra.mxu0 0
        %5512 = vmatprep.subr.bf16.mxu0 0
        %5513 = vmatpush1.bf16.xpose.msra.mxu0 0
        %5514 = vmatprep.mubr.bf16.mxu0 0
        %5515 = vmatmul.mubr.bf16.gmra.mrb[0].mxu0 %v5477
        %v5516 = vpop.f32.mrb[0].mxu0
        %v5517 = vadd.f32 0.0, %v5516
        %v5518 = vpop.f32.mrb[0].mxu0
        %v5519 = vpop.f32.mrb[0].mxu0
        %v5520 = vadd.f32 0.0, %v5519
        %v5521 = vpop.f32.mrb[0].mxu0
        %5522 = vdwg.mxu0
        %v5524 = vsel %vm777, %v5440, 0
        %5526 = vmatprep.subr.bf16.mxu0 0
        %5527 = vmatpush1.bf16.xpose.msra.mxu0 %v5480
        %5528 = vmatprep.subr.bf16.mxu0 0
        %5529 = vmatpush1.bf16.xpose.msra.mxu0 0
        %5530 = vmatprep.subr.bf16.mxu0 0
        %5531 = vmatpush1.bf16.xpose.msra.mxu0 0
        %5532 = vmatprep.subr.bf16.mxu0 0
        %5533 = vmatpush1.bf16.xpose.msra.mxu0 0
        %5534 = vmatprep.subr.bf16.mxu0 0
        %5535 = vmatpush1.bf16.xpose.msra.mxu0 0
        %5536 = vmatprep.subr.bf16.mxu0 0
        %5537 = vmatpush1.bf16.xpose.msra.mxu0 0
        %5538 = vmatprep.subr.bf16.mxu0 0
        %5539 = vmatpush1.bf16.xpose.msra.mxu0 0
        %5540 = vmatprep.subr.bf16.mxu0 0
        %5541 = vmatpush1.bf16.xpose.msra.mxu0 0
        %5542 = vmatprep.subr.bf16.mxu0 0
        %5543 = vmatpush1.bf16.xpose.msra.mxu0 0
        %5544 = vmatprep.subr.bf16.mxu0 0
        %5545 = vmatpush1.bf16.xpose.msra.mxu0 0
        %5546 = vmatprep.subr.bf16.mxu0 0
        %5547 = vmatpush1.bf16.xpose.msra.mxu0 0
        %5548 = vmatprep.subr.bf16.mxu0 0
        %5549 = vmatpush1.bf16.xpose.msra.mxu0 0
        %5550 = vmatprep.subr.bf16.mxu0 0
        %5551 = vmatpush1.bf16.xpose.msra.mxu0 0
        %5552 = vmatprep.subr.bf16.mxu0 0
        %5553 = vmatpush1.bf16.xpose.msra.mxu0 0
        %5554 = vmatprep.subr.bf16.mxu0 0
        %5555 = vmatpush1.bf16.xpose.msra.mxu0 0
        %5556 = vmatprep.subr.bf16.mxu0 0
        %5557 = vmatpush1.bf16.xpose.msra.mxu0 0
        %5558 = vmatprep.mubr.bf16.mxu0 0
        %5559 = vmatmul.mubr.bf16.gmra.mrb[0].mxu0 %v5524
        %v5560 = vpop.f32.mrb[0].mxu0
        %v5561 = vadd.f32 0.0, %v5560
        %v5562 = vpop.f32.mrb[0].mxu0
        %v5563 = vpop.f32.mrb[0].mxu0
        %v5564 = vadd.f32 0.0, %v5563
        %v5565 = vpop.f32.mrb[0].mxu0
        %5566 = vdwg.mxu0
        %v5568 = vsel %vm777, %v5441, 0
        %5570 = vmatprep.subr.bf16.mxu0 0
        %5571 = vmatpush1.bf16.xpose.msra.mxu0 %v5480
        %5572 = vmatprep.subr.bf16.mxu0 0
        %5573 = vmatpush1.bf16.xpose.msra.mxu0 0
        %5574 = vmatprep.subr.bf16.mxu0 0
        %5575 = vmatpush1.bf16.xpose.msra.mxu0 0
        %5576 = vmatprep.subr.bf16.mxu0 0
        %5577 = vmatpush1.bf16.xpose.msra.mxu0 0
        %5578 = vmatprep.subr.bf16.mxu0 0
        %5579 = vmatpush1.bf16.xpose.msra.mxu0 0
        %5580 = vmatprep.subr.bf16.mxu0 0
        %5581 = vmatpush1.bf16.xpose.msra.mxu0 0
        %5582 = vmatprep.subr.bf16.mxu0 0
        %5583 = vmatpush1.bf16.xpose.msra.mxu0 0
        %5584 = vmatprep.subr.bf16.mxu0 0
        %5585 = vmatpush1.bf16.xpose.msra.mxu0 0
        %5586 = vmatprep.subr.bf16.mxu0 0
        %5587 = vmatpush1.bf16.xpose.msra.mxu0 0
        %5588 = vmatprep.subr.bf16.mxu0 0
        %5589 = vmatpush1.bf16.xpose.msra.mxu0 0
        %5590 = vmatprep.subr.bf16.mxu0 0
        %5591 = vmatpush1.bf16.xpose.msra.mxu0 0
        %5592 = vmatprep.subr.bf16.mxu0 0
        %5593 = vmatpush1.bf16.xpose.msra.mxu0 0
        %5594 = vmatprep.subr.bf16.mxu0 0
        %5595 = vmatpush1.bf16.xpose.msra.mxu0 0
        %5596 = vmatprep.subr.bf16.mxu0 0
        %5597 = vmatpush1.bf16.xpose.msra.mxu0 0
        %5598 = vmatprep.subr.bf16.mxu0 0
        %5599 = vmatpush1.bf16.xpose.msra.mxu0 0
        %5600 = vmatprep.subr.bf16.mxu0 0
        %5601 = vmatpush1.bf16.xpose.msra.mxu0 0
        %5602 = vmatprep.mubr.bf16.mxu0 0
        %5603 = vmatmul.mubr.bf16.gmra.mrb[0].mxu0 %v5568
        %v5604 = vpop.f32.mrb[0].mxu0
        %v5605 = vadd.f32 0.0, %v5604
        %v5606 = vpop.f32.mrb[0].mxu0
        %v5607 = vpop.f32.mrb[0].mxu0
        %v5608 = vadd.f32 0.0, %v5607
        %v5609 = vpop.f32.mrb[0].mxu0
        %5610 = vdwg.mxu0
        %v5612 = vsel %vm777, %v5442, 0
        %5614 = vmatprep.subr.bf16.mxu0 0
        %5615 = vmatpush1.bf16.xpose.msra.mxu0 %v5480
        %5616 = vmatprep.subr.bf16.mxu0 0
        %5617 = vmatpush1.bf16.xpose.msra.mxu0 0
        %5618 = vmatprep.subr.bf16.mxu0 0
        %5619 = vmatpush1.bf16.xpose.msra.mxu0 0
        %5620 = vmatprep.subr.bf16.mxu0 0
        %5621 = vmatpush1.bf16.xpose.msra.mxu0 0
        %5622 = vmatprep.subr.bf16.mxu0 0
        %5623 = vmatpush1.bf16.xpose.msra.mxu0 0
        %5624 = vmatprep.subr.bf16.mxu0 0
        %5625 = vmatpush1.bf16.xpose.msra.mxu0 0
        %5626 = vmatprep.subr.bf16.mxu0 0
        %5627 = vmatpush1.bf16.xpose.msra.mxu0 0
        %5628 = vmatprep.subr.bf16.mxu0 0
        %5629 = vmatpush1.bf16.xpose.msra.mxu0 0
        %5630 = vmatprep.subr.bf16.mxu0 0
        %5631 = vmatpush1.bf16.xpose.msra.mxu0 0
        %5632 = vmatprep.subr.bf16.mxu0 0
        %5633 = vmatpush1.bf16.xpose.msra.mxu0 0
        %5634 = vmatprep.subr.bf16.mxu0 0
        %5635 = vmatpush1.bf16.xpose.msra.mxu0 0
        %5636 = vmatprep.subr.bf16.mxu0 0
        %5637 = vmatpush1.bf16.xpose.msra.mxu0 0
        %5638 = vmatprep.subr.bf16.mxu0 0
        %5639 = vmatpush1.bf16.xpose.msra.mxu0 0
        %5640 = vmatprep.subr.bf16.mxu0 0
        %5641 = vmatpush1.bf16.xpose.msra.mxu0 0
        %5642 = vmatprep.subr.bf16.mxu0 0
        %5643 = vmatpush1.bf16.xpose.msra.mxu0 0
        %5644 = vmatprep.subr.bf16.mxu0 0
        %5645 = vmatpush1.bf16.xpose.msra.mxu0 0
        %5646 = vmatprep.mubr.bf16.mxu0 0
        %5647 = vmatmul.mubr.bf16.gmra.mrb[0].mxu0 %v5612
        %v5648 = vpop.f32.mrb[0].mxu0
        %v5649 = vadd.f32 0.0, %v5648
        %v5650 = vpop.f32.mrb[0].mxu0
        %v5651 = vpop.f32.mrb[0].mxu0
        %v5652 = vadd.f32 0.0, %v5651
        %v5653 = vpop.f32.mrb[0].mxu0
        %5654 = vdwg.mxu0
        %v5656 = vsel %vm777, %v5443, 0
        %5658 = vmatprep.subr.bf16.mxu0 0
        %5659 = vmatpush1.bf16.xpose.msra.mxu0 %v5480
        %5660 = vmatprep.subr.bf16.mxu0 0
        %5661 = vmatpush1.bf16.xpose.msra.mxu0 0
        %5662 = vmatprep.subr.bf16.mxu0 0
        %5663 = vmatpush1.bf16.xpose.msra.mxu0 0
        %5664 = vmatprep.subr.bf16.mxu0 0
        %5665 = vmatpush1.bf16.xpose.msra.mxu0 0
        %5666 = vmatprep.subr.bf16.mxu0 0
        %5667 = vmatpush1.bf16.xpose.msra.mxu0 0
        %5668 = vmatprep.subr.bf16.mxu0 0
        %5669 = vmatpush1.bf16.xpose.msra.mxu0 0
        %5670 = vmatprep.subr.bf16.mxu0 0
        %5671 = vmatpush1.bf16.xpose.msra.mxu0 0
        %5672 = vmatprep.subr.bf16.mxu0 0
        %5673 = vmatpush1.bf16.xpose.msra.mxu0 0
        %5674 = vmatprep.subr.bf16.mxu0 0
        %5675 = vmatpush1.bf16.xpose.msra.mxu0 0
        %5676 = vmatprep.subr.bf16.mxu0 0
        %5677 = vmatpush1.bf16.xpose.msra.mxu0 0
        %5678 = vmatprep.subr.bf16.mxu0 0
        %5679 = vmatpush1.bf16.xpose.msra.mxu0 0
        %5680 = vmatprep.subr.bf16.mxu0 0
        %5681 = vmatpush1.bf16.xpose.msra.mxu0 0
        %5682 = vmatprep.subr.bf16.mxu0 0
        %5683 = vmatpush1.bf16.xpose.msra.mxu0 0
        %5684 = vmatprep.subr.bf16.mxu0 0
        %5685 = vmatpush1.bf16.xpose.msra.mxu0 0
        %5686 = vmatprep.subr.bf16.mxu0 0
        %5687 = vmatpush1.bf16.xpose.msra.mxu0 0
        %5688 = vmatprep.subr.bf16.mxu0 0
        %5689 = vmatpush1.bf16.xpose.msra.mxu0 0
        %5690 = vmatprep.mubr.bf16.mxu0 0
        %5691 = vmatmul.mubr.bf16.gmra.mrb[0].mxu0 %v5656
        %v5692 = vpop.f32.mrb[0].mxu0
        %v5693 = vadd.f32 0.0, %v5692
        %v5694 = vpop.f32.mrb[0].mxu0
        %v5695 = vpop.f32.mrb[0].mxu0
        %v5696 = vadd.f32 0.0, %v5695
        %v5697 = vpop.f32.mrb[0].mxu0
        %5698 = vdwg.mxu0
        %v5700 = vsel %vm777, %v5444, 0
        %5702 = vmatprep.subr.bf16.mxu0 0
        %5703 = vmatpush1.bf16.xpose.msra.mxu0 %v5480
        %5704 = vmatprep.subr.bf16.mxu0 0
        %5705 = vmatpush1.bf16.xpose.msra.mxu0 0
        %5706 = vmatprep.subr.bf16.mxu0 0
        %5707 = vmatpush1.bf16.xpose.msra.mxu0 0
        %5708 = vmatprep.subr.bf16.mxu0 0
        %5709 = vmatpush1.bf16.xpose.msra.mxu0 0
        %5710 = vmatprep.subr.bf16.mxu0 0
        %5711 = vmatpush1.bf16.xpose.msra.mxu0 0
        %5712 = vmatprep.subr.bf16.mxu0 0
        %5713 = vmatpush1.bf16.xpose.msra.mxu0 0
        %5714 = vmatprep.subr.bf16.mxu0 0
        %5715 = vmatpush1.bf16.xpose.msra.mxu0 0
        %5716 = vmatprep.subr.bf16.mxu0 0
        %5717 = vmatpush1.bf16.xpose.msra.mxu0 0
        %5718 = vmatprep.subr.bf16.mxu0 0
        %5719 = vmatpush1.bf16.xpose.msra.mxu0 0
        %5720 = vmatprep.subr.bf16.mxu0 0
        %5721 = vmatpush1.bf16.xpose.msra.mxu0 0
        %5722 = vmatprep.subr.bf16.mxu0 0
        %5723 = vmatpush1.bf16.xpose.msra.mxu0 0
        %5724 = vmatprep.subr.bf16.mxu0 0
        %5725 = vmatpush1.bf16.xpose.msra.mxu0 0
        %5726 = vmatprep.subr.bf16.mxu0 0
        %5727 = vmatpush1.bf16.xpose.msra.mxu0 0
        %5728 = vmatprep.subr.bf16.mxu0 0
        %5729 = vmatpush1.bf16.xpose.msra.mxu0 0
        %5730 = vmatprep.subr.bf16.mxu0 0
        %5731 = vmatpush1.bf16.xpose.msra.mxu0 0
        %5732 = vmatprep.subr.bf16.mxu0 0
        %5733 = vmatpush1.bf16.xpose.msra.mxu0 0
        %5734 = vmatprep.mubr.bf16.mxu0 0
        %5735 = vmatmul.mubr.bf16.gmra.mrb[0].mxu0 %v5700
        %v5736 = vpop.f32.mrb[0].mxu0
        %v5737 = vadd.f32 0.0, %v5736
        %v5738 = vpop.f32.mrb[0].mxu0
        %v5739 = vpop.f32.mrb[0].mxu0
        %v5740 = vadd.f32 0.0, %v5739
        %v5741 = vpop.f32.mrb[0].mxu0
        %5742 = vdwg.mxu0
        %v5744 = vsel %vm777, %v5445, 0
        %5746 = vmatprep.subr.bf16.mxu0 0
        %5747 = vmatpush1.bf16.xpose.msra.mxu0 %v5480
        %5748 = vmatprep.subr.bf16.mxu0 0
        %5749 = vmatpush1.bf16.xpose.msra.mxu0 0
        %5750 = vmatprep.subr.bf16.mxu0 0
        %5751 = vmatpush1.bf16.xpose.msra.mxu0 0
        %5752 = vmatprep.subr.bf16.mxu0 0
        %5753 = vmatpush1.bf16.xpose.msra.mxu0 0
        %5754 = vmatprep.subr.bf16.mxu0 0
        %5755 = vmatpush1.bf16.xpose.msra.mxu0 0
        %5756 = vmatprep.subr.bf16.mxu0 0
        %5757 = vmatpush1.bf16.xpose.msra.mxu0 0
        %5758 = vmatprep.subr.bf16.mxu0 0
        %5759 = vmatpush1.bf16.xpose.msra.mxu0 0
        %5760 = vmatprep.subr.bf16.mxu0 0
        %5761 = vmatpush1.bf16.xpose.msra.mxu0 0
        %5762 = vmatprep.subr.bf16.mxu0 0
        %5763 = vmatpush1.bf16.xpose.msra.mxu0 0
        %5764 = vmatprep.subr.bf16.mxu0 0
        %5765 = vmatpush1.bf16.xpose.msra.mxu0 0
        %5766 = vmatprep.subr.bf16.mxu0 0
        %5767 = vmatpush1.bf16.xpose.msra.mxu0 0
        %5768 = vmatprep.subr.bf16.mxu0 0
        %5769 = vmatpush1.bf16.xpose.msra.mxu0 0
        %5770 = vmatprep.subr.bf16.mxu0 0
        %5771 = vmatpush1.bf16.xpose.msra.mxu0 0
        %5772 = vmatprep.subr.bf16.mxu0 0
        %5773 = vmatpush1.bf16.xpose.msra.mxu0 0
        %5774 = vmatprep.subr.bf16.mxu0 0
        %5775 = vmatpush1.bf16.xpose.msra.mxu0 0
        %5776 = vmatprep.subr.bf16.mxu0 0
        %5777 = vmatpush1.bf16.xpose.msra.mxu0 0
        %5778 = vmatprep.mubr.bf16.mxu0 0
        %5779 = vmatmul.mubr.bf16.gmra.mrb[0].mxu0 %v5744
        %v5780 = vpop.f32.mrb[0].mxu0
        %v5781 = vadd.f32 0.0, %v5780
        %v5782 = vpop.f32.mrb[0].mxu0
        %v5783 = vpop.f32.mrb[0].mxu0
        %v5784 = vadd.f32 0.0, %v5783
        %v5785 = vpop.f32.mrb[0].mxu0
        %5786 = vdwg.mxu0
        %v5788 = vsel %vm777, %v5446, 0
        %5790 = vmatprep.subr.bf16.mxu0 0
        %5791 = vmatpush1.bf16.xpose.msra.mxu0 %v5480
        %5792 = vmatprep.subr.bf16.mxu0 0
        %5793 = vmatpush1.bf16.xpose.msra.mxu0 0
        %5794 = vmatprep.subr.bf16.mxu0 0
        %5795 = vmatpush1.bf16.xpose.msra.mxu0 0
        %5796 = vmatprep.subr.bf16.mxu0 0
        %5797 = vmatpush1.bf16.xpose.msra.mxu0 0
        %5798 = vmatprep.subr.bf16.mxu0 0
        %5799 = vmatpush1.bf16.xpose.msra.mxu0 0
        %5800 = vmatprep.subr.bf16.mxu0 0
        %5801 = vmatpush1.bf16.xpose.msra.mxu0 0
        %5802 = vmatprep.subr.bf16.mxu0 0
        %5803 = vmatpush1.bf16.xpose.msra.mxu0 0
        %5804 = vmatprep.subr.bf16.mxu0 0
        %5805 = vmatpush1.bf16.xpose.msra.mxu0 0
        %5806 = vmatprep.subr.bf16.mxu0 0
        %5807 = vmatpush1.bf16.xpose.msra.mxu0 0
        %5808 = vmatprep.subr.bf16.mxu0 0
        %5809 = vmatpush1.bf16.xpose.msra.mxu0 0
        %5810 = vmatprep.subr.bf16.mxu0 0
        %5811 = vmatpush1.bf16.xpose.msra.mxu0 0
        %5812 = vmatprep.subr.bf16.mxu0 0
        %5813 = vmatpush1.bf16.xpose.msra.mxu0 0
        %5814 = vmatprep.subr.bf16.mxu0 0
        %5815 = vmatpush1.bf16.xpose.msra.mxu0 0
        %5816 = vmatprep.subr.bf16.mxu0 0
        %5817 = vmatpush1.bf16.xpose.msra.mxu0 0
        %5818 = vmatprep.subr.bf16.mxu0 0
        %5819 = vmatpush1.bf16.xpose.msra.mxu0 0
        %5820 = vmatprep.subr.bf16.mxu0 0
        %5821 = vmatpush1.bf16.xpose.msra.mxu0 0
        %5822 = vmatprep.mubr.bf16.mxu0 0
        %5823 = vmatmul.mubr.bf16.gmra.mrb[0].mxu0 %v5788
        %v5824 = vpop.f32.mrb[0].mxu0
        %v5825 = vadd.f32 0.0, %v5824
        %v5826 = vpop.f32.mrb[0].mxu0
        %v5827 = vpop.f32.mrb[0].mxu0
        %v5828 = vadd.f32 0.0, %v5827
        %v5829 = vpop.f32.mrb[0].mxu0
        %5830 = vdwg.mxu0
        %v5832 = vsel %vm777, %v5447, 0
        %5834 = vmatprep.subr.bf16.mxu0 0
        %5835 = vmatpush1.bf16.xpose.msra.mxu0 %v5480
        %5836 = vmatprep.subr.bf16.mxu0 0
        %5837 = vmatpush1.bf16.xpose.msra.mxu0 0
        %5838 = vmatprep.subr.bf16.mxu0 0
        %5839 = vmatpush1.bf16.xpose.msra.mxu0 0
        %5840 = vmatprep.subr.bf16.mxu0 0
        %5841 = vmatpush1.bf16.xpose.msra.mxu0 0
        %5842 = vmatprep.subr.bf16.mxu0 0
        %5843 = vmatpush1.bf16.xpose.msra.mxu0 0
        %5844 = vmatprep.subr.bf16.mxu0 0
        %5845 = vmatpush1.bf16.xpose.msra.mxu0 0
        %5846 = vmatprep.subr.bf16.mxu0 0
        %5847 = vmatpush1.bf16.xpose.msra.mxu0 0
        %5848 = vmatprep.subr.bf16.mxu0 0
        %5849 = vmatpush1.bf16.xpose.msra.mxu0 0
        %5850 = vmatprep.subr.bf16.mxu0 0
        %5851 = vmatpush1.bf16.xpose.msra.mxu0 0
        %5852 = vmatprep.subr.bf16.mxu0 0
        %5853 = vmatpush1.bf16.xpose.msra.mxu0 0
        %5854 = vmatprep.subr.bf16.mxu0 0
        %5855 = vmatpush1.bf16.xpose.msra.mxu0 0
        %5856 = vmatprep.subr.bf16.mxu0 0
        %5857 = vmatpush1.bf16.xpose.msra.mxu0 0
        %5858 = vmatprep.subr.bf16.mxu0 0
        %5859 = vmatpush1.bf16.xpose.msra.mxu0 0
        %5860 = vmatprep.subr.bf16.mxu0 0
        %5861 = vmatpush1.bf16.xpose.msra.mxu0 0
        %5862 = vmatprep.subr.bf16.mxu0 0
        %5863 = vmatpush1.bf16.xpose.msra.mxu0 0
        %5864 = vmatprep.subr.bf16.mxu0 0
        %5865 = vmatpush1.bf16.xpose.msra.mxu0 0
        %5866 = vmatprep.mubr.bf16.mxu0 0
        %5867 = vmatmul.mubr.bf16.gmra.mrb[0].mxu0 %v5832
        %v5868 = vpop.f32.mrb[0].mxu0
        %v5869 = vadd.f32 0.0, %v5868
        %v5870 = vpop.f32.mrb[0].mxu0
        %v5871 = vpop.f32.mrb[0].mxu0
        %v5872 = vadd.f32 0.0, %v5871
        %v5873 = vpop.f32.mrb[0].mxu0
        %5874 = vdwg.mxu0
        %v5876 = vsel %vm777, %v5448, 0
        %5878 = vmatprep.subr.bf16.mxu0 0
        %5879 = vmatpush1.bf16.xpose.msra.mxu0 %v5480
        %5880 = vmatprep.subr.bf16.mxu0 0
        %5881 = vmatpush1.bf16.xpose.msra.mxu0 0
        %5882 = vmatprep.subr.bf16.mxu0 0
        %5883 = vmatpush1.bf16.xpose.msra.mxu0 0
        %5884 = vmatprep.subr.bf16.mxu0 0
        %5885 = vmatpush1.bf16.xpose.msra.mxu0 0
        %5886 = vmatprep.subr.bf16.mxu0 0
        %5887 = vmatpush1.bf16.xpose.msra.mxu0 0
        %5888 = vmatprep.subr.bf16.mxu0 0
        %5889 = vmatpush1.bf16.xpose.msra.mxu0 0
        %5890 = vmatprep.subr.bf16.mxu0 0
        %5891 = vmatpush1.bf16.xpose.msra.mxu0 0
        %5892 = vmatprep.subr.bf16.mxu0 0
        %5893 = vmatpush1.bf16.xpose.msra.mxu0 0
        %5894 = vmatprep.subr.bf16.mxu0 0
        %5895 = vmatpush1.bf16.xpose.msra.mxu0 0
        %5896 = vmatprep.subr.bf16.mxu0 0
        %5897 = vmatpush1.bf16.xpose.msra.mxu0 0
        %5898 = vmatprep.subr.bf16.mxu0 0
        %5899 = vmatpush1.bf16.xpose.msra.mxu0 0
        %5900 = vmatprep.subr.bf16.mxu0 0
        %5901 = vmatpush1.bf16.xpose.msra.mxu0 0
        %5902 = vmatprep.subr.bf16.mxu0 0
        %5903 = vmatpush1.bf16.xpose.msra.mxu0 0
        %5904 = vmatprep.subr.bf16.mxu0 0
        %5905 = vmatpush1.bf16.xpose.msra.mxu0 0
        %5906 = vmatprep.subr.bf16.mxu0 0
        %5907 = vmatpush1.bf16.xpose.msra.mxu0 0
        %5908 = vmatprep.subr.bf16.mxu0 0
        %5909 = vmatpush1.bf16.xpose.msra.mxu0 0
        %5910 = vmatprep.mubr.bf16.mxu0 0
        %5911 = vmatmul.mubr.bf16.gmra.mrb[0].mxu0 %v5876
        %v5912 = vpop.f32.mrb[0].mxu0
        %v5913 = vadd.f32 0.0, %v5912
        %v5914 = vpop.f32.mrb[0].mxu0
        %v5915 = vpop.f32.mrb[0].mxu0
        %v5916 = vadd.f32 0.0, %v5915
        %v5917 = vpop.f32.mrb[0].mxu0
        %5918 = vdwg.mxu0
        %v5920 = vsel %vm777, %v5449, 0
        %5922 = vmatprep.subr.bf16.mxu0 0
        %5923 = vmatpush1.bf16.xpose.msra.mxu0 %v5480
        %5924 = vmatprep.subr.bf16.mxu0 0
        %5925 = vmatpush1.bf16.xpose.msra.mxu0 0
        %5926 = vmatprep.subr.bf16.mxu0 0
        %5927 = vmatpush1.bf16.xpose.msra.mxu0 0
        %5928 = vmatprep.subr.bf16.mxu0 0
        %5929 = vmatpush1.bf16.xpose.msra.mxu0 0
        %5930 = vmatprep.subr.bf16.mxu0 0
        %5931 = vmatpush1.bf16.xpose.msra.mxu0 0
        %5932 = vmatprep.subr.bf16.mxu0 0
        %5933 = vmatpush1.bf16.xpose.msra.mxu0 0
        %5934 = vmatprep.subr.bf16.mxu0 0
        %5935 = vmatpush1.bf16.xpose.msra.mxu0 0
        %5936 = vmatprep.subr.bf16.mxu0 0
        %5937 = vmatpush1.bf16.xpose.msra.mxu0 0
        %5938 = vmatprep.subr.bf16.mxu0 0
        %5939 = vmatpush1.bf16.xpose.msra.mxu0 0
        %5940 = vmatprep.subr.bf16.mxu0 0
        %5941 = vmatpush1.bf16.xpose.msra.mxu0 0
        %5942 = vmatprep.subr.bf16.mxu0 0
        %5943 = vmatpush1.bf16.xpose.msra.mxu0 0
        %5944 = vmatprep.subr.bf16.mxu0 0
        %5945 = vmatpush1.bf16.xpose.msra.mxu0 0
        %5946 = vmatprep.subr.bf16.mxu0 0
        %5947 = vmatpush1.bf16.xpose.msra.mxu0 0
        %5948 = vmatprep.subr.bf16.mxu0 0
        %5949 = vmatpush1.bf16.xpose.msra.mxu0 0
        %5950 = vmatprep.subr.bf16.mxu0 0
        %5951 = vmatpush1.bf16.xpose.msra.mxu0 0
        %5952 = vmatprep.subr.bf16.mxu0 0
        %5953 = vmatpush1.bf16.xpose.msra.mxu0 0
        %5954 = vmatprep.mubr.bf16.mxu0 0
        %5955 = vmatmul.mubr.bf16.gmra.mrb[0].mxu0 %v5920
        %v5956 = vpop.f32.mrb[0].mxu0
        %v5957 = vadd.f32 0.0, %v5956
        %v5958 = vpop.f32.mrb[0].mxu0
        %v5959 = vpop.f32.mrb[0].mxu0
        %v5960 = vadd.f32 0.0, %v5959
        %v5961 = vpop.f32.mrb[0].mxu0
        %5962 = vdwg.mxu0
        %v5964 = vsel %vm777, %v5450, 0
        %5966 = vmatprep.subr.bf16.mxu0 0
        %5967 = vmatpush1.bf16.xpose.msra.mxu0 %v5480
        %5968 = vmatprep.subr.bf16.mxu0 0
        %5969 = vmatpush1.bf16.xpose.msra.mxu0 0
        %5970 = vmatprep.subr.bf16.mxu0 0
        %5971 = vmatpush1.bf16.xpose.msra.mxu0 0
        %5972 = vmatprep.subr.bf16.mxu0 0
        %5973 = vmatpush1.bf16.xpose.msra.mxu0 0
        %5974 = vmatprep.subr.bf16.mxu0 0
        %5975 = vmatpush1.bf16.xpose.msra.mxu0 0
        %5976 = vmatprep.subr.bf16.mxu0 0
        %5977 = vmatpush1.bf16.xpose.msra.mxu0 0
        %5978 = vmatprep.subr.bf16.mxu0 0
        %5979 = vmatpush1.bf16.xpose.msra.mxu0 0
        %5980 = vmatprep.subr.bf16.mxu0 0
        %5981 = vmatpush1.bf16.xpose.msra.mxu0 0
        %5982 = vmatprep.subr.bf16.mxu0 0
        %5983 = vmatpush1.bf16.xpose.msra.mxu0 0
        %5984 = vmatprep.subr.bf16.mxu0 0
        %5985 = vmatpush1.bf16.xpose.msra.mxu0 0
        %5986 = vmatprep.subr.bf16.mxu0 0
        %5987 = vmatpush1.bf16.xpose.msra.mxu0 0
        %5988 = vmatprep.subr.bf16.mxu0 0
        %5989 = vmatpush1.bf16.xpose.msra.mxu0 0
        %5990 = vmatprep.subr.bf16.mxu0 0
        %5991 = vmatpush1.bf16.xpose.msra.mxu0 0
        %5992 = vmatprep.subr.bf16.mxu0 0
        %5993 = vmatpush1.bf16.xpose.msra.mxu0 0
        %5994 = vmatprep.subr.bf16.mxu0 0
        %5995 = vmatpush1.bf16.xpose.msra.mxu0 0
        %5996 = vmatprep.subr.bf16.mxu0 0
        %5997 = vmatpush1.bf16.xpose.msra.mxu0 0
        %5998 = vmatprep.mubr.bf16.mxu0 0
        %5999 = vmatmul.mubr.bf16.gmra.mrb[0].mxu0 %v5964
        %v6000 = vpop.f32.mrb[0].mxu0
        %v6001 = vadd.f32 0.0, %v6000
        %v6002 = vpop.f32.mrb[0].mxu0
        %v6003 = vpop.f32.mrb[0].mxu0
        %v6004 = vadd.f32 0.0, %v6003
        %v6005 = vpop.f32.mrb[0].mxu0
        %6006 = vdwg.mxu0
        %v6008 = vsel %vm777, %v5451, 0
        %6010 = vmatprep.subr.bf16.mxu0 0
        %6011 = vmatpush1.bf16.xpose.msra.mxu0 %v5480
        %6012 = vmatprep.subr.bf16.mxu0 0
        %6013 = vmatpush1.bf16.xpose.msra.mxu0 0
        %6014 = vmatprep.subr.bf16.mxu0 0
        %6015 = vmatpush1.bf16.xpose.msra.mxu0 0
        %6016 = vmatprep.subr.bf16.mxu0 0
        %6017 = vmatpush1.bf16.xpose.msra.mxu0 0
        %6018 = vmatprep.subr.bf16.mxu0 0
        %6019 = vmatpush1.bf16.xpose.msra.mxu0 0
        %6020 = vmatprep.subr.bf16.mxu0 0
        %6021 = vmatpush1.bf16.xpose.msra.mxu0 0
        %6022 = vmatprep.subr.bf16.mxu0 0
        %6023 = vmatpush1.bf16.xpose.msra.mxu0 0
        %6024 = vmatprep.subr.bf16.mxu0 0
        %6025 = vmatpush1.bf16.xpose.msra.mxu0 0
        %6026 = vmatprep.subr.bf16.mxu0 0
        %6027 = vmatpush1.bf16.xpose.msra.mxu0 0
        %6028 = vmatprep.subr.bf16.mxu0 0
        %6029 = vmatpush1.bf16.xpose.msra.mxu0 0
        %6030 = vmatprep.subr.bf16.mxu0 0
        %6031 = vmatpush1.bf16.xpose.msra.mxu0 0
        %6032 = vmatprep.subr.bf16.mxu0 0
        %6033 = vmatpush1.bf16.xpose.msra.mxu0 0
        %6034 = vmatprep.subr.bf16.mxu0 0
        %6035 = vmatpush1.bf16.xpose.msra.mxu0 0
        %6036 = vmatprep.subr.bf16.mxu0 0
        %6037 = vmatpush1.bf16.xpose.msra.mxu0 0
        %6038 = vmatprep.subr.bf16.mxu0 0
        %6039 = vmatpush1.bf16.xpose.msra.mxu0 0
        %6040 = vmatprep.subr.bf16.mxu0 0
        %6041 = vmatpush1.bf16.xpose.msra.mxu0 0
        %6042 = vmatprep.mubr.bf16.mxu0 0
        %6043 = vmatmul.mubr.bf16.gmra.mrb[0].mxu0 %v6008
        %v6044 = vpop.f32.mrb[0].mxu0
        %v6045 = vadd.f32 0.0, %v6044
        %v6046 = vpop.f32.mrb[0].mxu0
        %v6047 = vpop.f32.mrb[0].mxu0
        %v6048 = vadd.f32 0.0, %v6047
        %v6049 = vpop.f32.mrb[0].mxu0
        %6050 = vdwg.mxu0
        %v6052 = vsel %vm777, %v5452, 0
        %6054 = vmatprep.subr.bf16.mxu0 0
        %6055 = vmatpush1.bf16.xpose.msra.mxu0 %v5480
        %6056 = vmatprep.subr.bf16.mxu0 0
        %6057 = vmatpush1.bf16.xpose.msra.mxu0 0
        %6058 = vmatprep.subr.bf16.mxu0 0
        %6059 = vmatpush1.bf16.xpose.msra.mxu0 0
        %6060 = vmatprep.subr.bf16.mxu0 0
        %6061 = vmatpush1.bf16.xpose.msra.mxu0 0
        %6062 = vmatprep.subr.bf16.mxu0 0
        %6063 = vmatpush1.bf16.xpose.msra.mxu0 0
        %6064 = vmatprep.subr.bf16.mxu0 0
        %6065 = vmatpush1.bf16.xpose.msra.mxu0 0
        %6066 = vmatprep.subr.bf16.mxu0 0
        %6067 = vmatpush1.bf16.xpose.msra.mxu0 0
        %6068 = vmatprep.subr.bf16.mxu0 0
        %6069 = vmatpush1.bf16.xpose.msra.mxu0 0
        %6070 = vmatprep.subr.bf16.mxu0 0
        %6071 = vmatpush1.bf16.xpose.msra.mxu0 0
        %6072 = vmatprep.subr.bf16.mxu0 0
        %6073 = vmatpush1.bf16.xpose.msra.mxu0 0
        %6074 = vmatprep.subr.bf16.mxu0 0
        %6075 = vmatpush1.bf16.xpose.msra.mxu0 0
        %6076 = vmatprep.subr.bf16.mxu0 0
        %6077 = vmatpush1.bf16.xpose.msra.mxu0 0
        %6078 = vmatprep.subr.bf16.mxu0 0
        %6079 = vmatpush1.bf16.xpose.msra.mxu0 0
        %6080 = vmatprep.subr.bf16.mxu0 0
        %6081 = vmatpush1.bf16.xpose.msra.mxu0 0
        %6082 = vmatprep.subr.bf16.mxu0 0
        %6083 = vmatpush1.bf16.xpose.msra.mxu0 0
        %6084 = vmatprep.subr.bf16.mxu0 0
        %6085 = vmatpush1.bf16.xpose.msra.mxu0 0
        %6086 = vmatprep.mubr.bf16.mxu0 0
        %6087 = vmatmul.mubr.bf16.gmra.mrb[0].mxu0 %v6052
        %v6088 = vpop.f32.mrb[0].mxu0
        %v6089 = vadd.f32 0.0, %v6088
        %v6090 = vpop.f32.mrb[0].mxu0
        %v6091 = vpop.f32.mrb[0].mxu0
        %v6092 = vadd.f32 0.0, %v6091
        %v6093 = vpop.f32.mrb[0].mxu0
        %6094 = vdwg.mxu0
        %v6096 = vsel %vm777, %v5453, 0
        %6098 = vmatprep.subr.bf16.mxu0 0
        %6099 = vmatpush1.bf16.xpose.msra.mxu0 %v5480
        %6100 = vmatprep.subr.bf16.mxu0 0
        %6101 = vmatpush1.bf16.xpose.msra.mxu0 0
        %6102 = vmatprep.subr.bf16.mxu0 0
        %6103 = vmatpush1.bf16.xpose.msra.mxu0 0
        %6104 = vmatprep.subr.bf16.mxu0 0
        %6105 = vmatpush1.bf16.xpose.msra.mxu0 0
        %6106 = vmatprep.subr.bf16.mxu0 0
        %6107 = vmatpush1.bf16.xpose.msra.mxu0 0
        %6108 = vmatprep.subr.bf16.mxu0 0
        %6109 = vmatpush1.bf16.xpose.msra.mxu0 0
        %6110 = vmatprep.subr.bf16.mxu0 0
        %6111 = vmatpush1.bf16.xpose.msra.mxu0 0
        %6112 = vmatprep.subr.bf16.mxu0 0
        %6113 = vmatpush1.bf16.xpose.msra.mxu0 0
        %6114 = vmatprep.subr.bf16.mxu0 0
        %6115 = vmatpush1.bf16.xpose.msra.mxu0 0
        %6116 = vmatprep.subr.bf16.mxu0 0
        %6117 = vmatpush1.bf16.xpose.msra.mxu0 0
        %6118 = vmatprep.subr.bf16.mxu0 0
        %6119 = vmatpush1.bf16.xpose.msra.mxu0 0
        %6120 = vmatprep.subr.bf16.mxu0 0
        %6121 = vmatpush1.bf16.xpose.msra.mxu0 0
        %6122 = vmatprep.subr.bf16.mxu0 0
        %6123 = vmatpush1.bf16.xpose.msra.mxu0 0
        %6124 = vmatprep.subr.bf16.mxu0 0
        %6125 = vmatpush1.bf16.xpose.msra.mxu0 0
        %6126 = vmatprep.subr.bf16.mxu0 0
        %6127 = vmatpush1.bf16.xpose.msra.mxu0 0
        %6128 = vmatprep.subr.bf16.mxu0 0
        %6129 = vmatpush1.bf16.xpose.msra.mxu0 0
        %6130 = vmatprep.mubr.bf16.mxu0 0
        %6131 = vmatmul.mubr.bf16.gmra.mrb[0].mxu0 %v6096
        %v6132 = vpop.f32.mrb[0].mxu0
        %v6133 = vadd.f32 0.0, %v6132
        %v6134 = vpop.f32.mrb[0].mxu0
        %v6135 = vpop.f32.mrb[0].mxu0
        %v6136 = vadd.f32 0.0, %v6135
        %v6137 = vpop.f32.mrb[0].mxu0
        %6138 = vdwg.mxu0
        %v6140 = vsel %vm777, %v5454, 0
        %6142 = vmatprep.subr.bf16.mxu0 0
        %6143 = vmatpush1.bf16.xpose.msra.mxu0 %v5480
        %6144 = vmatprep.subr.bf16.mxu0 0
        %6145 = vmatpush1.bf16.xpose.msra.mxu0 0
        %6146 = vmatprep.subr.bf16.mxu0 0
        %6147 = vmatpush1.bf16.xpose.msra.mxu0 0
        %6148 = vmatprep.subr.bf16.mxu0 0
        %6149 = vmatpush1.bf16.xpose.msra.mxu0 0
        %6150 = vmatprep.subr.bf16.mxu0 0
        %6151 = vmatpush1.bf16.xpose.msra.mxu0 0
        %6152 = vmatprep.subr.bf16.mxu0 0
        %6153 = vmatpush1.bf16.xpose.msra.mxu0 0
        %6154 = vmatprep.subr.bf16.mxu0 0
        %6155 = vmatpush1.bf16.xpose.msra.mxu0 0
        %6156 = vmatprep.subr.bf16.mxu0 0
        %6157 = vmatpush1.bf16.xpose.msra.mxu0 0
        %6158 = vmatprep.subr.bf16.mxu0 0
        %6159 = vmatpush1.bf16.xpose.msra.mxu0 0
        %6160 = vmatprep.subr.bf16.mxu0 0
        %6161 = vmatpush1.bf16.xpose.msra.mxu0 0
        %6162 = vmatprep.subr.bf16.mxu0 0
        %6163 = vmatpush1.bf16.xpose.msra.mxu0 0
        %6164 = vmatprep.subr.bf16.mxu0 0
        %6165 = vmatpush1.bf16.xpose.msra.mxu0 0
        %6166 = vmatprep.subr.bf16.mxu0 0
        %6167 = vmatpush1.bf16.xpose.msra.mxu0 0
        %6168 = vmatprep.subr.bf16.mxu0 0
        %6169 = vmatpush1.bf16.xpose.msra.mxu0 0
        %6170 = vmatprep.subr.bf16.mxu0 0
        %6171 = vmatpush1.bf16.xpose.msra.mxu0 0
        %6172 = vmatprep.subr.bf16.mxu0 0
        %6173 = vmatpush1.bf16.xpose.msra.mxu0 0
        %6174 = vmatprep.mubr.bf16.mxu0 0
        %6175 = vmatmul.mubr.bf16.gmra.mrb[0].mxu0 %v6140
        %v6176 = vpop.f32.mrb[0].mxu0
        %v6177 = vadd.f32 0.0, %v6176
        %v6178 = vpop.f32.mrb[0].mxu0
        %v6179 = vpop.f32.mrb[0].mxu0
        %v6180 = vadd.f32 0.0, %v6179
        %v6181 = vpop.f32.mrb[0].mxu0
        %6182 = vdwg.mxu0
        %v6184 = vsel %vm777, %v5455, 0
        %6186 = vmatprep.subr.bf16.mxu0 0
        %6187 = vmatpush1.bf16.xpose.msra.mxu0 %v5480
        %6188 = vmatprep.subr.bf16.mxu0 0
        %6189 = vmatpush1.bf16.xpose.msra.mxu0 0
        %6190 = vmatprep.subr.bf16.mxu0 0
        %6191 = vmatpush1.bf16.xpose.msra.mxu0 0
        %6192 = vmatprep.subr.bf16.mxu0 0
        %6193 = vmatpush1.bf16.xpose.msra.mxu0 0
        %6194 = vmatprep.subr.bf16.mxu0 0
        %6195 = vmatpush1.bf16.xpose.msra.mxu0 0
        %6196 = vmatprep.subr.bf16.mxu0 0
        %6197 = vmatpush1.bf16.xpose.msra.mxu0 0
        %6198 = vmatprep.subr.bf16.mxu0 0
        %6199 = vmatpush1.bf16.xpose.msra.mxu0 0
        %6200 = vmatprep.subr.bf16.mxu0 0
        %6201 = vmatpush1.bf16.xpose.msra.mxu0 0
        %6202 = vmatprep.subr.bf16.mxu0 0
        %6203 = vmatpush1.bf16.xpose.msra.mxu0 0
        %6204 = vmatprep.subr.bf16.mxu0 0
        %6205 = vmatpush1.bf16.xpose.msra.mxu0 0
        %6206 = vmatprep.subr.bf16.mxu0 0
        %6207 = vmatpush1.bf16.xpose.msra.mxu0 0
        %6208 = vmatprep.subr.bf16.mxu0 0
        %6209 = vmatpush1.bf16.xpose.msra.mxu0 0
        %6210 = vmatprep.subr.bf16.mxu0 0
        %6211 = vmatpush1.bf16.xpose.msra.mxu0 0
        %6212 = vmatprep.subr.bf16.mxu0 0
        %6213 = vmatpush1.bf16.xpose.msra.mxu0 0
        %6214 = vmatprep.subr.bf16.mxu0 0
        %6215 = vmatpush1.bf16.xpose.msra.mxu0 0
        %6216 = vmatprep.subr.bf16.mxu0 0
        %6217 = vmatpush1.bf16.xpose.msra.mxu0 0
        %6218 = vmatprep.mubr.bf16.mxu0 0
        %6219 = vmatmul.mubr.bf16.gmra.mrb[0].mxu0 %v6184
        %v6220 = vpop.f32.mrb[0].mxu0
        %v6221 = vadd.f32 0.0, %v6220
        %v6222 = vpop.f32.mrb[0].mxu0
        %v6223 = vpop.f32.mrb[0].mxu0
        %v6224 = vadd.f32 0.0, %v6223
        %v6225 = vpop.f32.mrb[0].mxu0
        %6226 = vdwg.mxu0
        %v6228 = vsel %vm777, %v5456, 0
        %6230 = vmatprep.subr.bf16.mxu0 0
        %6231 = vmatpush1.bf16.xpose.msra.mxu0 %v5480
        %6232 = vmatprep.subr.bf16.mxu0 0
        %6233 = vmatpush1.bf16.xpose.msra.mxu0 0
        %6234 = vmatprep.subr.bf16.mxu0 0
        %6235 = vmatpush1.bf16.xpose.msra.mxu0 0
        %6236 = vmatprep.subr.bf16.mxu0 0
        %6237 = vmatpush1.bf16.xpose.msra.mxu0 0
        %6238 = vmatprep.subr.bf16.mxu0 0
        %6239 = vmatpush1.bf16.xpose.msra.mxu0 0
        %6240 = vmatprep.subr.bf16.mxu0 0
        %6241 = vmatpush1.bf16.xpose.msra.mxu0 0
        %6242 = vmatprep.subr.bf16.mxu0 0
        %6243 = vmatpush1.bf16.xpose.msra.mxu0 0
        %6244 = vmatprep.subr.bf16.mxu0 0
        %6245 = vmatpush1.bf16.xpose.msra.mxu0 0
        %6246 = vmatprep.subr.bf16.mxu0 0
        %6247 = vmatpush1.bf16.xpose.msra.mxu0 0
        %6248 = vmatprep.subr.bf16.mxu0 0
        %6249 = vmatpush1.bf16.xpose.msra.mxu0 0
        %6250 = vmatprep.subr.bf16.mxu0 0
        %6251 = vmatpush1.bf16.xpose.msra.mxu0 0
        %6252 = vmatprep.subr.bf16.mxu0 0
        %6253 = vmatpush1.bf16.xpose.msra.mxu0 0
        %6254 = vmatprep.subr.bf16.mxu0 0
        %6255 = vmatpush1.bf16.xpose.msra.mxu0 0
        %6256 = vmatprep.subr.bf16.mxu0 0
        %6257 = vmatpush1.bf16.xpose.msra.mxu0 0
        %6258 = vmatprep.subr.bf16.mxu0 0
        %6259 = vmatpush1.bf16.xpose.msra.mxu0 0
        %6260 = vmatprep.subr.bf16.mxu0 0
        %6261 = vmatpush1.bf16.xpose.msra.mxu0 0
        %6262 = vmatprep.mubr.bf16.mxu0 0
        %6263 = vmatmul.mubr.bf16.gmra.mrb[0].mxu0 %v6228
        %v6264 = vpop.f32.mrb[0].mxu0
        %v6265 = vadd.f32 0.0, %v6264
        %v6266 = vpop.f32.mrb[0].mxu0
        %v6267 = vpop.f32.mrb[0].mxu0
        %v6268 = vadd.f32 0.0, %v6267
        %v6269 = vpop.f32.mrb[0].mxu0
        %6270 = vdwg.mxu0
        %v6272 = vsel %vm777, %v5457, 0
        %6274 = vmatprep.subr.bf16.mxu0 0
        %6275 = vmatpush1.bf16.xpose.msra.mxu0 %v5480
        %6276 = vmatprep.subr.bf16.mxu0 0
        %6277 = vmatpush1.bf16.xpose.msra.mxu0 0
        %6278 = vmatprep.subr.bf16.mxu0 0
        %6279 = vmatpush1.bf16.xpose.msra.mxu0 0
        %6280 = vmatprep.subr.bf16.mxu0 0
        %6281 = vmatpush1.bf16.xpose.msra.mxu0 0
        %6282 = vmatprep.subr.bf16.mxu0 0
        %6283 = vmatpush1.bf16.xpose.msra.mxu0 0
        %6284 = vmatprep.subr.bf16.mxu0 0
        %6285 = vmatpush1.bf16.xpose.msra.mxu0 0
        %6286 = vmatprep.subr.bf16.mxu0 0
        %6287 = vmatpush1.bf16.xpose.msra.mxu0 0
        %6288 = vmatprep.subr.bf16.mxu0 0
        %6289 = vmatpush1.bf16.xpose.msra.mxu0 0
        %6290 = vmatprep.subr.bf16.mxu0 0
        %6291 = vmatpush1.bf16.xpose.msra.mxu0 0
        %6292 = vmatprep.subr.bf16.mxu0 0
        %6293 = vmatpush1.bf16.xpose.msra.mxu0 0
        %6294 = vmatprep.subr.bf16.mxu0 0
        %6295 = vmatpush1.bf16.xpose.msra.mxu0 0
        %6296 = vmatprep.subr.bf16.mxu0 0
        %6297 = vmatpush1.bf16.xpose.msra.mxu0 0
        %6298 = vmatprep.subr.bf16.mxu0 0
        %6299 = vmatpush1.bf16.xpose.msra.mxu0 0
        %6300 = vmatprep.subr.bf16.mxu0 0
        %6301 = vmatpush1.bf16.xpose.msra.mxu0 0
        %6302 = vmatprep.subr.bf16.mxu0 0
        %6303 = vmatpush1.bf16.xpose.msra.mxu0 0
        %6304 = vmatprep.subr.bf16.mxu0 0
        %6305 = vmatpush1.bf16.xpose.msra.mxu0 0
        %6306 = vmatprep.mubr.bf16.mxu0 0
        %6307 = vmatmul.mubr.bf16.gmra.mrb[0].mxu0 %v6272
        %v6308 = vpop.f32.mrb[0].mxu0
        %v6309 = vadd.f32 0.0, %v6308
        %v6310 = vpop.f32.mrb[0].mxu0
        %v6311 = vpop.f32.mrb[0].mxu0
        %v6312 = vadd.f32 0.0, %v6311
        %v6313 = vpop.f32.mrb[0].mxu0
        %6314 = vdwg.mxu0
        %v6316 = vsel %vm777, %v5458, 0
        %6318 = vmatprep.subr.bf16.mxu0 0
        %6319 = vmatpush1.bf16.xpose.msra.mxu0 %v5480
        %6320 = vmatprep.subr.bf16.mxu0 0
        %6321 = vmatpush1.bf16.xpose.msra.mxu0 0
        %6322 = vmatprep.subr.bf16.mxu0 0
        %6323 = vmatpush1.bf16.xpose.msra.mxu0 0
        %6324 = vmatprep.subr.bf16.mxu0 0
        %6325 = vmatpush1.bf16.xpose.msra.mxu0 0
        %6326 = vmatprep.subr.bf16.mxu0 0
        %6327 = vmatpush1.bf16.xpose.msra.mxu0 0
        %6328 = vmatprep.subr.bf16.mxu0 0
        %6329 = vmatpush1.bf16.xpose.msra.mxu0 0
        %6330 = vmatprep.subr.bf16.mxu0 0
        %6331 = vmatpush1.bf16.xpose.msra.mxu0 0
        %6332 = vmatprep.subr.bf16.mxu0 0
        %6333 = vmatpush1.bf16.xpose.msra.mxu0 0
        %6334 = vmatprep.subr.bf16.mxu0 0
        %6335 = vmatpush1.bf16.xpose.msra.mxu0 0
        %6336 = vmatprep.subr.bf16.mxu0 0
        %6337 = vmatpush1.bf16.xpose.msra.mxu0 0
        %6338 = vmatprep.subr.bf16.mxu0 0
        %6339 = vmatpush1.bf16.xpose.msra.mxu0 0
        %6340 = vmatprep.subr.bf16.mxu0 0
        %6341 = vmatpush1.bf16.xpose.msra.mxu0 0
        %6342 = vmatprep.subr.bf16.mxu0 0
        %6343 = vmatpush1.bf16.xpose.msra.mxu0 0
        %6344 = vmatprep.subr.bf16.mxu0 0
        %6345 = vmatpush1.bf16.xpose.msra.mxu0 0
        %6346 = vmatprep.subr.bf16.mxu0 0
        %6347 = vmatpush1.bf16.xpose.msra.mxu0 0
        %6348 = vmatprep.subr.bf16.mxu0 0
        %6349 = vmatpush1.bf16.xpose.msra.mxu0 0
        %6350 = vmatprep.mubr.bf16.mxu0 0
        %6351 = vmatmul.mubr.bf16.gmra.mrb[0].mxu0 %v6316
        %v6352 = vpop.f32.mrb[0].mxu0
        %v6353 = vadd.f32 0.0, %v6352
        %v6354 = vpop.f32.mrb[0].mxu0
        %v6355 = vpop.f32.mrb[0].mxu0
        %v6356 = vadd.f32 0.0, %v6355
        %v6357 = vpop.f32.mrb[0].mxu0
        %6358 = vdwg.mxu0
        %v6360 = vsel %vm777, %v5459, 0
        %6362 = vmatprep.subr.bf16.mxu0 0
        %6363 = vmatpush1.bf16.xpose.msra.mxu0 %v5480
        %6364 = vmatprep.subr.bf16.mxu0 0
        %6365 = vmatpush1.bf16.xpose.msra.mxu0 0
        %6366 = vmatprep.subr.bf16.mxu0 0
        %6367 = vmatpush1.bf16.xpose.msra.mxu0 0
        %6368 = vmatprep.subr.bf16.mxu0 0
        %6369 = vmatpush1.bf16.xpose.msra.mxu0 0
        %6370 = vmatprep.subr.bf16.mxu0 0
        %6371 = vmatpush1.bf16.xpose.msra.mxu0 0
        %6372 = vmatprep.subr.bf16.mxu0 0
        %6373 = vmatpush1.bf16.xpose.msra.mxu0 0
        %6374 = vmatprep.subr.bf16.mxu0 0
        %6375 = vmatpush1.bf16.xpose.msra.mxu0 0
        %6376 = vmatprep.subr.bf16.mxu0 0
        %6377 = vmatpush1.bf16.xpose.msra.mxu0 0
        %6378 = vmatprep.subr.bf16.mxu0 0
        %6379 = vmatpush1.bf16.xpose.msra.mxu0 0
        %6380 = vmatprep.subr.bf16.mxu0 0
        %6381 = vmatpush1.bf16.xpose.msra.mxu0 0
        %6382 = vmatprep.subr.bf16.mxu0 0
        %6383 = vmatpush1.bf16.xpose.msra.mxu0 0
        %6384 = vmatprep.subr.bf16.mxu0 0
        %6385 = vmatpush1.bf16.xpose.msra.mxu0 0
        %6386 = vmatprep.subr.bf16.mxu0 0
        %6387 = vmatpush1.bf16.xpose.msra.mxu0 0
        %6388 = vmatprep.subr.bf16.mxu0 0
        %6389 = vmatpush1.bf16.xpose.msra.mxu0 0
        %6390 = vmatprep.subr.bf16.mxu0 0
        %6391 = vmatpush1.bf16.xpose.msra.mxu0 0
        %6392 = vmatprep.subr.bf16.mxu0 0
        %6393 = vmatpush1.bf16.xpose.msra.mxu0 0
        %6394 = vmatprep.mubr.bf16.mxu0 0
        %6395 = vmatmul.mubr.bf16.gmra.mrb[0].mxu0 %v6360
        %v6396 = vpop.f32.mrb[0].mxu0
        %v6397 = vadd.f32 0.0, %v6396
        %v6398 = vpop.f32.mrb[0].mxu0
        %v6399 = vpop.f32.mrb[0].mxu0
        %v6400 = vadd.f32 0.0, %v6399
        %v6401 = vpop.f32.mrb[0].mxu0
        %6402 = vdwg.mxu0
        %v6404 = vsel %vm777, %v5460, 0
        %6406 = vmatprep.subr.bf16.mxu0 0
        %6407 = vmatpush1.bf16.xpose.msra.mxu0 %v5480
        %6408 = vmatprep.subr.bf16.mxu0 0
        %6409 = vmatpush1.bf16.xpose.msra.mxu0 0
        %6410 = vmatprep.subr.bf16.mxu0 0
        %6411 = vmatpush1.bf16.xpose.msra.mxu0 0
        %6412 = vmatprep.subr.bf16.mxu0 0
        %6413 = vmatpush1.bf16.xpose.msra.mxu0 0
        %6414 = vmatprep.subr.bf16.mxu0 0
        %6415 = vmatpush1.bf16.xpose.msra.mxu0 0
        %6416 = vmatprep.subr.bf16.mxu0 0
        %6417 = vmatpush1.bf16.xpose.msra.mxu0 0
        %6418 = vmatprep.subr.bf16.mxu0 0
        %6419 = vmatpush1.bf16.xpose.msra.mxu0 0
        %6420 = vmatprep.subr.bf16.mxu0 0
        %6421 = vmatpush1.bf16.xpose.msra.mxu0 0
        %6422 = vmatprep.subr.bf16.mxu0 0
        %6423 = vmatpush1.bf16.xpose.msra.mxu0 0
        %6424 = vmatprep.subr.bf16.mxu0 0
        %6425 = vmatpush1.bf16.xpose.msra.mxu0 0
        %6426 = vmatprep.subr.bf16.mxu0 0
        %6427 = vmatpush1.bf16.xpose.msra.mxu0 0
        %6428 = vmatprep.subr.bf16.mxu0 0
        %6429 = vmatpush1.bf16.xpose.msra.mxu0 0
        %6430 = vmatprep.subr.bf16.mxu0 0
        %6431 = vmatpush1.bf16.xpose.msra.mxu0 0
        %6432 = vmatprep.subr.bf16.mxu0 0
        %6433 = vmatpush1.bf16.xpose.msra.mxu0 0
        %6434 = vmatprep.subr.bf16.mxu0 0
        %6435 = vmatpush1.bf16.xpose.msra.mxu0 0
        %6436 = vmatprep.subr.bf16.mxu0 0
        %6437 = vmatpush1.bf16.xpose.msra.mxu0 0
        %6438 = vmatprep.mubr.bf16.mxu0 0
        %6439 = vmatmul.mubr.bf16.gmra.mrb[0].mxu0 %v6404
        %v6440 = vpop.f32.mrb[0].mxu0
        %v6441 = vadd.f32 0.0, %v6440
        %v6442 = vpop.f32.mrb[0].mxu0
        %v6443 = vpop.f32.mrb[0].mxu0
        %v6444 = vadd.f32 0.0, %v6443
        %v6445 = vpop.f32.mrb[0].mxu0
        %6446 = vdwg.mxu0
        %v6448 = vsel %vm777, %v5461, 0
        %6450 = vmatprep.subr.bf16.mxu0 0
        %6451 = vmatpush1.bf16.xpose.msra.mxu0 %v5480
        %6452 = vmatprep.subr.bf16.mxu0 0
        %6453 = vmatpush1.bf16.xpose.msra.mxu0 0
        %6454 = vmatprep.subr.bf16.mxu0 0
        %6455 = vmatpush1.bf16.xpose.msra.mxu0 0
        %6456 = vmatprep.subr.bf16.mxu0 0
        %6457 = vmatpush1.bf16.xpose.msra.mxu0 0
        %6458 = vmatprep.subr.bf16.mxu0 0
        %6459 = vmatpush1.bf16.xpose.msra.mxu0 0
        %6460 = vmatprep.subr.bf16.mxu0 0
        %6461 = vmatpush1.bf16.xpose.msra.mxu0 0
        %6462 = vmatprep.subr.bf16.mxu0 0
        %6463 = vmatpush1.bf16.xpose.msra.mxu0 0
        %6464 = vmatprep.subr.bf16.mxu0 0
        %6465 = vmatpush1.bf16.xpose.msra.mxu0 0
        %6466 = vmatprep.subr.bf16.mxu0 0
        %6467 = vmatpush1.bf16.xpose.msra.mxu0 0
        %6468 = vmatprep.subr.bf16.mxu0 0
        %6469 = vmatpush1.bf16.xpose.msra.mxu0 0
        %6470 = vmatprep.subr.bf16.mxu0 0
        %6471 = vmatpush1.bf16.xpose.msra.mxu0 0
        %6472 = vmatprep.subr.bf16.mxu0 0
        %6473 = vmatpush1.bf16.xpose.msra.mxu0 0
        %6474 = vmatprep.subr.bf16.mxu0 0
        %6475 = vmatpush1.bf16.xpose.msra.mxu0 0
        %6476 = vmatprep.subr.bf16.mxu0 0
        %6477 = vmatpush1.bf16.xpose.msra.mxu0 0
        %6478 = vmatprep.subr.bf16.mxu0 0
        %6479 = vmatpush1.bf16.xpose.msra.mxu0 0
        %6480 = vmatprep.subr.bf16.mxu0 0
        %6481 = vmatpush1.bf16.xpose.msra.mxu0 0
        %6482 = vmatprep.mubr.bf16.mxu0 0
        %6483 = vmatmul.mubr.bf16.gmra.mrb[0].mxu0 %v6448
        %v6484 = vpop.f32.mrb[0].mxu0
        %v6485 = vadd.f32 0.0, %v6484
        %v6486 = vpop.f32.mrb[0].mxu0
        %v6487 = vpop.f32.mrb[0].mxu0
        %v6488 = vadd.f32 0.0, %v6487
        %v6489 = vpop.f32.mrb[0].mxu0
        %6490 = vdwg.mxu0
        %v6492 = vsel %vm777, %v5462, 0
        %6494 = vmatprep.subr.bf16.mxu0 0
        %6495 = vmatpush1.bf16.xpose.msra.mxu0 %v5480
        %6496 = vmatprep.subr.bf16.mxu0 0
        %6497 = vmatpush1.bf16.xpose.msra.mxu0 0
        %6498 = vmatprep.subr.bf16.mxu0 0
        %6499 = vmatpush1.bf16.xpose.msra.mxu0 0
        %6500 = vmatprep.subr.bf16.mxu0 0
        %6501 = vmatpush1.bf16.xpose.msra.mxu0 0
        %6502 = vmatprep.subr.bf16.mxu0 0
        %6503 = vmatpush1.bf16.xpose.msra.mxu0 0
        %6504 = vmatprep.subr.bf16.mxu0 0
        %6505 = vmatpush1.bf16.xpose.msra.mxu0 0
        %6506 = vmatprep.subr.bf16.mxu0 0
        %6507 = vmatpush1.bf16.xpose.msra.mxu0 0
        %6508 = vmatprep.subr.bf16.mxu0 0
        %6509 = vmatpush1.bf16.xpose.msra.mxu0 0
        %6510 = vmatprep.subr.bf16.mxu0 0
        %6511 = vmatpush1.bf16.xpose.msra.mxu0 0
        %6512 = vmatprep.subr.bf16.mxu0 0
        %6513 = vmatpush1.bf16.xpose.msra.mxu0 0
        %6514 = vmatprep.subr.bf16.mxu0 0
        %6515 = vmatpush1.bf16.xpose.msra.mxu0 0
        %6516 = vmatprep.subr.bf16.mxu0 0
        %6517 = vmatpush1.bf16.xpose.msra.mxu0 0
        %6518 = vmatprep.subr.bf16.mxu0 0
        %6519 = vmatpush1.bf16.xpose.msra.mxu0 0
        %6520 = vmatprep.subr.bf16.mxu0 0
        %6521 = vmatpush1.bf16.xpose.msra.mxu0 0
        %6522 = vmatprep.subr.bf16.mxu0 0
        %6523 = vmatpush1.bf16.xpose.msra.mxu0 0
        %6524 = vmatprep.subr.bf16.mxu0 0
        %6525 = vmatpush1.bf16.xpose.msra.mxu0 0
        %6526 = vmatprep.mubr.bf16.mxu0 0
        %6527 = vmatmul.mubr.bf16.gmra.mrb[0].mxu0 %v6492
        %v6528 = vpop.f32.mrb[0].mxu0
        %v6529 = vadd.f32 0.0, %v6528
        %v6530 = vpop.f32.mrb[0].mxu0
        %v6531 = vpop.f32.mrb[0].mxu0
        %v6532 = vadd.f32 0.0, %v6531
        %v6533 = vpop.f32.mrb[0].mxu0
        %6534 = vdwg.mxu0
        %v6536 = vsel %vm777, %v5463, 0
        %6538 = vmatprep.subr.bf16.mxu0 0
        %6539 = vmatpush1.bf16.xpose.msra.mxu0 %v5480
        %6540 = vmatprep.subr.bf16.mxu0 0
        %6541 = vmatpush1.bf16.xpose.msra.mxu0 0
        %6542 = vmatprep.subr.bf16.mxu0 0
        %6543 = vmatpush1.bf16.xpose.msra.mxu0 0
        %6544 = vmatprep.subr.bf16.mxu0 0
        %6545 = vmatpush1.bf16.xpose.msra.mxu0 0
        %6546 = vmatprep.subr.bf16.mxu0 0
        %6547 = vmatpush1.bf16.xpose.msra.mxu0 0
        %6548 = vmatprep.subr.bf16.mxu0 0
        %6549 = vmatpush1.bf16.xpose.msra.mxu0 0
        %6550 = vmatprep.subr.bf16.mxu0 0
        %6551 = vmatpush1.bf16.xpose.msra.mxu0 0
        %6552 = vmatprep.subr.bf16.mxu0 0
        %6553 = vmatpush1.bf16.xpose.msra.mxu0 0
        %6554 = vmatprep.subr.bf16.mxu0 0
        %6555 = vmatpush1.bf16.xpose.msra.mxu0 0
        %6556 = vmatprep.subr.bf16.mxu0 0
        %6557 = vmatpush1.bf16.xpose.msra.mxu0 0
        %6558 = vmatprep.subr.bf16.mxu0 0
        %6559 = vmatpush1.bf16.xpose.msra.mxu0 0
        %6560 = vmatprep.subr.bf16.mxu0 0
        %6561 = vmatpush1.bf16.xpose.msra.mxu0 0
        %6562 = vmatprep.subr.bf16.mxu0 0
        %6563 = vmatpush1.bf16.xpose.msra.mxu0 0
        %6564 = vmatprep.subr.bf16.mxu0 0
        %6565 = vmatpush1.bf16.xpose.msra.mxu0 0
        %6566 = vmatprep.subr.bf16.mxu0 0
        %6567 = vmatpush1.bf16.xpose.msra.mxu0 0
        %6568 = vmatprep.subr.bf16.mxu0 0
        %6569 = vmatpush1.bf16.xpose.msra.mxu0 0
        %6570 = vmatprep.mubr.bf16.mxu0 0
        %6571 = vmatmul.mubr.bf16.gmra.mrb[0].mxu0 %v6536
        %v6572 = vpop.f32.mrb[0].mxu0
        %v6573 = vadd.f32 0.0, %v6572
        %v6574 = vpop.f32.mrb[0].mxu0
        %v6575 = vpop.f32.mrb[0].mxu0
        %v6576 = vadd.f32 0.0, %v6575
        %v6577 = vpop.f32.mrb[0].mxu0
        %6578 = vdwg.mxu0
        %v6580 = vsel %vm777, %v5464, 0
        %6582 = vmatprep.subr.bf16.mxu0 0
        %6583 = vmatpush1.bf16.xpose.msra.mxu0 %v5480
        %6584 = vmatprep.subr.bf16.mxu0 0
        %6585 = vmatpush1.bf16.xpose.msra.mxu0 0
        %6586 = vmatprep.subr.bf16.mxu0 0
        %6587 = vmatpush1.bf16.xpose.msra.mxu0 0
        %6588 = vmatprep.subr.bf16.mxu0 0
        %6589 = vmatpush1.bf16.xpose.msra.mxu0 0
        %6590 = vmatprep.subr.bf16.mxu0 0
        %6591 = vmatpush1.bf16.xpose.msra.mxu0 0
        %6592 = vmatprep.subr.bf16.mxu0 0
        %6593 = vmatpush1.bf16.xpose.msra.mxu0 0
        %6594 = vmatprep.subr.bf16.mxu0 0
        %6595 = vmatpush1.bf16.xpose.msra.mxu0 0
        %6596 = vmatprep.subr.bf16.mxu0 0
        %6597 = vmatpush1.bf16.xpose.msra.mxu0 0
        %6598 = vmatprep.subr.bf16.mxu0 0
        %6599 = vmatpush1.bf16.xpose.msra.mxu0 0
        %6600 = vmatprep.subr.bf16.mxu0 0
        %6601 = vmatpush1.bf16.xpose.msra.mxu0 0
        %6602 = vmatprep.subr.bf16.mxu0 0
        %6603 = vmatpush1.bf16.xpose.msra.mxu0 0
        %6604 = vmatprep.subr.bf16.mxu0 0
        %6605 = vmatpush1.bf16.xpose.msra.mxu0 0
        %6606 = vmatprep.subr.bf16.mxu0 0
        %6607 = vmatpush1.bf16.xpose.msra.mxu0 0
        %6608 = vmatprep.subr.bf16.mxu0 0
        %6609 = vmatpush1.bf16.xpose.msra.mxu0 0
        %6610 = vmatprep.subr.bf16.mxu0 0
        %6611 = vmatpush1.bf16.xpose.msra.mxu0 0
        %6612 = vmatprep.subr.bf16.mxu0 0
        %6613 = vmatpush1.bf16.xpose.msra.mxu0 0
        %6614 = vmatprep.mubr.bf16.mxu0 0
        %6615 = vmatmul.mubr.bf16.gmra.mrb[0].mxu0 %v6580
        %v6616 = vpop.f32.mrb[0].mxu0
        %v6617 = vadd.f32 0.0, %v6616
        %v6618 = vpop.f32.mrb[0].mxu0
        %v6619 = vpop.f32.mrb[0].mxu0
        %v6620 = vadd.f32 0.0, %v6619
        %v6621 = vpop.f32.mrb[0].mxu0
        %6622 = vdwg.mxu0
        %v6624 = vsel %vm777, %v5465, 0
        %6626 = vmatprep.subr.bf16.mxu0 0
        %6627 = vmatpush1.bf16.xpose.msra.mxu0 %v5480
        %6628 = vmatprep.subr.bf16.mxu0 0
        %6629 = vmatpush1.bf16.xpose.msra.mxu0 0
        %6630 = vmatprep.subr.bf16.mxu0 0
        %6631 = vmatpush1.bf16.xpose.msra.mxu0 0
        %6632 = vmatprep.subr.bf16.mxu0 0
        %6633 = vmatpush1.bf16.xpose.msra.mxu0 0
        %6634 = vmatprep.subr.bf16.mxu0 0
        %6635 = vmatpush1.bf16.xpose.msra.mxu0 0
        %6636 = vmatprep.subr.bf16.mxu0 0
        %6637 = vmatpush1.bf16.xpose.msra.mxu0 0
        %6638 = vmatprep.subr.bf16.mxu0 0
        %6639 = vmatpush1.bf16.xpose.msra.mxu0 0
        %6640 = vmatprep.subr.bf16.mxu0 0
        %6641 = vmatpush1.bf16.xpose.msra.mxu0 0
        %6642 = vmatprep.subr.bf16.mxu0 0
        %6643 = vmatpush1.bf16.xpose.msra.mxu0 0
        %6644 = vmatprep.subr.bf16.mxu0 0
        %6645 = vmatpush1.bf16.xpose.msra.mxu0 0
        %6646 = vmatprep.subr.bf16.mxu0 0
        %6647 = vmatpush1.bf16.xpose.msra.mxu0 0
        %6648 = vmatprep.subr.bf16.mxu0 0
        %6649 = vmatpush1.bf16.xpose.msra.mxu0 0
        %6650 = vmatprep.subr.bf16.mxu0 0
        %6651 = vmatpush1.bf16.xpose.msra.mxu0 0
        %6652 = vmatprep.subr.bf16.mxu0 0
        %6653 = vmatpush1.bf16.xpose.msra.mxu0 0
        %6654 = vmatprep.subr.bf16.mxu0 0
        %6655 = vmatpush1.bf16.xpose.msra.mxu0 0
        %6656 = vmatprep.subr.bf16.mxu0 0
        %6657 = vmatpush1.bf16.xpose.msra.mxu0 0
        %6658 = vmatprep.mubr.bf16.mxu0 0
        %6659 = vmatmul.mubr.bf16.gmra.mrb[0].mxu0 %v6624
        %v6660 = vpop.f32.mrb[0].mxu0
        %v6661 = vadd.f32 0.0, %v6660
        %v6662 = vpop.f32.mrb[0].mxu0
        %v6663 = vpop.f32.mrb[0].mxu0
        %v6664 = vadd.f32 0.0, %v6663
        %v6665 = vpop.f32.mrb[0].mxu0
        %6666 = vdwg.mxu0
        %v6668 = vsel %vm777, %v5466, 0
        %6670 = vmatprep.subr.bf16.mxu0 0
        %6671 = vmatpush1.bf16.xpose.msra.mxu0 %v5480
        %6672 = vmatprep.subr.bf16.mxu0 0
        %6673 = vmatpush1.bf16.xpose.msra.mxu0 0
        %6674 = vmatprep.subr.bf16.mxu0 0
        %6675 = vmatpush1.bf16.xpose.msra.mxu0 0
        %6676 = vmatprep.subr.bf16.mxu0 0
        %6677 = vmatpush1.bf16.xpose.msra.mxu0 0
        %6678 = vmatprep.subr.bf16.mxu0 0
        %6679 = vmatpush1.bf16.xpose.msra.mxu0 0
        %6680 = vmatprep.subr.bf16.mxu0 0
        %6681 = vmatpush1.bf16.xpose.msra.mxu0 0
        %6682 = vmatprep.subr.bf16.mxu0 0
        %6683 = vmatpush1.bf16.xpose.msra.mxu0 0
        %6684 = vmatprep.subr.bf16.mxu0 0
        %6685 = vmatpush1.bf16.xpose.msra.mxu0 0
        %6686 = vmatprep.subr.bf16.mxu0 0
        %6687 = vmatpush1.bf16.xpose.msra.mxu0 0
        %6688 = vmatprep.subr.bf16.mxu0 0
        %6689 = vmatpush1.bf16.xpose.msra.mxu0 0
        %6690 = vmatprep.subr.bf16.mxu0 0
        %6691 = vmatpush1.bf16.xpose.msra.mxu0 0
        %6692 = vmatprep.subr.bf16.mxu0 0
        %6693 = vmatpush1.bf16.xpose.msra.mxu0 0
        %6694 = vmatprep.subr.bf16.mxu0 0
        %6695 = vmatpush1.bf16.xpose.msra.mxu0 0
        %6696 = vmatprep.subr.bf16.mxu0 0
        %6697 = vmatpush1.bf16.xpose.msra.mxu0 0
        %6698 = vmatprep.subr.bf16.mxu0 0
        %6699 = vmatpush1.bf16.xpose.msra.mxu0 0
        %6700 = vmatprep.subr.bf16.mxu0 0
        %6701 = vmatpush1.bf16.xpose.msra.mxu0 0
        %6702 = vmatprep.mubr.bf16.mxu0 0
        %6703 = vmatmul.mubr.bf16.gmra.mrb[0].mxu0 %v6668
        %v6704 = vpop.f32.mrb[0].mxu0
        %v6705 = vadd.f32 0.0, %v6704
        %v6706 = vpop.f32.mrb[0].mxu0
        %v6707 = vpop.f32.mrb[0].mxu0
        %v6708 = vadd.f32 0.0, %v6707
        %v6709 = vpop.f32.mrb[0].mxu0
        %6710 = vdwg.mxu0
        %v6712 = vsel %vm777, %v5467, 0
        %6714 = vmatprep.subr.bf16.mxu0 0
        %6715 = vmatpush1.bf16.xpose.msra.mxu0 %v5480
        %6716 = vmatprep.subr.bf16.mxu0 0
        %6717 = vmatpush1.bf16.xpose.msra.mxu0 0
        %6718 = vmatprep.subr.bf16.mxu0 0
        %6719 = vmatpush1.bf16.xpose.msra.mxu0 0
        %6720 = vmatprep.subr.bf16.mxu0 0
        %6721 = vmatpush1.bf16.xpose.msra.mxu0 0
        %6722 = vmatprep.subr.bf16.mxu0 0
        %6723 = vmatpush1.bf16.xpose.msra.mxu0 0
        %6724 = vmatprep.subr.bf16.mxu0 0
        %6725 = vmatpush1.bf16.xpose.msra.mxu0 0
        %6726 = vmatprep.subr.bf16.mxu0 0
        %6727 = vmatpush1.bf16.xpose.msra.mxu0 0
        %6728 = vmatprep.subr.bf16.mxu0 0
        %6729 = vmatpush1.bf16.xpose.msra.mxu0 0
        %6730 = vmatprep.subr.bf16.mxu0 0
        %6731 = vmatpush1.bf16.xpose.msra.mxu0 0
        %6732 = vmatprep.subr.bf16.mxu0 0
        %6733 = vmatpush1.bf16.xpose.msra.mxu0 0
        %6734 = vmatprep.subr.bf16.mxu0 0
        %6735 = vmatpush1.bf16.xpose.msra.mxu0 0
        %6736 = vmatprep.subr.bf16.mxu0 0
        %6737 = vmatpush1.bf16.xpose.msra.mxu0 0
        %6738 = vmatprep.subr.bf16.mxu0 0
        %6739 = vmatpush1.bf16.xpose.msra.mxu0 0
        %6740 = vmatprep.subr.bf16.mxu0 0
        %6741 = vmatpush1.bf16.xpose.msra.mxu0 0
        %6742 = vmatprep.subr.bf16.mxu0 0
        %6743 = vmatpush1.bf16.xpose.msra.mxu0 0
        %6744 = vmatprep.subr.bf16.mxu0 0
        %6745 = vmatpush1.bf16.xpose.msra.mxu0 0
        %6746 = vmatprep.mubr.bf16.mxu0 0
        %6747 = vmatmul.mubr.bf16.gmra.mrb[0].mxu0 %v6712
        %v6748 = vpop.f32.mrb[0].mxu0
        %v6749 = vadd.f32 0.0, %v6748
        %v6750 = vpop.f32.mrb[0].mxu0
        %v6751 = vpop.f32.mrb[0].mxu0
        %v6752 = vadd.f32 0.0, %v6751
        %v6753 = vpop.f32.mrb[0].mxu0
        %6754 = vdwg.mxu0
        %v6756 = vsel %vm777, %v5468, 0
        %6758 = vmatprep.subr.bf16.mxu0 0
        %6759 = vmatpush1.bf16.xpose.msra.mxu0 %v5480
        %6760 = vmatprep.subr.bf16.mxu0 0
        %6761 = vmatpush1.bf16.xpose.msra.mxu0 0
        %6762 = vmatprep.subr.bf16.mxu0 0
        %6763 = vmatpush1.bf16.xpose.msra.mxu0 0
        %6764 = vmatprep.subr.bf16.mxu0 0
        %6765 = vmatpush1.bf16.xpose.msra.mxu0 0
        %6766 = vmatprep.subr.bf16.mxu0 0
        %6767 = vmatpush1.bf16.xpose.msra.mxu0 0
        %6768 = vmatprep.subr.bf16.mxu0 0
        %6769 = vmatpush1.bf16.xpose.msra.mxu0 0
        %6770 = vmatprep.subr.bf16.mxu0 0
        %6771 = vmatpush1.bf16.xpose.msra.mxu0 0
        %6772 = vmatprep.subr.bf16.mxu0 0
        %6773 = vmatpush1.bf16.xpose.msra.mxu0 0
        %6774 = vmatprep.subr.bf16.mxu0 0
        %6775 = vmatpush1.bf16.xpose.msra.mxu0 0
        %6776 = vmatprep.subr.bf16.mxu0 0
        %6777 = vmatpush1.bf16.xpose.msra.mxu0 0
        %6778 = vmatprep.subr.bf16.mxu0 0
        %6779 = vmatpush1.bf16.xpose.msra.mxu0 0
        %6780 = vmatprep.subr.bf16.mxu0 0
        %6781 = vmatpush1.bf16.xpose.msra.mxu0 0
        %6782 = vmatprep.subr.bf16.mxu0 0
        %6783 = vmatpush1.bf16.xpose.msra.mxu0 0
        %6784 = vmatprep.subr.bf16.mxu0 0
        %6785 = vmatpush1.bf16.xpose.msra.mxu0 0
        %6786 = vmatprep.subr.bf16.mxu0 0
        %6787 = vmatpush1.bf16.xpose.msra.mxu0 0
        %6788 = vmatprep.subr.bf16.mxu0 0
        %6789 = vmatpush1.bf16.xpose.msra.mxu0 0
        %6790 = vmatprep.mubr.bf16.mxu0 0
        %6791 = vmatmul.mubr.bf16.gmra.mrb[0].mxu0 %v6756
        %v6792 = vpop.f32.mrb[0].mxu0
        %v6793 = vadd.f32 0.0, %v6792
        %v6794 = vpop.f32.mrb[0].mxu0
        %v6795 = vpop.f32.mrb[0].mxu0
        %v6796 = vadd.f32 0.0, %v6795
        %v6797 = vpop.f32.mrb[0].mxu0
        %6798 = vdwg.mxu0
        %v6800 = vsel %vm777, %v5469, 0
        %6802 = vmatprep.subr.bf16.mxu0 0
        %6803 = vmatpush1.bf16.xpose.msra.mxu0 %v5480
        %6804 = vmatprep.subr.bf16.mxu0 0
        %6805 = vmatpush1.bf16.xpose.msra.mxu0 0
        %6806 = vmatprep.subr.bf16.mxu0 0
        %6807 = vmatpush1.bf16.xpose.msra.mxu0 0
        %6808 = vmatprep.subr.bf16.mxu0 0
        %6809 = vmatpush1.bf16.xpose.msra.mxu0 0
        %6810 = vmatprep.subr.bf16.mxu0 0
        %6811 = vmatpush1.bf16.xpose.msra.mxu0 0
        %6812 = vmatprep.subr.bf16.mxu0 0
        %6813 = vmatpush1.bf16.xpose.msra.mxu0 0
        %6814 = vmatprep.subr.bf16.mxu0 0
        %6815 = vmatpush1.bf16.xpose.msra.mxu0 0
        %6816 = vmatprep.subr.bf16.mxu0 0
        %6817 = vmatpush1.bf16.xpose.msra.mxu0 0
        %6818 = vmatprep.subr.bf16.mxu0 0
        %6819 = vmatpush1.bf16.xpose.msra.mxu0 0
        %6820 = vmatprep.subr.bf16.mxu0 0
        %6821 = vmatpush1.bf16.xpose.msra.mxu0 0
        %6822 = vmatprep.subr.bf16.mxu0 0
        %6823 = vmatpush1.bf16.xpose.msra.mxu0 0
        %6824 = vmatprep.subr.bf16.mxu0 0
        %6825 = vmatpush1.bf16.xpose.msra.mxu0 0
        %6826 = vmatprep.subr.bf16.mxu0 0
        %6827 = vmatpush1.bf16.xpose.msra.mxu0 0
        %6828 = vmatprep.subr.bf16.mxu0 0
        %6829 = vmatpush1.bf16.xpose.msra.mxu0 0
        %6830 = vmatprep.subr.bf16.mxu0 0
        %6831 = vmatpush1.bf16.xpose.msra.mxu0 0
        %6832 = vmatprep.subr.bf16.mxu0 0
        %6833 = vmatpush1.bf16.xpose.msra.mxu0 0
        %6834 = vmatprep.mubr.bf16.mxu0 0
        %6835 = vmatmul.mubr.bf16.gmra.mrb[0].mxu0 %v6800
        %v6836 = vpop.f32.mrb[0].mxu0
        %v6837 = vadd.f32 0.0, %v6836
        %v6838 = vpop.f32.mrb[0].mxu0
        %v6839 = vpop.f32.mrb[0].mxu0
        %v6840 = vadd.f32 0.0, %v6839
        %v6841 = vpop.f32.mrb[0].mxu0
        %6842 = vdwg.mxu0
        %v6844 = vsel %vm777, %v5470, 0
        %6846 = vmatprep.subr.bf16.mxu0 0
        %6847 = vmatpush1.bf16.xpose.msra.mxu0 %v5480
        %6848 = vmatprep.subr.bf16.mxu0 0
        %6849 = vmatpush1.bf16.xpose.msra.mxu0 0
        %6850 = vmatprep.subr.bf16.mxu0 0
        %6851 = vmatpush1.bf16.xpose.msra.mxu0 0
        %6852 = vmatprep.subr.bf16.mxu0 0
        %6853 = vmatpush1.bf16.xpose.msra.mxu0 0
        %6854 = vmatprep.subr.bf16.mxu0 0
        %6855 = vmatpush1.bf16.xpose.msra.mxu0 0
        %6856 = vmatprep.subr.bf16.mxu0 0
        %6857 = vmatpush1.bf16.xpose.msra.mxu0 0
        %6858 = vmatprep.subr.bf16.mxu0 0
        %6859 = vmatpush1.bf16.xpose.msra.mxu0 0
        %6860 = vmatprep.subr.bf16.mxu0 0
        %6861 = vmatpush1.bf16.xpose.msra.mxu0 0
        %6862 = vmatprep.subr.bf16.mxu0 0
        %6863 = vmatpush1.bf16.xpose.msra.mxu0 0
        %6864 = vmatprep.subr.bf16.mxu0 0
        %6865 = vmatpush1.bf16.xpose.msra.mxu0 0
        %6866 = vmatprep.subr.bf16.mxu0 0
        %6867 = vmatpush1.bf16.xpose.msra.mxu0 0
        %6868 = vmatprep.subr.bf16.mxu0 0
        %6869 = vmatpush1.bf16.xpose.msra.mxu0 0
        %6870 = vmatprep.subr.bf16.mxu0 0
        %6871 = vmatpush1.bf16.xpose.msra.mxu0 0
        %6872 = vmatprep.subr.bf16.mxu0 0
        %6873 = vmatpush1.bf16.xpose.msra.mxu0 0
        %6874 = vmatprep.subr.bf16.mxu0 0
        %6875 = vmatpush1.bf16.xpose.msra.mxu0 0
        %6876 = vmatprep.subr.bf16.mxu0 0
        %6877 = vmatpush1.bf16.xpose.msra.mxu0 0
        %6878 = vmatprep.mubr.bf16.mxu0 0
        %6879 = vmatmul.mubr.bf16.gmra.mrb[0].mxu0 %v6844
        %v6880 = vpop.f32.mrb[0].mxu0
        %v6881 = vadd.f32 0.0, %v6880
        %v6882 = vpop.f32.mrb[0].mxu0
        %v6883 = vpop.f32.mrb[0].mxu0
        %v6884 = vadd.f32 0.0, %v6883
        %v6885 = vpop.f32.mrb[0].mxu0
        %6886 = vdwg.mxu0
        %v6887 = vadd.f32 %v3923, %v5517
        %v6888 = vadd.f32 %v3924, %v5520
        %v6889 = vadd.f32 %v3925, %v5561
        %v6890 = vadd.f32 %v3926, %v5564
        %v6891 = vadd.f32 %v3927, %v5605
        %v6892 = vadd.f32 %v3928, %v5608
        %v6893 = vadd.f32 %v3929, %v5649
        %v6894 = vadd.f32 %v3930, %v5652
        %v6895 = vadd.f32 %v3931, %v5693
        %v6896 = vadd.f32 %v3932, %v5696
        %v6897 = vadd.f32 %v3933, %v5737
        %v6898 = vadd.f32 %v3934, %v5740
        %v6899 = vadd.f32 %v3935, %v5781
        %v6900 = vadd.f32 %v3936, %v5784
        %v6901 = vadd.f32 %v3937, %v5825
        %v6902 = vadd.f32 %v3938, %v5828
        %v6903 = vadd.f32 %v3939, %v5869
        %v6904 = vadd.f32 %v3940, %v5872
        %v6905 = vadd.f32 %v3941, %v5913
        %v6906 = vadd.f32 %v3942, %v5916
        %v6907 = vadd.f32 %v3943, %v5957
        %v6908 = vadd.f32 %v3944, %v5960
        %v6909 = vadd.f32 %v3945, %v6001
        %v6910 = vadd.f32 %v3946, %v6004
        %v6911 = vadd.f32 %v3947, %v6045
        %v6912 = vadd.f32 %v3948, %v6048
        %v6913 = vadd.f32 %v3949, %v6089
        %v6914 = vadd.f32 %v3950, %v6092
        %v6915 = vadd.f32 %v3951, %v6133
        %v6916 = vadd.f32 %v3952, %v6136
        %v6917 = vadd.f32 %v3953, %v6177
        %v6918 = vadd.f32 %v3954, %v6180
        %v6919 = vadd.f32 %v3955, %v6221
        %v6920 = vadd.f32 %v3956, %v6224
        %v6921 = vadd.f32 %v3957, %v6265
        %v6922 = vadd.f32 %v3958, %v6268
        %v6923 = vadd.f32 %v3959, %v6309
        %v6924 = vadd.f32 %v3960, %v6312
        %v6925 = vadd.f32 %v3961, %v6353
        %v6926 = vadd.f32 %v3962, %v6356
        %v6927 = vadd.f32 %v3963, %v6397
        %v6928 = vadd.f32 %v3964, %v6400
        %v6929 = vadd.f32 %v3965, %v6441
        %v6930 = vadd.f32 %v3966, %v6444
        %v6931 = vadd.f32 %v3967, %v6485
        %v6932 = vadd.f32 %v3968, %v6488
        %v6933 = vadd.f32 %v3969, %v6529
        %v6934 = vadd.f32 %v3970, %v6532
        %v6935 = vadd.f32 %v3971, %v6573
        %v6936 = vadd.f32 %v3972, %v6576
        %v6937 = vadd.f32 %v3973, %v6617
        %v6938 = vadd.f32 %v3974, %v6620
        %v6939 = vadd.f32 %v3975, %v6661
        %v6940 = vadd.f32 %v3976, %v6664
        %v6941 = vadd.f32 %v3977, %v6705
        %v6942 = vadd.f32 %v3978, %v6708
        %v6943 = vadd.f32 %v3979, %v6749
        %v6944 = vadd.f32 %v3980, %v6752
        %v6945 = vadd.f32 %v3981, %v6793
        %v6946 = vadd.f32 %v3982, %v6796
        %v6947 = vadd.f32 %v3983, %v6837
        %v6948 = vadd.f32 %v3984, %v6840
        %v6949 = vadd.f32 %v3985, %v6881
        %v6950 = vadd.f32 %v3986, %v6884
        %v6951 = vld [vmem:[%s11] sm:$0x1]
        %v6952 = vld [vmem:[%s11 + $0x1] sm:$0x1]
        %v6953 = vld [vmem:[%s11 + $0x2] sm:$0x1]
        %v6954 = vld [vmem:[%s11 + $0x3] sm:$0x1]
        %v6955 = vld [vmem:[%s11 + $0x4] sm:$0x1]
        %v6956 = vld [vmem:[%s11 + $0x5] sm:$0x1]
        %v6957 = vld [vmem:[%s11 + $0x6] sm:$0x1]
        %v6958 = vld [vmem:[%s11 + $0x7] sm:$0x1]
        %v6959 = vld [vmem:[%s11 + $0x8] sm:$0x1]
        %v6960 = vld [vmem:[%s11 + $0x9] sm:$0x1]
        %v6961 = vld [vmem:[%s11 + $0xa] sm:$0x1]
        %v6962 = vld [vmem:[%s11 + $0xb] sm:$0x1]
        %v6963 = vld [vmem:[%s11 + $0xc] sm:$0x1]
        %v6964 = vld [vmem:[%s11 + $0xd] sm:$0x1]
        %v6965 = vld [vmem:[%s11 + $0xe] sm:$0x1]
        %v6966 = vld [vmem:[%s11 + $0xf] sm:$0x1]
        %v6967 = vld [vmem:[%s11 + $0x10] sm:$0x1]
        %v6968 = vld [vmem:[%s11 + $0x11] sm:$0x1]
        %v6969 = vld [vmem:[%s11 + $0x12] sm:$0x1]
        %v6970 = vld [vmem:[%s11 + $0x13] sm:$0x1]
        %v6971 = vld [vmem:[%s11 + $0x14] sm:$0x1]
        %v6972 = vld [vmem:[%s11 + $0x15] sm:$0x1]
        %v6973 = vld [vmem:[%s11 + $0x16] sm:$0x1]
        %v6974 = vld [vmem:[%s11 + $0x17] sm:$0x1]
        %v6975 = vld [vmem:[%s11 + $0x18] sm:$0x1]
        %v6976 = vld [vmem:[%s11 + $0x19] sm:$0x1]
        %v6977 = vld [vmem:[%s11 + $0x1a] sm:$0x1]
        %v6978 = vld [vmem:[%s11 + $0x1b] sm:$0x1]
        %v6979 = vld [vmem:[%s11 + $0x1c] sm:$0x1]
        %v6980 = vld [vmem:[%s11 + $0x1d] sm:$0x1]
        %v6981 = vld [vmem:[%s11 + $0x1e] sm:$0x1]
        %v6982 = vld [vmem:[%s11 + $0x1f] sm:$0x1]
        %v7015 = vlaneseq
        %v7016 = vshrl.u32 %v7015, 7
        %v7017 = vsub.s32 0, %v7016
        %v7018 = vrot.slane %v6951, %v7017
        %v7019 = vlaneseq
        %v7020 = vshrl.u32 %v7019, 7
        %v7021 = vsub.s32 0, %v7020
        %v7022 = vrot.slane %v6952, %v7021
        %v7023 = vlaneseq
        %v7024 = vshrl.u32 %v7023, 7
        %v7025 = vsub.s32 0, %v7024
        %v7026 = vrot.slane %v6953, %v7025
        %v7027 = vlaneseq
        %v7028 = vshrl.u32 %v7027, 7
        %v7029 = vsub.s32 0, %v7028
        %v7030 = vrot.slane %v6954, %v7029
        %v7031 = vlaneseq
        %v7032 = vshrl.u32 %v7031, 7
        %v7033 = vsub.s32 0, %v7032
        %v7034 = vrot.slane %v6955, %v7033
        %v7035 = vlaneseq
        %v7036 = vshrl.u32 %v7035, 7
        %v7037 = vsub.s32 0, %v7036
        %v7038 = vrot.slane %v6956, %v7037
        %v7039 = vlaneseq
        %v7040 = vshrl.u32 %v7039, 7
        %v7041 = vsub.s32 0, %v7040
        %v7042 = vrot.slane %v6957, %v7041
        %v7043 = vlaneseq
        %v7044 = vshrl.u32 %v7043, 7
        %v7045 = vsub.s32 0, %v7044
        %v7046 = vrot.slane %v6958, %v7045
        %v7047 = vlaneseq
        %v7048 = vshrl.u32 %v7047, 7
        %v7049 = vsub.s32 0, %v7048
        %v7050 = vrot.slane %v6959, %v7049
        %v7051 = vlaneseq
        %v7052 = vshrl.u32 %v7051, 7
        %v7053 = vsub.s32 0, %v7052
        %v7054 = vrot.slane %v6960, %v7053
        %v7055 = vlaneseq
        %v7056 = vshrl.u32 %v7055, 7
        %v7057 = vsub.s32 0, %v7056
        %v7058 = vrot.slane %v6961, %v7057
        %v7059 = vlaneseq
        %v7060 = vshrl.u32 %v7059, 7
        %v7061 = vsub.s32 0, %v7060
        %v7062 = vrot.slane %v6962, %v7061
        %v7063 = vlaneseq
        %v7064 = vshrl.u32 %v7063, 7
        %v7065 = vsub.s32 0, %v7064
        %v7066 = vrot.slane %v6963, %v7065
        %v7067 = vlaneseq
        %v7068 = vshrl.u32 %v7067, 7
        %v7069 = vsub.s32 0, %v7068
        %v7070 = vrot.slane %v6964, %v7069
        %v7071 = vlaneseq
        %v7072 = vshrl.u32 %v7071, 7
        %v7073 = vsub.s32 0, %v7072
        %v7074 = vrot.slane %v6965, %v7073
        %v7075 = vlaneseq
        %v7076 = vshrl.u32 %v7075, 7
        %v7077 = vsub.s32 0, %v7076
        %v7078 = vrot.slane %v6966, %v7077
        %v7079 = vlaneseq
        %v7080 = vshrl.u32 %v7079, 7
        %v7081 = vsub.s32 0, %v7080
        %v7082 = vrot.slane %v6967, %v7081
        %v7083 = vlaneseq
        %v7084 = vshrl.u32 %v7083, 7
        %v7085 = vsub.s32 0, %v7084
        %v7086 = vrot.slane %v6968, %v7085
        %v7087 = vlaneseq
        %v7088 = vshrl.u32 %v7087, 7
        %v7089 = vsub.s32 0, %v7088
        %v7090 = vrot.slane %v6969, %v7089
        %v7091 = vlaneseq
        %v7092 = vshrl.u32 %v7091, 7
        %v7093 = vsub.s32 0, %v7092
        %v7094 = vrot.slane %v6970, %v7093
        %v7095 = vlaneseq
        %v7096 = vshrl.u32 %v7095, 7
        %v7097 = vsub.s32 0, %v7096
        %v7098 = vrot.slane %v6971, %v7097
        %v7099 = vlaneseq
        %v7100 = vshrl.u32 %v7099, 7
        %v7101 = vsub.s32 0, %v7100
        %v7102 = vrot.slane %v6972, %v7101
        %v7103 = vlaneseq
        %v7104 = vshrl.u32 %v7103, 7
        %v7105 = vsub.s32 0, %v7104
        %v7106 = vrot.slane %v6973, %v7105
        %v7107 = vlaneseq
        %v7108 = vshrl.u32 %v7107, 7
        %v7109 = vsub.s32 0, %v7108
        %v7110 = vrot.slane %v6974, %v7109
        %v7111 = vlaneseq
        %v7112 = vshrl.u32 %v7111, 7
        %v7113 = vsub.s32 0, %v7112
        %v7114 = vrot.slane %v6975, %v7113
        %v7115 = vlaneseq
        %v7116 = vshrl.u32 %v7115, 7
        %v7117 = vsub.s32 0, %v7116
        %v7118 = vrot.slane %v6976, %v7117
        %v7119 = vlaneseq
        %v7120 = vshrl.u32 %v7119, 7
        %v7121 = vsub.s32 0, %v7120
        %v7122 = vrot.slane %v6977, %v7121
        %v7123 = vlaneseq
        %v7124 = vshrl.u32 %v7123, 7
        %v7125 = vsub.s32 0, %v7124
        %v7126 = vrot.slane %v6978, %v7125
        %v7127 = vlaneseq
        %v7128 = vshrl.u32 %v7127, 7
        %v7129 = vsub.s32 0, %v7128
        %v7130 = vrot.slane %v6979, %v7129
        %v7131 = vlaneseq
        %v7132 = vshrl.u32 %v7131, 7
        %v7133 = vsub.s32 0, %v7132
        %v7134 = vrot.slane %v6980, %v7133
        %v7135 = vlaneseq
        %v7136 = vshrl.u32 %v7135, 7
        %v7137 = vsub.s32 0, %v7136
        %v7138 = vrot.slane %v6981, %v7137
        %v7139 = vlaneseq
        %v7140 = vshrl.u32 %v7139, 7
        %v7141 = vsub.s32 0, %v7140
        %v7142 = vrot.slane %v6982, %v7141
        %7143 = vset.pattern.permute.xlu0 0
        %7144 = vperm.xlu0 %7143, %v7018
        %v7145 = vpop.permute.xlu0 %7144
        %7147 = vset.pattern.permute.xlu0 0
        %7148 = vperm.xlu0 %7147, %v7022
        %v7149 = vpop.permute.xlu0 %7148
        %7151 = vset.pattern.permute.xlu0 0
        %7152 = vperm.xlu0 %7151, %v7026
        %v7153 = vpop.permute.xlu0 %7152
        %7155 = vset.pattern.permute.xlu0 0
        %7156 = vperm.xlu0 %7155, %v7030
        %v7157 = vpop.permute.xlu0 %7156
        %7159 = vset.pattern.permute.xlu0 0
        %7160 = vperm.xlu0 %7159, %v7034
        %v7161 = vpop.permute.xlu0 %7160
        %7163 = vset.pattern.permute.xlu0 0
        %7164 = vperm.xlu0 %7163, %v7038
        %v7165 = vpop.permute.xlu0 %7164
        %7167 = vset.pattern.permute.xlu0 0
        %7168 = vperm.xlu0 %7167, %v7042
        %v7169 = vpop.permute.xlu0 %7168
        %7171 = vset.pattern.permute.xlu0 0
        %7172 = vperm.xlu0 %7171, %v7046
        %v7173 = vpop.permute.xlu0 %7172
        %7175 = vset.pattern.permute.xlu0 0
        %7176 = vperm.xlu0 %7175, %v7050
        %v7177 = vpop.permute.xlu0 %7176
        %7179 = vset.pattern.permute.xlu0 0
        %7180 = vperm.xlu0 %7179, %v7054
        %v7181 = vpop.permute.xlu0 %7180
        %7183 = vset.pattern.permute.xlu0 0
        %7184 = vperm.xlu0 %7183, %v7058
        %v7185 = vpop.permute.xlu0 %7184
        %7187 = vset.pattern.permute.xlu0 0
        %7188 = vperm.xlu0 %7187, %v7062
        %v7189 = vpop.permute.xlu0 %7188
        %7191 = vset.pattern.permute.xlu0 0
        %7192 = vperm.xlu0 %7191, %v7066
        %v7193 = vpop.permute.xlu0 %7192
        %7195 = vset.pattern.permute.xlu0 0
        %7196 = vperm.xlu0 %7195, %v7070
        %v7197 = vpop.permute.xlu0 %7196
        %7199 = vset.pattern.permute.xlu0 0
        %7200 = vperm.xlu0 %7199, %v7074
        %v7201 = vpop.permute.xlu0 %7200
        %7203 = vset.pattern.permute.xlu0 0
        %7204 = vperm.xlu0 %7203, %v7078
        %v7205 = vpop.permute.xlu0 %7204
        %7207 = vset.pattern.permute.xlu0 0
        %7208 = vperm.xlu0 %7207, %v7082
        %v7209 = vpop.permute.xlu0 %7208
        %7211 = vset.pattern.permute.xlu0 0
        %7212 = vperm.xlu0 %7211, %v7086
        %v7213 = vpop.permute.xlu0 %7212
        %7215 = vset.pattern.permute.xlu0 0
        %7216 = vperm.xlu0 %7215, %v7090
        %v7217 = vpop.permute.xlu0 %7216
        %7219 = vset.pattern.permute.xlu0 0
        %7220 = vperm.xlu0 %7219, %v7094
        %v7221 = vpop.permute.xlu0 %7220
        %7223 = vset.pattern.permute.xlu0 0
        %7224 = vperm.xlu0 %7223, %v7098
        %v7225 = vpop.permute.xlu0 %7224
        %7227 = vset.pattern.permute.xlu0 0
        %7228 = vperm.xlu0 %7227, %v7102
        %v7229 = vpop.permute.xlu0 %7228
        %7231 = vset.pattern.permute.xlu0 0
        %7232 = vperm.xlu0 %7231, %v7106
        %v7233 = vpop.permute.xlu0 %7232
        %7235 = vset.pattern.permute.xlu0 0
        %7236 = vperm.xlu0 %7235, %v7110
        %v7237 = vpop.permute.xlu0 %7236
        %7239 = vset.pattern.permute.xlu0 0
        %7240 = vperm.xlu0 %7239, %v7114
        %v7241 = vpop.permute.xlu0 %7240
        %7243 = vset.pattern.permute.xlu0 0
        %7244 = vperm.xlu0 %7243, %v7118
        %v7245 = vpop.permute.xlu0 %7244
        %7247 = vset.pattern.permute.xlu0 0
        %7248 = vperm.xlu0 %7247, %v7122
        %v7249 = vpop.permute.xlu0 %7248
        %7251 = vset.pattern.permute.xlu0 0
        %7252 = vperm.xlu0 %7251, %v7126
        %v7253 = vpop.permute.xlu0 %7252
        %7255 = vset.pattern.permute.xlu0 0
        %7256 = vperm.xlu0 %7255, %v7130
        %v7257 = vpop.permute.xlu0 %7256
        %7259 = vset.pattern.permute.xlu0 0
        %7260 = vperm.xlu0 %7259, %v7134
        %v7261 = vpop.permute.xlu0 %7260
        %7263 = vset.pattern.permute.xlu0 0
        %7264 = vperm.xlu0 %7263, %v7138
        %v7265 = vpop.permute.xlu0 %7264
        %7267 = vset.pattern.permute.xlu0 0
        %7268 = vperm.xlu0 %7267, %v7142
        %v7269 = vpop.permute.xlu0 %7268
        %v7271 = vadd.f32 %v6887, %v7145
        %v7272 = vadd.f32 %v6888, %v7145
        %v7273 = vadd.f32 %v6889, %v7149
        %v7274 = vadd.f32 %v6890, %v7149
        %v7275 = vadd.f32 %v6891, %v7153
        %v7276 = vadd.f32 %v6892, %v7153
        %v7277 = vadd.f32 %v6893, %v7157
        %v7278 = vadd.f32 %v6894, %v7157
        %v7279 = vadd.f32 %v6895, %v7161
        %v7280 = vadd.f32 %v6896, %v7161
        %v7281 = vadd.f32 %v6897, %v7165
        %v7282 = vadd.f32 %v6898, %v7165
        %v7283 = vadd.f32 %v6899, %v7169
        %v7284 = vadd.f32 %v6900, %v7169
        %v7285 = vadd.f32 %v6901, %v7173
        %v7286 = vadd.f32 %v6902, %v7173
        %v7287 = vadd.f32 %v6903, %v7177
        %v7288 = vadd.f32 %v6904, %v7177
        %v7289 = vadd.f32 %v6905, %v7181
        %v7290 = vadd.f32 %v6906, %v7181
        %v7291 = vadd.f32 %v6907, %v7185
        %v7292 = vadd.f32 %v6908, %v7185
        %v7293 = vadd.f32 %v6909, %v7189
        %v7294 = vadd.f32 %v6910, %v7189
        %v7295 = vadd.f32 %v6911, %v7193
        %v7296 = vadd.f32 %v6912, %v7193
        %v7297 = vadd.f32 %v6913, %v7197
        %v7298 = vadd.f32 %v6914, %v7197
        %v7299 = vadd.f32 %v6915, %v7201
        %v7300 = vadd.f32 %v6916, %v7201
        %v7301 = vadd.f32 %v6917, %v7205
        %v7302 = vadd.f32 %v6918, %v7205
        %v7303 = vadd.f32 %v6919, %v7209
        %v7304 = vadd.f32 %v6920, %v7209
        %v7305 = vadd.f32 %v6921, %v7213
        %v7306 = vadd.f32 %v6922, %v7213
        %v7307 = vadd.f32 %v6923, %v7217
        %v7308 = vadd.f32 %v6924, %v7217
        %v7309 = vadd.f32 %v6925, %v7221
        %v7310 = vadd.f32 %v6926, %v7221
        %v7311 = vadd.f32 %v6927, %v7225
        %v7312 = vadd.f32 %v6928, %v7225
        %v7313 = vadd.f32 %v6929, %v7229
        %v7314 = vadd.f32 %v6930, %v7229
        %v7315 = vadd.f32 %v6931, %v7233
        %v7316 = vadd.f32 %v6932, %v7233
        %v7317 = vadd.f32 %v6933, %v7237
        %v7318 = vadd.f32 %v6934, %v7237
        %v7319 = vadd.f32 %v6935, %v7241
        %v7320 = vadd.f32 %v6936, %v7241
        %v7321 = vadd.f32 %v6937, %v7245
        %v7322 = vadd.f32 %v6938, %v7245
        %v7323 = vadd.f32 %v6939, %v7249
        %v7324 = vadd.f32 %v6940, %v7249
        %v7325 = vadd.f32 %v6941, %v7253
        %v7326 = vadd.f32 %v6942, %v7253
        %v7327 = vadd.f32 %v6943, %v7257
        %v7328 = vadd.f32 %v6944, %v7257
        %v7329 = vadd.f32 %v6945, %v7261
        %v7330 = vadd.f32 %v6946, %v7261
        %v7331 = vadd.f32 %v6947, %v7265
        %v7332 = vadd.f32 %v6948, %v7265
        %v7333 = vadd.f32 %v6949, %v7269
        %v7334 = vadd.f32 %v6950, %v7269
        %vm7335 = vcmask 130048
        %7336 = vst.msk [vmem:[%s577] sm:$0xff] %vm7335, %v893
        %7337 = vst.msk [vmem:[%s577 + $0x8] sm:$0xff] %vm7335, %v894
        %v7338 = vmax.f32 %v7271, 0.0
        %v7339 = vmax.f32 %v7272, 0.0
        %v7340 = vmax.f32 %v7273, 0.0
        %v7341 = vmax.f32 %v7274, 0.0
        %v7342 = vmax.f32 %v7275, 0.0
        %v7343 = vmax.f32 %v7276, 0.0
        %v7344 = vmax.f32 %v7277, 0.0
        %v7345 = vmax.f32 %v7278, 0.0
        %v7346 = vmax.f32 %v7279, 0.0
        %v7347 = vmax.f32 %v7280, 0.0
        %v7348 = vmax.f32 %v7281, 0.0
        %v7349 = vmax.f32 %v7282, 0.0
        %v7350 = vmax.f32 %v7283, 0.0
        %v7351 = vmax.f32 %v7284, 0.0
        %v7352 = vmax.f32 %v7285, 0.0
        %v7353 = vmax.f32 %v7286, 0.0
        %v7354 = vmax.f32 %v7287, 0.0
        %v7355 = vmax.f32 %v7288, 0.0
        %v7356 = vmax.f32 %v7289, 0.0
        %v7357 = vmax.f32 %v7290, 0.0
        %v7358 = vmax.f32 %v7291, 0.0
        %v7359 = vmax.f32 %v7292, 0.0
        %v7360 = vmax.f32 %v7293, 0.0
        %v7361 = vmax.f32 %v7294, 0.0
        %v7362 = vmax.f32 %v7295, 0.0
        %v7363 = vmax.f32 %v7296, 0.0
        %v7364 = vmax.f32 %v7297, 0.0
        %v7365 = vmax.f32 %v7298, 0.0
        %v7366 = vmax.f32 %v7299, 0.0
        %v7367 = vmax.f32 %v7300, 0.0
        %v7368 = vmax.f32 %v7301, 0.0
        %v7369 = vmax.f32 %v7302, 0.0
        %v7370 = vmax.f32 %v7303, 0.0
        %v7371 = vmax.f32 %v7304, 0.0
        %v7372 = vmax.f32 %v7305, 0.0
        %v7373 = vmax.f32 %v7306, 0.0
        %v7374 = vmax.f32 %v7307, 0.0
        %v7375 = vmax.f32 %v7308, 0.0
        %v7376 = vmax.f32 %v7309, 0.0
        %v7377 = vmax.f32 %v7310, 0.0
        %v7378 = vmax.f32 %v7311, 0.0
        %v7379 = vmax.f32 %v7312, 0.0
        %v7380 = vmax.f32 %v7313, 0.0
        %v7381 = vmax.f32 %v7314, 0.0
        %v7382 = vmax.f32 %v7315, 0.0
        %v7383 = vmax.f32 %v7316, 0.0
        %v7384 = vmax.f32 %v7317, 0.0
        %v7385 = vmax.f32 %v7318, 0.0
        %v7386 = vmax.f32 %v7319, 0.0
        %v7387 = vmax.f32 %v7320, 0.0
        %v7388 = vmax.f32 %v7321, 0.0
        %v7389 = vmax.f32 %v7322, 0.0
        %v7390 = vmax.f32 %v7323, 0.0
        %v7391 = vmax.f32 %v7324, 0.0
        %v7392 = vmax.f32 %v7325, 0.0
        %v7393 = vmax.f32 %v7326, 0.0
        %v7394 = vmax.f32 %v7327, 0.0
        %v7395 = vmax.f32 %v7328, 0.0
        %v7396 = vmax.f32 %v7329, 0.0
        %v7397 = vmax.f32 %v7330, 0.0
        %v7398 = vmax.f32 %v7331, 0.0
        %v7399 = vmax.f32 %v7332, 0.0
        %v7400 = vmax.f32 %v7333, 0.0
        %v7401 = vmax.f32 %v7334, 0.0
        %7402 = vst.msk [vmem:[%s648] sm:$0xff] %vm7335, %v7338
        %7403 = vst.msk [vmem:[%s648 + $0x8] sm:$0xff] %vm7335, %v7339
        %7404 = vst.msk [vmem:[%s648 + $0x10] sm:$0xff] %vm7335, %v7340
        %7405 = vst.msk [vmem:[%s648 + $0x18] sm:$0xff] %vm7335, %v7341
        %7406 = vst.msk [vmem:[%s648 + $0x20] sm:$0xff] %vm7335, %v7342
        %7407 = vst.msk [vmem:[%s648 + $0x28] sm:$0xff] %vm7335, %v7343
        %7408 = vst.msk [vmem:[%s648 + $0x30] sm:$0xff] %vm7335, %v7344
        %7409 = vst.msk [vmem:[%s648 + $0x38] sm:$0xff] %vm7335, %v7345
        %7410 = vst.msk [vmem:[%s648 + $0x40] sm:$0xff] %vm7335, %v7346
        %7411 = vst.msk [vmem:[%s648 + $0x48] sm:$0xff] %vm7335, %v7347
        %7412 = vst.msk [vmem:[%s648 + $0x50] sm:$0xff] %vm7335, %v7348
        %7413 = vst.msk [vmem:[%s648 + $0x58] sm:$0xff] %vm7335, %v7349
        %7414 = vst.msk [vmem:[%s648 + $0x60] sm:$0xff] %vm7335, %v7350
        %7415 = vst.msk [vmem:[%s648 + $0x68] sm:$0xff] %vm7335, %v7351
        %7416 = vst.msk [vmem:[%s648 + $0x70] sm:$0xff] %vm7335, %v7352
        %7417 = vst.msk [vmem:[%s648 + $0x78] sm:$0xff] %vm7335, %v7353
        %7418 = vst.msk [vmem:[%s648 + $0x80] sm:$0xff] %vm7335, %v7354
        %7419 = vst.msk [vmem:[%s648 + $0x88] sm:$0xff] %vm7335, %v7355
        %7420 = vst.msk [vmem:[%s648 + $0x90] sm:$0xff] %vm7335, %v7356
        %7421 = vst.msk [vmem:[%s648 + $0x98] sm:$0xff] %vm7335, %v7357
        %7422 = vst.msk [vmem:[%s648 + $0xa0] sm:$0xff] %vm7335, %v7358
        %7423 = vst.msk [vmem:[%s648 + $0xa8] sm:$0xff] %vm7335, %v7359
        %7424 = vst.msk [vmem:[%s648 + $0xb0] sm:$0xff] %vm7335, %v7360
        %7425 = vst.msk [vmem:[%s648 + $0xb8] sm:$0xff] %vm7335, %v7361
        %7426 = vst.msk [vmem:[%s648 + $0xc0] sm:$0xff] %vm7335, %v7362
        %7427 = vst.msk [vmem:[%s648 + $0xc8] sm:$0xff] %vm7335, %v7363
        %7428 = vst.msk [vmem:[%s648 + $0xd0] sm:$0xff] %vm7335, %v7364
        %7429 = vst.msk [vmem:[%s648 + $0xd8] sm:$0xff] %vm7335, %v7365
        %7430 = vst.msk [vmem:[%s648 + $0xe0] sm:$0xff] %vm7335, %v7366
        %7431 = vst.msk [vmem:[%s648 + $0xe8] sm:$0xff] %vm7335, %v7367
        %7432 = vst.msk [vmem:[%s648 + $0xf0] sm:$0xff] %vm7335, %v7368
        %7433 = vst.msk [vmem:[%s648 + $0xf8] sm:$0xff] %vm7335, %v7369
        %7434 = vst.msk [vmem:[%s648 + $0x100] sm:$0xff] %vm7335, %v7370
        %7435 = vst.msk [vmem:[%s648 + $0x108] sm:$0xff] %vm7335, %v7371
        %7436 = vst.msk [vmem:[%s648 + $0x110] sm:$0xff] %vm7335, %v7372
        %7437 = vst.msk [vmem:[%s648 + $0x118] sm:$0xff] %vm7335, %v7373
        %7438 = vst.msk [vmem:[%s648 + $0x120] sm:$0xff] %vm7335, %v7374
        %7439 = vst.msk [vmem:[%s648 + $0x128] sm:$0xff] %vm7335, %v7375
        %7440 = vst.msk [vmem:[%s648 + $0x130] sm:$0xff] %vm7335, %v7376
        %7441 = vst.msk [vmem:[%s648 + $0x138] sm:$0xff] %vm7335, %v7377
        %7442 = vst.msk [vmem:[%s648 + $0x140] sm:$0xff] %vm7335, %v7378
        %7443 = vst.msk [vmem:[%s648 + $0x148] sm:$0xff] %vm7335, %v7379
        %7444 = vst.msk [vmem:[%s648 + $0x150] sm:$0xff] %vm7335, %v7380
        %7445 = vst.msk [vmem:[%s648 + $0x158] sm:$0xff] %vm7335, %v7381
        %7446 = vst.msk [vmem:[%s648 + $0x160] sm:$0xff] %vm7335, %v7382
        %7447 = vst.msk [vmem:[%s648 + $0x168] sm:$0xff] %vm7335, %v7383
        %7448 = vst.msk [vmem:[%s648 + $0x170] sm:$0xff] %vm7335, %v7384
        %7449 = vst.msk [vmem:[%s648 + $0x178] sm:$0xff] %vm7335, %v7385
        %7450 = vst.msk [vmem:[%s648 + $0x180] sm:$0xff] %vm7335, %v7386
        %7451 = vst.msk [vmem:[%s648 + $0x188] sm:$0xff] %vm7335, %v7387
        %7452 = vst.msk [vmem:[%s648 + $0x190] sm:$0xff] %vm7335, %v7388
        %7453 = vst.msk [vmem:[%s648 + $0x198] sm:$0xff] %vm7335, %v7389
        %7454 = vst.msk [vmem:[%s648 + $0x1a0] sm:$0xff] %vm7335, %v7390
        %7455 = vst.msk [vmem:[%s648 + $0x1a8] sm:$0xff] %vm7335, %v7391
        %7456 = vst.msk [vmem:[%s648 + $0x1b0] sm:$0xff] %vm7335, %v7392
        %7457 = vst.msk [vmem:[%s648 + $0x1b8] sm:$0xff] %vm7335, %v7393
        %7458 = vst.msk [vmem:[%s648 + $0x1c0] sm:$0xff] %vm7335, %v7394
        %7459 = vst.msk [vmem:[%s648 + $0x1c8] sm:$0xff] %vm7335, %v7395
        %7460 = vst.msk [vmem:[%s648 + $0x1d0] sm:$0xff] %vm7335, %v7396
        %7461 = vst.msk [vmem:[%s648 + $0x1d8] sm:$0xff] %vm7335, %v7397
        %7462 = vst.msk [vmem:[%s648 + $0x1e0] sm:$0xff] %vm7335, %v7398
        %7463 = vst.msk [vmem:[%s648 + $0x1e8] sm:$0xff] %vm7335, %v7399
        %7464 = vst.msk [vmem:[%s648 + $0x1f0] sm:$0xff] %vm7335, %v7400
        %7465 = vst.msk [vmem:[%s648 + $0x1f8] sm:$0xff] %vm7335, %v7401
        %s7466 = sand.u32 %s348, 1
        %s7467 = scalar_lea.sflag [#allocation4], %s7466
        %s7468 = sand.u32 %s348, 1
        %s7469 = smul.addr %s7468, 16
        %s7470 = scalar_lea.vmem [#allocation3], %s7469
        %s7471 = smul.u32 2, %s35
        %p7472 = scmp.lt.s32.totalorder %s34, 1
        %s7473 = scalar_select %p7472, %s34, 1
        %p7474 = scmp.lt.s32.totalorder %s7471, 1
        %s7475 = scalar_select %p7474, %s7471, 1
        %s7476 = smul.addr %s7473, 64
        %s7477 = sadd.s32 %s7475, %s7476
        %s7478 = smul.addr %s7477, 8
        %s7479 = scalar_lea.vmem %s13, %s7478
        // Predicated region
        $region69: #{edge_module_forward.7} parent=67 // pred_check
          %p7480 = pneg %p358
        $region70: #{edge_module_forward.7} parent=67 // pred_check_branch
          %7482 = sbr.rel (%p7480) target = $region72
        $region71: #{edge_module_forward.7} parent=67 // pred_region
          %s7483 = smul.u32 2, %s35
          %s7485 = ssub.s32 256, 256
          %7486 = vsyncadd %s7467, %s7485
          %s7487 = smul.addr %s34, 2
          %s7488 = sadd.s32 %s7483, %s7487
          %s7489 = smul.addr %s7488, 128
          %s7490 = scalar_lea.hbm %s12, %s7489
          %s7491 = sshll.u32 %s7470, 4
          %s7492 = int_to_ptr.vmem [resolvable:$true] %s7491
          %7497 = dma.vmem_to_hbm [thread:$0]  %s7492, 256, %s7490, %s7467, 128, 128, 8
        $region72: #{edge_module_forward.7} parent=67 // pred_fallthru
          _
        // Predicated region
        $region73: #{edge_module_forward.7} parent=67 // pred_check
          %p7498 = pneg %p386
        $region74: #{edge_module_forward.7} parent=67 // pred_check_branch
          %7500 = sbr.rel (%p7498) target = $region76
        $region75: #{edge_module_forward.7} parent=67 // pred_region
          %s7501 = smul.u32 2, %s35
        $region76: #{edge_module_forward.7} parent=67 // pred_fallthru
          _
      $region68: #{edge_module_forward.7} parent=5 // pred_fallthru
        _
      %p7502 = scmp.le.s32.totalorder 2, %s25
      // Predicated region
      $region77: #{edge_module_forward.7} parent=5 // pred_check
        %p7503 = pneg %p7502
      $region78: #{edge_module_forward.7} parent=5 // pred_check_branch
        %7505 = sbr.rel (%p7503) target = $region80
      $region79: #{edge_module_forward.7} parent=5 // pred_region
        %s7506 = ssub.s32 %s25, 2
        // Predicated region
        $region81: #{edge_module_forward.7} parent=79 // pred_check
          %p7507 = pneg %p364
        $region82: #{edge_module_forward.7} parent=79 // pred_check_branch
          %7509 = sbr.rel (%p7507) target = $region84
        $region83: #{edge_module_forward.7} parent=79 // pred_region
          %s7510 = sand.u32 %s349, 1
          %s7511 = scalar_lea.sflag [#allocation4], %s7510
          %s7512 = sand.u32 %s349, 1
          %s7513 = smul.addr %s7512, 16
          %s7514 = scalar_lea.vmem [#allocation3], %s7513
          %7515 = dma.done %s7511, 256
        $region84: #{edge_module_forward.7} parent=79 // pred_fallthru
          _
        // Predicated region
        $region85: #{edge_module_forward.7} parent=79 // pred_check
          %p7516 = pneg %p392
        $region86: #{edge_module_forward.7} parent=79 // pred_check_branch
          %7518 = sbr.rel (%p7516) target = $region88
        $region87: #{edge_module_forward.7} parent=79 // pred_region
          %s7519 = smul.u32 2, %s37
          %p7520 = scmp.lt.s32.totalorder %s36, 1
          %s7521 = scalar_select %p7520, %s36, 1
          %p7522 = scmp.lt.s32.totalorder %s7519, 1
          %s7523 = scalar_select %p7522, %s7519, 1
          %s7524 = smul.addr %s7521, 64
          %s7525 = sadd.s32 %s7523, %s7524
          %s7526 = smul.addr %s7525, 8
          %s7527 = scalar_lea.vmem %s13, %s7526
        $region88: #{edge_module_forward.7} parent=79 // pred_fallthru
          _
      $region80: #{edge_module_forward.7} parent=5 // pred_fallthru
        _
    $region6: #{edge_module_forward.7} parent=1 // loop_footer
      %s29 = sadd.s32 1, %s25
    $region7: #{edge_module_forward.7} parent=1 // loop_footer_branch
      %24 = sbr.rel target = $region3
    $region8: #{edge_module_forward.7} parent=1 // loop_exit
      _
    %7528 = vsyncpa [#allocation4], 1
    %s7529 = scalar_lea.sflag [#allocation4], 1
    %7530 = vsyncpa %s7529, 1

</llo_original>
